<compile_context>
chip_gen: v7x
topology: tpu7x:2x2x1
jax: 0.10.0
libtpu: 0.0.40
codegen_flags: <defaults>
</compile_context>

<pallas_src>
import functools

import jax
import jax.numpy as jnp
from jax.experimental import pallas as pl
from jax.experimental.pallas import tpu as pltpu

SLOPE = 0.01


def _leaky(x):
    # LeakyReLU(negative_slope=SLOPE)
    return jnp.where(x >= 0, x, SLOPE * x)


# -----------------------------------------------------------------------------
# Fully fused forward kernel (one grid step per batch element)
# -----------------------------------------------------------------------------
def _build_fused_kernel(N, H, Hf, Fout, num_layers):
    NN = N * N
    inv_sqrt_n = 1.0 / float(N) ** 0.5
    inv_n = 1.0 / float(N)
    inv_offdiag = 1.0 / float(N * (N - 1))

    def kernel(a_ref, nrow_ref, dmask_ref, *refs):
        o_ref = refs[-1]
        wrefs = refs[:-1]
        pos = [0]

        def nxt():
            r = wrefs[pos[0]]
            pos[0] += 1
            return r[...]

        a_col = a_ref[...].reshape(NN, 1)      # adjacency column (this batch)
        n_col = nrow_ref[...]                  # noise-on-diagonal column (N*N, 1)
        d_col = dmask_ref[...]                 # diagonal mask column (N*N, 1)

        # ---- in_lin decomposed over the 2 input channels (VPU outer products;
        #      never materializes the (N*N, 2) input, avoids a K=2 matmul) ----
        in_w = nxt()                           # (2, H)
        in_b = nxt()                           # (1, H)
        x = a_col * in_w[0:1, :] + n_col * in_w[1:2, :] + in_b        # (N*N, H)

        # ---- PowerfulLayer stack; all intermediates stay in VMEM/vregs ----
        layer_feats = []
        for _ in range(num_layers):
            wA, bA = nxt(), nxt()              # fused m1[0] || m2[0]   (H, 2H)
            wB, bB = nxt(), nxt()              # block-diag m1[2]/m2[2] (2H, 2H)
            w4p, w4x, b4 = nxt(), nxt(), nxt() # m4 split into prod / x row blocks

            hpre = _leaky(jnp.dot(x, wA, preferred_element_type=jnp.float32) + bA)
            h12 = jnp.dot(hpre, wB, preferred_element_type=jnp.float32) + bB
            h1 = h12[:, :H].reshape(N, N, H)   # m1(x)
            h2 = h12[:, H:].reshape(N, N, H)   # m2(x)

            # per-feature N x N matmul in channels-last layout as an N-step
            # broadcast-FMA on the VPU (no transposes / relayouts):
            #   prod[i, j, f] = sum_k h1[i, k, f] * h2[k, j, f]
            acc = h1[:, 0:1, :] * h2[0:1, :, :]
            for k in range(1, N):
                acc = acc + h1[:, k:k + 1, :] * h2[k:k + 1, :, :]
            prod = acc.reshape(NN, H) * inv_sqrt_n

            # m4 without concatenation: cat([prod, x]) @ w4 == prod@w4p + x@w4x
            x = (jnp.dot(prod, w4p, preferred_element_type=jnp.float32)
                 + jnp.dot(x, w4x, preferred_element_type=jnp.float32) + b4)
            layer_feats.append(x)              # residual=False, norm='none'

        # ---- layer_cat_lin without materializing the 66-channel concat ----
        cat_wu = nxt()                                     # (2, H) rows for u0
        cat_wl = [nxt() for _ in range(num_layers)]        # (H, H) per conv out
        cat_b = nxt()                                      # (1, H)
        u = a_col * cat_wu[0:1, :] + n_col * cat_wu[1:2, :] + cat_b
        for feat, wl in zip(layer_feats, cat_wl):
            u = u + jnp.dot(feat, wl, preferred_element_type=jnp.float32)

        # ---- FeatureExtractor + after_conv + final_lin (per-batch head) ----
        fe1_w, fe1_b = nxt(), nxt()
        fe2_w, fe3_w = nxt(), nxt()
        ac_w, ac_b = nxt(), nxt()
        fin_w, fin_b = nxt(), nxt()

        trace = jnp.sum(u * d_col, axis=0, keepdims=True)             # (1, H)
        total = jnp.sum(u, axis=0, keepdims=True)                     # (1, H)
        out = (jnp.dot(trace * inv_n, fe1_w, preferred_element_type=jnp.float32)
               + fe1_b
               + jnp.dot((total - trace) * inv_offdiag, fe2_w,
                         preferred_element_type=jnp.float32))
        out = out + jnp.dot(_leaky(out), fe3_w, preferred_element_type=jnp.float32)
        out = out + _leaky(jnp.dot(out, ac_w, preferred_element_type=jnp.float32)
                           + ac_b)
        # TODO(synk): dropout with p=1e-6 is treated as identity (eval semantics).
        out = jnp.dot(out, fin_w, preferred_element_type=jnp.float32) + fin_b
        o_ref[...] = out.reshape(1, 1, Fout)

    return kernel


# -----------------------------------------------------------------------------
# One-time weight fusion / splitting for the fused kernel
# -----------------------------------------------------------------------------
def prepare_fused_params(params, N):
    """Weights stored as (in_features, out_features); biases as (1, out)."""
    f32 = jnp.float32
    H = params['in_w'].shape[1]
    Hf = params['fe1_w'].shape[1]
    Fout = params['fin_w'].shape[1]
    num_layers = len(params['convs'])

    weights = [params['in_w'], params['in_b']]
    zero = jnp.zeros((H, H), f32)
    for (w1a, b1a, w1b, b1b, w2a, b2a, w2b, b2b, w4, b4) in params['convs']:
        wA = jnp.concatenate([w1a, w2a], axis=1)                      # (H, 2H)
        bA = jnp.concatenate([b1a, b2a], axis=1)                      # (1, 2H)
        wB = jnp.concatenate(
            [jnp.concatenate([w1b, zero], axis=1),
             jnp.concatenate([zero, w2b], axis=1)], axis=0)           # (2H, 2H)
        bB = jnp.concatenate([b1b, b2b], axis=1)                      # (1, 2H)
        weights += [wA, bA, wB, bB, w4[:H, :], w4[H:, :], b4]

    cat_w = params['cat_w']                                           # (2+L*H, H)
    weights.append(cat_w[0:2, :])
    for li in range(num_layers):
        weights.append(cat_w[2 + li * H: 2 + (li + 1) * H, :])
    weights.append(params['cat_b'])
    weights += [params['fe1_w'], params['fe1_b'], params['fe2_w'], params['fe3_w'],
                params['ac_w'], params['ac_b'], params['fin_w'], params['fin_b']]

    dmask = jnp.eye(N, dtype=f32).reshape(N * N, 1)                   # diag mask col
    return dict(
        weights=tuple(jnp.asarray(w, f32) for w in weights),
        dmask=dmask,
        tm=(params['tm_w1'], params['tm_b1'], params['tm_w2'], params['tm_b2']),
        dims=dict(N=N, H=H, Hf=Hf, Fout=Fout, num_layers=num_layers))


# -----------------------------------------------------------------------------
# Forward builder: single fused pallas_call inside one jitted program
# -----------------------------------------------------------------------------
def make_powerful_forward(prepped):
    d = prepped['dims']
    N, H, Hf, Fout, L = d['N'], d['H'], d['Hf'], d['Fout'], d['num_layers']
    NN = N * N
    kernel = _build_fused_kernel(N, H, Hf, Fout, L)
    weights = prepped['weights']
    dmask = prepped['dmask']
    tm_w1, tm_b1, tm_w2, tm_b2 = prepped['tm']

    def _rep_spec(shape):
        nd = len(shape)
        return pl.BlockSpec(shape, lambda b, _nd=nd: (0,) * _nd)

    wbytes = sum(int(w.size) for w in weights) * 4

    @jax.jit
    def forward(node_features, A, noiselevel):
        # node_features is accepted but (as in the reference forward_cat) unused.
        del node_features
        B = A.shape[0]

        # time_mlp on the scalar noise level (tiny; fused into this jit program).
        t = jnp.full((1, 1), noiselevel, jnp.float32)
        t = jnp.dot(t, tm_w1) + tm_b1
        t = jax.nn.gelu(t, approximate=False)
        t = jnp.dot(t, tm_w2) + tm_b2
        noise_col = t[0, 0] * dmask                      # (N*N, 1) noise-diag column

        a_flat = A.astype(jnp.float32).reshape(B, NN, 1)

        in_specs = [pl.BlockSpec((1, NN, 1), lambda b: (b, 0, 0)),
                    _rep_spec((NN, 1)),
                    _rep_spec((NN, 1))]
        in_specs += [_rep_spec(tuple(w.shape)) for w in weights]

        flops_per_b = (
            4 * NN * H                                     # in_lin
            + L * (2 * NN * H * (2 * H)                    # fused m1/m2 stage A
                   + 2 * NN * (2 * H) * (2 * H)            # block-diag stage B
                   + 2 * H * N ** 3                        # pairwise product
                   + 4 * NN * H * H                        # m4 (two matmuls)
                   + 2 * NN * H * H)                       # layer_cat_lin part
            + 2 * (2 * H * Hf + 2 * Hf * Hf + Hf * Fout))  # head MLPs
        cost = pl.CostEstimate(
            flops=B * flops_per_b, transcendentals=0,
            bytes_accessed=4 * (B * NN + 2 * NN + B * Fout) + wbytes)

        out = pl.pallas_call(
            kernel,
            out_shape=jax.ShapeDtypeStruct((B, 1, Fout), jnp.float32),
            grid=(B,),
            in_specs=in_specs,
            out_specs=pl.BlockSpec((1, 1, Fout), lambda b: (b, 0, 0)),
            compiler_params=pltpu.CompilerParams(
                dimension_semantics=("parallel",)),   # batch across v7x's 2 TCs
            cost_estimate=cost,
        )(a_flat, noise_col, dmask, *weights)
        return out.reshape(B, Fout)

    return forward


# -----------------------------------------------------------------------------
# Pure-JAX reference (mirrors the PyTorch forward_cat, eval mode)
# -----------------------------------------------------------------------------
def _reference_forward(params, A, noiselevel):
    hp = jax.lax.Precision.HIGHEST
    dot = functools.partial(jnp.dot, precision=hp)
    f32 = jnp.float32
    B, N, _ = A.shape
    H = params['in_w'].shape[1]

    t = jnp.full((1, 1), noiselevel, f32)
    t = dot(t, params['tm_w1']) + params['tm_b1']
    t = jax.nn.gelu(t, approximate=False)
    t = dot(t, params['tm_w2']) + params['tm_b2']
    eye = jnp.eye(N, dtype=f32)
    u0 = jnp.concatenate(
        [A[..., None].astype(f32),
         jnp.broadcast_to((t[0, 0] * eye)[None, :, :, None], (B, N, N, 1))],
        axis=-1)

    outs = [u0]
    x = (dot(u0.reshape(B * N * N, 2), params['in_w'])
         + params['in_b']).reshape(B, N, N, H)
    for (w1a, b1a, w1b, b1b, w2a, b2a, w2b, b2b, w4, b4) in params['convs']:
        x2 = x.reshape(B * N * N, H)
        h1 = dot(_leaky(dot(x2, w1a) + b1a), w1b) + b1b
        h2 = dot(_leaky(dot(x2, w2a) + b2a), w2b) + b2b
        h1 = jnp.transpose(h1.reshape(B, N, N, H), (0, 3, 1, 2))
        h2 = jnp.transpose(h2.reshape(B, N, N, H), (0, 3, 1, 2))
        prod = jnp.einsum('bfik,bfkj->bfij', h1, h2,
                          precision=hp) / jnp.sqrt(f32(N))
        cat = jnp.concatenate([jnp.transpose(prod, (0, 2, 3, 1)), x], axis=-1)
        x = (dot(cat.reshape(B * N * N, 2 * H), w4) + b4).reshape(B, N, N, H)
        outs.append(x)

    cat = jnp.concatenate(outs, axis=-1)
    u = (dot(cat.reshape(B * N * N, cat.shape[-1]), params['cat_w'])
         + params['cat_b']).reshape(B, N, N, H)
    trace = jnp.sum(u * eye[None, :, :, None], axis=(1, 2))
    total = jnp.sum(u, axis=(1, 2))
    out = dot(trace / N, params['fe1_w']) + params['fe1_b']
    out = out + dot((total - trace) / (N * (N - 1)), params['fe2_w'])
    out = out + dot(_leaky(out), params['fe3_w'])
    out = out + _leaky(dot(out, params['ac_w']) + params['ac_b'])
    out = dot(out, params['fin_w']) + params['fin_b']
    return out


# -----------------------------------------------------------------------------
# Deterministic parameter init (synthetic)
# -----------------------------------------------------------------------------
def init_params(key, input_features=2, hidden=32, hidden_final=32,
                num_layers=2, output_features=1):
    keys = iter(jax.random.split(key, 64))

    def lin(fi, fo, bias=True):
        w = jax.random.normal(next(keys), (fi, fo), jnp.float32) / jnp.sqrt(float(fi))
        b = (0.01 * jax.random.normal(next(keys), (1, fo), jnp.float32)) if bias else None
        return w, b

    p = {}
    p['tm_w1'], p['tm_b1'] = lin(1, 4)
    p['tm_w2'], p['tm_b2'] = lin(4, 1)
    p['in_w'], p['in_b'] = lin(input_features, hidden)
    convs = []
    for _ in range(num_layers):
        w1a, b1a = lin(hidden, hidden)
        w1b, b1b = lin(hidden, hidden)
        w2a, b2a = lin(hidden, hidden)
        w2b, b2b = lin(hidden, hidden)
        w4, b4 = lin(2 * hidden, hidden)
        convs.append((w1a, b1a, w1b, b1b, w2a, b2a, w2b, b2b, w4, b4))
    p['convs'] = convs
    p['cat_w'], p['cat_b'] = lin(hidden * num_layers + input_features, hidden)
    p['fe1_w'], p['fe1_b'] = lin(hidden, hidden_final)
    p['fe2_w'], _ = lin(hidden, hidden_final, bias=False)
    p['fe3_w'], _ = lin(hidden_final, hidden_final, bias=False)
    p['ac_w'], p['ac_b'] = lin(hidden_final, hidden_final)
    p['fin_w'], p['fin_b'] = lin(hidden_final, output_features)
    return p


if __name__ == "__main__":
    B, N = 2, 16
    key = jax.random.PRNGKey(0)
    k_param, k_adj, k_node = jax.random.split(key, 3)

    params = init_params(k_param)

    # symmetric "adjacency-like" input
    A_raw = jax.random.uniform(k_adj, (B, N, N), jnp.float32)
    A = 0.5 * (A_raw + jnp.transpose(A_raw, (0, 2, 1)))
    node_features = jax.random.normal(k_node, (B, N, 1), jnp.float32)  # unused
    noiselevel = 0.5

    prepped = prepare_fused_params(params, N)
    forward = make_powerful_forward(prepped)

    out = forward(node_features, A, noiselevel)
    out = jax.block_until_ready(out)
    assert out.shape == (B, 1), out.shape

    ref = jax.block_until_ready(_reference_forward(params, A, noiselevel))
    max_err = float(jnp.max(jnp.abs(out - ref)))
    assert max_err < 3e-2, f"kernel/reference mismatch: max abs err {max_err}"

    print("KERNEL_OK")
</pallas_src>

<mosaic_0001>
module attributes {stable_mosaic.version = 11 : i64} {
  func.func @kernel(%arg0: i32, %arg1: memref<1x256x1xf32, #tpu.memory_space<vmem>>, %arg2: memref<256x1xf32, #tpu.memory_space<vmem>>, %arg3: memref<256x1xf32, #tpu.memory_space<vmem>>, %arg4: memref<2x32xf32, #tpu.memory_space<vmem>>, %arg5: memref<1x32xf32, #tpu.memory_space<vmem>>, %arg6: memref<32x64xf32, #tpu.memory_space<vmem>>, %arg7: memref<1x64xf32, #tpu.memory_space<vmem>>, %arg8: memref<64x64xf32, #tpu.memory_space<vmem>>, %arg9: memref<1x64xf32, #tpu.memory_space<vmem>>, %arg10: memref<32x32xf32, #tpu.memory_space<vmem>>, %arg11: memref<32x32xf32, #tpu.memory_space<vmem>>, %arg12: memref<1x32xf32, #tpu.memory_space<vmem>>, %arg13: memref<32x64xf32, #tpu.memory_space<vmem>>, %arg14: memref<1x64xf32, #tpu.memory_space<vmem>>, %arg15: memref<64x64xf32, #tpu.memory_space<vmem>>, %arg16: memref<1x64xf32, #tpu.memory_space<vmem>>, %arg17: memref<32x32xf32, #tpu.memory_space<vmem>>, %arg18: memref<32x32xf32, #tpu.memory_space<vmem>>, %arg19: memref<1x32xf32, #tpu.memory_space<vmem>>, %arg20: memref<2x32xf32, #tpu.memory_space<vmem>>, %arg21: memref<32x32xf32, #tpu.memory_space<vmem>>, %arg22: memref<32x32xf32, #tpu.memory_space<vmem>>, %arg23: memref<1x32xf32, #tpu.memory_space<vmem>>, %arg24: memref<32x32xf32, #tpu.memory_space<vmem>>, %arg25: memref<1x32xf32, #tpu.memory_space<vmem>>, %arg26: memref<32x32xf32, #tpu.memory_space<vmem>>, %arg27: memref<32x32xf32, #tpu.memory_space<vmem>>, %arg28: memref<32x32xf32, #tpu.memory_space<vmem>>, %arg29: memref<1x32xf32, #tpu.memory_space<vmem>>, %arg30: memref<32x1xf32, #tpu.memory_space<vmem>>, %arg31: memref<1x1xf32, #tpu.memory_space<vmem>>, %arg32: memref<1x1x1xf32, #tpu.memory_space<vmem>>) attributes {dimension_semantics = [#tpu.dimension_semantics<parallel>], iteration_bounds = array<i64: 2>, scalar_prefetch = 0 : i64, scratch_operands = 0 : i64, tpu.core_type = #tpu.core_type<tc>, window_params = [{transform_indices = @transform_0, window_bounds = array<i64: 1, 256, 1>}, {pipeline_mode = #tpu.pipeline_mode<synchronous>, transform_indices = @transform_1, window_bounds = array<i64: 256, 1>}, {pipeline_mode = #tpu.pipeline_mode<synchronous>, transform_indices = @transform_2, window_bounds = array<i64: 256, 1>}, {pipeline_mode = #tpu.pipeline_mode<synchronous>, transform_indices = @transform_3, window_bounds = array<i64: 2, 32>}, {pipeline_mode = #tpu.pipeline_mode<synchronous>, transform_indices = @transform_4, window_bounds = array<i64: 1, 32>}, {pipeline_mode = #tpu.pipeline_mode<synchronous>, transform_indices = @transform_5, window_bounds = array<i64: 32, 64>}, {pipeline_mode = #tpu.pipeline_mode<synchronous>, transform_indices = @transform_6, window_bounds = array<i64: 1, 64>}, {pipeline_mode = #tpu.pipeline_mode<synchronous>, transform_indices = @transform_7, window_bounds = array<i64: 64, 64>}, {pipeline_mode = #tpu.pipeline_mode<synchronous>, transform_indices = @transform_8, window_bounds = array<i64: 1, 64>}, {pipeline_mode = #tpu.pipeline_mode<synchronous>, transform_indices = @transform_9, window_bounds = array<i64: 32, 32>}, {pipeline_mode = #tpu.pipeline_mode<synchronous>, transform_indices = @transform_10, window_bounds = array<i64: 32, 32>}, {pipeline_mode = #tpu.pipeline_mode<synchronous>, transform_indices = @transform_11, window_bounds = array<i64: 1, 32>}, {pipeline_mode = #tpu.pipeline_mode<synchronous>, transform_indices = @transform_12, window_bounds = array<i64: 32, 64>}, {pipeline_mode = #tpu.pipeline_mode<synchronous>, transform_indices = @transform_13, window_bounds = array<i64: 1, 64>}, {pipeline_mode = #tpu.pipeline_mode<synchronous>, transform_indices = @transform_14, window_bounds = array<i64: 64, 64>}, {pipeline_mode = #tpu.pipeline_mode<synchronous>, transform_indices = @transform_15, window_bounds = array<i64: 1, 64>}, {pipeline_mode = #tpu.pipeline_mode<synchronous>, transform_indices = @transform_16, window_bounds = array<i64: 32, 32>}, {pipeline_mode = #tpu.pipeline_mode<synchronous>, transform_indices = @transform_17, window_bounds = array<i64: 32, 32>}, {pipeline_mode = #tpu.pipeline_mode<synchronous>, transform_indices = @transform_18, window_bounds = array<i64: 1, 32>}, {pipeline_mode = #tpu.pipeline_mode<synchronous>, transform_indices = @transform_19, window_bounds = array<i64: 2, 32>}, {pipeline_mode = #tpu.pipeline_mode<synchronous>, transform_indices = @transform_20, window_bounds = array<i64: 32, 32>}, {pipeline_mode = #tpu.pipeline_mode<synchronous>, transform_indices = @transform_21, window_bounds = array<i64: 32, 32>}, {pipeline_mode = #tpu.pipeline_mode<synchronous>, transform_indices = @transform_22, window_bounds = array<i64: 1, 32>}, {pipeline_mode = #tpu.pipeline_mode<synchronous>, transform_indices = @transform_23, window_bounds = array<i64: 32, 32>}, {pipeline_mode = #tpu.pipeline_mode<synchronous>, transform_indices = @transform_24, window_bounds = array<i64: 1, 32>}, {pipeline_mode = #tpu.pipeline_mode<synchronous>, transform_indices = @transform_25, window_bounds = array<i64: 32, 32>}, {pipeline_mode = #tpu.pipeline_mode<synchronous>, transform_indices = @transform_26, window_bounds = array<i64: 32, 32>}, {pipeline_mode = #tpu.pipeline_mode<synchronous>, transform_indices = @transform_27, window_bounds = array<i64: 32, 32>}, {pipeline_mode = #tpu.pipeline_mode<synchronous>, transform_indices = @transform_28, window_bounds = array<i64: 1, 32>}, {pipeline_mode = #tpu.pipeline_mode<synchronous>, transform_indices = @transform_29, window_bounds = array<i64: 32, 1>}, {pipeline_mode = #tpu.pipeline_mode<synchronous>, transform_indices = @transform_30, window_bounds = array<i64: 1, 1>}, {transform_indices = @transform_31, window_bounds = array<i64: 1, 1, 1>}]} {
    %c0 = arith.constant 0 : index
    %c0_0 = arith.constant 0 : index
    %c0_1 = arith.constant 0 : index
    %0 = vector.load %arg1[%c0, %c0_0, %c0_1] : memref<1x256x1xf32, #tpu.memory_space<vmem>>, vector<1x256x1xf32>
    %1 = vector.shape_cast %0 : vector<1x256x1xf32> to vector<256x1xf32>
    %c0_2 = arith.constant 0 : index
    %c0_3 = arith.constant 0 : index
    %2 = vector.load %arg2[%c0_2, %c0_3] : memref<256x1xf32, #tpu.memory_space<vmem>>, vector<256x1xf32>
    %c0_4 = arith.constant 0 : index
    %c0_5 = arith.constant 0 : index
    %3 = vector.load %arg3[%c0_4, %c0_5] : memref<256x1xf32, #tpu.memory_space<vmem>>, vector<256x1xf32>
    %c0_6 = arith.constant 0 : index
    %c0_7 = arith.constant 0 : index
    %4 = vector.load %arg4[%c0_6, %c0_7] : memref<2x32xf32, #tpu.memory_space<vmem>>, vector<2x32xf32>
    %c0_8 = arith.constant 0 : index
    %c0_9 = arith.constant 0 : index
    %5 = vector.load %arg5[%c0_8, %c0_9] : memref<1x32xf32, #tpu.memory_space<vmem>>, vector<1x32xf32>
    %6 = vector.extract_strided_slice %4 {offsets = [0, 0], sizes = [1, 32], strides = [1, 1]} : vector<2x32xf32> to vector<1x32xf32>
    %7 = vector.broadcast %1 : vector<256x1xf32> to vector<256x32xf32>
    %8 = vector.broadcast %6 : vector<1x32xf32> to vector<256x32xf32>
    %9 = arith.mulf %7, %8 : vector<256x32xf32>
    %10 = vector.extract_strided_slice %4 {offsets = [1, 0], sizes = [1, 32], strides = [1, 1]} : vector<2x32xf32> to vector<1x32xf32>
    %11 = vector.broadcast %2 : vector<256x1xf32> to vector<256x32xf32>
    %12 = vector.broadcast %10 : vector<1x32xf32> to vector<256x32xf32>
    %13 = arith.mulf %11, %12 : vector<256x32xf32>
    %14 = arith.addf %9, %13 : vector<256x32xf32>
    %15 = vector.broadcast %5 : vector<1x32xf32> to vector<256x32xf32>
    %16 = arith.addf %14, %15 : vector<256x32xf32>
    %c0_10 = arith.constant 0 : index
    %c0_11 = arith.constant 0 : index
    %17 = vector.load %arg6[%c0_10, %c0_11] : memref<32x64xf32, #tpu.memory_space<vmem>>, vector<32x64xf32>
    %c0_12 = arith.constant 0 : index
    %c0_13 = arith.constant 0 : index
    %18 = vector.load %arg7[%c0_12, %c0_13] : memref<1x64xf32, #tpu.memory_space<vmem>>, vector<1x64xf32>
    %c0_14 = arith.constant 0 : index
    %c0_15 = arith.constant 0 : index
    %19 = vector.load %arg8[%c0_14, %c0_15] : memref<64x64xf32, #tpu.memory_space<vmem>>, vector<64x64xf32>
    %c0_16 = arith.constant 0 : index
    %c0_17 = arith.constant 0 : index
    %20 = vector.load %arg9[%c0_16, %c0_17] : memref<1x64xf32, #tpu.memory_space<vmem>>, vector<1x64xf32>
    %c0_18 = arith.constant 0 : index
    %c0_19 = arith.constant 0 : index
    %21 = vector.load %arg10[%c0_18, %c0_19] : memref<32x32xf32, #tpu.memory_space<vmem>>, vector<32x32xf32>
    %c0_20 = arith.constant 0 : index
    %c0_21 = arith.constant 0 : index
    %22 = vector.load %arg11[%c0_20, %c0_21] : memref<32x32xf32, #tpu.memory_space<vmem>>, vector<32x32xf32>
    %c0_22 = arith.constant 0 : index
    %c0_23 = arith.constant 0 : index
    %23 = vector.load %arg12[%c0_22, %c0_23] : memref<1x32xf32, #tpu.memory_space<vmem>>, vector<1x32xf32>
    %cst = arith.constant dense<0.000000e+00> : vector<256x64xf32>
    %24 = tpu.matmul %16, %17, %cst {dimension_numbers = #tpu.dot_dimension_numbers<[1], [0], [0], [1], [0, 0, 1, 1], [], []>} : vector<256x32xf32>, vector<32x64xf32>, vector<256x64xf32> -> vector<256x64xf32>
    %25 = vector.broadcast %18 : vector<1x64xf32> to vector<256x64xf32>
    %26 = arith.addf %24, %25 : vector<256x64xf32>
    %cst_24 = arith.constant 0.000000e+00 : f32
    %27 = vector.broadcast %cst_24 : f32 to vector<256x64xf32>
    %28 = arith.cmpf oge, %26, %27 : vector<256x64xf32>
    %cst_25 = arith.constant 0.00999999977 : f32
    %29 = vector.broadcast %cst_25 : f32 to vector<256x64xf32>
    %30 = arith.mulf %29, %26 : vector<256x64xf32>
    %31 = arith.select %28, %26, %30 : vector<256x64xi1>, vector<256x64xf32>
    %cst_26 = arith.constant dense<0.000000e+00> : vector<256x64xf32>
    %32 = tpu.matmul %31, %19, %cst_26 {dimension_numbers = #tpu.dot_dimension_numbers<[1], [0], [0], [1], [0, 0, 1, 1], [], []>} : vector<256x64xf32>, vector<64x64xf32>, vector<256x64xf32> -> vector<256x64xf32>
    %33 = vector.broadcast %20 : vector<1x64xf32> to vector<256x64xf32>
    %34 = arith.addf %32, %33 : vector<256x64xf32>
    %35 = vector.extract_strided_slice %34 {offsets = [0, 0], sizes = [256, 32], strides = [1, 1]} : vector<256x64xf32> to vector<256x32xf32>
    %36 = vector.shape_cast %35 : vector<256x32xf32> to vector<16x16x32xf32>
    %37 = vector.extract_strided_slice %34 {offsets = [0, 32], sizes = [256, 32], strides = [1, 1]} : vector<256x64xf32> to vector<256x32xf32>
    %38 = vector.shape_cast %37 : vector<256x32xf32> to vector<16x16x32xf32>
    %39 = vector.extract_strided_slice %36 {offsets = [0, 0, 0], sizes = [16, 1, 32], strides = [1, 1, 1]} : vector<16x16x32xf32> to vector<16x1x32xf32>
    %40 = vector.extract_strided_slice %38 {offsets = [0, 0, 0], sizes = [1, 16, 32], strides = [1, 1, 1]} : vector<16x16x32xf32> to vector<1x16x32xf32>
    %41 = vector.broadcast %39 : vector<16x1x32xf32> to vector<16x16x32xf32>
    %42 = vector.broadcast %40 : vector<1x16x32xf32> to vector<16x16x32xf32>
    %43 = arith.mulf %41, %42 : vector<16x16x32xf32>
    %44 = vector.extract_strided_slice %36 {offsets = [0, 1, 0], sizes = [16, 1, 32], strides = [1, 1, 1]} : vector<16x16x32xf32> to vector<16x1x32xf32>
    %45 = vector.extract_strided_slice %38 {offsets = [1, 0, 0], sizes = [1, 16, 32], strides = [1, 1, 1]} : vector<16x16x32xf32> to vector<1x16x32xf32>
    %46 = vector.broadcast %44 : vector<16x1x32xf32> to vector<16x16x32xf32>
    %47 = vector.broadcast %45 : vector<1x16x32xf32> to vector<16x16x32xf32>
    %48 = arith.mulf %46, %47 : vector<16x16x32xf32>
    %49 = arith.addf %43, %48 : vector<16x16x32xf32>
    %50 = vector.extract_strided_slice %36 {offsets = [0, 2, 0], sizes = [16, 1, 32], strides = [1, 1, 1]} : vector<16x16x32xf32> to vector<16x1x32xf32>
    %51 = vector.extract_strided_slice %38 {offsets = [2, 0, 0], sizes = [1, 16, 32], strides = [1, 1, 1]} : vector<16x16x32xf32> to vector<1x16x32xf32>
    %52 = vector.broadcast %50 : vector<16x1x32xf32> to vector<16x16x32xf32>
    %53 = vector.broadcast %51 : vector<1x16x32xf32> to vector<16x16x32xf32>
    %54 = arith.mulf %52, %53 : vector<16x16x32xf32>
    %55 = arith.addf %49, %54 : vector<16x16x32xf32>
    %56 = vector.extract_strided_slice %36 {offsets = [0, 3, 0], sizes = [16, 1, 32], strides = [1, 1, 1]} : vector<16x16x32xf32> to vector<16x1x32xf32>
    %57 = vector.extract_strided_slice %38 {offsets = [3, 0, 0], sizes = [1, 16, 32], strides = [1, 1, 1]} : vector<16x16x32xf32> to vector<1x16x32xf32>
    %58 = vector.broadcast %56 : vector<16x1x32xf32> to vector<16x16x32xf32>
    %59 = vector.broadcast %57 : vector<1x16x32xf32> to vector<16x16x32xf32>
    %60 = arith.mulf %58, %59 : vector<16x16x32xf32>
    %61 = arith.addf %55, %60 : vector<16x16x32xf32>
    %62 = vector.extract_strided_slice %36 {offsets = [0, 4, 0], sizes = [16, 1, 32], strides = [1, 1, 1]} : vector<16x16x32xf32> to vector<16x1x32xf32>
    %63 = vector.extract_strided_slice %38 {offsets = [4, 0, 0], sizes = [1, 16, 32], strides = [1, 1, 1]} : vector<16x16x32xf32> to vector<1x16x32xf32>
    %64 = vector.broadcast %62 : vector<16x1x32xf32> to vector<16x16x32xf32>
    %65 = vector.broadcast %63 : vector<1x16x32xf32> to vector<16x16x32xf32>
    %66 = arith.mulf %64, %65 : vector<16x16x32xf32>
    %67 = arith.addf %61, %66 : vector<16x16x32xf32>
    %68 = vector.extract_strided_slice %36 {offsets = [0, 5, 0], sizes = [16, 1, 32], strides = [1, 1, 1]} : vector<16x16x32xf32> to vector<16x1x32xf32>
    %69 = vector.extract_strided_slice %38 {offsets = [5, 0, 0], sizes = [1, 16, 32], strides = [1, 1, 1]} : vector<16x16x32xf32> to vector<1x16x32xf32>
    %70 = vector.broadcast %68 : vector<16x1x32xf32> to vector<16x16x32xf32>
    %71 = vector.broadcast %69 : vector<1x16x32xf32> to vector<16x16x32xf32>
    %72 = arith.mulf %70, %71 : vector<16x16x32xf32>
    %73 = arith.addf %67, %72 : vector<16x16x32xf32>
    %74 = vector.extract_strided_slice %36 {offsets = [0, 6, 0], sizes = [16, 1, 32], strides = [1, 1, 1]} : vector<16x16x32xf32> to vector<16x1x32xf32>
    %75 = vector.extract_strided_slice %38 {offsets = [6, 0, 0], sizes = [1, 16, 32], strides = [1, 1, 1]} : vector<16x16x32xf32> to vector<1x16x32xf32>
    %76 = vector.broadcast %74 : vector<16x1x32xf32> to vector<16x16x32xf32>
    %77 = vector.broadcast %75 : vector<1x16x32xf32> to vector<16x16x32xf32>
    %78 = arith.mulf %76, %77 : vector<16x16x32xf32>
    %79 = arith.addf %73, %78 : vector<16x16x32xf32>
    %80 = vector.extract_strided_slice %36 {offsets = [0, 7, 0], sizes = [16, 1, 32], strides = [1, 1, 1]} : vector<16x16x32xf32> to vector<16x1x32xf32>
    %81 = vector.extract_strided_slice %38 {offsets = [7, 0, 0], sizes = [1, 16, 32], strides = [1, 1, 1]} : vector<16x16x32xf32> to vector<1x16x32xf32>
    %82 = vector.broadcast %80 : vector<16x1x32xf32> to vector<16x16x32xf32>
    %83 = vector.broadcast %81 : vector<1x16x32xf32> to vector<16x16x32xf32>
    %84 = arith.mulf %82, %83 : vector<16x16x32xf32>
    %85 = arith.addf %79, %84 : vector<16x16x32xf32>
    %86 = vector.extract_strided_slice %36 {offsets = [0, 8, 0], sizes = [16, 1, 32], strides = [1, 1, 1]} : vector<16x16x32xf32> to vector<16x1x32xf32>
    %87 = vector.extract_strided_slice %38 {offsets = [8, 0, 0], sizes = [1, 16, 32], strides = [1, 1, 1]} : vector<16x16x32xf32> to vector<1x16x32xf32>
    %88 = vector.broadcast %86 : vector<16x1x32xf32> to vector<16x16x32xf32>
    %89 = vector.broadcast %87 : vector<1x16x32xf32> to vector<16x16x32xf32>
    %90 = arith.mulf %88, %89 : vector<16x16x32xf32>
    %91 = arith.addf %85, %90 : vector<16x16x32xf32>
    %92 = vector.extract_strided_slice %36 {offsets = [0, 9, 0], sizes = [16, 1, 32], strides = [1, 1, 1]} : vector<16x16x32xf32> to vector<16x1x32xf32>
    %93 = vector.extract_strided_slice %38 {offsets = [9, 0, 0], sizes = [1, 16, 32], strides = [1, 1, 1]} : vector<16x16x32xf32> to vector<1x16x32xf32>
    %94 = vector.broadcast %92 : vector<16x1x32xf32> to vector<16x16x32xf32>
    %95 = vector.broadcast %93 : vector<1x16x32xf32> to vector<16x16x32xf32>
    %96 = arith.mulf %94, %95 : vector<16x16x32xf32>
    %97 = arith.addf %91, %96 : vector<16x16x32xf32>
    %98 = vector.extract_strided_slice %36 {offsets = [0, 10, 0], sizes = [16, 1, 32], strides = [1, 1, 1]} : vector<16x16x32xf32> to vector<16x1x32xf32>
    %99 = vector.extract_strided_slice %38 {offsets = [10, 0, 0], sizes = [1, 16, 32], strides = [1, 1, 1]} : vector<16x16x32xf32> to vector<1x16x32xf32>
    %100 = vector.broadcast %98 : vector<16x1x32xf32> to vector<16x16x32xf32>
    %101 = vector.broadcast %99 : vector<1x16x32xf32> to vector<16x16x32xf32>
    %102 = arith.mulf %100, %101 : vector<16x16x32xf32>
    %103 = arith.addf %97, %102 : vector<16x16x32xf32>
    %104 = vector.extract_strided_slice %36 {offsets = [0, 11, 0], sizes = [16, 1, 32], strides = [1, 1, 1]} : vector<16x16x32xf32> to vector<16x1x32xf32>
    %105 = vector.extract_strided_slice %38 {offsets = [11, 0, 0], sizes = [1, 16, 32], strides = [1, 1, 1]} : vector<16x16x32xf32> to vector<1x16x32xf32>
    %106 = vector.broadcast %104 : vector<16x1x32xf32> to vector<16x16x32xf32>
    %107 = vector.broadcast %105 : vector<1x16x32xf32> to vector<16x16x32xf32>
    %108 = arith.mulf %106, %107 : vector<16x16x32xf32>
    %109 = arith.addf %103, %108 : vector<16x16x32xf32>
    %110 = vector.extract_strided_slice %36 {offsets = [0, 12, 0], sizes = [16, 1, 32], strides = [1, 1, 1]} : vector<16x16x32xf32> to vector<16x1x32xf32>
    %111 = vector.extract_strided_slice %38 {offsets = [12, 0, 0], sizes = [1, 16, 32], strides = [1, 1, 1]} : vector<16x16x32xf32> to vector<1x16x32xf32>
    %112 = vector.broadcast %110 : vector<16x1x32xf32> to vector<16x16x32xf32>
    %113 = vector.broadcast %111 : vector<1x16x32xf32> to vector<16x16x32xf32>
    %114 = arith.mulf %112, %113 : vector<16x16x32xf32>
    %115 = arith.addf %109, %114 : vector<16x16x32xf32>
    %116 = vector.extract_strided_slice %36 {offsets = [0, 13, 0], sizes = [16, 1, 32], strides = [1, 1, 1]} : vector<16x16x32xf32> to vector<16x1x32xf32>
    %117 = vector.extract_strided_slice %38 {offsets = [13, 0, 0], sizes = [1, 16, 32], strides = [1, 1, 1]} : vector<16x16x32xf32> to vector<1x16x32xf32>
    %118 = vector.broadcast %116 : vector<16x1x32xf32> to vector<16x16x32xf32>
    %119 = vector.broadcast %117 : vector<1x16x32xf32> to vector<16x16x32xf32>
    %120 = arith.mulf %118, %119 : vector<16x16x32xf32>
    %121 = arith.addf %115, %120 : vector<16x16x32xf32>
    %122 = vector.extract_strided_slice %36 {offsets = [0, 14, 0], sizes = [16, 1, 32], strides = [1, 1, 1]} : vector<16x16x32xf32> to vector<16x1x32xf32>
    %123 = vector.extract_strided_slice %38 {offsets = [14, 0, 0], sizes = [1, 16, 32], strides = [1, 1, 1]} : vector<16x16x32xf32> to vector<1x16x32xf32>
    %124 = vector.broadcast %122 : vector<16x1x32xf32> to vector<16x16x32xf32>
    %125 = vector.broadcast %123 : vector<1x16x32xf32> to vector<16x16x32xf32>
    %126 = arith.mulf %124, %125 : vector<16x16x32xf32>
    %127 = arith.addf %121, %126 : vector<16x16x32xf32>
    %128 = vector.extract_strided_slice %36 {offsets = [0, 15, 0], sizes = [16, 1, 32], strides = [1, 1, 1]} : vector<16x16x32xf32> to vector<16x1x32xf32>
    %129 = vector.extract_strided_slice %38 {offsets = [15, 0, 0], sizes = [1, 16, 32], strides = [1, 1, 1]} : vector<16x16x32xf32> to vector<1x16x32xf32>
    %130 = vector.broadcast %128 : vector<16x1x32xf32> to vector<16x16x32xf32>
    %131 = vector.broadcast %129 : vector<1x16x32xf32> to vector<16x16x32xf32>
    %132 = arith.mulf %130, %131 : vector<16x16x32xf32>
    %133 = arith.addf %127, %132 : vector<16x16x32xf32>
    %134 = vector.shape_cast %133 : vector<16x16x32xf32> to vector<256x32xf32>
    %cst_27 = arith.constant 2.500000e-01 : f32
    %135 = vector.broadcast %cst_27 : f32 to vector<256x32xf32>
    %136 = arith.mulf %134, %135 : vector<256x32xf32>
    %cst_28 = arith.constant dense<0.000000e+00> : vector<256x32xf32>
    %137 = tpu.matmul %136, %21, %cst_28 {dimension_numbers = #tpu.dot_dimension_numbers<[1], [0], [0], [1], [0, 0, 1, 1], [], []>} : vector<256x32xf32>, vector<32x32xf32>, vector<256x32xf32> -> vector<256x32xf32>
    %cst_29 = arith.constant dense<0.000000e+00> : vector<256x32xf32>
    %138 = tpu.matmul %16, %22, %cst_29 {dimension_numbers = #tpu.dot_dimension_numbers<[1], [0], [0], [1], [0, 0, 1, 1], [], []>} : vector<256x32xf32>, vector<32x32xf32>, vector<256x32xf32> -> vector<256x32xf32>
    %139 = arith.addf %137, %138 : vector<256x32xf32>
    %140 = vector.broadcast %23 : vector<1x32xf32> to vector<256x32xf32>
    %141 = arith.addf %139, %140 : vector<256x32xf32>
    %c0_30 = arith.constant 0 : index
    %c0_31 = arith.constant 0 : index
    %142 = vector.load %arg13[%c0_30, %c0_31] : memref<32x64xf32, #tpu.memory_space<vmem>>, vector<32x64xf32>
    %c0_32 = arith.constant 0 : index
    %c0_33 = arith.constant 0 : index
    %143 = vector.load %arg14[%c0_32, %c0_33] : memref<1x64xf32, #tpu.memory_space<vmem>>, vector<1x64xf32>
    %c0_34 = arith.constant 0 : index
    %c0_35 = arith.constant 0 : index
    %144 = vector.load %arg15[%c0_34, %c0_35] : memref<64x64xf32, #tpu.memory_space<vmem>>, vector<64x64xf32>
    %c0_36 = arith.constant 0 : index
    %c0_37 = arith.constant 0 : index
    %145 = vector.load %arg16[%c0_36, %c0_37] : memref<1x64xf32, #tpu.memory_space<vmem>>, vector<1x64xf32>
    %c0_38 = arith.constant 0 : index
    %c0_39 = arith.constant 0 : index
    %146 = vector.load %arg17[%c0_38, %c0_39] : memref<32x32xf32, #tpu.memory_space<vmem>>, vector<32x32xf32>
    %c0_40 = arith.constant 0 : index
    %c0_41 = arith.constant 0 : index
    %147 = vector.load %arg18[%c0_40, %c0_41] : memref<32x32xf32, #tpu.memory_space<vmem>>, vector<32x32xf32>
    %c0_42 = arith.constant 0 : index
    %c0_43 = arith.constant 0 : index
    %148 = vector.load %arg19[%c0_42, %c0_43] : memref<1x32xf32, #tpu.memory_space<vmem>>, vector<1x32xf32>
    %cst_44 = arith.constant dense<0.000000e+00> : vector<256x64xf32>
    %149 = tpu.matmul %141, %142, %cst_44 {dimension_numbers = #tpu.dot_dimension_numbers<[1], [0], [0], [1], [0, 0, 1, 1], [], []>} : vector<256x32xf32>, vector<32x64xf32>, vector<256x64xf32> -> vector<256x64xf32>
    %150 = vector.broadcast %143 : vector<1x64xf32> to vector<256x64xf32>
    %151 = arith.addf %149, %150 : vector<256x64xf32>
    %cst_45 = arith.constant 0.000000e+00 : f32
    %152 = vector.broadcast %cst_45 : f32 to vector<256x64xf32>
    %153 = arith.cmpf oge, %151, %152 : vector<256x64xf32>
    %cst_46 = arith.constant 0.00999999977 : f32
    %154 = vector.broadcast %cst_46 : f32 to vector<256x64xf32>
    %155 = arith.mulf %154, %151 : vector<256x64xf32>
    %156 = arith.select %153, %151, %155 : vector<256x64xi1>, vector<256x64xf32>
    %cst_47 = arith.constant dense<0.000000e+00> : vector<256x64xf32>
    %157 = tpu.matmul %156, %144, %cst_47 {dimension_numbers = #tpu.dot_dimension_numbers<[1], [0], [0], [1], [0, 0, 1, 1], [], []>} : vector<256x64xf32>, vector<64x64xf32>, vector<256x64xf32> -> vector<256x64xf32>
    %158 = vector.broadcast %145 : vector<1x64xf32> to vector<256x64xf32>
    %159 = arith.addf %157, %158 : vector<256x64xf32>
    %160 = vector.extract_strided_slice %159 {offsets = [0, 0], sizes = [256, 32], strides = [1, 1]} : vector<256x64xf32> to vector<256x32xf32>
    %161 = vector.shape_cast %160 : vector<256x32xf32> to vector<16x16x32xf32>
    %162 = vector.extract_strided_slice %159 {offsets = [0, 32], sizes = [256, 32], strides = [1, 1]} : vector<256x64xf32> to vector<256x32xf32>
    %163 = vector.shape_cast %162 : vector<256x32xf32> to vector<16x16x32xf32>
    %164 = vector.extract_strided_slice %161 {offsets = [0, 0, 0], sizes = [16, 1, 32], strides = [1, 1, 1]} : vector<16x16x32xf32> to vector<16x1x32xf32>
    %165 = vector.extract_strided_slice %163 {offsets = [0, 0, 0], sizes = [1, 16, 32], strides = [1, 1, 1]} : vector<16x16x32xf32> to vector<1x16x32xf32>
    %166 = vector.broadcast %164 : vector<16x1x32xf32> to vector<16x16x32xf32>
    %167 = vector.broadcast %165 : vector<1x16x32xf32> to vector<16x16x32xf32>
    %168 = arith.mulf %166, %167 : vector<16x16x32xf32>
    %169 = vector.extract_strided_slice %161 {offsets = [0, 1, 0], sizes = [16, 1, 32], strides = [1, 1, 1]} : vector<16x16x32xf32> to vector<16x1x32xf32>
    %170 = vector.extract_strided_slice %163 {offsets = [1, 0, 0], sizes = [1, 16, 32], strides = [1, 1, 1]} : vector<16x16x32xf32> to vector<1x16x32xf32>
    %171 = vector.broadcast %169 : vector<16x1x32xf32> to vector<16x16x32xf32>
    %172 = vector.broadcast %170 : vector<1x16x32xf32> to vector<16x16x32xf32>
    %173 = arith.mulf %171, %172 : vector<16x16x32xf32>
    %174 = arith.addf %168, %173 : vector<16x16x32xf32>
    %175 = vector.extract_strided_slice %161 {offsets = [0, 2, 0], sizes = [16, 1, 32], strides = [1, 1, 1]} : vector<16x16x32xf32> to vector<16x1x32xf32>
    %176 = vector.extract_strided_slice %163 {offsets = [2, 0, 0], sizes = [1, 16, 32], strides = [1, 1, 1]} : vector<16x16x32xf32> to vector<1x16x32xf32>
    %177 = vector.broadcast %175 : vector<16x1x32xf32> to vector<16x16x32xf32>
    %178 = vector.broadcast %176 : vector<1x16x32xf32> to vector<16x16x32xf32>
    %179 = arith.mulf %177, %178 : vector<16x16x32xf32>
    %180 = arith.addf %174, %179 : vector<16x16x32xf32>
    %181 = vector.extract_strided_slice %161 {offsets = [0, 3, 0], sizes = [16, 1, 32], strides = [1, 1, 1]} : vector<16x16x32xf32> to vector<16x1x32xf32>
    %182 = vector.extract_strided_slice %163 {offsets = [3, 0, 0], sizes = [1, 16, 32], strides = [1, 1, 1]} : vector<16x16x32xf32> to vector<1x16x32xf32>
    %183 = vector.broadcast %181 : vector<16x1x32xf32> to vector<16x16x32xf32>
    %184 = vector.broadcast %182 : vector<1x16x32xf32> to vector<16x16x32xf32>
    %185 = arith.mulf %183, %184 : vector<16x16x32xf32>
    %186 = arith.addf %180, %185 : vector<16x16x32xf32>
    %187 = vector.extract_strided_slice %161 {offsets = [0, 4, 0], sizes = [16, 1, 32], strides = [1, 1, 1]} : vector<16x16x32xf32> to vector<16x1x32xf32>
    %188 = vector.extract_strided_slice %163 {offsets = [4, 0, 0], sizes = [1, 16, 32], strides = [1, 1, 1]} : vector<16x16x32xf32> to vector<1x16x32xf32>
    %189 = vector.broadcast %187 : vector<16x1x32xf32> to vector<16x16x32xf32>
    %190 = vector.broadcast %188 : vector<1x16x32xf32> to vector<16x16x32xf32>
    %191 = arith.mulf %189, %190 : vector<16x16x32xf32>
    %192 = arith.addf %186, %191 : vector<16x16x32xf32>
    %193 = vector.extract_strided_slice %161 {offsets = [0, 5, 0], sizes = [16, 1, 32], strides = [1, 1, 1]} : vector<16x16x32xf32> to vector<16x1x32xf32>
    %194 = vector.extract_strided_slice %163 {offsets = [5, 0, 0], sizes = [1, 16, 32], strides = [1, 1, 1]} : vector<16x16x32xf32> to vector<1x16x32xf32>
    %195 = vector.broadcast %193 : vector<16x1x32xf32> to vector<16x16x32xf32>
    %196 = vector.broadcast %194 : vector<1x16x32xf32> to vector<16x16x32xf32>
    %197 = arith.mulf %195, %196 : vector<16x16x32xf32>
    %198 = arith.addf %192, %197 : vector<16x16x32xf32>
    %199 = vector.extract_strided_slice %161 {offsets = [0, 6, 0], sizes = [16, 1, 32], strides = [1, 1, 1]} : vector<16x16x32xf32> to vector<16x1x32xf32>
    %200 = vector.extract_strided_slice %163 {offsets = [6, 0, 0], sizes = [1, 16, 32], strides = [1, 1, 1]} : vector<16x16x32xf32> to vector<1x16x32xf32>
    %201 = vector.broadcast %199 : vector<16x1x32xf32> to vector<16x16x32xf32>
    %202 = vector.broadcast %200 : vector<1x16x32xf32> to vector<16x16x32xf32>
    %203 = arith.mulf %201, %202 : vector<16x16x32xf32>
    %204 = arith.addf %198, %203 : vector<16x16x32xf32>
    %205 = vector.extract_strided_slice %161 {offsets = [0, 7, 0], sizes = [16, 1, 32], strides = [1, 1, 1]} : vector<16x16x32xf32> to vector<16x1x32xf32>
    %206 = vector.extract_strided_slice %163 {offsets = [7, 0, 0], sizes = [1, 16, 32], strides = [1, 1, 1]} : vector<16x16x32xf32> to vector<1x16x32xf32>
    %207 = vector.broadcast %205 : vector<16x1x32xf32> to vector<16x16x32xf32>
    %208 = vector.broadcast %206 : vector<1x16x32xf32> to vector<16x16x32xf32>
    %209 = arith.mulf %207, %208 : vector<16x16x32xf32>
    %210 = arith.addf %204, %209 : vector<16x16x32xf32>
    %211 = vector.extract_strided_slice %161 {offsets = [0, 8, 0], sizes = [16, 1, 32], strides = [1, 1, 1]} : vector<16x16x32xf32> to vector<16x1x32xf32>
    %212 = vector.extract_strided_slice %163 {offsets = [8, 0, 0], sizes = [1, 16, 32], strides = [1, 1, 1]} : vector<16x16x32xf32> to vector<1x16x32xf32>
    %213 = vector.broadcast %211 : vector<16x1x32xf32> to vector<16x16x32xf32>
    %214 = vector.broadcast %212 : vector<1x16x32xf32> to vector<16x16x32xf32>
    %215 = arith.mulf %213, %214 : vector<16x16x32xf32>
    %216 = arith.addf %210, %215 : vector<16x16x32xf32>
    %217 = vector.extract_strided_slice %161 {offsets = [0, 9, 0], sizes = [16, 1, 32], strides = [1, 1, 1]} : vector<16x16x32xf32> to vector<16x1x32xf32>
    %218 = vector.extract_strided_slice %163 {offsets = [9, 0, 0], sizes = [1, 16, 32], strides = [1, 1, 1]} : vector<16x16x32xf32> to vector<1x16x32xf32>
    %219 = vector.broadcast %217 : vector<16x1x32xf32> to vector<16x16x32xf32>
    %220 = vector.broadcast %218 : vector<1x16x32xf32> to vector<16x16x32xf32>
    %221 = arith.mulf %219, %220 : vector<16x16x32xf32>
    %222 = arith.addf %216, %221 : vector<16x16x32xf32>
    %223 = vector.extract_strided_slice %161 {offsets = [0, 10, 0], sizes = [16, 1, 32], strides = [1, 1, 1]} : vector<16x16x32xf32> to vector<16x1x32xf32>
    %224 = vector.extract_strided_slice %163 {offsets = [10, 0, 0], sizes = [1, 16, 32], strides = [1, 1, 1]} : vector<16x16x32xf32> to vector<1x16x32xf32>
    %225 = vector.broadcast %223 : vector<16x1x32xf32> to vector<16x16x32xf32>
    %226 = vector.broadcast %224 : vector<1x16x32xf32> to vector<16x16x32xf32>
    %227 = arith.mulf %225, %226 : vector<16x16x32xf32>
    %228 = arith.addf %222, %227 : vector<16x16x32xf32>
    %229 = vector.extract_strided_slice %161 {offsets = [0, 11, 0], sizes = [16, 1, 32], strides = [1, 1, 1]} : vector<16x16x32xf32> to vector<16x1x32xf32>
    %230 = vector.extract_strided_slice %163 {offsets = [11, 0, 0], sizes = [1, 16, 32], strides = [1, 1, 1]} : vector<16x16x32xf32> to vector<1x16x32xf32>
    %231 = vector.broadcast %229 : vector<16x1x32xf32> to vector<16x16x32xf32>
    %232 = vector.broadcast %230 : vector<1x16x32xf32> to vector<16x16x32xf32>
    %233 = arith.mulf %231, %232 : vector<16x16x32xf32>
    %234 = arith.addf %228, %233 : vector<16x16x32xf32>
    %235 = vector.extract_strided_slice %161 {offsets = [0, 12, 0], sizes = [16, 1, 32], strides = [1, 1, 1]} : vector<16x16x32xf32> to vector<16x1x32xf32>
    %236 = vector.extract_strided_slice %163 {offsets = [12, 0, 0], sizes = [1, 16, 32], strides = [1, 1, 1]} : vector<16x16x32xf32> to vector<1x16x32xf32>
    %237 = vector.broadcast %235 : vector<16x1x32xf32> to vector<16x16x32xf32>
    %238 = vector.broadcast %236 : vector<1x16x32xf32> to vector<16x16x32xf32>
    %239 = arith.mulf %237, %238 : vector<16x16x32xf32>
    %240 = arith.addf %234, %239 : vector<16x16x32xf32>
    %241 = vector.extract_strided_slice %161 {offsets = [0, 13, 0], sizes = [16, 1, 32], strides = [1, 1, 1]} : vector<16x16x32xf32> to vector<16x1x32xf32>
    %242 = vector.extract_strided_slice %163 {offsets = [13, 0, 0], sizes = [1, 16, 32], strides = [1, 1, 1]} : vector<16x16x32xf32> to vector<1x16x32xf32>
    %243 = vector.broadcast %241 : vector<16x1x32xf32> to vector<16x16x32xf32>
    %244 = vector.broadcast %242 : vector<1x16x32xf32> to vector<16x16x32xf32>
    %245 = arith.mulf %243, %244 : vector<16x16x32xf32>
    %246 = arith.addf %240, %245 : vector<16x16x32xf32>
    %247 = vector.extract_strided_slice %161 {offsets = [0, 14, 0], sizes = [16, 1, 32], strides = [1, 1, 1]} : vector<16x16x32xf32> to vector<16x1x32xf32>
    %248 = vector.extract_strided_slice %163 {offsets = [14, 0, 0], sizes = [1, 16, 32], strides = [1, 1, 1]} : vector<16x16x32xf32> to vector<1x16x32xf32>
    %249 = vector.broadcast %247 : vector<16x1x32xf32> to vector<16x16x32xf32>
    %250 = vector.broadcast %248 : vector<1x16x32xf32> to vector<16x16x32xf32>
    %251 = arith.mulf %249, %250 : vector<16x16x32xf32>
    %252 = arith.addf %246, %251 : vector<16x16x32xf32>
    %253 = vector.extract_strided_slice %161 {offsets = [0, 15, 0], sizes = [16, 1, 32], strides = [1, 1, 1]} : vector<16x16x32xf32> to vector<16x1x32xf32>
    %254 = vector.extract_strided_slice %163 {offsets = [15, 0, 0], sizes = [1, 16, 32], strides = [1, 1, 1]} : vector<16x16x32xf32> to vector<1x16x32xf32>
    %255 = vector.broadcast %253 : vector<16x1x32xf32> to vector<16x16x32xf32>
    %256 = vector.broadcast %254 : vector<1x16x32xf32> to vector<16x16x32xf32>
    %257 = arith.mulf %255, %256 : vector<16x16x32xf32>
    %258 = arith.addf %252, %257 : vector<16x16x32xf32>
    %259 = vector.shape_cast %258 : vector<16x16x32xf32> to vector<256x32xf32>
    %cst_48 = arith.constant 2.500000e-01 : f32
    %260 = vector.broadcast %cst_48 : f32 to vector<256x32xf32>
    %261 = arith.mulf %259, %260 : vector<256x32xf32>
    %cst_49 = arith.constant dense<0.000000e+00> : vector<256x32xf32>
    %262 = tpu.matmul %261, %146, %cst_49 {dimension_numbers = #tpu.dot_dimension_numbers<[1], [0], [0], [1], [0, 0, 1, 1], [], []>} : vector<256x32xf32>, vector<32x32xf32>, vector<256x32xf32> -> vector<256x32xf32>
    %cst_50 = arith.constant dense<0.000000e+00> : vector<256x32xf32>
    %263 = tpu.matmul %141, %147, %cst_50 {dimension_numbers = #tpu.dot_dimension_numbers<[1], [0], [0], [1], [0, 0, 1, 1], [], []>} : vector<256x32xf32>, vector<32x32xf32>, vector<256x32xf32> -> vector<256x32xf32>
    %264 = arith.addf %262, %263 : vector<256x32xf32>
    %265 = vector.broadcast %148 : vector<1x32xf32> to vector<256x32xf32>
    %266 = arith.addf %264, %265 : vector<256x32xf32>
    %c0_51 = arith.constant 0 : index
    %c0_52 = arith.constant 0 : index
    %267 = vector.load %arg20[%c0_51, %c0_52] : memref<2x32xf32, #tpu.memory_space<vmem>>, vector<2x32xf32>
    %c0_53 = arith.constant 0 : index
    %c0_54 = arith.constant 0 : index
    %268 = vector.load %arg21[%c0_53, %c0_54] : memref<32x32xf32, #tpu.memory_space<vmem>>, vector<32x32xf32>
    %c0_55 = arith.constant 0 : index
    %c0_56 = arith.constant 0 : index
    %269 = vector.load %arg22[%c0_55, %c0_56] : memref<32x32xf32, #tpu.memory_space<vmem>>, vector<32x32xf32>
    %c0_57 = arith.constant 0 : index
    %c0_58 = arith.constant 0 : index
    %270 = vector.load %arg23[%c0_57, %c0_58] : memref<1x32xf32, #tpu.memory_space<vmem>>, vector<1x32xf32>
    %271 = vector.extract_strided_slice %267 {offsets = [0, 0], sizes = [1, 32], strides = [1, 1]} : vector<2x32xf32> to vector<1x32xf32>
    %272 = vector.broadcast %1 : vector<256x1xf32> to vector<256x32xf32>
    %273 = vector.broadcast %271 : vector<1x32xf32> to vector<256x32xf32>
    %274 = arith.mulf %272, %273 : vector<256x32xf32>
    %275 = vector.extract_strided_slice %267 {offsets = [1, 0], sizes = [1, 32], strides = [1, 1]} : vector<2x32xf32> to vector<1x32xf32>
    %276 = vector.broadcast %2 : vector<256x1xf32> to vector<256x32xf32>
    %277 = vector.broadcast %275 : vector<1x32xf32> to vector<256x32xf32>
    %278 = arith.mulf %276, %277 : vector<256x32xf32>
    %279 = arith.addf %274, %278 : vector<256x32xf32>
    %280 = vector.broadcast %270 : vector<1x32xf32> to vector<256x32xf32>
    %281 = arith.addf %279, %280 : vector<256x32xf32>
    %cst_59 = arith.constant dense<0.000000e+00> : vector<256x32xf32>
    %282 = tpu.matmul %141, %268, %cst_59 {dimension_numbers = #tpu.dot_dimension_numbers<[1], [0], [0], [1], [0, 0, 1, 1], [], []>} : vector<256x32xf32>, vector<32x32xf32>, vector<256x32xf32> -> vector<256x32xf32>
    %283 = arith.addf %281, %282 : vector<256x32xf32>
    %cst_60 = arith.constant dense<0.000000e+00> : vector<256x32xf32>
    %284 = tpu.matmul %266, %269, %cst_60 {dimension_numbers = #tpu.dot_dimension_numbers<[1], [0], [0], [1], [0, 0, 1, 1], [], []>} : vector<256x32xf32>, vector<32x32xf32>, vector<256x32xf32> -> vector<256x32xf32>
    %285 = arith.addf %283, %284 : vector<256x32xf32>
    %c0_61 = arith.constant 0 : index
    %c0_62 = arith.constant 0 : index
    %286 = vector.load %arg24[%c0_61, %c0_62] : memref<32x32xf32, #tpu.memory_space<vmem>>, vector<32x32xf32>
    %c0_63 = arith.constant 0 : index
    %c0_64 = arith.constant 0 : index
    %287 = vector.load %arg25[%c0_63, %c0_64] : memref<1x32xf32, #tpu.memory_space<vmem>>, vector<1x32xf32>
    %c0_65 = arith.constant 0 : index
    %c0_66 = arith.constant 0 : index
    %288 = vector.load %arg26[%c0_65, %c0_66] : memref<32x32xf32, #tpu.memory_space<vmem>>, vector<32x32xf32>
    %c0_67 = arith.constant 0 : index
    %c0_68 = arith.constant 0 : index
    %289 = vector.load %arg27[%c0_67, %c0_68] : memref<32x32xf32, #tpu.memory_space<vmem>>, vector<32x32xf32>
    %c0_69 = arith.constant 0 : index
    %c0_70 = arith.constant 0 : index
    %290 = vector.load %arg28[%c0_69, %c0_70] : memref<32x32xf32, #tpu.memory_space<vmem>>, vector<32x32xf32>
    %c0_71 = arith.constant 0 : index
    %c0_72 = arith.constant 0 : index
    %291 = vector.load %arg29[%c0_71, %c0_72] : memref<1x32xf32, #tpu.memory_space<vmem>>, vector<1x32xf32>
    %c0_73 = arith.constant 0 : index
    %c0_74 = arith.constant 0 : index
    %292 = vector.load %arg30[%c0_73, %c0_74] : memref<32x1xf32, #tpu.memory_space<vmem>>, vector<32x1xf32>
    %c0_75 = arith.constant 0 : index
    %c0_76 = arith.constant 0 : index
    %293 = vector.load %arg31[%c0_75, %c0_76] : memref<1x1xf32, #tpu.memory_space<vmem>>, vector<1x1xf32>
    %294 = vector.broadcast %3 : vector<256x1xf32> to vector<256x32xf32>
    %295 = arith.mulf %285, %294 : vector<256x32xf32>
    %cst_77 = arith.constant dense<0.000000e+00> : vector<32xf32>
    %296 = vector.multi_reduction <add>, %295, %cst_77 [0] : vector<256x32xf32> to vector<32xf32>
    %297 = vector.shape_cast %296 : vector<32xf32> to vector<1x32xf32>
    %cst_78 = arith.constant dense<0.000000e+00> : vector<32xf32>
    %298 = vector.multi_reduction <add>, %285, %cst_78 [0] : vector<256x32xf32> to vector<32xf32>
    %299 = vector.shape_cast %298 : vector<32xf32> to vector<1x32xf32>
    %cst_79 = arith.constant 6.250000e-02 : f32
    %300 = vector.broadcast %cst_79 : f32 to vector<1x32xf32>
    %301 = arith.mulf %297, %300 : vector<1x32xf32>
    %cst_80 = arith.constant dense<0.000000e+00> : vector<1x32xf32>
    %302 = tpu.matmul %301, %286, %cst_80 {dimension_numbers = #tpu.dot_dimension_numbers<[1], [0], [0], [1], [0, 0, 1, 1], [], []>} : vector<1x32xf32>, vector<32x32xf32>, vector<1x32xf32> -> vector<1x32xf32>
    %303 = arith.addf %302, %287 : vector<1x32xf32>
    %304 = arith.subf %299, %297 : vector<1x32xf32>
    %cst_81 = arith.constant 0.00416666688 : f32
    %305 = vector.broadcast %cst_81 : f32 to vector<1x32xf32>
    %306 = arith.mulf %304, %305 : vector<1x32xf32>
    %cst_82 = arith.constant dense<0.000000e+00> : vector<1x32xf32>
    %307 = tpu.matmul %306, %288, %cst_82 {dimension_numbers = #tpu.dot_dimension_numbers<[1], [0], [0], [1], [0, 0, 1, 1], [], []>} : vector<1x32xf32>, vector<32x32xf32>, vector<1x32xf32> -> vector<1x32xf32>
    %308 = arith.addf %303, %307 : vector<1x32xf32>
    %cst_83 = arith.constant 0.000000e+00 : f32
    %309 = vector.broadcast %cst_83 : f32 to vector<1x32xf32>
    %310 = arith.cmpf oge, %308, %309 : vector<1x32xf32>
    %cst_84 = arith.constant 0.00999999977 : f32
    %311 = vector.broadcast %cst_84 : f32 to vector<1x32xf32>
    %312 = arith.mulf %311, %308 : vector<1x32xf32>
    %313 = arith.select %310, %308, %312 : vector<1x32xi1>, vector<1x32xf32>
    %cst_85 = arith.constant dense<0.000000e+00> : vector<1x32xf32>
    %314 = tpu.matmul %313, %289, %cst_85 {dimension_numbers = #tpu.dot_dimension_numbers<[1], [0], [0], [1], [0, 0, 1, 1], [], []>} : vector<1x32xf32>, vector<32x32xf32>, vector<1x32xf32> -> vector<1x32xf32>
    %315 = arith.addf %308, %314 : vector<1x32xf32>
    %cst_86 = arith.constant dense<0.000000e+00> : vector<1x32xf32>
    %316 = tpu.matmul %315, %290, %cst_86 {dimension_numbers = #tpu.dot_dimension_numbers<[1], [0], [0], [1], [0, 0, 1, 1], [], []>} : vector<1x32xf32>, vector<32x32xf32>, vector<1x32xf32> -> vector<1x32xf32>
    %317 = arith.addf %316, %291 : vector<1x32xf32>
    %cst_87 = arith.constant 0.000000e+00 : f32
    %318 = vector.broadcast %cst_87 : f32 to vector<1x32xf32>
    %319 = arith.cmpf oge, %317, %318 : vector<1x32xf32>
    %cst_88 = arith.constant 0.00999999977 : f32
    %320 = vector.broadcast %cst_88 : f32 to vector<1x32xf32>
    %321 = arith.mulf %320, %317 : vector<1x32xf32>
    %322 = arith.select %319, %317, %321 : vector<1x32xi1>, vector<1x32xf32>
    %323 = arith.addf %315, %322 : vector<1x32xf32>
    %cst_89 = arith.constant dense<0.000000e+00> : vector<1x1xf32>
    %324 = tpu.matmul %323, %292, %cst_89 {dimension_numbers = #tpu.dot_dimension_numbers<[1], [0], [0], [1], [0, 0, 1, 1], [], []>} : vector<1x32xf32>, vector<32x1xf32>, vector<1x1xf32> -> vector<1x1xf32>
    %325 = arith.addf %324, %293 : vector<1x1xf32>
    %326 = vector.shape_cast %325 : vector<1x1xf32> to vector<1x1x1xf32>
    %c0_90 = arith.constant 0 : index
    %c0_91 = arith.constant 0 : index
    %c0_92 = arith.constant 0 : index
    %327 = vector.load %arg32[%c0_90, %c0_91, %c0_92] : memref<1x1x1xf32, #tpu.memory_space<vmem>>, vector<1x1x1xf32>
    tpu.vector_store %arg32[%c0_90, %c0_91, %c0_92], %326 {strides = array<i32>} : memref<1x1x1xf32, #tpu.memory_space<vmem>>, vector<1x1x1xf32>,
    return
  }
  func.func @transform_0(%arg0: i32) -> (i32, i32, i32) {
    %c0_i32 = arith.constant 0 : i32
    %c0_i32_0 = arith.constant 0 : i32
    %c0_i32_1 = arith.constant 0 : i32
    return %arg0, %c0_i32, %c0_i32_0 : i32, i32, i32
  }
  func.func @transform_1(%arg0: i32) -> (i32, i32) {
    %c0_i32 = arith.constant 0 : i32
    %c0_i32_0 = arith.constant 0 : i32
    %c0_i32_1 = arith.constant 0 : i32
    return %c0_i32, %c0_i32_0 : i32, i32
  }
  func.func @transform_2(%arg0: i32) -> (i32, i32) {
    %c0_i32 = arith.constant 0 : i32
    %c0_i32_0 = arith.constant 0 : i32
    %c0_i32_1 = arith.constant 0 : i32
    return %c0_i32, %c0_i32_0 : i32, i32
  }
  func.func @transform_3(%arg0: i32) -> (i32, i32) {
    %c0_i32 = arith.constant 0 : i32
    %c0_i32_0 = arith.constant 0 : i32
    %c0_i32_1 = arith.constant 0 : i32
    return %c0_i32, %c0_i32_0 : i32, i32
  }
  func.func @transform_4(%arg0: i32) -> (i32, i32) {
    %c0_i32 = arith.constant 0 : i32
    %c0_i32_0 = arith.constant 0 : i32
    %c0_i32_1 = arith.constant 0 : i32
    return %c0_i32, %c0_i32_0 : i32, i32
  }
  func.func @transform_5(%arg0: i32) -> (i32, i32) {
    %c0_i32 = arith.constant 0 : i32
    %c0_i32_0 = arith.constant 0 : i32
    %c0_i32_1 = arith.constant 0 : i32
    return %c0_i32, %c0_i32_0 : i32, i32
  }
  func.func @transform_6(%arg0: i32) -> (i32, i32) {
    %c0_i32 = arith.constant 0 : i32
    %c0_i32_0 = arith.constant 0 : i32
    %c0_i32_1 = arith.constant 0 : i32
    return %c0_i32, %c0_i32_0 : i32, i32
  }
  func.func @transform_7(%arg0: i32) -> (i32, i32) {
    %c0_i32 = arith.constant 0 : i32
    %c0_i32_0 = arith.constant 0 : i32
    %c0_i32_1 = arith.constant 0 : i32
    return %c0_i32, %c0_i32_0 : i32, i32
  }
  func.func @transform_8(%arg0: i32) -> (i32, i32) {
    %c0_i32 = arith.constant 0 : i32
    %c0_i32_0 = arith.constant 0 : i32
    %c0_i32_1 = arith.constant 0 : i32
    return %c0_i32, %c0_i32_0 : i32, i32
  }
  func.func @transform_9(%arg0: i32) -> (i32, i32) {
    %c0_i32 = arith.constant 0 : i32
    %c0_i32_0 = arith.constant 0 : i32
    %c0_i32_1 = arith.constant 0 : i32
    return %c0_i32, %c0_i32_0 : i32, i32
  }
  func.func @transform_10(%arg0: i32) -> (i32, i32) {
    %c0_i32 = arith.constant 0 : i32
    %c0_i32_0 = arith.constant 0 : i32
    %c0_i32_1 = arith.constant 0 : i32
    return %c0_i32, %c0_i32_0 : i32, i32
  }
  func.func @transform_11(%arg0: i32) -> (i32, i32) {
    %c0_i32 = arith.constant 0 : i32
    %c0_i32_0 = arith.constant 0 : i32
    %c0_i32_1 = arith.constant 0 : i32
    return %c0_i32, %c0_i32_0 : i32, i32
  }
  func.func @transform_12(%arg0: i32) -> (i32, i32) {
    %c0_i32 = arith.constant 0 : i32
    %c0_i32_0 = arith.constant 0 : i32
    %c0_i32_1 = arith.constant 0 : i32
    return %c0_i32, %c0_i32_0 : i32, i32
  }
  func.func @transform_13(%arg0: i32) -> (i32, i32) {
    %c0_i32 = arith.constant 0 : i32
    %c0_i32_0 = arith.constant 0 : i32
    %c0_i32_1 = arith.constant 0 : i32
    return %c0_i32, %c0_i32_0 : i32, i32
  }
  func.func @transform_14(%arg0: i32) -> (i32, i32) {
    %c0_i32 = arith.constant 0 : i32
    %c0_i32_0 = arith.constant 0 : i32
    %c0_i32_1 = arith.constant 0 : i32
    return %c0_i32, %c0_i32_0 : i32, i32
  }
  func.func @transform_15(%arg0: i32) -> (i32, i32) {
    %c0_i32 = arith.constant 0 : i32
    %c0_i32_0 = arith.constant 0 : i32
    %c0_i32_1 = arith.constant 0 : i32
    return %c0_i32, %c0_i32_0 : i32, i32
  }
  func.func @transform_16(%arg0: i32) -> (i32, i32) {
    %c0_i32 = arith.constant 0 : i32
    %c0_i32_0 = arith.constant 0 : i32
    %c0_i32_1 = arith.constant 0 : i32
    return %c0_i32, %c0_i32_0 : i32, i32
  }
  func.func @transform_17(%arg0: i32) -> (i32, i32) {
    %c0_i32 = arith.constant 0 : i32
    %c0_i32_0 = arith.constant 0 : i32
    %c0_i32_1 = arith.constant 0 : i32
    return %c0_i32, %c0_i32_0 : i32, i32
  }
  func.func @transform_18(%arg0: i32) -> (i32, i32) {
    %c0_i32 = arith.constant 0 : i32
    %c0_i32_0 = arith.constant 0 : i32
    %c0_i32_1 = arith.constant 0 : i32
    return %c0_i32, %c0_i32_0 : i32, i32
  }
  func.func @transform_19(%arg0: i32) -> (i32, i32) {
    %c0_i32 = arith.constant 0 : i32
    %c0_i32_0 = arith.constant 0 : i32
    %c0_i32_1 = arith.constant 0 : i32
    return %c0_i32, %c0_i32_0 : i32, i32
  }
  func.func @transform_20(%arg0: i32) -> (i32, i32) {
    %c0_i32 = arith.constant 0 : i32
    %c0_i32_0 = arith.constant 0 : i32
    %c0_i32_1 = arith.constant 0 : i32
    return %c0_i32, %c0_i32_0 : i32, i32
  }
  func.func @transform_21(%arg0: i32) -> (i32, i32) {
    %c0_i32 = arith.constant 0 : i32
    %c0_i32_0 = arith.constant 0 : i32
    %c0_i32_1 = arith.constant 0 : i32
    return %c0_i32, %c0_i32_0 : i32, i32
  }
  func.func @transform_22(%arg0: i32) -> (i32, i32) {
    %c0_i32 = arith.constant 0 : i32
    %c0_i32_0 = arith.constant 0 : i32
    %c0_i32_1 = arith.constant 0 : i32
    return %c0_i32, %c0_i32_0 : i32, i32
  }
  func.func @transform_23(%arg0: i32) -> (i32, i32) {
    %c0_i32 = arith.constant 0 : i32
    %c0_i32_0 = arith.constant 0 : i32
    %c0_i32_1 = arith.constant 0 : i32
    return %c0_i32, %c0_i32_0 : i32, i32
  }
  func.func @transform_24(%arg0: i32) -> (i32, i32) {
    %c0_i32 = arith.constant 0 : i32
    %c0_i32_0 = arith.constant 0 : i32
    %c0_i32_1 = arith.constant 0 : i32
    return %c0_i32, %c0_i32_0 : i32, i32
  }
  func.func @transform_25(%arg0: i32) -> (i32, i32) {
    %c0_i32 = arith.constant 0 : i32
    %c0_i32_0 = arith.constant 0 : i32
    %c0_i32_1 = arith.constant 0 : i32
    return %c0_i32, %c0_i32_0 : i32, i32
  }
  func.func @transform_26(%arg0: i32) -> (i32, i32) {
    %c0_i32 = arith.constant 0 : i32
    %c0_i32_0 = arith.constant 0 : i32
    %c0_i32_1 = arith.constant 0 : i32
    return %c0_i32, %c0_i32_0 : i32, i32
  }
  func.func @transform_27(%arg0: i32) -> (i32, i32) {
    %c0_i32 = arith.constant 0 : i32
    %c0_i32_0 = arith.constant 0 : i32
    %c0_i32_1 = arith.constant 0 : i32
    return %c0_i32, %c0_i32_0 : i32, i32
  }
  func.func @transform_28(%arg0: i32) -> (i32, i32) {
    %c0_i32 = arith.constant 0 : i32
    %c0_i32_0 = arith.constant 0 : i32
    %c0_i32_1 = arith.constant 0 : i32
    return %c0_i32, %c0_i32_0 : i32, i32
  }
  func.func @transform_29(%arg0: i32) -> (i32, i32) {
    %c0_i32 = arith.constant 0 : i32
    %c0_i32_0 = arith.constant 0 : i32
    %c0_i32_1 = arith.constant 0 : i32
    return %c0_i32, %c0_i32_0 : i32, i32
  }
  func.func @transform_30(%arg0: i32) -> (i32, i32) {
    %c0_i32 = arith.constant 0 : i32
    %c0_i32_0 = arith.constant 0 : i32
    %c0_i32_1 = arith.constant 0 : i32
    return %c0_i32, %c0_i32_0 : i32, i32
  }
  func.func @transform_31(%arg0: i32) -> (i32, i32, i32) {
    %c0_i32 = arith.constant 0 : i32
    %c0_i32_0 = arith.constant 0 : i32
    %c0_i32_1 = arith.constant 0 : i32
    return %arg0, %c0_i32, %c0_i32_0 : i32, i32, i32
  }
}

</mosaic_0001>

<llo_original>
// kernel: forward.1
$region0: #{forward.1}
  #allocation0 [shape = 'u32[]', space=smem, size = 0x4, offset = 0x4, fixed_abs, tag = 'smem constant byte address 0x4 - core index']
  #allocation1 [shape = 'u32[144,128]{1,0:T(1,128)}', space=vmem, size = 0x12000, scoped, tag = 'internal scratch']
  #allocation2 [shape = 'f32[1,1]{1,0:T(1,128)S(1)}', space=vmem, size = 0x200, scoped, tag = 'scoped memory for forward.1']
  %s0 = inlined_call_operand.smem [shape: u32[32], index: -1, kind: input, shape index: {}]
  %s1 = sld [smem:[%s0]]
  %s2 = scalar_lea.smem %s0, 1
  %s3 = sld [smem:[%s2]]
  %s4 = scalar_lea.smem %s0, 2
  %s5 = sld [smem:[%s4]]
  %s6 = scalar_lea.smem %s0, 3
  %s7 = sld [smem:[%s6]]
  %s8 = scalar_lea.smem %s0, 4
  %s9 = sld [smem:[%s8]]
  %s10 = scalar_lea.smem %s0, 5
  %s11 = sld [smem:[%s10]]
  %s12 = scalar_lea.smem %s0, 6
  %s13 = sld [smem:[%s12]]
  %s14 = scalar_lea.smem %s0, 7
  %s15 = sld [smem:[%s14]]
  %s16 = scalar_lea.smem %s0, 8
  %s17 = sld [smem:[%s16]]
  %s18 = scalar_lea.smem %s0, 9
  %s19 = sld [smem:[%s18]]
  %s20 = scalar_lea.smem %s0, 10
  %s21 = sld [smem:[%s20]]
  %s22 = scalar_lea.smem %s0, 11
  %s23 = sld [smem:[%s22]]
  %s24 = scalar_lea.smem %s0, 12
  %s25 = sld [smem:[%s24]]
  %s26 = scalar_lea.smem %s0, 13
  %s27 = sld [smem:[%s26]]
  %s28 = scalar_lea.smem %s0, 14
  %s29 = sld [smem:[%s28]]
  %s30 = scalar_lea.smem %s0, 15
  %s31 = sld [smem:[%s30]]
  %s32 = scalar_lea.smem %s0, 16
  %s33 = sld [smem:[%s32]]
  %s34 = scalar_lea.smem %s0, 17
  %s35 = sld [smem:[%s34]]
  %s36 = scalar_lea.smem %s0, 18
  %s37 = sld [smem:[%s36]]
  %s38 = scalar_lea.smem %s0, 19
  %s39 = sld [smem:[%s38]]
  %s40 = scalar_lea.smem %s0, 20
  %s41 = sld [smem:[%s40]]
  %s42 = scalar_lea.smem %s0, 21
  %s43 = sld [smem:[%s42]]
  %s44 = scalar_lea.smem %s0, 22
  %s45 = sld [smem:[%s44]]
  %s46 = scalar_lea.smem %s0, 23
  %s47 = sld [smem:[%s46]]
  %s48 = scalar_lea.smem %s0, 24
  %s49 = sld [smem:[%s48]]
  %s50 = scalar_lea.smem %s0, 25
  %s51 = sld [smem:[%s50]]
  %s52 = scalar_lea.smem %s0, 26
  %s53 = sld [smem:[%s52]]
  %s54 = scalar_lea.smem %s0, 27
  %s55 = sld [smem:[%s54]]
  %s56 = scalar_lea.smem %s0, 28
  %s57 = sld [smem:[%s56]]
  %s58 = scalar_lea.smem %s0, 29
  %s59 = sld [smem:[%s58]]
  %s60 = scalar_lea.smem %s0, 30
  %s61 = sld [smem:[%s60]]
  %s62 = scalar_lea.smem %s0, 31
  %s63 = sld [smem:[%s62]]
  %s64 = sld [smem:[#allocation0]]
  $region157: #{forward.1} parent=0
    _
  %s66 = ssub.s32 1, %s64
  %s67 = scalar_select 0, %s66, %s64
  %v68 = vstv %s61
  %69 = vst [vmem:[#allocation2] sm:$0x1] %v68
  loop: start=0, step=1, limit=4
  $region2: #{forward.1} parent=0 // loop_pre_header
    _
  $region3: #{forward.1} parent=0 // loop_header
    %s71 = sphi 0, %s75
    %p72 = scmp.ge.s32.totalorder %s71, 4
    %s81 = sphi 0, %s83
    %s84 = sphi 0, %s81
    %s85 = sphi 0, %s84
    %s101 = sphi 0, %s85
    %s105 = sphi 0, %s105
    %s107 = sphi 0, %s105
    %s108 = sphi 0, %s107
    %s122 = sphi 0, %s108
    %s126 = sphi 0, %s126
    %s128 = sphi 0, %s126
    %s129 = sphi 0, %s128
    %s143 = sphi 0, %s129
    %s147 = sphi 0, %s147
    %s149 = sphi 0, %s147
    %s150 = sphi 0, %s149
    %s164 = sphi 0, %s150
    %s168 = sphi 0, %s168
    %s170 = sphi 0, %s168
    %s171 = sphi 0, %s170
    %s185 = sphi 0, %s171
    %s189 = sphi 0, %s189
    %s191 = sphi 0, %s189
    %s192 = sphi 0, %s191
    %s206 = sphi 0, %s192
    %s210 = sphi 0, %s210
    %s212 = sphi 0, %s210
    %s213 = sphi 0, %s212
    %s227 = sphi 0, %s213
    %s231 = sphi 0, %s231
    %s233 = sphi 0, %s231
    %s234 = sphi 0, %s233
    %s248 = sphi 0, %s234
    %s252 = sphi 0, %s252
    %s254 = sphi 0, %s252
    %s255 = sphi 0, %s254
    %s269 = sphi 0, %s255
    %s273 = sphi 0, %s273
    %s275 = sphi 0, %s273
    %s276 = sphi 0, %s275
    %s290 = sphi 0, %s276
    %s294 = sphi 0, %s294
    %s296 = sphi 0, %s294
    %s297 = sphi 0, %s296
    %s311 = sphi 0, %s297
    %s315 = sphi 0, %s315
    %s317 = sphi 0, %s315
    %s318 = sphi 0, %s317
    %s332 = sphi 0, %s318
    %s336 = sphi 0, %s336
    %s338 = sphi 0, %s336
    %s339 = sphi 0, %s338
    %s353 = sphi 0, %s339
    %s357 = sphi 0, %s357
    %s359 = sphi 0, %s357
    %s360 = sphi 0, %s359
    %s374 = sphi 0, %s360
    %s378 = sphi 0, %s378
    %s380 = sphi 0, %s378
    %s381 = sphi 0, %s380
    %s395 = sphi 0, %s381
    %s399 = sphi 0, %s399
    %s401 = sphi 0, %s399
    %s402 = sphi 0, %s401
    %s416 = sphi 0, %s402
    %s420 = sphi 0, %s420
    %s422 = sphi 0, %s420
    %s423 = sphi 0, %s422
    %s437 = sphi 0, %s423
    %s441 = sphi 0, %s441
    %s443 = sphi 0, %s441
    %s444 = sphi 0, %s443
    %s458 = sphi 0, %s444
    %s462 = sphi 0, %s462
    %s464 = sphi 0, %s462
    %s465 = sphi 0, %s464
    %s479 = sphi 0, %s465
    %s483 = sphi 0, %s483
    %s485 = sphi 0, %s483
    %s486 = sphi 0, %s485
    %s500 = sphi 0, %s486
    %s504 = sphi 0, %s504
    %s506 = sphi 0, %s504
    %s507 = sphi 0, %s506
    %s521 = sphi 0, %s507
    %s525 = sphi 0, %s525
    %s527 = sphi 0, %s525
    %s528 = sphi 0, %s527
    %s542 = sphi 0, %s528
    %s546 = sphi 0, %s546
    %s548 = sphi 0, %s546
    %s549 = sphi 0, %s548
    %s563 = sphi 0, %s549
    %s567 = sphi 0, %s567
    %s569 = sphi 0, %s567
    %s570 = sphi 0, %s569
    %s584 = sphi 0, %s570
    %s588 = sphi 0, %s588
    %s590 = sphi 0, %s588
    %s591 = sphi 0, %s590
    %s605 = sphi 0, %s591
    %s609 = sphi 0, %s609
    %s611 = sphi 0, %s609
    %s612 = sphi 0, %s611
    %s626 = sphi 0, %s612
    %s630 = sphi 0, %s630
    %s632 = sphi 0, %s630
    %s633 = sphi 0, %s632
    %s647 = sphi 0, %s633
    %s651 = sphi 0, %s651
    %s653 = sphi 0, %s651
    %s654 = sphi 0, %s653
    %s668 = sphi 0, %s654
    %s672 = sphi 0, %s672
    %s674 = sphi 0, %s672
    %s675 = sphi 0, %s674
    %s689 = sphi 0, %s675
    %s693 = sphi 0, %s693
    %s695 = sphi 0, %s693
    %s696 = sphi 0, %s695
    %s710 = sphi 0, %s696
    %s714 = sphi 0, %s714
    %s716 = sphi 0, %s714
    %s717 = sphi 0, %s716
    %s731 = sphi 0, %s717
    %s737 = sphi 0, %s739
    %s740 = sphi 0, %s737
    %s741 = sphi 0, %s740
    %s757 = sphi 0, %s741
  $region4: #{forward.1} parent=0 // loop_header_branch
    %74 = sbr.rel (%p72) target = $region8
  $region5: #{forward.1} parent=0 // loop_body
    %s76 = ssub.s32 %s71, 1
    %s77 = ssub.s32 %s71, 2
    %s78 = sadd.s32 %s71, 1
    %s79 = ssub.s32 %s71, %s78
    %p80 = scmp.eq.s32.totalorder %s79, 0
    %s82 = sadd.s32 %s81, 1
    %s83 = scalar_select %p80, %s81, %s82
    %p86 = pneg %p80
    %p87 = scmp.eq.s32.totalorder %s71, 1
    %p88 = por %p86, %p87
    %p89 = scmp.ne.s32.totalorder %s81, %s84
    %p90 = scmp.eq.s32.totalorder %s71, 0
    %p91 = por %p89, %p90
    %p92 = scmp.ne.s32.totalorder %s81, %s84
    %p93 = scmp.eq.s32.totalorder %s76, 1
    %p94 = por %p92, %p93
    %p95 = scmp.ne.s32.totalorder %s84, %s85
    %p96 = scmp.eq.s32.totalorder %s76, 0
    %p97 = por %p95, %p96
    %p98 = scmp.ne.s32.totalorder %s84, %s85
    %p99 = scmp.eq.s32.totalorder %s77, 1
    %p100 = por %p98, %p99
    %p102 = scmp.ne.s32.totalorder %s85, %s101
    %p103 = scmp.eq.s32.totalorder %s77, 0
    %p104 = por %p102, %p103
    %s106 = sadd.s32 %s105, 1
    %p109 = scmp.eq.s32.totalorder %s71, 1
    %p110 = scmp.ne.s32.totalorder %s105, %s107
    %p111 = scmp.eq.s32.totalorder %s71, 0
    %p112 = por %p110, %p111
    %p113 = scmp.ne.s32.totalorder %s105, %s107
    %p114 = scmp.eq.s32.totalorder %s76, 1
    %p115 = por %p113, %p114
    %p116 = scmp.ne.s32.totalorder %s107, %s108
    %p117 = scmp.eq.s32.totalorder %s76, 0
    %p118 = por %p116, %p117
    %p119 = scmp.ne.s32.totalorder %s107, %s108
    %p120 = scmp.eq.s32.totalorder %s77, 1
    %p121 = por %p119, %p120
    %p123 = scmp.ne.s32.totalorder %s108, %s122
    %p124 = scmp.eq.s32.totalorder %s77, 0
    %p125 = por %p123, %p124
    %s127 = sadd.s32 %s126, 1
    %p130 = scmp.eq.s32.totalorder %s71, 1
    %p131 = scmp.ne.s32.totalorder %s126, %s128
    %p132 = scmp.eq.s32.totalorder %s71, 0
    %p133 = por %p131, %p132
    %p134 = scmp.ne.s32.totalorder %s126, %s128
    %p135 = scmp.eq.s32.totalorder %s76, 1
    %p136 = por %p134, %p135
    %p137 = scmp.ne.s32.totalorder %s128, %s129
    %p138 = scmp.eq.s32.totalorder %s76, 0
    %p139 = por %p137, %p138
    %p140 = scmp.ne.s32.totalorder %s128, %s129
    %p141 = scmp.eq.s32.totalorder %s77, 1
    %p142 = por %p140, %p141
    %p144 = scmp.ne.s32.totalorder %s129, %s143
    %p145 = scmp.eq.s32.totalorder %s77, 0
    %p146 = por %p144, %p145
    %s148 = sadd.s32 %s147, 1
    %p151 = scmp.eq.s32.totalorder %s71, 1
    %p152 = scmp.ne.s32.totalorder %s147, %s149
    %p153 = scmp.eq.s32.totalorder %s71, 0
    %p154 = por %p152, %p153
    %p155 = scmp.ne.s32.totalorder %s147, %s149
    %p156 = scmp.eq.s32.totalorder %s76, 1
    %p157 = por %p155, %p156
    %p158 = scmp.ne.s32.totalorder %s149, %s150
    %p159 = scmp.eq.s32.totalorder %s76, 0
    %p160 = por %p158, %p159
    %p161 = scmp.ne.s32.totalorder %s149, %s150
    %p162 = scmp.eq.s32.totalorder %s77, 1
    %p163 = por %p161, %p162
    %p165 = scmp.ne.s32.totalorder %s150, %s164
    %p166 = scmp.eq.s32.totalorder %s77, 0
    %p167 = por %p165, %p166
    %s169 = sadd.s32 %s168, 1
    %p172 = scmp.eq.s32.totalorder %s71, 1
    %p173 = scmp.ne.s32.totalorder %s168, %s170
    %p174 = scmp.eq.s32.totalorder %s71, 0
    %p175 = por %p173, %p174
    %p176 = scmp.ne.s32.totalorder %s168, %s170
    %p177 = scmp.eq.s32.totalorder %s76, 1
    %p178 = por %p176, %p177
    %p179 = scmp.ne.s32.totalorder %s170, %s171
    %p180 = scmp.eq.s32.totalorder %s76, 0
    %p181 = por %p179, %p180
    %p182 = scmp.ne.s32.totalorder %s170, %s171
    %p183 = scmp.eq.s32.totalorder %s77, 1
    %p184 = por %p182, %p183
    %p186 = scmp.ne.s32.totalorder %s171, %s185
    %p187 = scmp.eq.s32.totalorder %s77, 0
    %p188 = por %p186, %p187
    %s190 = sadd.s32 %s189, 1
    %p193 = scmp.eq.s32.totalorder %s71, 1
    %p194 = scmp.ne.s32.totalorder %s189, %s191
    %p195 = scmp.eq.s32.totalorder %s71, 0
    %p196 = por %p194, %p195
    %p197 = scmp.ne.s32.totalorder %s189, %s191
    %p198 = scmp.eq.s32.totalorder %s76, 1
    %p199 = por %p197, %p198
    %p200 = scmp.ne.s32.totalorder %s191, %s192
    %p201 = scmp.eq.s32.totalorder %s76, 0
    %p202 = por %p200, %p201
    %p203 = scmp.ne.s32.totalorder %s191, %s192
    %p204 = scmp.eq.s32.totalorder %s77, 1
    %p205 = por %p203, %p204
    %p207 = scmp.ne.s32.totalorder %s192, %s206
    %p208 = scmp.eq.s32.totalorder %s77, 0
    %p209 = por %p207, %p208
    %s211 = sadd.s32 %s210, 1
    %p214 = scmp.eq.s32.totalorder %s71, 1
    %p215 = scmp.ne.s32.totalorder %s210, %s212
    %p216 = scmp.eq.s32.totalorder %s71, 0
    %p217 = por %p215, %p216
    %p218 = scmp.ne.s32.totalorder %s210, %s212
    %p219 = scmp.eq.s32.totalorder %s76, 1
    %p220 = por %p218, %p219
    %p221 = scmp.ne.s32.totalorder %s212, %s213
    %p222 = scmp.eq.s32.totalorder %s76, 0
    %p223 = por %p221, %p222
    %p224 = scmp.ne.s32.totalorder %s212, %s213
    %p225 = scmp.eq.s32.totalorder %s77, 1
    %p226 = por %p224, %p225
    %p228 = scmp.ne.s32.totalorder %s213, %s227
    %p229 = scmp.eq.s32.totalorder %s77, 0
    %p230 = por %p228, %p229
    %s232 = sadd.s32 %s231, 1
    %p235 = scmp.eq.s32.totalorder %s71, 1
    %p236 = scmp.ne.s32.totalorder %s231, %s233
    %p237 = scmp.eq.s32.totalorder %s71, 0
    %p238 = por %p236, %p237
    %p239 = scmp.ne.s32.totalorder %s231, %s233
    %p240 = scmp.eq.s32.totalorder %s76, 1
    %p241 = por %p239, %p240
    %p242 = scmp.ne.s32.totalorder %s233, %s234
    %p243 = scmp.eq.s32.totalorder %s76, 0
    %p244 = por %p242, %p243
    %p245 = scmp.ne.s32.totalorder %s233, %s234
    %p246 = scmp.eq.s32.totalorder %s77, 1
    %p247 = por %p245, %p246
    %p249 = scmp.ne.s32.totalorder %s234, %s248
    %p250 = scmp.eq.s32.totalorder %s77, 0
    %p251 = por %p249, %p250
    %s253 = sadd.s32 %s252, 1
    %p256 = scmp.eq.s32.totalorder %s71, 1
    %p257 = scmp.ne.s32.totalorder %s252, %s254
    %p258 = scmp.eq.s32.totalorder %s71, 0
    %p259 = por %p257, %p258
    %p260 = scmp.ne.s32.totalorder %s252, %s254
    %p261 = scmp.eq.s32.totalorder %s76, 1
    %p262 = por %p260, %p261
    %p263 = scmp.ne.s32.totalorder %s254, %s255
    %p264 = scmp.eq.s32.totalorder %s76, 0
    %p265 = por %p263, %p264
    %p266 = scmp.ne.s32.totalorder %s254, %s255
    %p267 = scmp.eq.s32.totalorder %s77, 1
    %p268 = por %p266, %p267
    %p270 = scmp.ne.s32.totalorder %s255, %s269
    %p271 = scmp.eq.s32.totalorder %s77, 0
    %p272 = por %p270, %p271
    %s274 = sadd.s32 %s273, 1
    %p277 = scmp.eq.s32.totalorder %s71, 1
    %p278 = scmp.ne.s32.totalorder %s273, %s275
    %p279 = scmp.eq.s32.totalorder %s71, 0
    %p280 = por %p278, %p279
    %p281 = scmp.ne.s32.totalorder %s273, %s275
    %p282 = scmp.eq.s32.totalorder %s76, 1
    %p283 = por %p281, %p282
    %p284 = scmp.ne.s32.totalorder %s275, %s276
    %p285 = scmp.eq.s32.totalorder %s76, 0
    %p286 = por %p284, %p285
    %p287 = scmp.ne.s32.totalorder %s275, %s276
    %p288 = scmp.eq.s32.totalorder %s77, 1
    %p289 = por %p287, %p288
    %p291 = scmp.ne.s32.totalorder %s276, %s290
    %p292 = scmp.eq.s32.totalorder %s77, 0
    %p293 = por %p291, %p292
    %s295 = sadd.s32 %s294, 1
    %p298 = scmp.eq.s32.totalorder %s71, 1
    %p299 = scmp.ne.s32.totalorder %s294, %s296
    %p300 = scmp.eq.s32.totalorder %s71, 0
    %p301 = por %p299, %p300
    %p302 = scmp.ne.s32.totalorder %s294, %s296
    %p303 = scmp.eq.s32.totalorder %s76, 1
    %p304 = por %p302, %p303
    %p305 = scmp.ne.s32.totalorder %s296, %s297
    %p306 = scmp.eq.s32.totalorder %s76, 0
    %p307 = por %p305, %p306
    %p308 = scmp.ne.s32.totalorder %s296, %s297
    %p309 = scmp.eq.s32.totalorder %s77, 1
    %p310 = por %p308, %p309
    %p312 = scmp.ne.s32.totalorder %s297, %s311
    %p313 = scmp.eq.s32.totalorder %s77, 0
    %p314 = por %p312, %p313
    %s316 = sadd.s32 %s315, 1
    %p319 = scmp.eq.s32.totalorder %s71, 1
    %p320 = scmp.ne.s32.totalorder %s315, %s317
    %p321 = scmp.eq.s32.totalorder %s71, 0
    %p322 = por %p320, %p321
    %p323 = scmp.ne.s32.totalorder %s315, %s317
    %p324 = scmp.eq.s32.totalorder %s76, 1
    %p325 = por %p323, %p324
    %p326 = scmp.ne.s32.totalorder %s317, %s318
    %p327 = scmp.eq.s32.totalorder %s76, 0
    %p328 = por %p326, %p327
    %p329 = scmp.ne.s32.totalorder %s317, %s318
    %p330 = scmp.eq.s32.totalorder %s77, 1
    %p331 = por %p329, %p330
    %p333 = scmp.ne.s32.totalorder %s318, %s332
    %p334 = scmp.eq.s32.totalorder %s77, 0
    %p335 = por %p333, %p334
    %s337 = sadd.s32 %s336, 1
    %p340 = scmp.eq.s32.totalorder %s71, 1
    %p341 = scmp.ne.s32.totalorder %s336, %s338
    %p342 = scmp.eq.s32.totalorder %s71, 0
    %p343 = por %p341, %p342
    %p344 = scmp.ne.s32.totalorder %s336, %s338
    %p345 = scmp.eq.s32.totalorder %s76, 1
    %p346 = por %p344, %p345
    %p347 = scmp.ne.s32.totalorder %s338, %s339
    %p348 = scmp.eq.s32.totalorder %s76, 0
    %p349 = por %p347, %p348
    %p350 = scmp.ne.s32.totalorder %s338, %s339
    %p351 = scmp.eq.s32.totalorder %s77, 1
    %p352 = por %p350, %p351
    %p354 = scmp.ne.s32.totalorder %s339, %s353
    %p355 = scmp.eq.s32.totalorder %s77, 0
    %p356 = por %p354, %p355
    %s358 = sadd.s32 %s357, 1
    %p361 = scmp.eq.s32.totalorder %s71, 1
    %p362 = scmp.ne.s32.totalorder %s357, %s359
    %p363 = scmp.eq.s32.totalorder %s71, 0
    %p364 = por %p362, %p363
    %p365 = scmp.ne.s32.totalorder %s357, %s359
    %p366 = scmp.eq.s32.totalorder %s76, 1
    %p367 = por %p365, %p366
    %p368 = scmp.ne.s32.totalorder %s359, %s360
    %p369 = scmp.eq.s32.totalorder %s76, 0
    %p370 = por %p368, %p369
    %p371 = scmp.ne.s32.totalorder %s359, %s360
    %p372 = scmp.eq.s32.totalorder %s77, 1
    %p373 = por %p371, %p372
    %p375 = scmp.ne.s32.totalorder %s360, %s374
    %p376 = scmp.eq.s32.totalorder %s77, 0
    %p377 = por %p375, %p376
    %s379 = sadd.s32 %s378, 1
    %p382 = scmp.eq.s32.totalorder %s71, 1
    %p383 = scmp.ne.s32.totalorder %s378, %s380
    %p384 = scmp.eq.s32.totalorder %s71, 0
    %p385 = por %p383, %p384
    %p386 = scmp.ne.s32.totalorder %s378, %s380
    %p387 = scmp.eq.s32.totalorder %s76, 1
    %p388 = por %p386, %p387
    %p389 = scmp.ne.s32.totalorder %s380, %s381
    %p390 = scmp.eq.s32.totalorder %s76, 0
    %p391 = por %p389, %p390
    %p392 = scmp.ne.s32.totalorder %s380, %s381
    %p393 = scmp.eq.s32.totalorder %s77, 1
    %p394 = por %p392, %p393
    %p396 = scmp.ne.s32.totalorder %s381, %s395
    %p397 = scmp.eq.s32.totalorder %s77, 0
    %p398 = por %p396, %p397
    %s400 = sadd.s32 %s399, 1
    %p403 = scmp.eq.s32.totalorder %s71, 1
    %p404 = scmp.ne.s32.totalorder %s399, %s401
    %p405 = scmp.eq.s32.totalorder %s71, 0
    %p406 = por %p404, %p405
    %p407 = scmp.ne.s32.totalorder %s399, %s401
    %p408 = scmp.eq.s32.totalorder %s76, 1
    %p409 = por %p407, %p408
    %p410 = scmp.ne.s32.totalorder %s401, %s402
    %p411 = scmp.eq.s32.totalorder %s76, 0
    %p412 = por %p410, %p411
    %p413 = scmp.ne.s32.totalorder %s401, %s402
    %p414 = scmp.eq.s32.totalorder %s77, 1
    %p415 = por %p413, %p414
    %p417 = scmp.ne.s32.totalorder %s402, %s416
    %p418 = scmp.eq.s32.totalorder %s77, 0
    %p419 = por %p417, %p418
    %s421 = sadd.s32 %s420, 1
    %p424 = scmp.eq.s32.totalorder %s71, 1
    %p425 = scmp.ne.s32.totalorder %s420, %s422
    %p426 = scmp.eq.s32.totalorder %s71, 0
    %p427 = por %p425, %p426
    %p428 = scmp.ne.s32.totalorder %s420, %s422
    %p429 = scmp.eq.s32.totalorder %s76, 1
    %p430 = por %p428, %p429
    %p431 = scmp.ne.s32.totalorder %s422, %s423
    %p432 = scmp.eq.s32.totalorder %s76, 0
    %p433 = por %p431, %p432
    %p434 = scmp.ne.s32.totalorder %s422, %s423
    %p435 = scmp.eq.s32.totalorder %s77, 1
    %p436 = por %p434, %p435
    %p438 = scmp.ne.s32.totalorder %s423, %s437
    %p439 = scmp.eq.s32.totalorder %s77, 0
    %p440 = por %p438, %p439
    %s442 = sadd.s32 %s441, 1
    %p445 = scmp.eq.s32.totalorder %s71, 1
    %p446 = scmp.ne.s32.totalorder %s441, %s443
    %p447 = scmp.eq.s32.totalorder %s71, 0
    %p448 = por %p446, %p447
    %p449 = scmp.ne.s32.totalorder %s441, %s443
    %p450 = scmp.eq.s32.totalorder %s76, 1
    %p451 = por %p449, %p450
    %p452 = scmp.ne.s32.totalorder %s443, %s444
    %p453 = scmp.eq.s32.totalorder %s76, 0
    %p454 = por %p452, %p453
    %p455 = scmp.ne.s32.totalorder %s443, %s444
    %p456 = scmp.eq.s32.totalorder %s77, 1
    %p457 = por %p455, %p456
    %p459 = scmp.ne.s32.totalorder %s444, %s458
    %p460 = scmp.eq.s32.totalorder %s77, 0
    %p461 = por %p459, %p460
    %s463 = sadd.s32 %s462, 1
    %p466 = scmp.eq.s32.totalorder %s71, 1
    %p467 = scmp.ne.s32.totalorder %s462, %s464
    %p468 = scmp.eq.s32.totalorder %s71, 0
    %p469 = por %p467, %p468
    %p470 = scmp.ne.s32.totalorder %s462, %s464
    %p471 = scmp.eq.s32.totalorder %s76, 1
    %p472 = por %p470, %p471
    %p473 = scmp.ne.s32.totalorder %s464, %s465
    %p474 = scmp.eq.s32.totalorder %s76, 0
    %p475 = por %p473, %p474
    %p476 = scmp.ne.s32.totalorder %s464, %s465
    %p477 = scmp.eq.s32.totalorder %s77, 1
    %p478 = por %p476, %p477
    %p480 = scmp.ne.s32.totalorder %s465, %s479
    %p481 = scmp.eq.s32.totalorder %s77, 0
    %p482 = por %p480, %p481
    %s484 = sadd.s32 %s483, 1
    %p487 = scmp.eq.s32.totalorder %s71, 1
    %p488 = scmp.ne.s32.totalorder %s483, %s485
    %p489 = scmp.eq.s32.totalorder %s71, 0
    %p490 = por %p488, %p489
    %p491 = scmp.ne.s32.totalorder %s483, %s485
    %p492 = scmp.eq.s32.totalorder %s76, 1
    %p493 = por %p491, %p492
    %p494 = scmp.ne.s32.totalorder %s485, %s486
    %p495 = scmp.eq.s32.totalorder %s76, 0
    %p496 = por %p494, %p495
    %p497 = scmp.ne.s32.totalorder %s485, %s486
    %p498 = scmp.eq.s32.totalorder %s77, 1
    %p499 = por %p497, %p498
    %p501 = scmp.ne.s32.totalorder %s486, %s500
    %p502 = scmp.eq.s32.totalorder %s77, 0
    %p503 = por %p501, %p502
    %s505 = sadd.s32 %s504, 1
    %p508 = scmp.eq.s32.totalorder %s71, 1
    %p509 = scmp.ne.s32.totalorder %s504, %s506
    %p510 = scmp.eq.s32.totalorder %s71, 0
    %p511 = por %p509, %p510
    %p512 = scmp.ne.s32.totalorder %s504, %s506
    %p513 = scmp.eq.s32.totalorder %s76, 1
    %p514 = por %p512, %p513
    %p515 = scmp.ne.s32.totalorder %s506, %s507
    %p516 = scmp.eq.s32.totalorder %s76, 0
    %p517 = por %p515, %p516
    %p518 = scmp.ne.s32.totalorder %s506, %s507
    %p519 = scmp.eq.s32.totalorder %s77, 1
    %p520 = por %p518, %p519
    %p522 = scmp.ne.s32.totalorder %s507, %s521
    %p523 = scmp.eq.s32.totalorder %s77, 0
    %p524 = por %p522, %p523
    %s526 = sadd.s32 %s525, 1
    %p529 = scmp.eq.s32.totalorder %s71, 1
    %p530 = scmp.ne.s32.totalorder %s525, %s527
    %p531 = scmp.eq.s32.totalorder %s71, 0
    %p532 = por %p530, %p531
    %p533 = scmp.ne.s32.totalorder %s525, %s527
    %p534 = scmp.eq.s32.totalorder %s76, 1
    %p535 = por %p533, %p534
    %p536 = scmp.ne.s32.totalorder %s527, %s528
    %p537 = scmp.eq.s32.totalorder %s76, 0
    %p538 = por %p536, %p537
    %p539 = scmp.ne.s32.totalorder %s527, %s528
    %p540 = scmp.eq.s32.totalorder %s77, 1
    %p541 = por %p539, %p540
    %p543 = scmp.ne.s32.totalorder %s528, %s542
    %p544 = scmp.eq.s32.totalorder %s77, 0
    %p545 = por %p543, %p544
    %s547 = sadd.s32 %s546, 1
    %p550 = scmp.eq.s32.totalorder %s71, 1
    %p551 = scmp.ne.s32.totalorder %s546, %s548
    %p552 = scmp.eq.s32.totalorder %s71, 0
    %p553 = por %p551, %p552
    %p554 = scmp.ne.s32.totalorder %s546, %s548
    %p555 = scmp.eq.s32.totalorder %s76, 1
    %p556 = por %p554, %p555
    %p557 = scmp.ne.s32.totalorder %s548, %s549
    %p558 = scmp.eq.s32.totalorder %s76, 0
    %p559 = por %p557, %p558
    %p560 = scmp.ne.s32.totalorder %s548, %s549
    %p561 = scmp.eq.s32.totalorder %s77, 1
    %p562 = por %p560, %p561
    %p564 = scmp.ne.s32.totalorder %s549, %s563
    %p565 = scmp.eq.s32.totalorder %s77, 0
    %p566 = por %p564, %p565
    %s568 = sadd.s32 %s567, 1
    %p571 = scmp.eq.s32.totalorder %s71, 1
    %p572 = scmp.ne.s32.totalorder %s567, %s569
    %p573 = scmp.eq.s32.totalorder %s71, 0
    %p574 = por %p572, %p573
    %p575 = scmp.ne.s32.totalorder %s567, %s569
    %p576 = scmp.eq.s32.totalorder %s76, 1
    %p577 = por %p575, %p576
    %p578 = scmp.ne.s32.totalorder %s569, %s570
    %p579 = scmp.eq.s32.totalorder %s76, 0
    %p580 = por %p578, %p579
    %p581 = scmp.ne.s32.totalorder %s569, %s570
    %p582 = scmp.eq.s32.totalorder %s77, 1
    %p583 = por %p581, %p582
    %p585 = scmp.ne.s32.totalorder %s570, %s584
    %p586 = scmp.eq.s32.totalorder %s77, 0
    %p587 = por %p585, %p586
    %s589 = sadd.s32 %s588, 1
    %p592 = scmp.eq.s32.totalorder %s71, 1
    %p593 = scmp.ne.s32.totalorder %s588, %s590
    %p594 = scmp.eq.s32.totalorder %s71, 0
    %p595 = por %p593, %p594
    %p596 = scmp.ne.s32.totalorder %s588, %s590
    %p597 = scmp.eq.s32.totalorder %s76, 1
    %p598 = por %p596, %p597
    %p599 = scmp.ne.s32.totalorder %s590, %s591
    %p600 = scmp.eq.s32.totalorder %s76, 0
    %p601 = por %p599, %p600
    %p602 = scmp.ne.s32.totalorder %s590, %s591
    %p603 = scmp.eq.s32.totalorder %s77, 1
    %p604 = por %p602, %p603
    %p606 = scmp.ne.s32.totalorder %s591, %s605
    %p607 = scmp.eq.s32.totalorder %s77, 0
    %p608 = por %p606, %p607
    %s610 = sadd.s32 %s609, 1
    %p613 = scmp.eq.s32.totalorder %s71, 1
    %p614 = scmp.ne.s32.totalorder %s609, %s611
    %p615 = scmp.eq.s32.totalorder %s71, 0
    %p616 = por %p614, %p615
    %p617 = scmp.ne.s32.totalorder %s609, %s611
    %p618 = scmp.eq.s32.totalorder %s76, 1
    %p619 = por %p617, %p618
    %p620 = scmp.ne.s32.totalorder %s611, %s612
    %p621 = scmp.eq.s32.totalorder %s76, 0
    %p622 = por %p620, %p621
    %p623 = scmp.ne.s32.totalorder %s611, %s612
    %p624 = scmp.eq.s32.totalorder %s77, 1
    %p625 = por %p623, %p624
    %p627 = scmp.ne.s32.totalorder %s612, %s626
    %p628 = scmp.eq.s32.totalorder %s77, 0
    %p629 = por %p627, %p628
    %s631 = sadd.s32 %s630, 1
    %p634 = scmp.eq.s32.totalorder %s71, 1
    %p635 = scmp.ne.s32.totalorder %s630, %s632
    %p636 = scmp.eq.s32.totalorder %s71, 0
    %p637 = por %p635, %p636
    %p638 = scmp.ne.s32.totalorder %s630, %s632
    %p639 = scmp.eq.s32.totalorder %s76, 1
    %p640 = por %p638, %p639
    %p641 = scmp.ne.s32.totalorder %s632, %s633
    %p642 = scmp.eq.s32.totalorder %s76, 0
    %p643 = por %p641, %p642
    %p644 = scmp.ne.s32.totalorder %s632, %s633
    %p645 = scmp.eq.s32.totalorder %s77, 1
    %p646 = por %p644, %p645
    %p648 = scmp.ne.s32.totalorder %s633, %s647
    %p649 = scmp.eq.s32.totalorder %s77, 0
    %p650 = por %p648, %p649
    %s652 = sadd.s32 %s651, 1
    %p655 = scmp.eq.s32.totalorder %s71, 1
    %p656 = scmp.ne.s32.totalorder %s651, %s653
    %p657 = scmp.eq.s32.totalorder %s71, 0
    %p658 = por %p656, %p657
    %p659 = scmp.ne.s32.totalorder %s651, %s653
    %p660 = scmp.eq.s32.totalorder %s76, 1
    %p661 = por %p659, %p660
    %p662 = scmp.ne.s32.totalorder %s653, %s654
    %p663 = scmp.eq.s32.totalorder %s76, 0
    %p664 = por %p662, %p663
    %p665 = scmp.ne.s32.totalorder %s653, %s654
    %p666 = scmp.eq.s32.totalorder %s77, 1
    %p667 = por %p665, %p666
    %p669 = scmp.ne.s32.totalorder %s654, %s668
    %p670 = scmp.eq.s32.totalorder %s77, 0
    %p671 = por %p669, %p670
    %s673 = sadd.s32 %s672, 1
    %p676 = scmp.eq.s32.totalorder %s71, 1
    %p677 = scmp.ne.s32.totalorder %s672, %s674
    %p678 = scmp.eq.s32.totalorder %s71, 0
    %p679 = por %p677, %p678
    %p680 = scmp.ne.s32.totalorder %s672, %s674
    %p681 = scmp.eq.s32.totalorder %s76, 1
    %p682 = por %p680, %p681
    %p683 = scmp.ne.s32.totalorder %s674, %s675
    %p684 = scmp.eq.s32.totalorder %s76, 0
    %p685 = por %p683, %p684
    %p686 = scmp.ne.s32.totalorder %s674, %s675
    %p687 = scmp.eq.s32.totalorder %s77, 1
    %p688 = por %p686, %p687
    %p690 = scmp.ne.s32.totalorder %s675, %s689
    %p691 = scmp.eq.s32.totalorder %s77, 0
    %p692 = por %p690, %p691
    %s694 = sadd.s32 %s693, 1
    %p697 = scmp.eq.s32.totalorder %s71, 1
    %p698 = scmp.ne.s32.totalorder %s693, %s695
    %p699 = scmp.eq.s32.totalorder %s71, 0
    %p700 = por %p698, %p699
    %p701 = scmp.ne.s32.totalorder %s693, %s695
    %p702 = scmp.eq.s32.totalorder %s76, 1
    %p703 = por %p701, %p702
    %p704 = scmp.ne.s32.totalorder %s695, %s696
    %p705 = scmp.eq.s32.totalorder %s76, 0
    %p706 = por %p704, %p705
    %p707 = scmp.ne.s32.totalorder %s695, %s696
    %p708 = scmp.eq.s32.totalorder %s77, 1
    %p709 = por %p707, %p708
    %p711 = scmp.ne.s32.totalorder %s696, %s710
    %p712 = scmp.eq.s32.totalorder %s77, 0
    %p713 = por %p711, %p712
    %s715 = sadd.s32 %s714, 1
    %p718 = scmp.eq.s32.totalorder %s71, 1
    %p719 = scmp.ne.s32.totalorder %s714, %s716
    %p720 = scmp.eq.s32.totalorder %s71, 0
    %p721 = por %p719, %p720
    %p722 = scmp.ne.s32.totalorder %s714, %s716
    %p723 = scmp.eq.s32.totalorder %s76, 1
    %p724 = por %p722, %p723
    %p725 = scmp.ne.s32.totalorder %s716, %s717
    %p726 = scmp.eq.s32.totalorder %s76, 0
    %p727 = por %p725, %p726
    %p728 = scmp.ne.s32.totalorder %s716, %s717
    %p729 = scmp.eq.s32.totalorder %s77, 1
    %p730 = por %p728, %p729
    %p732 = scmp.ne.s32.totalorder %s717, %s731
    %p733 = scmp.eq.s32.totalorder %s77, 0
    %p734 = por %p732, %p733
    %s735 = ssub.s32 %s71, %s78
    %p736 = scmp.eq.s32.totalorder %s735, 0
    %s738 = sadd.s32 %s737, 1
    %s739 = scalar_select %p736, %s737, %s738
    %p742 = pneg %p736
    %p743 = scmp.eq.s32.totalorder %s71, 1
    %p744 = por %p742, %p743
    %p745 = scmp.ne.s32.totalorder %s737, %s740
    %p746 = scmp.eq.s32.totalorder %s71, 0
    %p747 = por %p745, %p746
    %p748 = scmp.ne.s32.totalorder %s737, %s740
    %p749 = scmp.eq.s32.totalorder %s76, 1
    %p750 = por %p748, %p749
    %p751 = scmp.ne.s32.totalorder %s740, %s741
    %p752 = scmp.eq.s32.totalorder %s76, 0
    %p753 = por %p751, %p752
    %p754 = scmp.ne.s32.totalorder %s740, %s741
    %p755 = scmp.eq.s32.totalorder %s77, 1
    %p756 = por %p754, %p755
    %p758 = scmp.ne.s32.totalorder %s741, %s757
    %p759 = scmp.eq.s32.totalorder %s77, 0
    %p760 = por %p758, %p759
    %p761 = scmp.le.s32.totalorder 1, %s71
    %p762 = scmp.lt.s32.totalorder %s71, 3
    %p763 = pnand %p761, %p762
    %p764 = pneg %p763
    // Predicated region
    $region9: #{forward.1} parent=5 // pred_check
      _
    $region10: #{forward.1} parent=5 // pred_check_branch
      %766 = sbr.rel (%p763) target = $region12
    $region11: #{forward.1} parent=5 // pred_region
      %s767 = ssub.s32 %s71, 1
      // Predicated region
      $region13: #{forward.1} parent=11 // pred_check
        %p768 = pneg %p118
      $region14: #{forward.1} parent=11 // pred_check_branch
        %770 = sbr.rel (%p768) target = $region16
      $region15: #{forward.1} parent=11 // pred_region
        _
      $region16: #{forward.1} parent=11 // pred_fallthru
        _
      // Predicated region
      $region17: #{forward.1} parent=11 // pred_check
        %p771 = pneg %p139
      $region18: #{forward.1} parent=11 // pred_check_branch
        %773 = sbr.rel (%p771) target = $region20
      $region19: #{forward.1} parent=11 // pred_region
        _
      $region20: #{forward.1} parent=11 // pred_fallthru
        _
      // Predicated region
      $region21: #{forward.1} parent=11 // pred_check
        %p774 = pneg %p160
      $region22: #{forward.1} parent=11 // pred_check_branch
        %776 = sbr.rel (%p774) target = $region24
      $region23: #{forward.1} parent=11 // pred_region
        _
      $region24: #{forward.1} parent=11 // pred_fallthru
        _
      // Predicated region
      $region25: #{forward.1} parent=11 // pred_check
        %p777 = pneg %p181
      $region26: #{forward.1} parent=11 // pred_check_branch
        %779 = sbr.rel (%p777) target = $region28
      $region27: #{forward.1} parent=11 // pred_region
        _
      $region28: #{forward.1} parent=11 // pred_fallthru
        _
      // Predicated region
      $region29: #{forward.1} parent=11 // pred_check
        %p780 = pneg %p202
      $region30: #{forward.1} parent=11 // pred_check_branch
        %782 = sbr.rel (%p780) target = $region32
      $region31: #{forward.1} parent=11 // pred_region
        _
      $region32: #{forward.1} parent=11 // pred_fallthru
        _
      // Predicated region
      $region33: #{forward.1} parent=11 // pred_check
        %p783 = pneg %p223
      $region34: #{forward.1} parent=11 // pred_check_branch
        %785 = sbr.rel (%p783) target = $region36
      $region35: #{forward.1} parent=11 // pred_region
        _
      $region36: #{forward.1} parent=11 // pred_fallthru
        _
      // Predicated region
      $region37: #{forward.1} parent=11 // pred_check
        %p786 = pneg %p244
      $region38: #{forward.1} parent=11 // pred_check_branch
        %788 = sbr.rel (%p786) target = $region40
      $region39: #{forward.1} parent=11 // pred_region
        _
      $region40: #{forward.1} parent=11 // pred_fallthru
        _
      // Predicated region
      $region41: #{forward.1} parent=11 // pred_check
        %p789 = pneg %p265
      $region42: #{forward.1} parent=11 // pred_check_branch
        %791 = sbr.rel (%p789) target = $region44
      $region43: #{forward.1} parent=11 // pred_region
        _
      $region44: #{forward.1} parent=11 // pred_fallthru
        _
      // Predicated region
      $region45: #{forward.1} parent=11 // pred_check
        %p792 = pneg %p286
      $region46: #{forward.1} parent=11 // pred_check_branch
        %794 = sbr.rel (%p792) target = $region48
      $region47: #{forward.1} parent=11 // pred_region
        _
      $region48: #{forward.1} parent=11 // pred_fallthru
        _
      // Predicated region
      $region49: #{forward.1} parent=11 // pred_check
        %p795 = pneg %p307
      $region50: #{forward.1} parent=11 // pred_check_branch
        %797 = sbr.rel (%p795) target = $region52
      $region51: #{forward.1} parent=11 // pred_region
        _
      $region52: #{forward.1} parent=11 // pred_fallthru
        _
      // Predicated region
      $region53: #{forward.1} parent=11 // pred_check
        %p798 = pneg %p328
      $region54: #{forward.1} parent=11 // pred_check_branch
        %800 = sbr.rel (%p798) target = $region56
      $region55: #{forward.1} parent=11 // pred_region
        _
      $region56: #{forward.1} parent=11 // pred_fallthru
        _
      // Predicated region
      $region57: #{forward.1} parent=11 // pred_check
        %p801 = pneg %p349
      $region58: #{forward.1} parent=11 // pred_check_branch
        %803 = sbr.rel (%p801) target = $region60
      $region59: #{forward.1} parent=11 // pred_region
        _
      $region60: #{forward.1} parent=11 // pred_fallthru
        _
      // Predicated region
      $region61: #{forward.1} parent=11 // pred_check
        %p804 = pneg %p370
      $region62: #{forward.1} parent=11 // pred_check_branch
        %806 = sbr.rel (%p804) target = $region64
      $region63: #{forward.1} parent=11 // pred_region
        _
      $region64: #{forward.1} parent=11 // pred_fallthru
        _
      // Predicated region
      $region65: #{forward.1} parent=11 // pred_check
        %p807 = pneg %p391
      $region66: #{forward.1} parent=11 // pred_check_branch
        %809 = sbr.rel (%p807) target = $region68
      $region67: #{forward.1} parent=11 // pred_region
        _
      $region68: #{forward.1} parent=11 // pred_fallthru
        _
      // Predicated region
      $region69: #{forward.1} parent=11 // pred_check
        %p810 = pneg %p412
      $region70: #{forward.1} parent=11 // pred_check_branch
        %812 = sbr.rel (%p810) target = $region72
      $region71: #{forward.1} parent=11 // pred_region
        _
      $region72: #{forward.1} parent=11 // pred_fallthru
        _
      // Predicated region
      $region73: #{forward.1} parent=11 // pred_check
        %p813 = pneg %p433
      $region74: #{forward.1} parent=11 // pred_check_branch
        %815 = sbr.rel (%p813) target = $region76
      $region75: #{forward.1} parent=11 // pred_region
        _
      $region76: #{forward.1} parent=11 // pred_fallthru
        _
      // Predicated region
      $region77: #{forward.1} parent=11 // pred_check
        %p816 = pneg %p454
      $region78: #{forward.1} parent=11 // pred_check_branch
        %818 = sbr.rel (%p816) target = $region80
      $region79: #{forward.1} parent=11 // pred_region
        _
      $region80: #{forward.1} parent=11 // pred_fallthru
        _
      // Predicated region
      $region81: #{forward.1} parent=11 // pred_check
        %p819 = pneg %p475
      $region82: #{forward.1} parent=11 // pred_check_branch
        %821 = sbr.rel (%p819) target = $region84
      $region83: #{forward.1} parent=11 // pred_region
        _
      $region84: #{forward.1} parent=11 // pred_fallthru
        _
      // Predicated region
      $region85: #{forward.1} parent=11 // pred_check
        %p822 = pneg %p496
      $region86: #{forward.1} parent=11 // pred_check_branch
        %824 = sbr.rel (%p822) target = $region88
      $region87: #{forward.1} parent=11 // pred_region
        _
      $region88: #{forward.1} parent=11 // pred_fallthru
        _
      // Predicated region
      $region89: #{forward.1} parent=11 // pred_check
        %p825 = pneg %p517
      $region90: #{forward.1} parent=11 // pred_check_branch
        %827 = sbr.rel (%p825) target = $region92
      $region91: #{forward.1} parent=11 // pred_region
        _
      $region92: #{forward.1} parent=11 // pred_fallthru
        _
      // Predicated region
      $region93: #{forward.1} parent=11 // pred_check
        %p828 = pneg %p538
      $region94: #{forward.1} parent=11 // pred_check_branch
        %830 = sbr.rel (%p828) target = $region96
      $region95: #{forward.1} parent=11 // pred_region
        _
      $region96: #{forward.1} parent=11 // pred_fallthru
        _
      // Predicated region
      $region97: #{forward.1} parent=11 // pred_check
        %p831 = pneg %p559
      $region98: #{forward.1} parent=11 // pred_check_branch
        %833 = sbr.rel (%p831) target = $region100
      $region99: #{forward.1} parent=11 // pred_region
        _
      $region100: #{forward.1} parent=11 // pred_fallthru
        _
      // Predicated region
      $region101: #{forward.1} parent=11 // pred_check
        %p834 = pneg %p580
      $region102: #{forward.1} parent=11 // pred_check_branch
        %836 = sbr.rel (%p834) target = $region104
      $region103: #{forward.1} parent=11 // pred_region
        _
      $region104: #{forward.1} parent=11 // pred_fallthru
        _
      // Predicated region
      $region105: #{forward.1} parent=11 // pred_check
        %p837 = pneg %p601
      $region106: #{forward.1} parent=11 // pred_check_branch
        %839 = sbr.rel (%p837) target = $region108
      $region107: #{forward.1} parent=11 // pred_region
        _
      $region108: #{forward.1} parent=11 // pred_fallthru
        _
      // Predicated region
      $region109: #{forward.1} parent=11 // pred_check
        %p840 = pneg %p622
      $region110: #{forward.1} parent=11 // pred_check_branch
        %842 = sbr.rel (%p840) target = $region112
      $region111: #{forward.1} parent=11 // pred_region
        _
      $region112: #{forward.1} parent=11 // pred_fallthru
        _
      // Predicated region
      $region113: #{forward.1} parent=11 // pred_check
        %p843 = pneg %p643
      $region114: #{forward.1} parent=11 // pred_check_branch
        %845 = sbr.rel (%p843) target = $region116
      $region115: #{forward.1} parent=11 // pred_region
        _
      $region116: #{forward.1} parent=11 // pred_fallthru
        _
      // Predicated region
      $region117: #{forward.1} parent=11 // pred_check
        %p846 = pneg %p664
      $region118: #{forward.1} parent=11 // pred_check_branch
        %848 = sbr.rel (%p846) target = $region120
      $region119: #{forward.1} parent=11 // pred_region
        _
      $region120: #{forward.1} parent=11 // pred_fallthru
        _
      // Predicated region
      $region121: #{forward.1} parent=11 // pred_check
        %p849 = pneg %p685
      $region122: #{forward.1} parent=11 // pred_check_branch
        %851 = sbr.rel (%p849) target = $region124
      $region123: #{forward.1} parent=11 // pred_region
        _
      $region124: #{forward.1} parent=11 // pred_fallthru
        _
      // Predicated region
      $region125: #{forward.1} parent=11 // pred_check
        %p852 = pneg %p706
      $region126: #{forward.1} parent=11 // pred_check_branch
        %854 = sbr.rel (%p852) target = $region128
      $region127: #{forward.1} parent=11 // pred_region
        _
      $region128: #{forward.1} parent=11 // pred_fallthru
        _
      // Predicated region
      $region129: #{forward.1} parent=11 // pred_check
        %p855 = pneg %p727
      $region130: #{forward.1} parent=11 // pred_check_branch
        %857 = sbr.rel (%p855) target = $region132
      $region131: #{forward.1} parent=11 // pred_region
        _
      $region132: #{forward.1} parent=11 // pred_fallthru
        _
    $region12: #{forward.1} parent=5 // pred_fallthru
      _
    %p858 = scmp.lt.s32.totalorder %s71, 2
    // Predicated region
    $region133: #{forward.1} parent=5 // pred_check
      %p859 = pneg %p858
    $region134: #{forward.1} parent=5 // pred_check_branch
      %861 = sbr.rel (%p859) target = $region136
    $region135: #{forward.1} parent=5 // pred_region
      // Predicated region
      $region137: #{forward.1} parent=135 // pred_check
        %p862 = pneg %p91
      $region138: #{forward.1} parent=135 // pred_check_branch
        %864 = sbr.rel (%p862) target = $region140
      $region139: #{forward.1} parent=135 // pred_region
        %p865 = scmp.lt.s32.totalorder %s71, 1
        %s866 = scalar_select %p865, %s71, 1
        %s867 = smul.addr %s866, 32
        %s868 = smul.addr %s867, 8
        %s869 = scalar_lea.vmem %s1, %s868
      $region140: #{forward.1} parent=135 // pred_fallthru
        _
    $region136: #{forward.1} parent=5 // pred_fallthru
      _
    %p870 = scmp.le.s32.totalorder 1, %s71
    %p871 = scmp.lt.s32.totalorder %s71, 3
    %p872 = pnand %p870, %p871
    %p873 = pneg %p872
    // Predicated region
    $region141: #{forward.1} parent=5 // pred_check
      _
    $region142: #{forward.1} parent=5 // pred_check_branch
      %875 = sbr.rel (%p872) target = $region144
    $region143: #{forward.1} parent=5 // pred_region
      %s876 = ssub.s32 %s71, 1
      %p877 = scmp.lt.s32.totalorder %s76, 1
      %s878 = scalar_select %p877, %s76, 1
      %s879 = smul.addr %s878, 32
      %s880 = smul.addr %s879, 8
      %s881 = scalar_lea.vmem %s1, %s880
      %p882 = pneg %p97
      %p883 = pneg %p94
      %p884 = pneg %p118
      %p885 = pneg %p115
      %p886 = pneg %p139
      %p887 = pneg %p136
      %p888 = pneg %p160
      %p889 = pneg %p157
      %p890 = pneg %p181
      %p891 = pneg %p178
      %p892 = pneg %p202
      %p893 = pneg %p199
      %p894 = pneg %p223
      %p895 = pneg %p220
      %p896 = pneg %p244
      %p897 = pneg %p241
      %p898 = pneg %p265
      %p899 = pneg %p262
      %p900 = pneg %p286
      %p901 = pneg %p283
      %p902 = pneg %p307
      %p903 = pneg %p304
      %p904 = pneg %p328
      %p905 = pneg %p325
      %p906 = pneg %p349
      %p907 = pneg %p346
      %p908 = pneg %p370
      %p909 = pneg %p367
      %p910 = pneg %p391
      %p911 = pneg %p388
      %p912 = pneg %p412
      %p913 = pneg %p409
      %p914 = pneg %p433
      %p915 = pneg %p430
      %p916 = pneg %p454
      %p917 = pneg %p451
      %p918 = pneg %p475
      %p919 = pneg %p472
      %p920 = pneg %p496
      %p921 = pneg %p493
      %p922 = pneg %p517
      %p923 = pneg %p514
      %p924 = pneg %p538
      %p925 = pneg %p535
      %p926 = pneg %p559
      %p927 = pneg %p556
      %p928 = pneg %p580
      %p929 = pneg %p577
      %p930 = pneg %p601
      %p931 = pneg %p598
      %p932 = pneg %p622
      %p933 = pneg %p619
      %p934 = pneg %p643
      %p935 = pneg %p640
      %p936 = pneg %p664
      %p937 = pneg %p661
      %p938 = pneg %p685
      %p939 = pneg %p682
      %p940 = pneg %p706
      %p941 = pneg %p703
      %p942 = pneg %p727
      %p943 = pneg %p724
      %p944 = pneg %p753
      %p945 = pneg %p750
      %p946 = scmp.lt.s32.totalorder %s76, 1
      %s947 = scalar_select %p946, %s76, 1
      %s948 = scalar_lea.vmem %s63, %s947
      %p949 = scmp.lt.s32.totalorder %s76, 1
      %s950 = scalar_select %p949, %s76, 1
      %s951 = smul.addr %s950, 32
      %s952 = smul.addr %s951, 8
      %s953 = scalar_lea.vmem %s1, %s952
      %p954 = scmp.lt.s32.totalorder %s76, 1
      %s955 = scalar_select %p954, %s76, 1
      %s956 = scalar_lea.vmem %s63, %s955
      %v957 = vld [vmem:[%s953] sm:$0xff]
      %v958 = vld [vmem:[%s953 + $0x8] sm:$0xff]
      %v959 = vld [vmem:[%s953 + $0x10] sm:$0xff]
      %v960 = vld [vmem:[%s953 + $0x18] sm:$0xff]
      %v961 = vld [vmem:[%s953 + $0x20] sm:$0xff]
      %v962 = vld [vmem:[%s953 + $0x28] sm:$0xff]
      %v963 = vld [vmem:[%s953 + $0x30] sm:$0xff]
      %v964 = vld [vmem:[%s953 + $0x38] sm:$0xff]
      %v965 = vld [vmem:[%s953 + $0x40] sm:$0xff]
      %v966 = vld [vmem:[%s953 + $0x48] sm:$0xff]
      %v967 = vld [vmem:[%s953 + $0x50] sm:$0xff]
      %v968 = vld [vmem:[%s953 + $0x58] sm:$0xff]
      %v969 = vld [vmem:[%s953 + $0x60] sm:$0xff]
      %v970 = vld [vmem:[%s953 + $0x68] sm:$0xff]
      %v971 = vld [vmem:[%s953 + $0x70] sm:$0xff]
      %v972 = vld [vmem:[%s953 + $0x78] sm:$0xff]
      %v973 = vld [vmem:[%s953 + $0x80] sm:$0xff]
      %v974 = vld [vmem:[%s953 + $0x88] sm:$0xff]
      %v975 = vld [vmem:[%s953 + $0x90] sm:$0xff]
      %v976 = vld [vmem:[%s953 + $0x98] sm:$0xff]
      %v977 = vld [vmem:[%s953 + $0xa0] sm:$0xff]
      %v978 = vld [vmem:[%s953 + $0xa8] sm:$0xff]
      %v979 = vld [vmem:[%s953 + $0xb0] sm:$0xff]
      %v980 = vld [vmem:[%s953 + $0xb8] sm:$0xff]
      %v981 = vld [vmem:[%s953 + $0xc0] sm:$0xff]
      %v982 = vld [vmem:[%s953 + $0xc8] sm:$0xff]
      %v983 = vld [vmem:[%s953 + $0xd0] sm:$0xff]
      %v984 = vld [vmem:[%s953 + $0xd8] sm:$0xff]
      %v985 = vld [vmem:[%s953 + $0xe0] sm:$0xff]
      %v986 = vld [vmem:[%s953 + $0xe8] sm:$0xff]
      %v987 = vld [vmem:[%s953 + $0xf0] sm:$0xff]
      %v988 = vld [vmem:[%s953 + $0xf8] sm:$0xff]
      %v989 = vld [vmem:[%s3] sm:$0xff]
      %v990 = vld [vmem:[%s3 + $0x8] sm:$0xff]
      %v991 = vld [vmem:[%s3 + $0x10] sm:$0xff]
      %v992 = vld [vmem:[%s3 + $0x18] sm:$0xff]
      %v993 = vld [vmem:[%s3 + $0x20] sm:$0xff]
      %v994 = vld [vmem:[%s3 + $0x28] sm:$0xff]
      %v995 = vld [vmem:[%s3 + $0x30] sm:$0xff]
      %v996 = vld [vmem:[%s3 + $0x38] sm:$0xff]
      %v997 = vld [vmem:[%s3 + $0x40] sm:$0xff]
      %v998 = vld [vmem:[%s3 + $0x48] sm:$0xff]
      %v999 = vld [vmem:[%s3 + $0x50] sm:$0xff]
      %v1000 = vld [vmem:[%s3 + $0x58] sm:$0xff]
      %v1001 = vld [vmem:[%s3 + $0x60] sm:$0xff]
      %v1002 = vld [vmem:[%s3 + $0x68] sm:$0xff]
      %v1003 = vld [vmem:[%s3 + $0x70] sm:$0xff]
      %v1004 = vld [vmem:[%s3 + $0x78] sm:$0xff]
      %v1005 = vld [vmem:[%s3 + $0x80] sm:$0xff]
      %v1006 = vld [vmem:[%s3 + $0x88] sm:$0xff]
      %v1007 = vld [vmem:[%s3 + $0x90] sm:$0xff]
      %v1008 = vld [vmem:[%s3 + $0x98] sm:$0xff]
      %v1009 = vld [vmem:[%s3 + $0xa0] sm:$0xff]
      %v1010 = vld [vmem:[%s3 + $0xa8] sm:$0xff]
      %v1011 = vld [vmem:[%s3 + $0xb0] sm:$0xff]
      %v1012 = vld [vmem:[%s3 + $0xb8] sm:$0xff]
      %v1013 = vld [vmem:[%s3 + $0xc0] sm:$0xff]
      %v1014 = vld [vmem:[%s3 + $0xc8] sm:$0xff]
      %v1015 = vld [vmem:[%s3 + $0xd0] sm:$0xff]
      %v1016 = vld [vmem:[%s3 + $0xd8] sm:$0xff]
      %v1017 = vld [vmem:[%s3 + $0xe0] sm:$0xff]
      %v1018 = vld [vmem:[%s3 + $0xe8] sm:$0xff]
      %v1019 = vld [vmem:[%s3 + $0xf0] sm:$0xff]
      %v1020 = vld [vmem:[%s3 + $0xf8] sm:$0xff]
      %v1021 = vld [vmem:[%s5] sm:$0xff]
      %v1022 = vld [vmem:[%s5 + $0x8] sm:$0xff]
      %v1023 = vld [vmem:[%s5 + $0x10] sm:$0xff]
      %v1024 = vld [vmem:[%s5 + $0x18] sm:$0xff]
      %v1025 = vld [vmem:[%s5 + $0x20] sm:$0xff]
      %v1026 = vld [vmem:[%s5 + $0x28] sm:$0xff]
      %v1027 = vld [vmem:[%s5 + $0x30] sm:$0xff]
      %v1028 = vld [vmem:[%s5 + $0x38] sm:$0xff]
      %v1029 = vld [vmem:[%s5 + $0x40] sm:$0xff]
      %v1030 = vld [vmem:[%s5 + $0x48] sm:$0xff]
      %v1031 = vld [vmem:[%s5 + $0x50] sm:$0xff]
      %v1032 = vld [vmem:[%s5 + $0x58] sm:$0xff]
      %v1033 = vld [vmem:[%s5 + $0x60] sm:$0xff]
      %v1034 = vld [vmem:[%s5 + $0x68] sm:$0xff]
      %v1035 = vld [vmem:[%s5 + $0x70] sm:$0xff]
      %v1036 = vld [vmem:[%s5 + $0x78] sm:$0xff]
      %v1037 = vld [vmem:[%s5 + $0x80] sm:$0xff]
      %v1038 = vld [vmem:[%s5 + $0x88] sm:$0xff]
      %v1039 = vld [vmem:[%s5 + $0x90] sm:$0xff]
      %v1040 = vld [vmem:[%s5 + $0x98] sm:$0xff]
      %v1041 = vld [vmem:[%s5 + $0xa0] sm:$0xff]
      %v1042 = vld [vmem:[%s5 + $0xa8] sm:$0xff]
      %v1043 = vld [vmem:[%s5 + $0xb0] sm:$0xff]
      %v1044 = vld [vmem:[%s5 + $0xb8] sm:$0xff]
      %v1045 = vld [vmem:[%s5 + $0xc0] sm:$0xff]
      %v1046 = vld [vmem:[%s5 + $0xc8] sm:$0xff]
      %v1047 = vld [vmem:[%s5 + $0xd0] sm:$0xff]
      %v1048 = vld [vmem:[%s5 + $0xd8] sm:$0xff]
      %v1049 = vld [vmem:[%s5 + $0xe0] sm:$0xff]
      %v1050 = vld [vmem:[%s5 + $0xe8] sm:$0xff]
      %v1051 = vld [vmem:[%s5 + $0xf0] sm:$0xff]
      %v1052 = vld [vmem:[%s5 + $0xf8] sm:$0xff]
      %v1053 = vld [vmem:[%s7] sm:$0x3]
      %v1054 = vld [vmem:[%s9] sm:$0x1]
      %1056 = vset.pattern.permute.xlu0 0
      %1057 = vperm.xlu0 %1056, %v957
      %v1058 = vpop.permute.xlu0 %1057
      %1061 = vset.pattern.permute.xlu0 0
      %1062 = vperm.xlu0 %1061, %v958
      %v1063 = vpop.permute.xlu0 %1062
      %1066 = vset.pattern.permute.xlu0 0
      %1067 = vperm.xlu0 %1066, %v959
      %v1068 = vpop.permute.xlu0 %1067
      %1071 = vset.pattern.permute.xlu0 0
      %1072 = vperm.xlu0 %1071, %v960
      %v1073 = vpop.permute.xlu0 %1072
      %1076 = vset.pattern.permute.xlu0 0
      %1077 = vperm.xlu0 %1076, %v961
      %v1078 = vpop.permute.xlu0 %1077
      %1081 = vset.pattern.permute.xlu0 0
      %1082 = vperm.xlu0 %1081, %v962
      %v1083 = vpop.permute.xlu0 %1082
      %1086 = vset.pattern.permute.xlu0 0
      %1087 = vperm.xlu0 %1086, %v963
      %v1088 = vpop.permute.xlu0 %1087
      %1091 = vset.pattern.permute.xlu0 0
      %1092 = vperm.xlu0 %1091, %v964
      %v1093 = vpop.permute.xlu0 %1092
      %1096 = vset.pattern.permute.xlu0 0
      %1097 = vperm.xlu0 %1096, %v965
      %v1098 = vpop.permute.xlu0 %1097
      %1101 = vset.pattern.permute.xlu0 0
      %1102 = vperm.xlu0 %1101, %v966
      %v1103 = vpop.permute.xlu0 %1102
      %1106 = vset.pattern.permute.xlu0 0
      %1107 = vperm.xlu0 %1106, %v967
      %v1108 = vpop.permute.xlu0 %1107
      %1111 = vset.pattern.permute.xlu0 0
      %1112 = vperm.xlu0 %1111, %v968
      %v1113 = vpop.permute.xlu0 %1112
      %1116 = vset.pattern.permute.xlu0 0
      %1117 = vperm.xlu0 %1116, %v969
      %v1118 = vpop.permute.xlu0 %1117
      %1121 = vset.pattern.permute.xlu0 0
      %1122 = vperm.xlu0 %1121, %v970
      %v1123 = vpop.permute.xlu0 %1122
      %1126 = vset.pattern.permute.xlu0 0
      %1127 = vperm.xlu0 %1126, %v971
      %v1128 = vpop.permute.xlu0 %1127
      %1131 = vset.pattern.permute.xlu0 0
      %1132 = vperm.xlu0 %1131, %v972
      %v1133 = vpop.permute.xlu0 %1132
      %1136 = vset.pattern.permute.xlu0 0
      %1137 = vperm.xlu0 %1136, %v973
      %v1138 = vpop.permute.xlu0 %1137
      %1141 = vset.pattern.permute.xlu0 0
      %1142 = vperm.xlu0 %1141, %v974
      %v1143 = vpop.permute.xlu0 %1142
      %1146 = vset.pattern.permute.xlu0 0
      %1147 = vperm.xlu0 %1146, %v975
      %v1148 = vpop.permute.xlu0 %1147
      %1151 = vset.pattern.permute.xlu0 0
      %1152 = vperm.xlu0 %1151, %v976
      %v1153 = vpop.permute.xlu0 %1152
      %1156 = vset.pattern.permute.xlu0 0
      %1157 = vperm.xlu0 %1156, %v977
      %v1158 = vpop.permute.xlu0 %1157
      %1161 = vset.pattern.permute.xlu0 0
      %1162 = vperm.xlu0 %1161, %v978
      %v1163 = vpop.permute.xlu0 %1162
      %1166 = vset.pattern.permute.xlu0 0
      %1167 = vperm.xlu0 %1166, %v979
      %v1168 = vpop.permute.xlu0 %1167
      %1171 = vset.pattern.permute.xlu0 0
      %1172 = vperm.xlu0 %1171, %v980
      %v1173 = vpop.permute.xlu0 %1172
      %1176 = vset.pattern.permute.xlu0 0
      %1177 = vperm.xlu0 %1176, %v981
      %v1178 = vpop.permute.xlu0 %1177
      %1181 = vset.pattern.permute.xlu0 0
      %1182 = vperm.xlu0 %1181, %v982
      %v1183 = vpop.permute.xlu0 %1182
      %1186 = vset.pattern.permute.xlu0 0
      %1187 = vperm.xlu0 %1186, %v983
      %v1188 = vpop.permute.xlu0 %1187
      %1191 = vset.pattern.permute.xlu0 0
      %1192 = vperm.xlu0 %1191, %v984
      %v1193 = vpop.permute.xlu0 %1192
      %1196 = vset.pattern.permute.xlu0 0
      %1197 = vperm.xlu0 %1196, %v985
      %v1198 = vpop.permute.xlu0 %1197
      %1201 = vset.pattern.permute.xlu0 0
      %1202 = vperm.xlu0 %1201, %v986
      %v1203 = vpop.permute.xlu0 %1202
      %1206 = vset.pattern.permute.xlu0 0
      %1207 = vperm.xlu0 %1206, %v987
      %v1208 = vpop.permute.xlu0 %1207
      %1211 = vset.pattern.permute.xlu0 0
      %1212 = vperm.xlu0 %1211, %v988
      %v1213 = vpop.permute.xlu0 %1212
      %v1215 = vlaneseq
      %v1216 = vshrl.u32 %v1215, 7
      %v1217 = vsub.s32 0, %v1216
      %v1218 = vrot.slane %v1053, %v1217
      %v1219 = vmul.f32 %v1058, %v1218
      %v1220 = vmul.f32 %v1063, %v1218
      %v1221 = vmul.f32 %v1068, %v1218
      %v1222 = vmul.f32 %v1073, %v1218
      %v1223 = vmul.f32 %v1078, %v1218
      %v1224 = vmul.f32 %v1083, %v1218
      %v1225 = vmul.f32 %v1088, %v1218
      %v1226 = vmul.f32 %v1093, %v1218
      %v1227 = vmul.f32 %v1098, %v1218
      %v1228 = vmul.f32 %v1103, %v1218
      %v1229 = vmul.f32 %v1108, %v1218
      %v1230 = vmul.f32 %v1113, %v1218
      %v1231 = vmul.f32 %v1118, %v1218
      %v1232 = vmul.f32 %v1123, %v1218
      %v1233 = vmul.f32 %v1128, %v1218
      %v1234 = vmul.f32 %v1133, %v1218
      %v1235 = vmul.f32 %v1138, %v1218
      %v1236 = vmul.f32 %v1143, %v1218
      %v1237 = vmul.f32 %v1148, %v1218
      %v1238 = vmul.f32 %v1153, %v1218
      %v1239 = vmul.f32 %v1158, %v1218
      %v1240 = vmul.f32 %v1163, %v1218
      %v1241 = vmul.f32 %v1168, %v1218
      %v1242 = vmul.f32 %v1173, %v1218
      %v1243 = vmul.f32 %v1178, %v1218
      %v1244 = vmul.f32 %v1183, %v1218
      %v1245 = vmul.f32 %v1188, %v1218
      %v1246 = vmul.f32 %v1193, %v1218
      %v1247 = vmul.f32 %v1198, %v1218
      %v1248 = vmul.f32 %v1203, %v1218
      %v1249 = vmul.f32 %v1208, %v1218
      %v1250 = vmul.f32 %v1213, %v1218
      %1252 = vset.pattern.permute.xlu0 0
      %1253 = vperm.xlu0 %1252, %v989
      %v1254 = vpop.permute.xlu0 %1253
      %1257 = vset.pattern.permute.xlu0 0
      %1258 = vperm.xlu0 %1257, %v990
      %v1259 = vpop.permute.xlu0 %1258
      %1262 = vset.pattern.permute.xlu0 0
      %1263 = vperm.xlu0 %1262, %v991
      %v1264 = vpop.permute.xlu0 %1263
      %1267 = vset.pattern.permute.xlu0 0
      %1268 = vperm.xlu0 %1267, %v992
      %v1269 = vpop.permute.xlu0 %1268
      %1272 = vset.pattern.permute.xlu0 0
      %1273 = vperm.xlu0 %1272, %v993
      %v1274 = vpop.permute.xlu0 %1273
      %1277 = vset.pattern.permute.xlu0 0
      %1278 = vperm.xlu0 %1277, %v994
      %v1279 = vpop.permute.xlu0 %1278
      %1282 = vset.pattern.permute.xlu0 0
      %1283 = vperm.xlu0 %1282, %v995
      %v1284 = vpop.permute.xlu0 %1283
      %1287 = vset.pattern.permute.xlu0 0
      %1288 = vperm.xlu0 %1287, %v996
      %v1289 = vpop.permute.xlu0 %1288
      %1292 = vset.pattern.permute.xlu0 0
      %1293 = vperm.xlu0 %1292, %v997
      %v1294 = vpop.permute.xlu0 %1293
      %1297 = vset.pattern.permute.xlu0 0
      %1298 = vperm.xlu0 %1297, %v998
      %v1299 = vpop.permute.xlu0 %1298
      %1302 = vset.pattern.permute.xlu0 0
      %1303 = vperm.xlu0 %1302, %v999
      %v1304 = vpop.permute.xlu0 %1303
      %1307 = vset.pattern.permute.xlu0 0
      %1308 = vperm.xlu0 %1307, %v1000
      %v1309 = vpop.permute.xlu0 %1308
      %1312 = vset.pattern.permute.xlu0 0
      %1313 = vperm.xlu0 %1312, %v1001
      %v1314 = vpop.permute.xlu0 %1313
      %1317 = vset.pattern.permute.xlu0 0
      %1318 = vperm.xlu0 %1317, %v1002
      %v1319 = vpop.permute.xlu0 %1318
      %1322 = vset.pattern.permute.xlu0 0
      %1323 = vperm.xlu0 %1322, %v1003
      %v1324 = vpop.permute.xlu0 %1323
      %1327 = vset.pattern.permute.xlu0 0
      %1328 = vperm.xlu0 %1327, %v1004
      %v1329 = vpop.permute.xlu0 %1328
      %1332 = vset.pattern.permute.xlu0 0
      %1333 = vperm.xlu0 %1332, %v1005
      %v1334 = vpop.permute.xlu0 %1333
      %1337 = vset.pattern.permute.xlu0 0
      %1338 = vperm.xlu0 %1337, %v1006
      %v1339 = vpop.permute.xlu0 %1338
      %1342 = vset.pattern.permute.xlu0 0
      %1343 = vperm.xlu0 %1342, %v1007
      %v1344 = vpop.permute.xlu0 %1343
      %1347 = vset.pattern.permute.xlu0 0
      %1348 = vperm.xlu0 %1347, %v1008
      %v1349 = vpop.permute.xlu0 %1348
      %1352 = vset.pattern.permute.xlu0 0
      %1353 = vperm.xlu0 %1352, %v1009
      %v1354 = vpop.permute.xlu0 %1353
      %1357 = vset.pattern.permute.xlu0 0
      %1358 = vperm.xlu0 %1357, %v1010
      %v1359 = vpop.permute.xlu0 %1358
      %1362 = vset.pattern.permute.xlu0 0
      %1363 = vperm.xlu0 %1362, %v1011
      %v1364 = vpop.permute.xlu0 %1363
      %1367 = vset.pattern.permute.xlu0 0
      %1368 = vperm.xlu0 %1367, %v1012
      %v1369 = vpop.permute.xlu0 %1368
      %1372 = vset.pattern.permute.xlu0 0
      %1373 = vperm.xlu0 %1372, %v1013
      %v1374 = vpop.permute.xlu0 %1373
      %1377 = vset.pattern.permute.xlu0 0
      %1378 = vperm.xlu0 %1377, %v1014
      %v1379 = vpop.permute.xlu0 %1378
      %1382 = vset.pattern.permute.xlu0 0
      %1383 = vperm.xlu0 %1382, %v1015
      %v1384 = vpop.permute.xlu0 %1383
      %1387 = vset.pattern.permute.xlu0 0
      %1388 = vperm.xlu0 %1387, %v1016
      %v1389 = vpop.permute.xlu0 %1388
      %1392 = vset.pattern.permute.xlu0 0
      %1393 = vperm.xlu0 %1392, %v1017
      %v1394 = vpop.permute.xlu0 %1393
      %1397 = vset.pattern.permute.xlu0 0
      %1398 = vperm.xlu0 %1397, %v1018
      %v1399 = vpop.permute.xlu0 %1398
      %1402 = vset.pattern.permute.xlu0 0
      %1403 = vperm.xlu0 %1402, %v1019
      %v1404 = vpop.permute.xlu0 %1403
      %1407 = vset.pattern.permute.xlu0 0
      %1408 = vperm.xlu0 %1407, %v1020
      %v1409 = vpop.permute.xlu0 %1408
      %v1411 = vlaneseq
      %v1412 = vshrl.u32 %v1411, 7
      %v1413 = vsub.s32 1, %v1412
      %v1414 = vrot.slane %v1053, %v1413
      %v1415 = vmul.f32 %v1254, %v1414
      %v1416 = vmul.f32 %v1259, %v1414
      %v1417 = vmul.f32 %v1264, %v1414
      %v1418 = vmul.f32 %v1269, %v1414
      %v1419 = vmul.f32 %v1274, %v1414
      %v1420 = vmul.f32 %v1279, %v1414
      %v1421 = vmul.f32 %v1284, %v1414
      %v1422 = vmul.f32 %v1289, %v1414
      %v1423 = vmul.f32 %v1294, %v1414
      %v1424 = vmul.f32 %v1299, %v1414
      %v1425 = vmul.f32 %v1304, %v1414
      %v1426 = vmul.f32 %v1309, %v1414
      %v1427 = vmul.f32 %v1314, %v1414
      %v1428 = vmul.f32 %v1319, %v1414
      %v1429 = vmul.f32 %v1324, %v1414
      %v1430 = vmul.f32 %v1329, %v1414
      %v1431 = vmul.f32 %v1334, %v1414
      %v1432 = vmul.f32 %v1339, %v1414
      %v1433 = vmul.f32 %v1344, %v1414
      %v1434 = vmul.f32 %v1349, %v1414
      %v1435 = vmul.f32 %v1354, %v1414
      %v1436 = vmul.f32 %v1359, %v1414
      %v1437 = vmul.f32 %v1364, %v1414
      %v1438 = vmul.f32 %v1369, %v1414
      %v1439 = vmul.f32 %v1374, %v1414
      %v1440 = vmul.f32 %v1379, %v1414
      %v1441 = vmul.f32 %v1384, %v1414
      %v1442 = vmul.f32 %v1389, %v1414
      %v1443 = vmul.f32 %v1394, %v1414
      %v1444 = vmul.f32 %v1399, %v1414
      %v1445 = vmul.f32 %v1404, %v1414
      %v1446 = vmul.f32 %v1409, %v1414
      %v1447 = vadd.f32 %v1219, %v1415
      %v1448 = vadd.f32 %v1220, %v1416
      %v1449 = vadd.f32 %v1221, %v1417
      %v1450 = vadd.f32 %v1222, %v1418
      %v1451 = vadd.f32 %v1223, %v1419
      %v1452 = vadd.f32 %v1224, %v1420
      %v1453 = vadd.f32 %v1225, %v1421
      %v1454 = vadd.f32 %v1226, %v1422
      %v1455 = vadd.f32 %v1227, %v1423
      %v1456 = vadd.f32 %v1228, %v1424
      %v1457 = vadd.f32 %v1229, %v1425
      %v1458 = vadd.f32 %v1230, %v1426
      %v1459 = vadd.f32 %v1231, %v1427
      %v1460 = vadd.f32 %v1232, %v1428
      %v1461 = vadd.f32 %v1233, %v1429
      %v1462 = vadd.f32 %v1234, %v1430
      %v1463 = vadd.f32 %v1235, %v1431
      %v1464 = vadd.f32 %v1236, %v1432
      %v1465 = vadd.f32 %v1237, %v1433
      %v1466 = vadd.f32 %v1238, %v1434
      %v1467 = vadd.f32 %v1239, %v1435
      %v1468 = vadd.f32 %v1240, %v1436
      %v1469 = vadd.f32 %v1241, %v1437
      %v1470 = vadd.f32 %v1242, %v1438
      %v1471 = vadd.f32 %v1243, %v1439
      %v1472 = vadd.f32 %v1244, %v1440
      %v1473 = vadd.f32 %v1245, %v1441
      %v1474 = vadd.f32 %v1246, %v1442
      %v1475 = vadd.f32 %v1247, %v1443
      %v1476 = vadd.f32 %v1248, %v1444
      %v1477 = vadd.f32 %v1249, %v1445
      %v1478 = vadd.f32 %v1250, %v1446
      %v1480 = vlaneseq
      %v1481 = vshrl.u32 %v1480, 7
      %v1482 = vsub.s32 0, %v1481
      %v1483 = vrot.slane %v1054, %v1482
      %v1485 = vadd.f32 %v1447, %v1483
      %v1486 = vadd.f32 %v1448, %v1483
      %v1487 = vadd.f32 %v1449, %v1483
      %v1488 = vadd.f32 %v1450, %v1483
      %v1489 = vadd.f32 %v1451, %v1483
      %v1490 = vadd.f32 %v1452, %v1483
      %v1491 = vadd.f32 %v1453, %v1483
      %v1492 = vadd.f32 %v1454, %v1483
      %v1493 = vadd.f32 %v1455, %v1483
      %v1494 = vadd.f32 %v1456, %v1483
      %v1495 = vadd.f32 %v1457, %v1483
      %v1496 = vadd.f32 %v1458, %v1483
      %v1497 = vadd.f32 %v1459, %v1483
      %v1498 = vadd.f32 %v1460, %v1483
      %v1499 = vadd.f32 %v1461, %v1483
      %v1500 = vadd.f32 %v1462, %v1483
      %v1501 = vadd.f32 %v1463, %v1483
      %v1502 = vadd.f32 %v1464, %v1483
      %v1503 = vadd.f32 %v1465, %v1483
      %v1504 = vadd.f32 %v1466, %v1483
      %v1505 = vadd.f32 %v1467, %v1483
      %v1506 = vadd.f32 %v1468, %v1483
      %v1507 = vadd.f32 %v1469, %v1483
      %v1508 = vadd.f32 %v1470, %v1483
      %v1509 = vadd.f32 %v1471, %v1483
      %v1510 = vadd.f32 %v1472, %v1483
      %v1511 = vadd.f32 %v1473, %v1483
      %v1512 = vadd.f32 %v1474, %v1483
      %v1513 = vadd.f32 %v1475, %v1483
      %v1514 = vadd.f32 %v1476, %v1483
      %v1515 = vadd.f32 %v1477, %v1483
      %v1516 = vadd.f32 %v1478, %v1483
      %v1517 = vld [vmem:[%s11] sm:$0xff]
      %v1518 = vld [vmem:[%s11 + $0x8] sm:$0xff]
      %v1519 = vld [vmem:[%s11 + $0x10] sm:$0xff]
      %v1520 = vld [vmem:[%s11 + $0x18] sm:$0xff]
      %v1521 = vld [vmem:[%s13] sm:$0x1]
      %v1522 = vld [vmem:[%s15] sm:$0xff]
      %v1523 = vld [vmem:[%s15 + $0x8] sm:$0xff]
      %v1524 = vld [vmem:[%s15 + $0x10] sm:$0xff]
      %v1525 = vld [vmem:[%s15 + $0x18] sm:$0xff]
      %v1526 = vld [vmem:[%s15 + $0x20] sm:$0xff]
      %v1527 = vld [vmem:[%s15 + $0x28] sm:$0xff]
      %v1528 = vld [vmem:[%s15 + $0x30] sm:$0xff]
      %v1529 = vld [vmem:[%s15 + $0x38] sm:$0xff]
      %v1530 = vld [vmem:[%s17] sm:$0x1]
      %v1531 = vld [vmem:[%s19] sm:$0xff]
      %v1532 = vld [vmem:[%s19 + $0x8] sm:$0xff]
      %v1533 = vld [vmem:[%s19 + $0x10] sm:$0xff]
      %v1534 = vld [vmem:[%s19 + $0x18] sm:$0xff]
      %v1535 = vld [vmem:[%s21] sm:$0xff]
      %v1536 = vld [vmem:[%s21 + $0x8] sm:$0xff]
      %v1537 = vld [vmem:[%s21 + $0x10] sm:$0xff]
      %v1538 = vld [vmem:[%s21 + $0x18] sm:$0xff]
      %v1539 = vld [vmem:[%s23] sm:$0x1]
      %v1541 = vlaneseq
      %v1542 = vshrl.u32 %v1541, 7
      %v1543 = vsub.s32 0, %v1542
      %v1544 = vrot.slane %v1521, %v1543
      %vm1546 = vcmask 261120
      %v1548 = vsel %vm1546, %v1485, 0
      %v1551 = vsel %vm1546, %v1486, 0
      %v1554 = vsel %vm1546, %v1487, 0
      %v1557 = vsel %vm1546, %v1488, 0
      %v1560 = vsel %vm1546, %v1489, 0
      %v1563 = vsel %vm1546, %v1490, 0
      %v1566 = vsel %vm1546, %v1491, 0
      %v1569 = vsel %vm1546, %v1492, 0
      %v1572 = vsel %vm1546, %v1493, 0
      %v1575 = vsel %vm1546, %v1494, 0
      %v1578 = vsel %vm1546, %v1495, 0
      %v1581 = vsel %vm1546, %v1496, 0
      %v1584 = vsel %vm1546, %v1497, 0
      %v1587 = vsel %vm1546, %v1498, 0
      %v1590 = vsel %vm1546, %v1499, 0
      %v1593 = vsel %vm1546, %v1500, 0
      %v1596 = vsel %vm1546, %v1501, 0
      %v1599 = vsel %vm1546, %v1502, 0
      %v1602 = vsel %vm1546, %v1503, 0
      %v1605 = vsel %vm1546, %v1504, 0
      %v1608 = vsel %vm1546, %v1505, 0
      %v1611 = vsel %vm1546, %v1506, 0
      %v1614 = vsel %vm1546, %v1507, 0
      %v1617 = vsel %vm1546, %v1508, 0
      %v1620 = vsel %vm1546, %v1509, 0
      %v1623 = vsel %vm1546, %v1510, 0
      %v1626 = vsel %vm1546, %v1511, 0
      %v1629 = vsel %vm1546, %v1512, 0
      %v1632 = vsel %vm1546, %v1513, 0
      %v1635 = vsel %vm1546, %v1514, 0
      %v1638 = vsel %vm1546, %v1515, 0
      %v1641 = vsel %vm1546, %v1516, 0
      %1643 = vmatprep.subr.mxu0 0.0
      %1644 = vmatpush1.msra.mxu0 %v1517
      %1645 = vmatprep.subr.mxu0 0.0
      %1646 = vmatpush1.msra.mxu0 %v1518
      %1647 = vmatprep.subr.mxu0 0.0
      %1648 = vmatpush1.msra.mxu0 %v1519
      %1649 = vmatprep.subr.mxu0 0.0
      %1650 = vmatpush1.msra.mxu0 %v1520
      %1651 = vmatprep.subr.mxu0 0.0
      %1652 = vmatpush1.msra.mxu0 0.0
      %1653 = vmatprep.subr.mxu0 0.0
      %1654 = vmatpush1.msra.mxu0 0.0
      %1655 = vmatprep.subr.mxu0 0.0
      %1656 = vmatpush1.msra.mxu0 0.0
      %1657 = vmatprep.subr.mxu0 0.0
      %1658 = vmatpush1.msra.mxu0 0.0
      %1659 = vmatprep.subr.mxu0 0.0
      %1660 = vmatpush1.msra.mxu0 0.0
      %1661 = vmatprep.subr.mxu0 0.0
      %1662 = vmatpush1.msra.mxu0 0.0
      %1663 = vmatprep.subr.mxu0 0.0
      %1664 = vmatpush1.msra.mxu0 0.0
      %1665 = vmatprep.subr.mxu0 0.0
      %1666 = vmatpush1.msra.mxu0 0.0
      %1667 = vmatprep.subr.mxu0 0.0
      %1668 = vmatpush1.msra.mxu0 0.0
      %1669 = vmatprep.subr.mxu0 0.0
      %1670 = vmatpush1.msra.mxu0 0.0
      %1671 = vmatprep.subr.mxu0 0.0
      %1672 = vmatpush1.msra.mxu0 0.0
      %1673 = vmatprep.subr.mxu0 0.0
      %1674 = vmatpush1.msra.mxu0 0.0
      %1675 = vmatprep.subr.mxu0 0.0
      %1676 = vmatpush1.msra.mxu0 0.0
      %1677 = vmatprep.subr.mxu0 0.0
      %1678 = vmatpush1.msra.mxu0 0.0
      %1679 = vmatprep.subr.mxu0 0.0
      %1680 = vmatpush1.msra.mxu0 0.0
      %1681 = vmatprep.subr.mxu0 0.0
      %1682 = vmatpush1.msra.mxu0 0.0
      %1683 = vmatprep.subr.mxu0 0.0
      %1684 = vmatpush1.msra.mxu0 0.0
      %1685 = vmatprep.subr.mxu0 0.0
      %1686 = vmatpush1.msra.mxu0 0.0
      %1687 = vmatprep.subr.mxu0 0.0
      %1688 = vmatpush1.msra.mxu0 0.0
      %1689 = vmatprep.subr.mxu0 0.0
      %1690 = vmatpush1.msra.mxu0 0.0
      %1691 = vmatprep.subr.mxu0 0.0
      %1692 = vmatpush1.msra.mxu0 0.0
      %1693 = vmatprep.subr.mxu0 0.0
      %1694 = vmatpush1.msra.mxu0 0.0
      %1695 = vmatprep.subr.mxu0 0.0
      %1696 = vmatpush1.msra.mxu0 0.0
      %1697 = vmatprep.subr.mxu0 0.0
      %1698 = vmatpush1.msra.mxu0 0.0
      %1699 = vmatprep.subr.mxu0 0.0
      %1700 = vmatpush1.msra.mxu0 0.0
      %1701 = vmatprep.subr.mxu0 0.0
      %1702 = vmatpush1.msra.mxu0 0.0
      %1703 = vmatprep.subr.mxu0 0.0
      %1704 = vmatpush1.msra.mxu0 0.0
      %1705 = vmatprep.subr.mxu0 0.0
      %1706 = vmatpush1.msra.mxu0 0.0
      %1707 = vmatprep.mubr.f32.mxu0 0.0
      %1708 = vmatmul.mubr.f32.gmra.mrb[0].mxu0 %v1548
      %v1709 = vpop.f32.mrb[0].mxu0
      %v1710 = vadd.f32 %v1544, %v1709
      %v1711 = vpop.f32.mrb[0].mxu0
      %1712 = vmatprep.mubr.f32.mxu0 0.0
      %1713 = vmatmul.mubr.f32.gmra.mrb[0].mxu0 %v1551
      %v1714 = vpop.f32.mrb[0].mxu0
      %v1715 = vadd.f32 %v1544, %v1714
      %v1716 = vpop.f32.mrb[0].mxu0
      %1717 = vmatprep.mubr.f32.mxu0 0.0
      %1718 = vmatmul.mubr.f32.gmra.mrb[0].mxu0 %v1554
      %v1719 = vpop.f32.mrb[0].mxu0
      %v1720 = vadd.f32 %v1544, %v1719
      %v1721 = vpop.f32.mrb[0].mxu0
      %1722 = vmatprep.mubr.f32.mxu0 0.0
      %1723 = vmatmul.mubr.f32.gmra.mrb[0].mxu0 %v1557
      %v1724 = vpop.f32.mrb[0].mxu0
      %v1725 = vadd.f32 %v1544, %v1724
      %v1726 = vpop.f32.mrb[0].mxu0
      %1727 = vmatprep.mubr.f32.mxu0 0.0
      %1728 = vmatmul.mubr.f32.gmra.mrb[0].mxu0 %v1560
      %v1729 = vpop.f32.mrb[0].mxu0
      %v1730 = vadd.f32 %v1544, %v1729
      %v1731 = vpop.f32.mrb[0].mxu0
      %1732 = vmatprep.mubr.f32.mxu0 0.0
      %1733 = vmatmul.mubr.f32.gmra.mrb[0].mxu0 %v1563
      %v1734 = vpop.f32.mrb[0].mxu0
      %v1735 = vadd.f32 %v1544, %v1734
      %v1736 = vpop.f32.mrb[0].mxu0
      %1737 = vmatprep.mubr.f32.mxu0 0.0
      %1738 = vmatmul.mubr.f32.gmra.mrb[0].mxu0 %v1566
      %v1739 = vpop.f32.mrb[0].mxu0
      %v1740 = vadd.f32 %v1544, %v1739
      %v1741 = vpop.f32.mrb[0].mxu0
      %1742 = vmatprep.mubr.f32.mxu0 0.0
      %1743 = vmatmul.mubr.f32.gmra.mrb[0].mxu0 %v1569
      %v1744 = vpop.f32.mrb[0].mxu0
      %v1745 = vadd.f32 %v1544, %v1744
      %v1746 = vpop.f32.mrb[0].mxu0
      %1747 = vmatprep.mubr.f32.mxu0 0.0
      %1748 = vmatmul.mubr.f32.gmra.mrb[0].mxu0 %v1572
      %v1749 = vpop.f32.mrb[0].mxu0
      %v1750 = vadd.f32 %v1544, %v1749
      %v1751 = vpop.f32.mrb[0].mxu0
      %1752 = vmatprep.mubr.f32.mxu0 0.0
      %1753 = vmatmul.mubr.f32.gmra.mrb[0].mxu0 %v1575
      %v1754 = vpop.f32.mrb[0].mxu0
      %v1755 = vadd.f32 %v1544, %v1754
      %v1756 = vpop.f32.mrb[0].mxu0
      %1757 = vmatprep.mubr.f32.mxu0 0.0
      %1758 = vmatmul.mubr.f32.gmra.mrb[0].mxu0 %v1578
      %v1759 = vpop.f32.mrb[0].mxu0
      %v1760 = vadd.f32 %v1544, %v1759
      %v1761 = vpop.f32.mrb[0].mxu0
      %1762 = vmatprep.mubr.f32.mxu0 0.0
      %1763 = vmatmul.mubr.f32.gmra.mrb[0].mxu0 %v1581
      %v1764 = vpop.f32.mrb[0].mxu0
      %v1765 = vadd.f32 %v1544, %v1764
      %v1766 = vpop.f32.mrb[0].mxu0
      %1767 = vmatprep.mubr.f32.mxu0 0.0
      %1768 = vmatmul.mubr.f32.gmra.mrb[0].mxu0 %v1584
      %v1769 = vpop.f32.mrb[0].mxu0
      %v1770 = vadd.f32 %v1544, %v1769
      %v1771 = vpop.f32.mrb[0].mxu0
      %1772 = vmatprep.mubr.f32.mxu0 0.0
      %1773 = vmatmul.mubr.f32.gmra.mrb[0].mxu0 %v1587
      %v1774 = vpop.f32.mrb[0].mxu0
      %v1775 = vadd.f32 %v1544, %v1774
      %v1776 = vpop.f32.mrb[0].mxu0
      %1777 = vmatprep.mubr.f32.mxu0 0.0
      %1778 = vmatmul.mubr.f32.gmra.mrb[0].mxu0 %v1590
      %v1779 = vpop.f32.mrb[0].mxu0
      %v1780 = vadd.f32 %v1544, %v1779
      %v1781 = vpop.f32.mrb[0].mxu0
      %1782 = vmatprep.mubr.f32.mxu0 0.0
      %1783 = vmatmul.mubr.f32.gmra.mrb[0].mxu0 %v1593
      %v1784 = vpop.f32.mrb[0].mxu0
      %v1785 = vadd.f32 %v1544, %v1784
      %v1786 = vpop.f32.mrb[0].mxu0
      %1787 = vmatprep.mubr.f32.mxu0 0.0
      %1788 = vmatmul.mubr.f32.gmra.mrb[0].mxu0 %v1596
      %v1789 = vpop.f32.mrb[0].mxu0
      %v1790 = vadd.f32 %v1544, %v1789
      %v1791 = vpop.f32.mrb[0].mxu0
      %1792 = vmatprep.mubr.f32.mxu0 0.0
      %1793 = vmatmul.mubr.f32.gmra.mrb[0].mxu0 %v1599
      %v1794 = vpop.f32.mrb[0].mxu0
      %v1795 = vadd.f32 %v1544, %v1794
      %v1796 = vpop.f32.mrb[0].mxu0
      %1797 = vmatprep.mubr.f32.mxu0 0.0
      %1798 = vmatmul.mubr.f32.gmra.mrb[0].mxu0 %v1602
      %v1799 = vpop.f32.mrb[0].mxu0
      %v1800 = vadd.f32 %v1544, %v1799
      %v1801 = vpop.f32.mrb[0].mxu0
      %1802 = vmatprep.mubr.f32.mxu0 0.0
      %1803 = vmatmul.mubr.f32.gmra.mrb[0].mxu0 %v1605
      %v1804 = vpop.f32.mrb[0].mxu0
      %v1805 = vadd.f32 %v1544, %v1804
      %v1806 = vpop.f32.mrb[0].mxu0
      %1807 = vmatprep.mubr.f32.mxu0 0.0
      %1808 = vmatmul.mubr.f32.gmra.mrb[0].mxu0 %v1608
      %v1809 = vpop.f32.mrb[0].mxu0
      %v1810 = vadd.f32 %v1544, %v1809
      %v1811 = vpop.f32.mrb[0].mxu0
      %1812 = vmatprep.mubr.f32.mxu0 0.0
      %1813 = vmatmul.mubr.f32.gmra.mrb[0].mxu0 %v1611
      %v1814 = vpop.f32.mrb[0].mxu0
      %v1815 = vadd.f32 %v1544, %v1814
      %v1816 = vpop.f32.mrb[0].mxu0
      %1817 = vmatprep.mubr.f32.mxu0 0.0
      %1818 = vmatmul.mubr.f32.gmra.mrb[0].mxu0 %v1614
      %v1819 = vpop.f32.mrb[0].mxu0
      %v1820 = vadd.f32 %v1544, %v1819
      %v1821 = vpop.f32.mrb[0].mxu0
      %1822 = vmatprep.mubr.f32.mxu0 0.0
      %1823 = vmatmul.mubr.f32.gmra.mrb[0].mxu0 %v1617
      %v1824 = vpop.f32.mrb[0].mxu0
      %v1825 = vadd.f32 %v1544, %v1824
      %v1826 = vpop.f32.mrb[0].mxu0
      %1827 = vmatprep.mubr.f32.mxu0 0.0
      %1828 = vmatmul.mubr.f32.gmra.mrb[0].mxu0 %v1620
      %v1829 = vpop.f32.mrb[0].mxu0
      %v1830 = vadd.f32 %v1544, %v1829
      %v1831 = vpop.f32.mrb[0].mxu0
      %1832 = vmatprep.mubr.f32.mxu0 0.0
      %1833 = vmatmul.mubr.f32.gmra.mrb[0].mxu0 %v1623
      %v1834 = vpop.f32.mrb[0].mxu0
      %v1835 = vadd.f32 %v1544, %v1834
      %v1836 = vpop.f32.mrb[0].mxu0
      %1837 = vmatprep.mubr.f32.mxu0 0.0
      %1838 = vmatmul.mubr.f32.gmra.mrb[0].mxu0 %v1626
      %v1839 = vpop.f32.mrb[0].mxu0
      %v1840 = vadd.f32 %v1544, %v1839
      %v1841 = vpop.f32.mrb[0].mxu0
      %1842 = vmatprep.mubr.f32.mxu0 0.0
      %1843 = vmatmul.mubr.f32.gmra.mrb[0].mxu0 %v1629
      %v1844 = vpop.f32.mrb[0].mxu0
      %v1845 = vadd.f32 %v1544, %v1844
      %v1846 = vpop.f32.mrb[0].mxu0
      %1847 = vmatprep.mubr.f32.mxu0 0.0
      %1848 = vmatmul.mubr.f32.gmra.mrb[0].mxu0 %v1632
      %v1849 = vpop.f32.mrb[0].mxu0
      %v1850 = vadd.f32 %v1544, %v1849
      %v1851 = vpop.f32.mrb[0].mxu0
      %1852 = vmatprep.mubr.f32.mxu0 0.0
      %1853 = vmatmul.mubr.f32.gmra.mrb[0].mxu0 %v1635
      %v1854 = vpop.f32.mrb[0].mxu0
      %v1855 = vadd.f32 %v1544, %v1854
      %v1856 = vpop.f32.mrb[0].mxu0
      %1857 = vmatprep.mubr.f32.mxu0 0.0
      %1858 = vmatmul.mubr.f32.gmra.mrb[0].mxu0 %v1638
      %v1859 = vpop.f32.mrb[0].mxu0
      %v1860 = vadd.f32 %v1544, %v1859
      %v1861 = vpop.f32.mrb[0].mxu0
      %1862 = vmatprep.mubr.f32.mxu0 0.0
      %1863 = vmatmul.mubr.f32.gmra.mrb[0].mxu0 %v1641
      %v1864 = vpop.f32.mrb[0].mxu0
      %v1865 = vadd.f32 %v1544, %v1864
      %v1866 = vpop.f32.mrb[0].mxu0
      %1867 = vdwg.mxu0
      %vm1868 = vcmp.ge.f32.partialorder %v1710, 0.0
      %vm1869 = vcmp.ge.f32.partialorder %v1715, 0.0
      %vm1870 = vcmp.ge.f32.partialorder %v1720, 0.0
      %vm1871 = vcmp.ge.f32.partialorder %v1725, 0.0
      %vm1872 = vcmp.ge.f32.partialorder %v1730, 0.0
      %vm1873 = vcmp.ge.f32.partialorder %v1735, 0.0
      %vm1874 = vcmp.ge.f32.partialorder %v1740, 0.0
      %vm1875 = vcmp.ge.f32.partialorder %v1745, 0.0
      %vm1876 = vcmp.ge.f32.partialorder %v1750, 0.0
      %vm1877 = vcmp.ge.f32.partialorder %v1755, 0.0
      %vm1878 = vcmp.ge.f32.partialorder %v1760, 0.0
      %vm1879 = vcmp.ge.f32.partialorder %v1765, 0.0
      %vm1880 = vcmp.ge.f32.partialorder %v1770, 0.0
      %vm1881 = vcmp.ge.f32.partialorder %v1775, 0.0
      %vm1882 = vcmp.ge.f32.partialorder %v1780, 0.0
      %vm1883 = vcmp.ge.f32.partialorder %v1785, 0.0
      %vm1884 = vcmp.ge.f32.partialorder %v1790, 0.0
      %vm1885 = vcmp.ge.f32.partialorder %v1795, 0.0
      %vm1886 = vcmp.ge.f32.partialorder %v1800, 0.0
      %vm1887 = vcmp.ge.f32.partialorder %v1805, 0.0
      %vm1888 = vcmp.ge.f32.partialorder %v1810, 0.0
      %vm1889 = vcmp.ge.f32.partialorder %v1815, 0.0
      %vm1890 = vcmp.ge.f32.partialorder %v1820, 0.0
      %vm1891 = vcmp.ge.f32.partialorder %v1825, 0.0
      %vm1892 = vcmp.ge.f32.partialorder %v1830, 0.0
      %vm1893 = vcmp.ge.f32.partialorder %v1835, 0.0
      %vm1894 = vcmp.ge.f32.partialorder %v1840, 0.0
      %vm1895 = vcmp.ge.f32.partialorder %v1845, 0.0
      %vm1896 = vcmp.ge.f32.partialorder %v1850, 0.0
      %vm1897 = vcmp.ge.f32.partialorder %v1855, 0.0
      %vm1898 = vcmp.ge.f32.partialorder %v1860, 0.0
      %vm1899 = vcmp.ge.f32.partialorder %v1865, 0.0
      %v1900 = vmul.f32 %v1710, 0.01
      %v1901 = vmul.f32 %v1715, 0.01
      %v1902 = vmul.f32 %v1720, 0.01
      %v1903 = vmul.f32 %v1725, 0.01
      %v1904 = vmul.f32 %v1730, 0.01
      %v1905 = vmul.f32 %v1735, 0.01
      %v1906 = vmul.f32 %v1740, 0.01
      %v1907 = vmul.f32 %v1745, 0.01
      %v1908 = vmul.f32 %v1750, 0.01
      %v1909 = vmul.f32 %v1755, 0.01
      %v1910 = vmul.f32 %v1760, 0.01
      %v1911 = vmul.f32 %v1765, 0.01
      %v1912 = vmul.f32 %v1770, 0.01
      %v1913 = vmul.f32 %v1775, 0.01
      %v1914 = vmul.f32 %v1780, 0.01
      %v1915 = vmul.f32 %v1785, 0.01
      %v1916 = vmul.f32 %v1790, 0.01
      %v1917 = vmul.f32 %v1795, 0.01
      %v1918 = vmul.f32 %v1800, 0.01
      %v1919 = vmul.f32 %v1805, 0.01
      %v1920 = vmul.f32 %v1810, 0.01
      %v1921 = vmul.f32 %v1815, 0.01
      %v1922 = vmul.f32 %v1820, 0.01
      %v1923 = vmul.f32 %v1825, 0.01
      %v1924 = vmul.f32 %v1830, 0.01
      %v1925 = vmul.f32 %v1835, 0.01
      %v1926 = vmul.f32 %v1840, 0.01
      %v1927 = vmul.f32 %v1845, 0.01
      %v1928 = vmul.f32 %v1850, 0.01
      %v1929 = vmul.f32 %v1855, 0.01
      %v1930 = vmul.f32 %v1860, 0.01
      %v1931 = vmul.f32 %v1865, 0.01
      %v1932 = vsel %vm1868, %v1710, %v1900
      %v1933 = vsel %vm1869, %v1715, %v1901
      %v1934 = vsel %vm1870, %v1720, %v1902
      %v1935 = vsel %vm1871, %v1725, %v1903
      %v1936 = vsel %vm1872, %v1730, %v1904
      %v1937 = vsel %vm1873, %v1735, %v1905
      %v1938 = vsel %vm1874, %v1740, %v1906
      %v1939 = vsel %vm1875, %v1745, %v1907
      %v1940 = vsel %vm1876, %v1750, %v1908
      %v1941 = vsel %vm1877, %v1755, %v1909
      %v1942 = vsel %vm1878, %v1760, %v1910
      %v1943 = vsel %vm1879, %v1765, %v1911
      %v1944 = vsel %vm1880, %v1770, %v1912
      %v1945 = vsel %vm1881, %v1775, %v1913
      %v1946 = vsel %vm1882, %v1780, %v1914
      %v1947 = vsel %vm1883, %v1785, %v1915
      %v1948 = vsel %vm1884, %v1790, %v1916
      %v1949 = vsel %vm1885, %v1795, %v1917
      %v1950 = vsel %vm1886, %v1800, %v1918
      %v1951 = vsel %vm1887, %v1805, %v1919
      %v1952 = vsel %vm1888, %v1810, %v1920
      %v1953 = vsel %vm1889, %v1815, %v1921
      %v1954 = vsel %vm1890, %v1820, %v1922
      %v1955 = vsel %vm1891, %v1825, %v1923
      %v1956 = vsel %vm1892, %v1830, %v1924
      %v1957 = vsel %vm1893, %v1835, %v1925
      %v1958 = vsel %vm1894, %v1840, %v1926
      %v1959 = vsel %vm1895, %v1845, %v1927
      %v1960 = vsel %vm1896, %v1850, %v1928
      %v1961 = vsel %vm1897, %v1855, %v1929
      %v1962 = vsel %vm1898, %v1860, %v1930
      %v1963 = vsel %vm1899, %v1865, %v1931
      %v1965 = vlaneseq
      %v1966 = vshrl.u32 %v1965, 7
      %v1967 = vsub.s32 0, %v1966
      %v1968 = vrot.slane %v1530, %v1967
      %vm1970 = vcmask 523264
      %v1972 = vsel %vm1970, %v1932, 0
      %v1975 = vsel %vm1970, %v1933, 0
      %v1978 = vsel %vm1970, %v1934, 0
      %v1981 = vsel %vm1970, %v1935, 0
      %v1984 = vsel %vm1970, %v1936, 0
      %v1987 = vsel %vm1970, %v1937, 0
      %v1990 = vsel %vm1970, %v1938, 0
      %v1993 = vsel %vm1970, %v1939, 0
      %v1996 = vsel %vm1970, %v1940, 0
      %v1999 = vsel %vm1970, %v1941, 0
      %v2002 = vsel %vm1970, %v1942, 0
      %v2005 = vsel %vm1970, %v1943, 0
      %v2008 = vsel %vm1970, %v1944, 0
      %v2011 = vsel %vm1970, %v1945, 0
      %v2014 = vsel %vm1970, %v1946, 0
      %v2017 = vsel %vm1970, %v1947, 0
      %v2020 = vsel %vm1970, %v1948, 0
      %v2023 = vsel %vm1970, %v1949, 0
      %v2026 = vsel %vm1970, %v1950, 0
      %v2029 = vsel %vm1970, %v1951, 0
      %v2032 = vsel %vm1970, %v1952, 0
      %v2035 = vsel %vm1970, %v1953, 0
      %v2038 = vsel %vm1970, %v1954, 0
      %v2041 = vsel %vm1970, %v1955, 0
      %v2044 = vsel %vm1970, %v1956, 0
      %v2047 = vsel %vm1970, %v1957, 0
      %v2050 = vsel %vm1970, %v1958, 0
      %v2053 = vsel %vm1970, %v1959, 0
      %v2056 = vsel %vm1970, %v1960, 0
      %v2059 = vsel %vm1970, %v1961, 0
      %v2062 = vsel %vm1970, %v1962, 0
      %v2065 = vsel %vm1970, %v1963, 0
      %2067 = vmatprep.subr.mxu0 0.0
      %2068 = vmatpush1.msra.mxu0 %v1522
      %2069 = vmatprep.subr.mxu0 0.0
      %2070 = vmatpush1.msra.mxu0 %v1523
      %2071 = vmatprep.subr.mxu0 0.0
      %2072 = vmatpush1.msra.mxu0 %v1524
      %2073 = vmatprep.subr.mxu0 0.0
      %2074 = vmatpush1.msra.mxu0 %v1525
      %2075 = vmatprep.subr.mxu0 0.0
      %2076 = vmatpush1.msra.mxu0 %v1526
      %2077 = vmatprep.subr.mxu0 0.0
      %2078 = vmatpush1.msra.mxu0 %v1527
      %2079 = vmatprep.subr.mxu0 0.0
      %2080 = vmatpush1.msra.mxu0 %v1528
      %2081 = vmatprep.subr.mxu0 0.0
      %2082 = vmatpush1.msra.mxu0 %v1529
      %2083 = vmatprep.subr.mxu0 0.0
      %2084 = vmatpush1.msra.mxu0 0.0
      %2085 = vmatprep.subr.mxu0 0.0
      %2086 = vmatpush1.msra.mxu0 0.0
      %2087 = vmatprep.subr.mxu0 0.0
      %2088 = vmatpush1.msra.mxu0 0.0
      %2089 = vmatprep.subr.mxu0 0.0
      %2090 = vmatpush1.msra.mxu0 0.0
      %2091 = vmatprep.subr.mxu0 0.0
      %2092 = vmatpush1.msra.mxu0 0.0
      %2093 = vmatprep.subr.mxu0 0.0
      %2094 = vmatpush1.msra.mxu0 0.0
      %2095 = vmatprep.subr.mxu0 0.0
      %2096 = vmatpush1.msra.mxu0 0.0
      %2097 = vmatprep.subr.mxu0 0.0
      %2098 = vmatpush1.msra.mxu0 0.0
      %2099 = vmatprep.subr.mxu0 0.0
      %2100 = vmatpush1.msra.mxu0 0.0
      %2101 = vmatprep.subr.mxu0 0.0
      %2102 = vmatpush1.msra.mxu0 0.0
      %2103 = vmatprep.subr.mxu0 0.0
      %2104 = vmatpush1.msra.mxu0 0.0
      %2105 = vmatprep.subr.mxu0 0.0
      %2106 = vmatpush1.msra.mxu0 0.0
      %2107 = vmatprep.subr.mxu0 0.0
      %2108 = vmatpush1.msra.mxu0 0.0
      %2109 = vmatprep.subr.mxu0 0.0
      %2110 = vmatpush1.msra.mxu0 0.0
      %2111 = vmatprep.subr.mxu0 0.0
      %2112 = vmatpush1.msra.mxu0 0.0
      %2113 = vmatprep.subr.mxu0 0.0
      %2114 = vmatpush1.msra.mxu0 0.0
      %2115 = vmatprep.subr.mxu0 0.0
      %2116 = vmatpush1.msra.mxu0 0.0
      %2117 = vmatprep.subr.mxu0 0.0
      %2118 = vmatpush1.msra.mxu0 0.0
      %2119 = vmatprep.subr.mxu0 0.0
      %2120 = vmatpush1.msra.mxu0 0.0
      %2121 = vmatprep.subr.mxu0 0.0
      %2122 = vmatpush1.msra.mxu0 0.0
      %2123 = vmatprep.subr.mxu0 0.0
      %2124 = vmatpush1.msra.mxu0 0.0
      %2125 = vmatprep.subr.mxu0 0.0
      %2126 = vmatpush1.msra.mxu0 0.0
      %2127 = vmatprep.subr.mxu0 0.0
      %2128 = vmatpush1.msra.mxu0 0.0
      %2129 = vmatprep.subr.mxu0 0.0
      %2130 = vmatpush1.msra.mxu0 0.0
      %2131 = vmatprep.mubr.f32.mxu0 0.0
      %2132 = vmatmul.mubr.f32.gmra.mrb[0].mxu0 %v1972
      %v2133 = vpop.f32.mrb[0].mxu0
      %v2134 = vadd.f32 %v1968, %v2133
      %v2135 = vpop.f32.mrb[0].mxu0
      %2136 = vmatprep.mubr.f32.mxu0 0.0
      %2137 = vmatmul.mubr.f32.gmra.mrb[0].mxu0 %v1975
      %v2138 = vpop.f32.mrb[0].mxu0
      %v2139 = vadd.f32 %v1968, %v2138
      %v2140 = vpop.f32.mrb[0].mxu0
      %2141 = vmatprep.mubr.f32.mxu0 0.0
      %2142 = vmatmul.mubr.f32.gmra.mrb[0].mxu0 %v1978
      %v2143 = vpop.f32.mrb[0].mxu0
      %v2144 = vadd.f32 %v1968, %v2143
      %v2145 = vpop.f32.mrb[0].mxu0
      %2146 = vmatprep.mubr.f32.mxu0 0.0
      %2147 = vmatmul.mubr.f32.gmra.mrb[0].mxu0 %v1981
      %v2148 = vpop.f32.mrb[0].mxu0
      %v2149 = vadd.f32 %v1968, %v2148
      %v2150 = vpop.f32.mrb[0].mxu0
      %2151 = vmatprep.mubr.f32.mxu0 0.0
      %2152 = vmatmul.mubr.f32.gmra.mrb[0].mxu0 %v1984
      %v2153 = vpop.f32.mrb[0].mxu0
      %v2154 = vadd.f32 %v1968, %v2153
      %v2155 = vpop.f32.mrb[0].mxu0
      %2156 = vmatprep.mubr.f32.mxu0 0.0
      %2157 = vmatmul.mubr.f32.gmra.mrb[0].mxu0 %v1987
      %v2158 = vpop.f32.mrb[0].mxu0
      %v2159 = vadd.f32 %v1968, %v2158
      %v2160 = vpop.f32.mrb[0].mxu0
      %2161 = vmatprep.mubr.f32.mxu0 0.0
      %2162 = vmatmul.mubr.f32.gmra.mrb[0].mxu0 %v1990
      %v2163 = vpop.f32.mrb[0].mxu0
      %v2164 = vadd.f32 %v1968, %v2163
      %v2165 = vpop.f32.mrb[0].mxu0
      %2166 = vmatprep.mubr.f32.mxu0 0.0
      %2167 = vmatmul.mubr.f32.gmra.mrb[0].mxu0 %v1993
      %v2168 = vpop.f32.mrb[0].mxu0
      %v2169 = vadd.f32 %v1968, %v2168
      %v2170 = vpop.f32.mrb[0].mxu0
      %2171 = vmatprep.mubr.f32.mxu0 0.0
      %2172 = vmatmul.mubr.f32.gmra.mrb[0].mxu0 %v1996
      %v2173 = vpop.f32.mrb[0].mxu0
      %v2174 = vadd.f32 %v1968, %v2173
      %v2175 = vpop.f32.mrb[0].mxu0
      %2176 = vmatprep.mubr.f32.mxu0 0.0
      %2177 = vmatmul.mubr.f32.gmra.mrb[0].mxu0 %v1999
      %v2178 = vpop.f32.mrb[0].mxu0
      %v2179 = vadd.f32 %v1968, %v2178
      %v2180 = vpop.f32.mrb[0].mxu0
      %2181 = vmatprep.mubr.f32.mxu0 0.0
      %2182 = vmatmul.mubr.f32.gmra.mrb[0].mxu0 %v2002
      %v2183 = vpop.f32.mrb[0].mxu0
      %v2184 = vadd.f32 %v1968, %v2183
      %v2185 = vpop.f32.mrb[0].mxu0
      %2186 = vmatprep.mubr.f32.mxu0 0.0
      %2187 = vmatmul.mubr.f32.gmra.mrb[0].mxu0 %v2005
      %v2188 = vpop.f32.mrb[0].mxu0
      %v2189 = vadd.f32 %v1968, %v2188
      %v2190 = vpop.f32.mrb[0].mxu0
      %2191 = vmatprep.mubr.f32.mxu0 0.0
      %2192 = vmatmul.mubr.f32.gmra.mrb[0].mxu0 %v2008
      %v2193 = vpop.f32.mrb[0].mxu0
      %v2194 = vadd.f32 %v1968, %v2193
      %v2195 = vpop.f32.mrb[0].mxu0
      %2196 = vmatprep.mubr.f32.mxu0 0.0
      %2197 = vmatmul.mubr.f32.gmra.mrb[0].mxu0 %v2011
      %v2198 = vpop.f32.mrb[0].mxu0
      %v2199 = vadd.f32 %v1968, %v2198
      %v2200 = vpop.f32.mrb[0].mxu0
      %2201 = vmatprep.mubr.f32.mxu0 0.0
      %2202 = vmatmul.mubr.f32.gmra.mrb[0].mxu0 %v2014
      %v2203 = vpop.f32.mrb[0].mxu0
      %v2204 = vadd.f32 %v1968, %v2203
      %v2205 = vpop.f32.mrb[0].mxu0
      %2206 = vmatprep.mubr.f32.mxu0 0.0
      %2207 = vmatmul.mubr.f32.gmra.mrb[0].mxu0 %v2017
      %v2208 = vpop.f32.mrb[0].mxu0
      %v2209 = vadd.f32 %v1968, %v2208
      %v2210 = vpop.f32.mrb[0].mxu0
      %2211 = vmatprep.mubr.f32.mxu0 0.0
      %2212 = vmatmul.mubr.f32.gmra.mrb[0].mxu0 %v2020
      %v2213 = vpop.f32.mrb[0].mxu0
      %v2214 = vadd.f32 %v1968, %v2213
      %v2215 = vpop.f32.mrb[0].mxu0
      %2216 = vmatprep.mubr.f32.mxu0 0.0
      %2217 = vmatmul.mubr.f32.gmra.mrb[0].mxu0 %v2023
      %v2218 = vpop.f32.mrb[0].mxu0
      %v2219 = vadd.f32 %v1968, %v2218
      %v2220 = vpop.f32.mrb[0].mxu0
      %2221 = vmatprep.mubr.f32.mxu0 0.0
      %2222 = vmatmul.mubr.f32.gmra.mrb[0].mxu0 %v2026
      %v2223 = vpop.f32.mrb[0].mxu0
      %v2224 = vadd.f32 %v1968, %v2223
      %v2225 = vpop.f32.mrb[0].mxu0
      %2226 = vmatprep.mubr.f32.mxu0 0.0
      %2227 = vmatmul.mubr.f32.gmra.mrb[0].mxu0 %v2029
      %v2228 = vpop.f32.mrb[0].mxu0
      %v2229 = vadd.f32 %v1968, %v2228
      %v2230 = vpop.f32.mrb[0].mxu0
      %2231 = vmatprep.mubr.f32.mxu0 0.0
      %2232 = vmatmul.mubr.f32.gmra.mrb[0].mxu0 %v2032
      %v2233 = vpop.f32.mrb[0].mxu0
      %v2234 = vadd.f32 %v1968, %v2233
      %v2235 = vpop.f32.mrb[0].mxu0
      %2236 = vmatprep.mubr.f32.mxu0 0.0
      %2237 = vmatmul.mubr.f32.gmra.mrb[0].mxu0 %v2035
      %v2238 = vpop.f32.mrb[0].mxu0
      %v2239 = vadd.f32 %v1968, %v2238
      %v2240 = vpop.f32.mrb[0].mxu0
      %2241 = vmatprep.mubr.f32.mxu0 0.0
      %2242 = vmatmul.mubr.f32.gmra.mrb[0].mxu0 %v2038
      %v2243 = vpop.f32.mrb[0].mxu0
      %v2244 = vadd.f32 %v1968, %v2243
      %v2245 = vpop.f32.mrb[0].mxu0
      %2246 = vmatprep.mubr.f32.mxu0 0.0
      %2247 = vmatmul.mubr.f32.gmra.mrb[0].mxu0 %v2041
      %v2248 = vpop.f32.mrb[0].mxu0
      %v2249 = vadd.f32 %v1968, %v2248
      %v2250 = vpop.f32.mrb[0].mxu0
      %2251 = vmatprep.mubr.f32.mxu0 0.0
      %2252 = vmatmul.mubr.f32.gmra.mrb[0].mxu0 %v2044
      %v2253 = vpop.f32.mrb[0].mxu0
      %v2254 = vadd.f32 %v1968, %v2253
      %v2255 = vpop.f32.mrb[0].mxu0
      %2256 = vmatprep.mubr.f32.mxu0 0.0
      %2257 = vmatmul.mubr.f32.gmra.mrb[0].mxu0 %v2047
      %v2258 = vpop.f32.mrb[0].mxu0
      %v2259 = vadd.f32 %v1968, %v2258
      %v2260 = vpop.f32.mrb[0].mxu0
      %2261 = vmatprep.mubr.f32.mxu0 0.0
      %2262 = vmatmul.mubr.f32.gmra.mrb[0].mxu0 %v2050
      %v2263 = vpop.f32.mrb[0].mxu0
      %v2264 = vadd.f32 %v1968, %v2263
      %v2265 = vpop.f32.mrb[0].mxu0
      %2266 = vmatprep.mubr.f32.mxu0 0.0
      %2267 = vmatmul.mubr.f32.gmra.mrb[0].mxu0 %v2053
      %v2268 = vpop.f32.mrb[0].mxu0
      %v2269 = vadd.f32 %v1968, %v2268
      %v2270 = vpop.f32.mrb[0].mxu0
      %2271 = vmatprep.mubr.f32.mxu0 0.0
      %2272 = vmatmul.mubr.f32.gmra.mrb[0].mxu0 %v2056
      %v2273 = vpop.f32.mrb[0].mxu0
      %v2274 = vadd.f32 %v1968, %v2273
      %v2275 = vpop.f32.mrb[0].mxu0
      %2276 = vmatprep.mubr.f32.mxu0 0.0
      %2277 = vmatmul.mubr.f32.gmra.mrb[0].mxu0 %v2059
      %v2278 = vpop.f32.mrb[0].mxu0
      %v2279 = vadd.f32 %v1968, %v2278
      %v2280 = vpop.f32.mrb[0].mxu0
      %2281 = vmatprep.mubr.f32.mxu0 0.0
      %2282 = vmatmul.mubr.f32.gmra.mrb[0].mxu0 %v2062
      %v2283 = vpop.f32.mrb[0].mxu0
      %v2284 = vadd.f32 %v1968, %v2283
      %v2285 = vpop.f32.mrb[0].mxu0
      %2286 = vmatprep.mubr.f32.mxu0 0.0
      %2287 = vmatmul.mubr.f32.gmra.mrb[0].mxu0 %v2065
      %v2288 = vpop.f32.mrb[0].mxu0
      %v2289 = vadd.f32 %v1968, %v2288
      %v2290 = vpop.f32.mrb[0].mxu0
      %2291 = vdwg.mxu0
      %v2292 = vlaneseq
      %v2293 = vshrl.u32 %v2292, 7
      %v2294 = vsub.s32 0, %v2293
      %v2295 = vrot.slane %v2134, %v2294
      %v2296 = vlaneseq
      %v2297 = vshrl.u32 %v2296, 7
      %v2298 = vsub.s32 0, %v2297
      %v2299 = vrot.slane %v2144, %v2298
      %v2300 = vlaneseq
      %v2301 = vshrl.u32 %v2300, 7
      %v2302 = vsub.s32 0, %v2301
      %v2303 = vrot.slane %v2154, %v2302
      %v2304 = vlaneseq
      %v2305 = vshrl.u32 %v2304, 7
      %v2306 = vsub.s32 0, %v2305
      %v2307 = vrot.slane %v2164, %v2306
      %v2308 = vlaneseq
      %v2309 = vshrl.u32 %v2308, 7
      %v2310 = vsub.s32 0, %v2309
      %v2311 = vrot.slane %v2174, %v2310
      %v2312 = vlaneseq
      %v2313 = vshrl.u32 %v2312, 7
      %v2314 = vsub.s32 0, %v2313
      %v2315 = vrot.slane %v2184, %v2314
      %v2316 = vlaneseq
      %v2317 = vshrl.u32 %v2316, 7
      %v2318 = vsub.s32 0, %v2317
      %v2319 = vrot.slane %v2194, %v2318
      %v2320 = vlaneseq
      %v2321 = vshrl.u32 %v2320, 7
      %v2322 = vsub.s32 0, %v2321
      %v2323 = vrot.slane %v2204, %v2322
      %v2324 = vlaneseq
      %v2325 = vshrl.u32 %v2324, 7
      %v2326 = vsub.s32 0, %v2325
      %v2327 = vrot.slane %v2214, %v2326
      %v2328 = vlaneseq
      %v2329 = vshrl.u32 %v2328, 7
      %v2330 = vsub.s32 0, %v2329
      %v2331 = vrot.slane %v2224, %v2330
      %v2332 = vlaneseq
      %v2333 = vshrl.u32 %v2332, 7
      %v2334 = vsub.s32 0, %v2333
      %v2335 = vrot.slane %v2234, %v2334
      %v2336 = vlaneseq
      %v2337 = vshrl.u32 %v2336, 7
      %v2338 = vsub.s32 0, %v2337
      %v2339 = vrot.slane %v2244, %v2338
      %v2340 = vlaneseq
      %v2341 = vshrl.u32 %v2340, 7
      %v2342 = vsub.s32 0, %v2341
      %v2343 = vrot.slane %v2254, %v2342
      %v2344 = vlaneseq
      %v2345 = vshrl.u32 %v2344, 7
      %v2346 = vsub.s32 0, %v2345
      %v2347 = vrot.slane %v2264, %v2346
      %v2348 = vlaneseq
      %v2349 = vshrl.u32 %v2348, 7
      %v2350 = vsub.s32 0, %v2349
      %v2351 = vrot.slane %v2274, %v2350
      %v2352 = vlaneseq
      %v2353 = vshrl.u32 %v2352, 7
      %v2354 = vsub.s32 0, %v2353
      %v2355 = vrot.slane %v2284, %v2354
      %2358 = vrot.lane.b32.xlu0 %v2134, 96
      %v2359 = vpop.permute.xlu0 %2358
      %2360 = vrot.lane.b32.xlu0 %v2139, 96
      %v2361 = vpop.permute.xlu0 %2360
      %v2364 = vmul.f32 %v2295, %v2359
      %v2365 = vmul.f32 %v2295, %v2361
      %v2366 = vmul.f32 %v2299, %v2359
      %v2367 = vmul.f32 %v2299, %v2361
      %v2368 = vmul.f32 %v2303, %v2359
      %v2369 = vmul.f32 %v2303, %v2361
      %v2370 = vmul.f32 %v2307, %v2359
      %v2371 = vmul.f32 %v2307, %v2361
      %v2372 = vmul.f32 %v2311, %v2359
      %v2373 = vmul.f32 %v2311, %v2361
      %v2374 = vmul.f32 %v2315, %v2359
      %v2375 = vmul.f32 %v2315, %v2361
      %v2376 = vmul.f32 %v2319, %v2359
      %v2377 = vmul.f32 %v2319, %v2361
      %v2378 = vmul.f32 %v2323, %v2359
      %v2379 = vmul.f32 %v2323, %v2361
      %v2380 = vmul.f32 %v2327, %v2359
      %v2381 = vmul.f32 %v2327, %v2361
      %v2382 = vmul.f32 %v2331, %v2359
      %v2383 = vmul.f32 %v2331, %v2361
      %v2384 = vmul.f32 %v2335, %v2359
      %v2385 = vmul.f32 %v2335, %v2361
      %v2386 = vmul.f32 %v2339, %v2359
      %v2387 = vmul.f32 %v2339, %v2361
      %v2388 = vmul.f32 %v2343, %v2359
      %v2389 = vmul.f32 %v2343, %v2361
      %v2390 = vmul.f32 %v2347, %v2359
      %v2391 = vmul.f32 %v2347, %v2361
      %v2392 = vmul.f32 %v2351, %v2359
      %v2393 = vmul.f32 %v2351, %v2361
      %v2394 = vmul.f32 %v2355, %v2359
      %v2395 = vmul.f32 %v2355, %v2361
      %v2396 = vlaneseq
      %v2397 = vshrl.u32 %v2396, 7
      %v2398 = vsub.s32 1, %v2397
      %v2399 = vrot.slane %v2134, %v2398
      %v2400 = vlaneseq
      %v2401 = vshrl.u32 %v2400, 7
      %v2402 = vsub.s32 1, %v2401
      %v2403 = vrot.slane %v2144, %v2402
      %v2404 = vlaneseq
      %v2405 = vshrl.u32 %v2404, 7
      %v2406 = vsub.s32 1, %v2405
      %v2407 = vrot.slane %v2154, %v2406
      %v2408 = vlaneseq
      %v2409 = vshrl.u32 %v2408, 7
      %v2410 = vsub.s32 1, %v2409
      %v2411 = vrot.slane %v2164, %v2410
      %v2412 = vlaneseq
      %v2413 = vshrl.u32 %v2412, 7
      %v2414 = vsub.s32 1, %v2413
      %v2415 = vrot.slane %v2174, %v2414
      %v2416 = vlaneseq
      %v2417 = vshrl.u32 %v2416, 7
      %v2418 = vsub.s32 1, %v2417
      %v2419 = vrot.slane %v2184, %v2418
      %v2420 = vlaneseq
      %v2421 = vshrl.u32 %v2420, 7
      %v2422 = vsub.s32 1, %v2421
      %v2423 = vrot.slane %v2194, %v2422
      %v2424 = vlaneseq
      %v2425 = vshrl.u32 %v2424, 7
      %v2426 = vsub.s32 1, %v2425
      %v2427 = vrot.slane %v2204, %v2426
      %v2428 = vlaneseq
      %v2429 = vshrl.u32 %v2428, 7
      %v2430 = vsub.s32 1, %v2429
      %v2431 = vrot.slane %v2214, %v2430
      %v2432 = vlaneseq
      %v2433 = vshrl.u32 %v2432, 7
      %v2434 = vsub.s32 1, %v2433
      %v2435 = vrot.slane %v2224, %v2434
      %v2436 = vlaneseq
      %v2437 = vshrl.u32 %v2436, 7
      %v2438 = vsub.s32 1, %v2437
      %v2439 = vrot.slane %v2234, %v2438
      %v2440 = vlaneseq
      %v2441 = vshrl.u32 %v2440, 7
      %v2442 = vsub.s32 1, %v2441
      %v2443 = vrot.slane %v2244, %v2442
      %v2444 = vlaneseq
      %v2445 = vshrl.u32 %v2444, 7
      %v2446 = vsub.s32 1, %v2445
      %v2447 = vrot.slane %v2254, %v2446
      %v2448 = vlaneseq
      %v2449 = vshrl.u32 %v2448, 7
      %v2450 = vsub.s32 1, %v2449
      %v2451 = vrot.slane %v2264, %v2450
      %v2452 = vlaneseq
      %v2453 = vshrl.u32 %v2452, 7
      %v2454 = vsub.s32 1, %v2453
      %v2455 = vrot.slane %v2274, %v2454
      %v2456 = vlaneseq
      %v2457 = vshrl.u32 %v2456, 7
      %v2458 = vsub.s32 1, %v2457
      %v2459 = vrot.slane %v2284, %v2458
      %2462 = vrot.lane.b32.xlu0 %v2144, 96
      %v2463 = vpop.permute.xlu0 %2462
      %2464 = vrot.lane.b32.xlu0 %v2149, 96
      %v2465 = vpop.permute.xlu0 %2464
      %v2468 = vmul.f32 %v2399, %v2463
      %v2469 = vmul.f32 %v2399, %v2465
      %v2470 = vmul.f32 %v2403, %v2463
      %v2471 = vmul.f32 %v2403, %v2465
      %v2472 = vmul.f32 %v2407, %v2463
      %v2473 = vmul.f32 %v2407, %v2465
      %v2474 = vmul.f32 %v2411, %v2463
      %v2475 = vmul.f32 %v2411, %v2465
      %v2476 = vmul.f32 %v2415, %v2463
      %v2477 = vmul.f32 %v2415, %v2465
      %v2478 = vmul.f32 %v2419, %v2463
      %v2479 = vmul.f32 %v2419, %v2465
      %v2480 = vmul.f32 %v2423, %v2463
      %v2481 = vmul.f32 %v2423, %v2465
      %v2482 = vmul.f32 %v2427, %v2463
      %v2483 = vmul.f32 %v2427, %v2465
      %v2484 = vmul.f32 %v2431, %v2463
      %v2485 = vmul.f32 %v2431, %v2465
      %v2486 = vmul.f32 %v2435, %v2463
      %v2487 = vmul.f32 %v2435, %v2465
      %v2488 = vmul.f32 %v2439, %v2463
      %v2489 = vmul.f32 %v2439, %v2465
      %v2490 = vmul.f32 %v2443, %v2463
      %v2491 = vmul.f32 %v2443, %v2465
      %v2492 = vmul.f32 %v2447, %v2463
      %v2493 = vmul.f32 %v2447, %v2465
      %v2494 = vmul.f32 %v2451, %v2463
      %v2495 = vmul.f32 %v2451, %v2465
      %v2496 = vmul.f32 %v2455, %v2463
      %v2497 = vmul.f32 %v2455, %v2465
      %v2498 = vmul.f32 %v2459, %v2463
      %v2499 = vmul.f32 %v2459, %v2465
      %v2500 = vadd.f32 %v2364, %v2468
      %v2501 = vadd.f32 %v2365, %v2469
      %v2502 = vadd.f32 %v2366, %v2470
      %v2503 = vadd.f32 %v2367, %v2471
      %v2504 = vadd.f32 %v2368, %v2472
      %v2505 = vadd.f32 %v2369, %v2473
      %v2506 = vadd.f32 %v2370, %v2474
      %v2507 = vadd.f32 %v2371, %v2475
      %v2508 = vadd.f32 %v2372, %v2476
      %v2509 = vadd.f32 %v2373, %v2477
      %v2510 = vadd.f32 %v2374, %v2478
      %v2511 = vadd.f32 %v2375, %v2479
      %v2512 = vadd.f32 %v2376, %v2480
      %v2513 = vadd.f32 %v2377, %v2481
      %v2514 = vadd.f32 %v2378, %v2482
      %v2515 = vadd.f32 %v2379, %v2483
      %v2516 = vadd.f32 %v2380, %v2484
      %v2517 = vadd.f32 %v2381, %v2485
      %v2518 = vadd.f32 %v2382, %v2486
      %v2519 = vadd.f32 %v2383, %v2487
      %v2520 = vadd.f32 %v2384, %v2488
      %v2521 = vadd.f32 %v2385, %v2489
      %v2522 = vadd.f32 %v2386, %v2490
      %v2523 = vadd.f32 %v2387, %v2491
      %v2524 = vadd.f32 %v2388, %v2492
      %v2525 = vadd.f32 %v2389, %v2493
      %v2526 = vadd.f32 %v2390, %v2494
      %v2527 = vadd.f32 %v2391, %v2495
      %v2528 = vadd.f32 %v2392, %v2496
      %v2529 = vadd.f32 %v2393, %v2497
      %v2530 = vadd.f32 %v2394, %v2498
      %v2531 = vadd.f32 %v2395, %v2499
      %v2532 = vlaneseq
      %v2533 = vshrl.u32 %v2532, 7
      %v2534 = vsub.s32 2, %v2533
      %v2535 = vrot.slane %v2134, %v2534
      %v2536 = vlaneseq
      %v2537 = vshrl.u32 %v2536, 7
      %v2538 = vsub.s32 2, %v2537
      %v2539 = vrot.slane %v2144, %v2538
      %v2540 = vlaneseq
      %v2541 = vshrl.u32 %v2540, 7
      %v2542 = vsub.s32 2, %v2541
      %v2543 = vrot.slane %v2154, %v2542
      %v2544 = vlaneseq
      %v2545 = vshrl.u32 %v2544, 7
      %v2546 = vsub.s32 2, %v2545
      %v2547 = vrot.slane %v2164, %v2546
      %v2548 = vlaneseq
      %v2549 = vshrl.u32 %v2548, 7
      %v2550 = vsub.s32 2, %v2549
      %v2551 = vrot.slane %v2174, %v2550
      %v2552 = vlaneseq
      %v2553 = vshrl.u32 %v2552, 7
      %v2554 = vsub.s32 2, %v2553
      %v2555 = vrot.slane %v2184, %v2554
      %v2556 = vlaneseq
      %v2557 = vshrl.u32 %v2556, 7
      %v2558 = vsub.s32 2, %v2557
      %v2559 = vrot.slane %v2194, %v2558
      %v2560 = vlaneseq
      %v2561 = vshrl.u32 %v2560, 7
      %v2562 = vsub.s32 2, %v2561
      %v2563 = vrot.slane %v2204, %v2562
      %v2564 = vlaneseq
      %v2565 = vshrl.u32 %v2564, 7
      %v2566 = vsub.s32 2, %v2565
      %v2567 = vrot.slane %v2214, %v2566
      %v2568 = vlaneseq
      %v2569 = vshrl.u32 %v2568, 7
      %v2570 = vsub.s32 2, %v2569
      %v2571 = vrot.slane %v2224, %v2570
      %v2572 = vlaneseq
      %v2573 = vshrl.u32 %v2572, 7
      %v2574 = vsub.s32 2, %v2573
      %v2575 = vrot.slane %v2234, %v2574
      %v2576 = vlaneseq
      %v2577 = vshrl.u32 %v2576, 7
      %v2578 = vsub.s32 2, %v2577
      %v2579 = vrot.slane %v2244, %v2578
      %v2580 = vlaneseq
      %v2581 = vshrl.u32 %v2580, 7
      %v2582 = vsub.s32 2, %v2581
      %v2583 = vrot.slane %v2254, %v2582
      %v2584 = vlaneseq
      %v2585 = vshrl.u32 %v2584, 7
      %v2586 = vsub.s32 2, %v2585
      %v2587 = vrot.slane %v2264, %v2586
      %v2588 = vlaneseq
      %v2589 = vshrl.u32 %v2588, 7
      %v2590 = vsub.s32 2, %v2589
      %v2591 = vrot.slane %v2274, %v2590
      %v2592 = vlaneseq
      %v2593 = vshrl.u32 %v2592, 7
      %v2594 = vsub.s32 2, %v2593
      %v2595 = vrot.slane %v2284, %v2594
      %2598 = vrot.lane.b32.xlu0 %v2154, 96
      %v2599 = vpop.permute.xlu0 %2598
      %2600 = vrot.lane.b32.xlu0 %v2159, 96
      %v2601 = vpop.permute.xlu0 %2600
      %v2604 = vmul.f32 %v2535, %v2599
      %v2605 = vmul.f32 %v2535, %v2601
      %v2606 = vmul.f32 %v2539, %v2599
      %v2607 = vmul.f32 %v2539, %v2601
      %v2608 = vmul.f32 %v2543, %v2599
      %v2609 = vmul.f32 %v2543, %v2601
      %v2610 = vmul.f32 %v2547, %v2599
      %v2611 = vmul.f32 %v2547, %v2601
      %v2612 = vmul.f32 %v2551, %v2599
      %v2613 = vmul.f32 %v2551, %v2601
      %v2614 = vmul.f32 %v2555, %v2599
      %v2615 = vmul.f32 %v2555, %v2601
      %v2616 = vmul.f32 %v2559, %v2599
      %v2617 = vmul.f32 %v2559, %v2601
      %v2618 = vmul.f32 %v2563, %v2599
      %v2619 = vmul.f32 %v2563, %v2601
      %v2620 = vmul.f32 %v2567, %v2599
      %v2621 = vmul.f32 %v2567, %v2601
      %v2622 = vmul.f32 %v2571, %v2599
      %v2623 = vmul.f32 %v2571, %v2601
      %v2624 = vmul.f32 %v2575, %v2599
      %v2625 = vmul.f32 %v2575, %v2601
      %v2626 = vmul.f32 %v2579, %v2599
      %v2627 = vmul.f32 %v2579, %v2601
      %v2628 = vmul.f32 %v2583, %v2599
      %v2629 = vmul.f32 %v2583, %v2601
      %v2630 = vmul.f32 %v2587, %v2599
      %v2631 = vmul.f32 %v2587, %v2601
      %v2632 = vmul.f32 %v2591, %v2599
      %v2633 = vmul.f32 %v2591, %v2601
      %v2634 = vmul.f32 %v2595, %v2599
      %v2635 = vmul.f32 %v2595, %v2601
      %v2636 = vadd.f32 %v2500, %v2604
      %v2637 = vadd.f32 %v2501, %v2605
      %v2638 = vadd.f32 %v2502, %v2606
      %v2639 = vadd.f32 %v2503, %v2607
      %v2640 = vadd.f32 %v2504, %v2608
      %v2641 = vadd.f32 %v2505, %v2609
      %v2642 = vadd.f32 %v2506, %v2610
      %v2643 = vadd.f32 %v2507, %v2611
      %v2644 = vadd.f32 %v2508, %v2612
      %v2645 = vadd.f32 %v2509, %v2613
      %v2646 = vadd.f32 %v2510, %v2614
      %v2647 = vadd.f32 %v2511, %v2615
      %v2648 = vadd.f32 %v2512, %v2616
      %v2649 = vadd.f32 %v2513, %v2617
      %v2650 = vadd.f32 %v2514, %v2618
      %v2651 = vadd.f32 %v2515, %v2619
      %v2652 = vadd.f32 %v2516, %v2620
      %v2653 = vadd.f32 %v2517, %v2621
      %v2654 = vadd.f32 %v2518, %v2622
      %v2655 = vadd.f32 %v2519, %v2623
      %v2656 = vadd.f32 %v2520, %v2624
      %v2657 = vadd.f32 %v2521, %v2625
      %v2658 = vadd.f32 %v2522, %v2626
      %v2659 = vadd.f32 %v2523, %v2627
      %v2660 = vadd.f32 %v2524, %v2628
      %v2661 = vadd.f32 %v2525, %v2629
      %v2662 = vadd.f32 %v2526, %v2630
      %v2663 = vadd.f32 %v2527, %v2631
      %v2664 = vadd.f32 %v2528, %v2632
      %v2665 = vadd.f32 %v2529, %v2633
      %v2666 = vadd.f32 %v2530, %v2634
      %v2667 = vadd.f32 %v2531, %v2635
      %v2668 = vlaneseq
      %v2669 = vshrl.u32 %v2668, 7
      %v2670 = vsub.s32 3, %v2669
      %v2671 = vrot.slane %v2134, %v2670
      %v2672 = vlaneseq
      %v2673 = vshrl.u32 %v2672, 7
      %v2674 = vsub.s32 3, %v2673
      %v2675 = vrot.slane %v2144, %v2674
      %v2676 = vlaneseq
      %v2677 = vshrl.u32 %v2676, 7
      %v2678 = vsub.s32 3, %v2677
      %v2679 = vrot.slane %v2154, %v2678
      %v2680 = vlaneseq
      %v2681 = vshrl.u32 %v2680, 7
      %v2682 = vsub.s32 3, %v2681
      %v2683 = vrot.slane %v2164, %v2682
      %v2684 = vlaneseq
      %v2685 = vshrl.u32 %v2684, 7
      %v2686 = vsub.s32 3, %v2685
      %v2687 = vrot.slane %v2174, %v2686
      %v2688 = vlaneseq
      %v2689 = vshrl.u32 %v2688, 7
      %v2690 = vsub.s32 3, %v2689
      %v2691 = vrot.slane %v2184, %v2690
      %v2692 = vlaneseq
      %v2693 = vshrl.u32 %v2692, 7
      %v2694 = vsub.s32 3, %v2693
      %v2695 = vrot.slane %v2194, %v2694
      %v2696 = vlaneseq
      %v2697 = vshrl.u32 %v2696, 7
      %v2698 = vsub.s32 3, %v2697
      %v2699 = vrot.slane %v2204, %v2698
      %v2700 = vlaneseq
      %v2701 = vshrl.u32 %v2700, 7
      %v2702 = vsub.s32 3, %v2701
      %v2703 = vrot.slane %v2214, %v2702
      %v2704 = vlaneseq
      %v2705 = vshrl.u32 %v2704, 7
      %v2706 = vsub.s32 3, %v2705
      %v2707 = vrot.slane %v2224, %v2706
      %v2708 = vlaneseq
      %v2709 = vshrl.u32 %v2708, 7
      %v2710 = vsub.s32 3, %v2709
      %v2711 = vrot.slane %v2234, %v2710
      %v2712 = vlaneseq
      %v2713 = vshrl.u32 %v2712, 7
      %v2714 = vsub.s32 3, %v2713
      %v2715 = vrot.slane %v2244, %v2714
      %v2716 = vlaneseq
      %v2717 = vshrl.u32 %v2716, 7
      %v2718 = vsub.s32 3, %v2717
      %v2719 = vrot.slane %v2254, %v2718
      %v2720 = vlaneseq
      %v2721 = vshrl.u32 %v2720, 7
      %v2722 = vsub.s32 3, %v2721
      %v2723 = vrot.slane %v2264, %v2722
      %v2724 = vlaneseq
      %v2725 = vshrl.u32 %v2724, 7
      %v2726 = vsub.s32 3, %v2725
      %v2727 = vrot.slane %v2274, %v2726
      %v2728 = vlaneseq
      %v2729 = vshrl.u32 %v2728, 7
      %v2730 = vsub.s32 3, %v2729
      %v2731 = vrot.slane %v2284, %v2730
      %2734 = vrot.lane.b32.xlu0 %v2164, 96
      %v2735 = vpop.permute.xlu0 %2734
      %2736 = vrot.lane.b32.xlu0 %v2169, 96
      %v2737 = vpop.permute.xlu0 %2736
      %v2740 = vmul.f32 %v2671, %v2735
      %v2741 = vmul.f32 %v2671, %v2737
      %v2742 = vmul.f32 %v2675, %v2735
      %v2743 = vmul.f32 %v2675, %v2737
      %v2744 = vmul.f32 %v2679, %v2735
      %v2745 = vmul.f32 %v2679, %v2737
      %v2746 = vmul.f32 %v2683, %v2735
      %v2747 = vmul.f32 %v2683, %v2737
      %v2748 = vmul.f32 %v2687, %v2735
      %v2749 = vmul.f32 %v2687, %v2737
      %v2750 = vmul.f32 %v2691, %v2735
      %v2751 = vmul.f32 %v2691, %v2737
      %v2752 = vmul.f32 %v2695, %v2735
      %v2753 = vmul.f32 %v2695, %v2737
      %v2754 = vmul.f32 %v2699, %v2735
      %v2755 = vmul.f32 %v2699, %v2737
      %v2756 = vmul.f32 %v2703, %v2735
      %v2757 = vmul.f32 %v2703, %v2737
      %v2758 = vmul.f32 %v2707, %v2735
      %v2759 = vmul.f32 %v2707, %v2737
      %v2760 = vmul.f32 %v2711, %v2735
      %v2761 = vmul.f32 %v2711, %v2737
      %v2762 = vmul.f32 %v2715, %v2735
      %v2763 = vmul.f32 %v2715, %v2737
      %v2764 = vmul.f32 %v2719, %v2735
      %v2765 = vmul.f32 %v2719, %v2737
      %v2766 = vmul.f32 %v2723, %v2735
      %v2767 = vmul.f32 %v2723, %v2737
      %v2768 = vmul.f32 %v2727, %v2735
      %v2769 = vmul.f32 %v2727, %v2737
      %v2770 = vmul.f32 %v2731, %v2735
      %v2771 = vmul.f32 %v2731, %v2737
      %v2772 = vadd.f32 %v2636, %v2740
      %v2773 = vadd.f32 %v2637, %v2741
      %v2774 = vadd.f32 %v2638, %v2742
      %v2775 = vadd.f32 %v2639, %v2743
      %v2776 = vadd.f32 %v2640, %v2744
      %v2777 = vadd.f32 %v2641, %v2745
      %v2778 = vadd.f32 %v2642, %v2746
      %v2779 = vadd.f32 %v2643, %v2747
      %v2780 = vadd.f32 %v2644, %v2748
      %v2781 = vadd.f32 %v2645, %v2749
      %v2782 = vadd.f32 %v2646, %v2750
      %v2783 = vadd.f32 %v2647, %v2751
      %v2784 = vadd.f32 %v2648, %v2752
      %v2785 = vadd.f32 %v2649, %v2753
      %v2786 = vadd.f32 %v2650, %v2754
      %v2787 = vadd.f32 %v2651, %v2755
      %v2788 = vadd.f32 %v2652, %v2756
      %v2789 = vadd.f32 %v2653, %v2757
      %v2790 = vadd.f32 %v2654, %v2758
      %v2791 = vadd.f32 %v2655, %v2759
      %v2792 = vadd.f32 %v2656, %v2760
      %v2793 = vadd.f32 %v2657, %v2761
      %v2794 = vadd.f32 %v2658, %v2762
      %v2795 = vadd.f32 %v2659, %v2763
      %v2796 = vadd.f32 %v2660, %v2764
      %v2797 = vadd.f32 %v2661, %v2765
      %v2798 = vadd.f32 %v2662, %v2766
      %v2799 = vadd.f32 %v2663, %v2767
      %v2800 = vadd.f32 %v2664, %v2768
      %v2801 = vadd.f32 %v2665, %v2769
      %v2802 = vadd.f32 %v2666, %v2770
      %v2803 = vadd.f32 %v2667, %v2771
      %v2804 = vlaneseq
      %v2805 = vshrl.u32 %v2804, 7
      %v2806 = vsub.s32 4, %v2805
      %v2807 = vrot.slane %v2134, %v2806
      %v2808 = vlaneseq
      %v2809 = vshrl.u32 %v2808, 7
      %v2810 = vsub.s32 4, %v2809
      %v2811 = vrot.slane %v2144, %v2810
      %v2812 = vlaneseq
      %v2813 = vshrl.u32 %v2812, 7
      %v2814 = vsub.s32 4, %v2813
      %v2815 = vrot.slane %v2154, %v2814
      %v2816 = vlaneseq
      %v2817 = vshrl.u32 %v2816, 7
      %v2818 = vsub.s32 4, %v2817
      %v2819 = vrot.slane %v2164, %v2818
      %v2820 = vlaneseq
      %v2821 = vshrl.u32 %v2820, 7
      %v2822 = vsub.s32 4, %v2821
      %v2823 = vrot.slane %v2174, %v2822
      %v2824 = vlaneseq
      %v2825 = vshrl.u32 %v2824, 7
      %v2826 = vsub.s32 4, %v2825
      %v2827 = vrot.slane %v2184, %v2826
      %v2828 = vlaneseq
      %v2829 = vshrl.u32 %v2828, 7
      %v2830 = vsub.s32 4, %v2829
      %v2831 = vrot.slane %v2194, %v2830
      %v2832 = vlaneseq
      %v2833 = vshrl.u32 %v2832, 7
      %v2834 = vsub.s32 4, %v2833
      %v2835 = vrot.slane %v2204, %v2834
      %v2836 = vlaneseq
      %v2837 = vshrl.u32 %v2836, 7
      %v2838 = vsub.s32 4, %v2837
      %v2839 = vrot.slane %v2214, %v2838
      %v2840 = vlaneseq
      %v2841 = vshrl.u32 %v2840, 7
      %v2842 = vsub.s32 4, %v2841
      %v2843 = vrot.slane %v2224, %v2842
      %v2844 = vlaneseq
      %v2845 = vshrl.u32 %v2844, 7
      %v2846 = vsub.s32 4, %v2845
      %v2847 = vrot.slane %v2234, %v2846
      %v2848 = vlaneseq
      %v2849 = vshrl.u32 %v2848, 7
      %v2850 = vsub.s32 4, %v2849
      %v2851 = vrot.slane %v2244, %v2850
      %v2852 = vlaneseq
      %v2853 = vshrl.u32 %v2852, 7
      %v2854 = vsub.s32 4, %v2853
      %v2855 = vrot.slane %v2254, %v2854
      %v2856 = vlaneseq
      %v2857 = vshrl.u32 %v2856, 7
      %v2858 = vsub.s32 4, %v2857
      %v2859 = vrot.slane %v2264, %v2858
      %v2860 = vlaneseq
      %v2861 = vshrl.u32 %v2860, 7
      %v2862 = vsub.s32 4, %v2861
      %v2863 = vrot.slane %v2274, %v2862
      %v2864 = vlaneseq
      %v2865 = vshrl.u32 %v2864, 7
      %v2866 = vsub.s32 4, %v2865
      %v2867 = vrot.slane %v2284, %v2866
      %2870 = vrot.lane.b32.xlu0 %v2174, 96
      %v2871 = vpop.permute.xlu0 %2870
      %2872 = vrot.lane.b32.xlu0 %v2179, 96
      %v2873 = vpop.permute.xlu0 %2872
      %v2876 = vmul.f32 %v2807, %v2871
      %v2877 = vmul.f32 %v2807, %v2873
      %v2878 = vmul.f32 %v2811, %v2871
      %v2879 = vmul.f32 %v2811, %v2873
      %v2880 = vmul.f32 %v2815, %v2871
      %v2881 = vmul.f32 %v2815, %v2873
      %v2882 = vmul.f32 %v2819, %v2871
      %v2883 = vmul.f32 %v2819, %v2873
      %v2884 = vmul.f32 %v2823, %v2871
      %v2885 = vmul.f32 %v2823, %v2873
      %v2886 = vmul.f32 %v2827, %v2871
      %v2887 = vmul.f32 %v2827, %v2873
      %v2888 = vmul.f32 %v2831, %v2871
      %v2889 = vmul.f32 %v2831, %v2873
      %v2890 = vmul.f32 %v2835, %v2871
      %v2891 = vmul.f32 %v2835, %v2873
      %v2892 = vmul.f32 %v2839, %v2871
      %v2893 = vmul.f32 %v2839, %v2873
      %v2894 = vmul.f32 %v2843, %v2871
      %v2895 = vmul.f32 %v2843, %v2873
      %v2896 = vmul.f32 %v2847, %v2871
      %v2897 = vmul.f32 %v2847, %v2873
      %v2898 = vmul.f32 %v2851, %v2871
      %v2899 = vmul.f32 %v2851, %v2873
      %v2900 = vmul.f32 %v2855, %v2871
      %v2901 = vmul.f32 %v2855, %v2873
      %v2902 = vmul.f32 %v2859, %v2871
      %v2903 = vmul.f32 %v2859, %v2873
      %v2904 = vmul.f32 %v2863, %v2871
      %v2905 = vmul.f32 %v2863, %v2873
      %v2906 = vmul.f32 %v2867, %v2871
      %v2907 = vmul.f32 %v2867, %v2873
      %v2908 = vadd.f32 %v2772, %v2876
      %v2909 = vadd.f32 %v2773, %v2877
      %v2910 = vadd.f32 %v2774, %v2878
      %v2911 = vadd.f32 %v2775, %v2879
      %v2912 = vadd.f32 %v2776, %v2880
      %v2913 = vadd.f32 %v2777, %v2881
      %v2914 = vadd.f32 %v2778, %v2882
      %v2915 = vadd.f32 %v2779, %v2883
      %v2916 = vadd.f32 %v2780, %v2884
      %v2917 = vadd.f32 %v2781, %v2885
      %v2918 = vadd.f32 %v2782, %v2886
      %v2919 = vadd.f32 %v2783, %v2887
      %v2920 = vadd.f32 %v2784, %v2888
      %v2921 = vadd.f32 %v2785, %v2889
      %v2922 = vadd.f32 %v2786, %v2890
      %v2923 = vadd.f32 %v2787, %v2891
      %v2924 = vadd.f32 %v2788, %v2892
      %v2925 = vadd.f32 %v2789, %v2893
      %v2926 = vadd.f32 %v2790, %v2894
      %v2927 = vadd.f32 %v2791, %v2895
      %v2928 = vadd.f32 %v2792, %v2896
      %v2929 = vadd.f32 %v2793, %v2897
      %v2930 = vadd.f32 %v2794, %v2898
      %v2931 = vadd.f32 %v2795, %v2899
      %v2932 = vadd.f32 %v2796, %v2900
      %v2933 = vadd.f32 %v2797, %v2901
      %v2934 = vadd.f32 %v2798, %v2902
      %v2935 = vadd.f32 %v2799, %v2903
      %v2936 = vadd.f32 %v2800, %v2904
      %v2937 = vadd.f32 %v2801, %v2905
      %v2938 = vadd.f32 %v2802, %v2906
      %v2939 = vadd.f32 %v2803, %v2907
      %v2940 = vlaneseq
      %v2941 = vshrl.u32 %v2940, 7
      %v2942 = vsub.s32 5, %v2941
      %v2943 = vrot.slane %v2134, %v2942
      %v2944 = vlaneseq
      %v2945 = vshrl.u32 %v2944, 7
      %v2946 = vsub.s32 5, %v2945
      %v2947 = vrot.slane %v2144, %v2946
      %v2948 = vlaneseq
      %v2949 = vshrl.u32 %v2948, 7
      %v2950 = vsub.s32 5, %v2949
      %v2951 = vrot.slane %v2154, %v2950
      %v2952 = vlaneseq
      %v2953 = vshrl.u32 %v2952, 7
      %v2954 = vsub.s32 5, %v2953
      %v2955 = vrot.slane %v2164, %v2954
      %v2956 = vlaneseq
      %v2957 = vshrl.u32 %v2956, 7
      %v2958 = vsub.s32 5, %v2957
      %v2959 = vrot.slane %v2174, %v2958
      %v2960 = vlaneseq
      %v2961 = vshrl.u32 %v2960, 7
      %v2962 = vsub.s32 5, %v2961
      %v2963 = vrot.slane %v2184, %v2962
      %v2964 = vlaneseq
      %v2965 = vshrl.u32 %v2964, 7
      %v2966 = vsub.s32 5, %v2965
      %v2967 = vrot.slane %v2194, %v2966
      %v2968 = vlaneseq
      %v2969 = vshrl.u32 %v2968, 7
      %v2970 = vsub.s32 5, %v2969
      %v2971 = vrot.slane %v2204, %v2970
      %v2972 = vlaneseq
      %v2973 = vshrl.u32 %v2972, 7
      %v2974 = vsub.s32 5, %v2973
      %v2975 = vrot.slane %v2214, %v2974
      %v2976 = vlaneseq
      %v2977 = vshrl.u32 %v2976, 7
      %v2978 = vsub.s32 5, %v2977
      %v2979 = vrot.slane %v2224, %v2978
      %v2980 = vlaneseq
      %v2981 = vshrl.u32 %v2980, 7
      %v2982 = vsub.s32 5, %v2981
      %v2983 = vrot.slane %v2234, %v2982
      %v2984 = vlaneseq
      %v2985 = vshrl.u32 %v2984, 7
      %v2986 = vsub.s32 5, %v2985
      %v2987 = vrot.slane %v2244, %v2986
      %v2988 = vlaneseq
      %v2989 = vshrl.u32 %v2988, 7
      %v2990 = vsub.s32 5, %v2989
      %v2991 = vrot.slane %v2254, %v2990
      %v2992 = vlaneseq
      %v2993 = vshrl.u32 %v2992, 7
      %v2994 = vsub.s32 5, %v2993
      %v2995 = vrot.slane %v2264, %v2994
      %v2996 = vlaneseq
      %v2997 = vshrl.u32 %v2996, 7
      %v2998 = vsub.s32 5, %v2997
      %v2999 = vrot.slane %v2274, %v2998
      %v3000 = vlaneseq
      %v3001 = vshrl.u32 %v3000, 7
      %v3002 = vsub.s32 5, %v3001
      %v3003 = vrot.slane %v2284, %v3002
      %3006 = vrot.lane.b32.xlu0 %v2184, 96
      %v3007 = vpop.permute.xlu0 %3006
      %3008 = vrot.lane.b32.xlu0 %v2189, 96
      %v3009 = vpop.permute.xlu0 %3008
      %v3012 = vmul.f32 %v2943, %v3007
      %v3013 = vmul.f32 %v2943, %v3009
      %v3014 = vmul.f32 %v2947, %v3007
      %v3015 = vmul.f32 %v2947, %v3009
      %v3016 = vmul.f32 %v2951, %v3007
      %v3017 = vmul.f32 %v2951, %v3009
      %v3018 = vmul.f32 %v2955, %v3007
      %v3019 = vmul.f32 %v2955, %v3009
      %v3020 = vmul.f32 %v2959, %v3007
      %v3021 = vmul.f32 %v2959, %v3009
      %v3022 = vmul.f32 %v2963, %v3007
      %v3023 = vmul.f32 %v2963, %v3009
      %v3024 = vmul.f32 %v2967, %v3007
      %v3025 = vmul.f32 %v2967, %v3009
      %v3026 = vmul.f32 %v2971, %v3007
      %v3027 = vmul.f32 %v2971, %v3009
      %v3028 = vmul.f32 %v2975, %v3007
      %v3029 = vmul.f32 %v2975, %v3009
      %v3030 = vmul.f32 %v2979, %v3007
      %v3031 = vmul.f32 %v2979, %v3009
      %v3032 = vmul.f32 %v2983, %v3007
      %v3033 = vmul.f32 %v2983, %v3009
      %v3034 = vmul.f32 %v2987, %v3007
      %v3035 = vmul.f32 %v2987, %v3009
      %v3036 = vmul.f32 %v2991, %v3007
      %v3037 = vmul.f32 %v2991, %v3009
      %v3038 = vmul.f32 %v2995, %v3007
      %v3039 = vmul.f32 %v2995, %v3009
      %v3040 = vmul.f32 %v2999, %v3007
      %v3041 = vmul.f32 %v2999, %v3009
      %v3042 = vmul.f32 %v3003, %v3007
      %v3043 = vmul.f32 %v3003, %v3009
      %v3044 = vadd.f32 %v2908, %v3012
      %v3045 = vadd.f32 %v2909, %v3013
      %v3046 = vadd.f32 %v2910, %v3014
      %v3047 = vadd.f32 %v2911, %v3015
      %v3048 = vadd.f32 %v2912, %v3016
      %v3049 = vadd.f32 %v2913, %v3017
      %v3050 = vadd.f32 %v2914, %v3018
      %v3051 = vadd.f32 %v2915, %v3019
      %v3052 = vadd.f32 %v2916, %v3020
      %v3053 = vadd.f32 %v2917, %v3021
      %v3054 = vadd.f32 %v2918, %v3022
      %v3055 = vadd.f32 %v2919, %v3023
      %v3056 = vadd.f32 %v2920, %v3024
      %v3057 = vadd.f32 %v2921, %v3025
      %v3058 = vadd.f32 %v2922, %v3026
      %v3059 = vadd.f32 %v2923, %v3027
      %v3060 = vadd.f32 %v2924, %v3028
      %v3061 = vadd.f32 %v2925, %v3029
      %v3062 = vadd.f32 %v2926, %v3030
      %v3063 = vadd.f32 %v2927, %v3031
      %v3064 = vadd.f32 %v2928, %v3032
      %v3065 = vadd.f32 %v2929, %v3033
      %v3066 = vadd.f32 %v2930, %v3034
      %v3067 = vadd.f32 %v2931, %v3035
      %v3068 = vadd.f32 %v2932, %v3036
      %v3069 = vadd.f32 %v2933, %v3037
      %v3070 = vadd.f32 %v2934, %v3038
      %v3071 = vadd.f32 %v2935, %v3039
      %v3072 = vadd.f32 %v2936, %v3040
      %v3073 = vadd.f32 %v2937, %v3041
      %v3074 = vadd.f32 %v2938, %v3042
      %v3075 = vadd.f32 %v2939, %v3043
      %v3076 = vlaneseq
      %v3077 = vshrl.u32 %v3076, 7
      %v3078 = vsub.s32 6, %v3077
      %v3079 = vrot.slane %v2134, %v3078
      %v3080 = vlaneseq
      %v3081 = vshrl.u32 %v3080, 7
      %v3082 = vsub.s32 6, %v3081
      %v3083 = vrot.slane %v2144, %v3082
      %v3084 = vlaneseq
      %v3085 = vshrl.u32 %v3084, 7
      %v3086 = vsub.s32 6, %v3085
      %v3087 = vrot.slane %v2154, %v3086
      %v3088 = vlaneseq
      %v3089 = vshrl.u32 %v3088, 7
      %v3090 = vsub.s32 6, %v3089
      %v3091 = vrot.slane %v2164, %v3090
      %v3092 = vlaneseq
      %v3093 = vshrl.u32 %v3092, 7
      %v3094 = vsub.s32 6, %v3093
      %v3095 = vrot.slane %v2174, %v3094
      %v3096 = vlaneseq
      %v3097 = vshrl.u32 %v3096, 7
      %v3098 = vsub.s32 6, %v3097
      %v3099 = vrot.slane %v2184, %v3098
      %v3100 = vlaneseq
      %v3101 = vshrl.u32 %v3100, 7
      %v3102 = vsub.s32 6, %v3101
      %v3103 = vrot.slane %v2194, %v3102
      %v3104 = vlaneseq
      %v3105 = vshrl.u32 %v3104, 7
      %v3106 = vsub.s32 6, %v3105
      %v3107 = vrot.slane %v2204, %v3106
      %v3108 = vlaneseq
      %v3109 = vshrl.u32 %v3108, 7
      %v3110 = vsub.s32 6, %v3109
      %v3111 = vrot.slane %v2214, %v3110
      %v3112 = vlaneseq
      %v3113 = vshrl.u32 %v3112, 7
      %v3114 = vsub.s32 6, %v3113
      %v3115 = vrot.slane %v2224, %v3114
      %v3116 = vlaneseq
      %v3117 = vshrl.u32 %v3116, 7
      %v3118 = vsub.s32 6, %v3117
      %v3119 = vrot.slane %v2234, %v3118
      %v3120 = vlaneseq
      %v3121 = vshrl.u32 %v3120, 7
      %v3122 = vsub.s32 6, %v3121
      %v3123 = vrot.slane %v2244, %v3122
      %v3124 = vlaneseq
      %v3125 = vshrl.u32 %v3124, 7
      %v3126 = vsub.s32 6, %v3125
      %v3127 = vrot.slane %v2254, %v3126
      %v3128 = vlaneseq
      %v3129 = vshrl.u32 %v3128, 7
      %v3130 = vsub.s32 6, %v3129
      %v3131 = vrot.slane %v2264, %v3130
      %v3132 = vlaneseq
      %v3133 = vshrl.u32 %v3132, 7
      %v3134 = vsub.s32 6, %v3133
      %v3135 = vrot.slane %v2274, %v3134
      %v3136 = vlaneseq
      %v3137 = vshrl.u32 %v3136, 7
      %v3138 = vsub.s32 6, %v3137
      %v3139 = vrot.slane %v2284, %v3138
      %3142 = vrot.lane.b32.xlu0 %v2194, 96
      %v3143 = vpop.permute.xlu0 %3142
      %3144 = vrot.lane.b32.xlu0 %v2199, 96
      %v3145 = vpop.permute.xlu0 %3144
      %v3148 = vmul.f32 %v3079, %v3143
      %v3149 = vmul.f32 %v3079, %v3145
      %v3150 = vmul.f32 %v3083, %v3143
      %v3151 = vmul.f32 %v3083, %v3145
      %v3152 = vmul.f32 %v3087, %v3143
      %v3153 = vmul.f32 %v3087, %v3145
      %v3154 = vmul.f32 %v3091, %v3143
      %v3155 = vmul.f32 %v3091, %v3145
      %v3156 = vmul.f32 %v3095, %v3143
      %v3157 = vmul.f32 %v3095, %v3145
      %v3158 = vmul.f32 %v3099, %v3143
      %v3159 = vmul.f32 %v3099, %v3145
      %v3160 = vmul.f32 %v3103, %v3143
      %v3161 = vmul.f32 %v3103, %v3145
      %v3162 = vmul.f32 %v3107, %v3143
      %v3163 = vmul.f32 %v3107, %v3145
      %v3164 = vmul.f32 %v3111, %v3143
      %v3165 = vmul.f32 %v3111, %v3145
      %v3166 = vmul.f32 %v3115, %v3143
      %v3167 = vmul.f32 %v3115, %v3145
      %v3168 = vmul.f32 %v3119, %v3143
      %v3169 = vmul.f32 %v3119, %v3145
      %v3170 = vmul.f32 %v3123, %v3143
      %v3171 = vmul.f32 %v3123, %v3145
      %v3172 = vmul.f32 %v3127, %v3143
      %v3173 = vmul.f32 %v3127, %v3145
      %v3174 = vmul.f32 %v3131, %v3143
      %v3175 = vmul.f32 %v3131, %v3145
      %v3176 = vmul.f32 %v3135, %v3143
      %v3177 = vmul.f32 %v3135, %v3145
      %v3178 = vmul.f32 %v3139, %v3143
      %v3179 = vmul.f32 %v3139, %v3145
      %v3180 = vadd.f32 %v3044, %v3148
      %v3181 = vadd.f32 %v3045, %v3149
      %v3182 = vadd.f32 %v3046, %v3150
      %v3183 = vadd.f32 %v3047, %v3151
      %v3184 = vadd.f32 %v3048, %v3152
      %v3185 = vadd.f32 %v3049, %v3153
      %v3186 = vadd.f32 %v3050, %v3154
      %v3187 = vadd.f32 %v3051, %v3155
      %v3188 = vadd.f32 %v3052, %v3156
      %v3189 = vadd.f32 %v3053, %v3157
      %v3190 = vadd.f32 %v3054, %v3158
      %v3191 = vadd.f32 %v3055, %v3159
      %v3192 = vadd.f32 %v3056, %v3160
      %v3193 = vadd.f32 %v3057, %v3161
      %v3194 = vadd.f32 %v3058, %v3162
      %v3195 = vadd.f32 %v3059, %v3163
      %v3196 = vadd.f32 %v3060, %v3164
      %v3197 = vadd.f32 %v3061, %v3165
      %v3198 = vadd.f32 %v3062, %v3166
      %v3199 = vadd.f32 %v3063, %v3167
      %v3200 = vadd.f32 %v3064, %v3168
      %v3201 = vadd.f32 %v3065, %v3169
      %v3202 = vadd.f32 %v3066, %v3170
      %v3203 = vadd.f32 %v3067, %v3171
      %v3204 = vadd.f32 %v3068, %v3172
      %v3205 = vadd.f32 %v3069, %v3173
      %v3206 = vadd.f32 %v3070, %v3174
      %v3207 = vadd.f32 %v3071, %v3175
      %v3208 = vadd.f32 %v3072, %v3176
      %v3209 = vadd.f32 %v3073, %v3177
      %v3210 = vadd.f32 %v3074, %v3178
      %v3211 = vadd.f32 %v3075, %v3179
      %v3212 = vlaneseq
      %v3213 = vshrl.u32 %v3212, 7
      %v3214 = vsub.s32 7, %v3213
      %v3215 = vrot.slane %v2134, %v3214
      %v3216 = vlaneseq
      %v3217 = vshrl.u32 %v3216, 7
      %v3218 = vsub.s32 7, %v3217
      %v3219 = vrot.slane %v2144, %v3218
      %v3220 = vlaneseq
      %v3221 = vshrl.u32 %v3220, 7
      %v3222 = vsub.s32 7, %v3221
      %v3223 = vrot.slane %v2154, %v3222
      %v3224 = vlaneseq
      %v3225 = vshrl.u32 %v3224, 7
      %v3226 = vsub.s32 7, %v3225
      %v3227 = vrot.slane %v2164, %v3226
      %v3228 = vlaneseq
      %v3229 = vshrl.u32 %v3228, 7
      %v3230 = vsub.s32 7, %v3229
      %v3231 = vrot.slane %v2174, %v3230
      %v3232 = vlaneseq
      %v3233 = vshrl.u32 %v3232, 7
      %v3234 = vsub.s32 7, %v3233
      %v3235 = vrot.slane %v2184, %v3234
      %v3236 = vlaneseq
      %v3237 = vshrl.u32 %v3236, 7
      %v3238 = vsub.s32 7, %v3237
      %v3239 = vrot.slane %v2194, %v3238
      %v3240 = vlaneseq
      %v3241 = vshrl.u32 %v3240, 7
      %v3242 = vsub.s32 7, %v3241
      %v3243 = vrot.slane %v2204, %v3242
      %v3244 = vlaneseq
      %v3245 = vshrl.u32 %v3244, 7
      %v3246 = vsub.s32 7, %v3245
      %v3247 = vrot.slane %v2214, %v3246
      %v3248 = vlaneseq
      %v3249 = vshrl.u32 %v3248, 7
      %v3250 = vsub.s32 7, %v3249
      %v3251 = vrot.slane %v2224, %v3250
      %v3252 = vlaneseq
      %v3253 = vshrl.u32 %v3252, 7
      %v3254 = vsub.s32 7, %v3253
      %v3255 = vrot.slane %v2234, %v3254
      %v3256 = vlaneseq
      %v3257 = vshrl.u32 %v3256, 7
      %v3258 = vsub.s32 7, %v3257
      %v3259 = vrot.slane %v2244, %v3258
      %v3260 = vlaneseq
      %v3261 = vshrl.u32 %v3260, 7
      %v3262 = vsub.s32 7, %v3261
      %v3263 = vrot.slane %v2254, %v3262
      %v3264 = vlaneseq
      %v3265 = vshrl.u32 %v3264, 7
      %v3266 = vsub.s32 7, %v3265
      %v3267 = vrot.slane %v2264, %v3266
      %v3268 = vlaneseq
      %v3269 = vshrl.u32 %v3268, 7
      %v3270 = vsub.s32 7, %v3269
      %v3271 = vrot.slane %v2274, %v3270
      %v3272 = vlaneseq
      %v3273 = vshrl.u32 %v3272, 7
      %v3274 = vsub.s32 7, %v3273
      %v3275 = vrot.slane %v2284, %v3274
      %3278 = vrot.lane.b32.xlu0 %v2204, 96
      %v3279 = vpop.permute.xlu0 %3278
      %3280 = vrot.lane.b32.xlu0 %v2209, 96
      %v3281 = vpop.permute.xlu0 %3280
      %v3284 = vmul.f32 %v3215, %v3279
      %v3285 = vmul.f32 %v3215, %v3281
      %v3286 = vmul.f32 %v3219, %v3279
      %v3287 = vmul.f32 %v3219, %v3281
      %v3288 = vmul.f32 %v3223, %v3279
      %v3289 = vmul.f32 %v3223, %v3281
      %v3290 = vmul.f32 %v3227, %v3279
      %v3291 = vmul.f32 %v3227, %v3281
      %v3292 = vmul.f32 %v3231, %v3279
      %v3293 = vmul.f32 %v3231, %v3281
      %v3294 = vmul.f32 %v3235, %v3279
      %v3295 = vmul.f32 %v3235, %v3281
      %v3296 = vmul.f32 %v3239, %v3279
      %v3297 = vmul.f32 %v3239, %v3281
      %v3298 = vmul.f32 %v3243, %v3279
      %v3299 = vmul.f32 %v3243, %v3281
      %v3300 = vmul.f32 %v3247, %v3279
      %v3301 = vmul.f32 %v3247, %v3281
      %v3302 = vmul.f32 %v3251, %v3279
      %v3303 = vmul.f32 %v3251, %v3281
      %v3304 = vmul.f32 %v3255, %v3279
      %v3305 = vmul.f32 %v3255, %v3281
      %v3306 = vmul.f32 %v3259, %v3279
      %v3307 = vmul.f32 %v3259, %v3281
      %v3308 = vmul.f32 %v3263, %v3279
      %v3309 = vmul.f32 %v3263, %v3281
      %v3310 = vmul.f32 %v3267, %v3279
      %v3311 = vmul.f32 %v3267, %v3281
      %v3312 = vmul.f32 %v3271, %v3279
      %v3313 = vmul.f32 %v3271, %v3281
      %v3314 = vmul.f32 %v3275, %v3279
      %v3315 = vmul.f32 %v3275, %v3281
      %v3316 = vadd.f32 %v3180, %v3284
      %v3317 = vadd.f32 %v3181, %v3285
      %v3318 = vadd.f32 %v3182, %v3286
      %v3319 = vadd.f32 %v3183, %v3287
      %v3320 = vadd.f32 %v3184, %v3288
      %v3321 = vadd.f32 %v3185, %v3289
      %v3322 = vadd.f32 %v3186, %v3290
      %v3323 = vadd.f32 %v3187, %v3291
      %v3324 = vadd.f32 %v3188, %v3292
      %v3325 = vadd.f32 %v3189, %v3293
      %v3326 = vadd.f32 %v3190, %v3294
      %v3327 = vadd.f32 %v3191, %v3295
      %v3328 = vadd.f32 %v3192, %v3296
      %v3329 = vadd.f32 %v3193, %v3297
      %v3330 = vadd.f32 %v3194, %v3298
      %v3331 = vadd.f32 %v3195, %v3299
      %v3332 = vadd.f32 %v3196, %v3300
      %v3333 = vadd.f32 %v3197, %v3301
      %v3334 = vadd.f32 %v3198, %v3302
      %v3335 = vadd.f32 %v3199, %v3303
      %v3336 = vadd.f32 %v3200, %v3304
      %v3337 = vadd.f32 %v3201, %v3305
      %v3338 = vadd.f32 %v3202, %v3306
      %v3339 = vadd.f32 %v3203, %v3307
      %v3340 = vadd.f32 %v3204, %v3308
      %v3341 = vadd.f32 %v3205, %v3309
      %v3342 = vadd.f32 %v3206, %v3310
      %v3343 = vadd.f32 %v3207, %v3311
      %v3344 = vadd.f32 %v3208, %v3312
      %v3345 = vadd.f32 %v3209, %v3313
      %v3346 = vadd.f32 %v3210, %v3314
      %v3347 = vadd.f32 %v3211, %v3315
      %v3348 = vlaneseq
      %v3349 = vshrl.u32 %v3348, 7
      %v3350 = vsub.s32 0, %v3349
      %v3351 = vrot.slane %v2139, %v3350
      %v3352 = vlaneseq
      %v3353 = vshrl.u32 %v3352, 7
      %v3354 = vsub.s32 0, %v3353
      %v3355 = vrot.slane %v2149, %v3354
      %v3356 = vlaneseq
      %v3357 = vshrl.u32 %v3356, 7
      %v3358 = vsub.s32 0, %v3357
      %v3359 = vrot.slane %v2159, %v3358
      %v3360 = vlaneseq
      %v3361 = vshrl.u32 %v3360, 7
      %v3362 = vsub.s32 0, %v3361
      %v3363 = vrot.slane %v2169, %v3362
      %v3364 = vlaneseq
      %v3365 = vshrl.u32 %v3364, 7
      %v3366 = vsub.s32 0, %v3365
      %v3367 = vrot.slane %v2179, %v3366
      %v3368 = vlaneseq
      %v3369 = vshrl.u32 %v3368, 7
      %v3370 = vsub.s32 0, %v3369
      %v3371 = vrot.slane %v2189, %v3370
      %v3372 = vlaneseq
      %v3373 = vshrl.u32 %v3372, 7
      %v3374 = vsub.s32 0, %v3373
      %v3375 = vrot.slane %v2199, %v3374
      %v3376 = vlaneseq
      %v3377 = vshrl.u32 %v3376, 7
      %v3378 = vsub.s32 0, %v3377
      %v3379 = vrot.slane %v2209, %v3378
      %v3380 = vlaneseq
      %v3381 = vshrl.u32 %v3380, 7
      %v3382 = vsub.s32 0, %v3381
      %v3383 = vrot.slane %v2219, %v3382
      %v3384 = vlaneseq
      %v3385 = vshrl.u32 %v3384, 7
      %v3386 = vsub.s32 0, %v3385
      %v3387 = vrot.slane %v2229, %v3386
      %v3388 = vlaneseq
      %v3389 = vshrl.u32 %v3388, 7
      %v3390 = vsub.s32 0, %v3389
      %v3391 = vrot.slane %v2239, %v3390
      %v3392 = vlaneseq
      %v3393 = vshrl.u32 %v3392, 7
      %v3394 = vsub.s32 0, %v3393
      %v3395 = vrot.slane %v2249, %v3394
      %v3396 = vlaneseq
      %v3397 = vshrl.u32 %v3396, 7
      %v3398 = vsub.s32 0, %v3397
      %v3399 = vrot.slane %v2259, %v3398
      %v3400 = vlaneseq
      %v3401 = vshrl.u32 %v3400, 7
      %v3402 = vsub.s32 0, %v3401
      %v3403 = vrot.slane %v2269, %v3402
      %v3404 = vlaneseq
      %v3405 = vshrl.u32 %v3404, 7
      %v3406 = vsub.s32 0, %v3405
      %v3407 = vrot.slane %v2279, %v3406
      %v3408 = vlaneseq
      %v3409 = vshrl.u32 %v3408, 7
      %v3410 = vsub.s32 0, %v3409
      %v3411 = vrot.slane %v2289, %v3410
      %3414 = vrot.lane.b32.xlu0 %v2214, 96
      %v3415 = vpop.permute.xlu0 %3414
      %3416 = vrot.lane.b32.xlu0 %v2219, 96
      %v3417 = vpop.permute.xlu0 %3416
      %v3420 = vmul.f32 %v3351, %v3415
      %v3421 = vmul.f32 %v3351, %v3417
      %v3422 = vmul.f32 %v3355, %v3415
      %v3423 = vmul.f32 %v3355, %v3417
      %v3424 = vmul.f32 %v3359, %v3415
      %v3425 = vmul.f32 %v3359, %v3417
      %v3426 = vmul.f32 %v3363, %v3415
      %v3427 = vmul.f32 %v3363, %v3417
      %v3428 = vmul.f32 %v3367, %v3415
      %v3429 = vmul.f32 %v3367, %v3417
      %v3430 = vmul.f32 %v3371, %v3415
      %v3431 = vmul.f32 %v3371, %v3417
      %v3432 = vmul.f32 %v3375, %v3415
      %v3433 = vmul.f32 %v3375, %v3417
      %v3434 = vmul.f32 %v3379, %v3415
      %v3435 = vmul.f32 %v3379, %v3417
      %v3436 = vmul.f32 %v3383, %v3415
      %v3437 = vmul.f32 %v3383, %v3417
      %v3438 = vmul.f32 %v3387, %v3415
      %v3439 = vmul.f32 %v3387, %v3417
      %v3440 = vmul.f32 %v3391, %v3415
      %v3441 = vmul.f32 %v3391, %v3417
      %v3442 = vmul.f32 %v3395, %v3415
      %v3443 = vmul.f32 %v3395, %v3417
      %v3444 = vmul.f32 %v3399, %v3415
      %v3445 = vmul.f32 %v3399, %v3417
      %v3446 = vmul.f32 %v3403, %v3415
      %v3447 = vmul.f32 %v3403, %v3417
      %v3448 = vmul.f32 %v3407, %v3415
      %v3449 = vmul.f32 %v3407, %v3417
      %v3450 = vmul.f32 %v3411, %v3415
      %v3451 = vmul.f32 %v3411, %v3417
      %v3452 = vadd.f32 %v3316, %v3420
      %v3453 = vadd.f32 %v3317, %v3421
      %v3454 = vadd.f32 %v3318, %v3422
      %v3455 = vadd.f32 %v3319, %v3423
      %v3456 = vadd.f32 %v3320, %v3424
      %v3457 = vadd.f32 %v3321, %v3425
      %v3458 = vadd.f32 %v3322, %v3426
      %v3459 = vadd.f32 %v3323, %v3427
      %v3460 = vadd.f32 %v3324, %v3428
      %v3461 = vadd.f32 %v3325, %v3429
      %v3462 = vadd.f32 %v3326, %v3430
      %v3463 = vadd.f32 %v3327, %v3431
      %v3464 = vadd.f32 %v3328, %v3432
      %v3465 = vadd.f32 %v3329, %v3433
      %v3466 = vadd.f32 %v3330, %v3434
      %v3467 = vadd.f32 %v3331, %v3435
      %v3468 = vadd.f32 %v3332, %v3436
      %v3469 = vadd.f32 %v3333, %v3437
      %v3470 = vadd.f32 %v3334, %v3438
      %v3471 = vadd.f32 %v3335, %v3439
      %v3472 = vadd.f32 %v3336, %v3440
      %v3473 = vadd.f32 %v3337, %v3441
      %v3474 = vadd.f32 %v3338, %v3442
      %v3475 = vadd.f32 %v3339, %v3443
      %v3476 = vadd.f32 %v3340, %v3444
      %v3477 = vadd.f32 %v3341, %v3445
      %v3478 = vadd.f32 %v3342, %v3446
      %v3479 = vadd.f32 %v3343, %v3447
      %v3480 = vadd.f32 %v3344, %v3448
      %v3481 = vadd.f32 %v3345, %v3449
      %v3482 = vadd.f32 %v3346, %v3450
      %v3483 = vadd.f32 %v3347, %v3451
      %v3484 = vlaneseq
      %v3485 = vshrl.u32 %v3484, 7
      %v3486 = vsub.s32 1, %v3485
      %v3487 = vrot.slane %v2139, %v3486
      %v3488 = vlaneseq
      %v3489 = vshrl.u32 %v3488, 7
      %v3490 = vsub.s32 1, %v3489
      %v3491 = vrot.slane %v2149, %v3490
      %v3492 = vlaneseq
      %v3493 = vshrl.u32 %v3492, 7
      %v3494 = vsub.s32 1, %v3493
      %v3495 = vrot.slane %v2159, %v3494
      %v3496 = vlaneseq
      %v3497 = vshrl.u32 %v3496, 7
      %v3498 = vsub.s32 1, %v3497
      %v3499 = vrot.slane %v2169, %v3498
      %v3500 = vlaneseq
      %v3501 = vshrl.u32 %v3500, 7
      %v3502 = vsub.s32 1, %v3501
      %v3503 = vrot.slane %v2179, %v3502
      %v3504 = vlaneseq
      %v3505 = vshrl.u32 %v3504, 7
      %v3506 = vsub.s32 1, %v3505
      %v3507 = vrot.slane %v2189, %v3506
      %v3508 = vlaneseq
      %v3509 = vshrl.u32 %v3508, 7
      %v3510 = vsub.s32 1, %v3509
      %v3511 = vrot.slane %v2199, %v3510
      %v3512 = vlaneseq
      %v3513 = vshrl.u32 %v3512, 7
      %v3514 = vsub.s32 1, %v3513
      %v3515 = vrot.slane %v2209, %v3514
      %v3516 = vlaneseq
      %v3517 = vshrl.u32 %v3516, 7
      %v3518 = vsub.s32 1, %v3517
      %v3519 = vrot.slane %v2219, %v3518
      %v3520 = vlaneseq
      %v3521 = vshrl.u32 %v3520, 7
      %v3522 = vsub.s32 1, %v3521
      %v3523 = vrot.slane %v2229, %v3522
      %v3524 = vlaneseq
      %v3525 = vshrl.u32 %v3524, 7
      %v3526 = vsub.s32 1, %v3525
      %v3527 = vrot.slane %v2239, %v3526
      %v3528 = vlaneseq
      %v3529 = vshrl.u32 %v3528, 7
      %v3530 = vsub.s32 1, %v3529
      %v3531 = vrot.slane %v2249, %v3530
      %v3532 = vlaneseq
      %v3533 = vshrl.u32 %v3532, 7
      %v3534 = vsub.s32 1, %v3533
      %v3535 = vrot.slane %v2259, %v3534
      %v3536 = vlaneseq
      %v3537 = vshrl.u32 %v3536, 7
      %v3538 = vsub.s32 1, %v3537
      %v3539 = vrot.slane %v2269, %v3538
      %v3540 = vlaneseq
      %v3541 = vshrl.u32 %v3540, 7
      %v3542 = vsub.s32 1, %v3541
      %v3543 = vrot.slane %v2279, %v3542
      %v3544 = vlaneseq
      %v3545 = vshrl.u32 %v3544, 7
      %v3546 = vsub.s32 1, %v3545
      %v3547 = vrot.slane %v2289, %v3546
      %3550 = vrot.lane.b32.xlu0 %v2224, 96
      %v3551 = vpop.permute.xlu0 %3550
      %3552 = vrot.lane.b32.xlu0 %v2229, 96
      %v3553 = vpop.permute.xlu0 %3552
      %v3556 = vmul.f32 %v3487, %v3551
      %v3557 = vmul.f32 %v3487, %v3553
      %v3558 = vmul.f32 %v3491, %v3551
      %v3559 = vmul.f32 %v3491, %v3553
      %v3560 = vmul.f32 %v3495, %v3551
      %v3561 = vmul.f32 %v3495, %v3553
      %v3562 = vmul.f32 %v3499, %v3551
      %v3563 = vmul.f32 %v3499, %v3553
      %v3564 = vmul.f32 %v3503, %v3551
      %v3565 = vmul.f32 %v3503, %v3553
      %v3566 = vmul.f32 %v3507, %v3551
      %v3567 = vmul.f32 %v3507, %v3553
      %v3568 = vmul.f32 %v3511, %v3551
      %v3569 = vmul.f32 %v3511, %v3553
      %v3570 = vmul.f32 %v3515, %v3551
      %v3571 = vmul.f32 %v3515, %v3553
      %v3572 = vmul.f32 %v3519, %v3551
      %v3573 = vmul.f32 %v3519, %v3553
      %v3574 = vmul.f32 %v3523, %v3551
      %v3575 = vmul.f32 %v3523, %v3553
      %v3576 = vmul.f32 %v3527, %v3551
      %v3577 = vmul.f32 %v3527, %v3553
      %v3578 = vmul.f32 %v3531, %v3551
      %v3579 = vmul.f32 %v3531, %v3553
      %v3580 = vmul.f32 %v3535, %v3551
      %v3581 = vmul.f32 %v3535, %v3553
      %v3582 = vmul.f32 %v3539, %v3551
      %v3583 = vmul.f32 %v3539, %v3553
      %v3584 = vmul.f32 %v3543, %v3551
      %v3585 = vmul.f32 %v3543, %v3553
      %v3586 = vmul.f32 %v3547, %v3551
      %v3587 = vmul.f32 %v3547, %v3553
      %v3588 = vadd.f32 %v3452, %v3556
      %v3589 = vadd.f32 %v3453, %v3557
      %v3590 = vadd.f32 %v3454, %v3558
      %v3591 = vadd.f32 %v3455, %v3559
      %v3592 = vadd.f32 %v3456, %v3560
      %v3593 = vadd.f32 %v3457, %v3561
      %v3594 = vadd.f32 %v3458, %v3562
      %v3595 = vadd.f32 %v3459, %v3563
      %v3596 = vadd.f32 %v3460, %v3564
      %v3597 = vadd.f32 %v3461, %v3565
      %v3598 = vadd.f32 %v3462, %v3566
      %v3599 = vadd.f32 %v3463, %v3567
      %v3600 = vadd.f32 %v3464, %v3568
      %v3601 = vadd.f32 %v3465, %v3569
      %v3602 = vadd.f32 %v3466, %v3570
      %v3603 = vadd.f32 %v3467, %v3571
      %v3604 = vadd.f32 %v3468, %v3572
      %v3605 = vadd.f32 %v3469, %v3573
      %v3606 = vadd.f32 %v3470, %v3574
      %v3607 = vadd.f32 %v3471, %v3575
      %v3608 = vadd.f32 %v3472, %v3576
      %v3609 = vadd.f32 %v3473, %v3577
      %v3610 = vadd.f32 %v3474, %v3578
      %v3611 = vadd.f32 %v3475, %v3579
      %v3612 = vadd.f32 %v3476, %v3580
      %v3613 = vadd.f32 %v3477, %v3581
      %v3614 = vadd.f32 %v3478, %v3582
      %v3615 = vadd.f32 %v3479, %v3583
      %v3616 = vadd.f32 %v3480, %v3584
      %v3617 = vadd.f32 %v3481, %v3585
      %v3618 = vadd.f32 %v3482, %v3586
      %v3619 = vadd.f32 %v3483, %v3587
      %v3620 = vlaneseq
      %v3621 = vshrl.u32 %v3620, 7
      %v3622 = vsub.s32 2, %v3621
      %v3623 = vrot.slane %v2139, %v3622
      %v3624 = vlaneseq
      %v3625 = vshrl.u32 %v3624, 7
      %v3626 = vsub.s32 2, %v3625
      %v3627 = vrot.slane %v2149, %v3626
      %v3628 = vlaneseq
      %v3629 = vshrl.u32 %v3628, 7
      %v3630 = vsub.s32 2, %v3629
      %v3631 = vrot.slane %v2159, %v3630
      %v3632 = vlaneseq
      %v3633 = vshrl.u32 %v3632, 7
      %v3634 = vsub.s32 2, %v3633
      %v3635 = vrot.slane %v2169, %v3634
      %v3636 = vlaneseq
      %v3637 = vshrl.u32 %v3636, 7
      %v3638 = vsub.s32 2, %v3637
      %v3639 = vrot.slane %v2179, %v3638
      %v3640 = vlaneseq
      %v3641 = vshrl.u32 %v3640, 7
      %v3642 = vsub.s32 2, %v3641
      %v3643 = vrot.slane %v2189, %v3642
      %v3644 = vlaneseq
      %v3645 = vshrl.u32 %v3644, 7
      %v3646 = vsub.s32 2, %v3645
      %v3647 = vrot.slane %v2199, %v3646
      %v3648 = vlaneseq
      %v3649 = vshrl.u32 %v3648, 7
      %v3650 = vsub.s32 2, %v3649
      %v3651 = vrot.slane %v2209, %v3650
      %v3652 = vlaneseq
      %v3653 = vshrl.u32 %v3652, 7
      %v3654 = vsub.s32 2, %v3653
      %v3655 = vrot.slane %v2219, %v3654
      %v3656 = vlaneseq
      %v3657 = vshrl.u32 %v3656, 7
      %v3658 = vsub.s32 2, %v3657
      %v3659 = vrot.slane %v2229, %v3658
      %v3660 = vlaneseq
      %v3661 = vshrl.u32 %v3660, 7
      %v3662 = vsub.s32 2, %v3661
      %v3663 = vrot.slane %v2239, %v3662
      %v3664 = vlaneseq
      %v3665 = vshrl.u32 %v3664, 7
      %v3666 = vsub.s32 2, %v3665
      %v3667 = vrot.slane %v2249, %v3666
      %v3668 = vlaneseq
      %v3669 = vshrl.u32 %v3668, 7
      %v3670 = vsub.s32 2, %v3669
      %v3671 = vrot.slane %v2259, %v3670
      %v3672 = vlaneseq
      %v3673 = vshrl.u32 %v3672, 7
      %v3674 = vsub.s32 2, %v3673
      %v3675 = vrot.slane %v2269, %v3674
      %v3676 = vlaneseq
      %v3677 = vshrl.u32 %v3676, 7
      %v3678 = vsub.s32 2, %v3677
      %v3679 = vrot.slane %v2279, %v3678
      %v3680 = vlaneseq
      %v3681 = vshrl.u32 %v3680, 7
      %v3682 = vsub.s32 2, %v3681
      %v3683 = vrot.slane %v2289, %v3682
      %3686 = vrot.lane.b32.xlu0 %v2234, 96
      %v3687 = vpop.permute.xlu0 %3686
      %3688 = vrot.lane.b32.xlu0 %v2239, 96
      %v3689 = vpop.permute.xlu0 %3688
      %v3692 = vmul.f32 %v3623, %v3687
      %v3693 = vmul.f32 %v3623, %v3689
      %v3694 = vmul.f32 %v3627, %v3687
      %v3695 = vmul.f32 %v3627, %v3689
      %v3696 = vmul.f32 %v3631, %v3687
      %v3697 = vmul.f32 %v3631, %v3689
      %v3698 = vmul.f32 %v3635, %v3687
      %v3699 = vmul.f32 %v3635, %v3689
      %v3700 = vmul.f32 %v3639, %v3687
      %v3701 = vmul.f32 %v3639, %v3689
      %v3702 = vmul.f32 %v3643, %v3687
      %v3703 = vmul.f32 %v3643, %v3689
      %v3704 = vmul.f32 %v3647, %v3687
      %v3705 = vmul.f32 %v3647, %v3689
      %v3706 = vmul.f32 %v3651, %v3687
      %v3707 = vmul.f32 %v3651, %v3689
      %v3708 = vmul.f32 %v3655, %v3687
      %v3709 = vmul.f32 %v3655, %v3689
      %v3710 = vmul.f32 %v3659, %v3687
      %v3711 = vmul.f32 %v3659, %v3689
      %v3712 = vmul.f32 %v3663, %v3687
      %v3713 = vmul.f32 %v3663, %v3689
      %v3714 = vmul.f32 %v3667, %v3687
      %v3715 = vmul.f32 %v3667, %v3689
      %v3716 = vmul.f32 %v3671, %v3687
      %v3717 = vmul.f32 %v3671, %v3689
      %v3718 = vmul.f32 %v3675, %v3687
      %v3719 = vmul.f32 %v3675, %v3689
      %v3720 = vmul.f32 %v3679, %v3687
      %v3721 = vmul.f32 %v3679, %v3689
      %v3722 = vmul.f32 %v3683, %v3687
      %v3723 = vmul.f32 %v3683, %v3689
      %v3724 = vadd.f32 %v3588, %v3692
      %v3725 = vadd.f32 %v3589, %v3693
      %v3726 = vadd.f32 %v3590, %v3694
      %v3727 = vadd.f32 %v3591, %v3695
      %v3728 = vadd.f32 %v3592, %v3696
      %v3729 = vadd.f32 %v3593, %v3697
      %v3730 = vadd.f32 %v3594, %v3698
      %v3731 = vadd.f32 %v3595, %v3699
      %v3732 = vadd.f32 %v3596, %v3700
      %v3733 = vadd.f32 %v3597, %v3701
      %v3734 = vadd.f32 %v3598, %v3702
      %v3735 = vadd.f32 %v3599, %v3703
      %v3736 = vadd.f32 %v3600, %v3704
      %v3737 = vadd.f32 %v3601, %v3705
      %v3738 = vadd.f32 %v3602, %v3706
      %v3739 = vadd.f32 %v3603, %v3707
      %v3740 = vadd.f32 %v3604, %v3708
      %v3741 = vadd.f32 %v3605, %v3709
      %v3742 = vadd.f32 %v3606, %v3710
      %v3743 = vadd.f32 %v3607, %v3711
      %v3744 = vadd.f32 %v3608, %v3712
      %v3745 = vadd.f32 %v3609, %v3713
      %v3746 = vadd.f32 %v3610, %v3714
      %v3747 = vadd.f32 %v3611, %v3715
      %v3748 = vadd.f32 %v3612, %v3716
      %v3749 = vadd.f32 %v3613, %v3717
      %v3750 = vadd.f32 %v3614, %v3718
      %v3751 = vadd.f32 %v3615, %v3719
      %v3752 = vadd.f32 %v3616, %v3720
      %v3753 = vadd.f32 %v3617, %v3721
      %v3754 = vadd.f32 %v3618, %v3722
      %v3755 = vadd.f32 %v3619, %v3723
      %v3756 = vlaneseq
      %v3757 = vshrl.u32 %v3756, 7
      %v3758 = vsub.s32 3, %v3757
      %v3759 = vrot.slane %v2139, %v3758
      %v3760 = vlaneseq
      %v3761 = vshrl.u32 %v3760, 7
      %v3762 = vsub.s32 3, %v3761
      %v3763 = vrot.slane %v2149, %v3762
      %v3764 = vlaneseq
      %v3765 = vshrl.u32 %v3764, 7
      %v3766 = vsub.s32 3, %v3765
      %v3767 = vrot.slane %v2159, %v3766
      %v3768 = vlaneseq
      %v3769 = vshrl.u32 %v3768, 7
      %v3770 = vsub.s32 3, %v3769
      %v3771 = vrot.slane %v2169, %v3770
      %v3772 = vlaneseq
      %v3773 = vshrl.u32 %v3772, 7
      %v3774 = vsub.s32 3, %v3773
      %v3775 = vrot.slane %v2179, %v3774
      %v3776 = vlaneseq
      %v3777 = vshrl.u32 %v3776, 7
      %v3778 = vsub.s32 3, %v3777
      %v3779 = vrot.slane %v2189, %v3778
      %v3780 = vlaneseq
      %v3781 = vshrl.u32 %v3780, 7
      %v3782 = vsub.s32 3, %v3781
      %v3783 = vrot.slane %v2199, %v3782
      %v3784 = vlaneseq
      %v3785 = vshrl.u32 %v3784, 7
      %v3786 = vsub.s32 3, %v3785
      %v3787 = vrot.slane %v2209, %v3786
      %v3788 = vlaneseq
      %v3789 = vshrl.u32 %v3788, 7
      %v3790 = vsub.s32 3, %v3789
      %v3791 = vrot.slane %v2219, %v3790
      %v3792 = vlaneseq
      %v3793 = vshrl.u32 %v3792, 7
      %v3794 = vsub.s32 3, %v3793
      %v3795 = vrot.slane %v2229, %v3794
      %v3796 = vlaneseq
      %v3797 = vshrl.u32 %v3796, 7
      %v3798 = vsub.s32 3, %v3797
      %v3799 = vrot.slane %v2239, %v3798
      %v3800 = vlaneseq
      %v3801 = vshrl.u32 %v3800, 7
      %v3802 = vsub.s32 3, %v3801
      %v3803 = vrot.slane %v2249, %v3802
      %v3804 = vlaneseq
      %v3805 = vshrl.u32 %v3804, 7
      %v3806 = vsub.s32 3, %v3805
      %v3807 = vrot.slane %v2259, %v3806
      %v3808 = vlaneseq
      %v3809 = vshrl.u32 %v3808, 7
      %v3810 = vsub.s32 3, %v3809
      %v3811 = vrot.slane %v2269, %v3810
      %v3812 = vlaneseq
      %v3813 = vshrl.u32 %v3812, 7
      %v3814 = vsub.s32 3, %v3813
      %v3815 = vrot.slane %v2279, %v3814
      %v3816 = vlaneseq
      %v3817 = vshrl.u32 %v3816, 7
      %v3818 = vsub.s32 3, %v3817
      %v3819 = vrot.slane %v2289, %v3818
      %3822 = vrot.lane.b32.xlu0 %v2244, 96
      %v3823 = vpop.permute.xlu0 %3822
      %3824 = vrot.lane.b32.xlu0 %v2249, 96
      %v3825 = vpop.permute.xlu0 %3824
      %v3828 = vmul.f32 %v3759, %v3823
      %v3829 = vmul.f32 %v3759, %v3825
      %v3830 = vmul.f32 %v3763, %v3823
      %v3831 = vmul.f32 %v3763, %v3825
      %v3832 = vmul.f32 %v3767, %v3823
      %v3833 = vmul.f32 %v3767, %v3825
      %v3834 = vmul.f32 %v3771, %v3823
      %v3835 = vmul.f32 %v3771, %v3825
      %v3836 = vmul.f32 %v3775, %v3823
      %v3837 = vmul.f32 %v3775, %v3825
      %v3838 = vmul.f32 %v3779, %v3823
      %v3839 = vmul.f32 %v3779, %v3825
      %v3840 = vmul.f32 %v3783, %v3823
      %v3841 = vmul.f32 %v3783, %v3825
      %v3842 = vmul.f32 %v3787, %v3823
      %v3843 = vmul.f32 %v3787, %v3825
      %v3844 = vmul.f32 %v3791, %v3823
      %v3845 = vmul.f32 %v3791, %v3825
      %v3846 = vmul.f32 %v3795, %v3823
      %v3847 = vmul.f32 %v3795, %v3825
      %v3848 = vmul.f32 %v3799, %v3823
      %v3849 = vmul.f32 %v3799, %v3825
      %v3850 = vmul.f32 %v3803, %v3823
      %v3851 = vmul.f32 %v3803, %v3825
      %v3852 = vmul.f32 %v3807, %v3823
      %v3853 = vmul.f32 %v3807, %v3825
      %v3854 = vmul.f32 %v3811, %v3823
      %v3855 = vmul.f32 %v3811, %v3825
      %v3856 = vmul.f32 %v3815, %v3823
      %v3857 = vmul.f32 %v3815, %v3825
      %v3858 = vmul.f32 %v3819, %v3823
      %v3859 = vmul.f32 %v3819, %v3825
      %v3860 = vadd.f32 %v3724, %v3828
      %v3861 = vadd.f32 %v3725, %v3829
      %v3862 = vadd.f32 %v3726, %v3830
      %v3863 = vadd.f32 %v3727, %v3831
      %v3864 = vadd.f32 %v3728, %v3832
      %v3865 = vadd.f32 %v3729, %v3833
      %v3866 = vadd.f32 %v3730, %v3834
      %v3867 = vadd.f32 %v3731, %v3835
      %v3868 = vadd.f32 %v3732, %v3836
      %v3869 = vadd.f32 %v3733, %v3837
      %v3870 = vadd.f32 %v3734, %v3838
      %v3871 = vadd.f32 %v3735, %v3839
      %v3872 = vadd.f32 %v3736, %v3840
      %v3873 = vadd.f32 %v3737, %v3841
      %v3874 = vadd.f32 %v3738, %v3842
      %v3875 = vadd.f32 %v3739, %v3843
      %v3876 = vadd.f32 %v3740, %v3844
      %v3877 = vadd.f32 %v3741, %v3845
      %v3878 = vadd.f32 %v3742, %v3846
      %v3879 = vadd.f32 %v3743, %v3847
      %v3880 = vadd.f32 %v3744, %v3848
      %v3881 = vadd.f32 %v3745, %v3849
      %v3882 = vadd.f32 %v3746, %v3850
      %v3883 = vadd.f32 %v3747, %v3851
      %v3884 = vadd.f32 %v3748, %v3852
      %v3885 = vadd.f32 %v3749, %v3853
      %v3886 = vadd.f32 %v3750, %v3854
      %v3887 = vadd.f32 %v3751, %v3855
      %v3888 = vadd.f32 %v3752, %v3856
      %v3889 = vadd.f32 %v3753, %v3857
      %v3890 = vadd.f32 %v3754, %v3858
      %v3891 = vadd.f32 %v3755, %v3859
      %v3892 = vlaneseq
      %v3893 = vshrl.u32 %v3892, 7
      %v3894 = vsub.s32 4, %v3893
      %v3895 = vrot.slane %v2139, %v3894
      %v3896 = vlaneseq
      %v3897 = vshrl.u32 %v3896, 7
      %v3898 = vsub.s32 4, %v3897
      %v3899 = vrot.slane %v2149, %v3898
      %v3900 = vlaneseq
      %v3901 = vshrl.u32 %v3900, 7
      %v3902 = vsub.s32 4, %v3901
      %v3903 = vrot.slane %v2159, %v3902
      %v3904 = vlaneseq
      %v3905 = vshrl.u32 %v3904, 7
      %v3906 = vsub.s32 4, %v3905
      %v3907 = vrot.slane %v2169, %v3906
      %v3908 = vlaneseq
      %v3909 = vshrl.u32 %v3908, 7
      %v3910 = vsub.s32 4, %v3909
      %v3911 = vrot.slane %v2179, %v3910
      %v3912 = vlaneseq
      %v3913 = vshrl.u32 %v3912, 7
      %v3914 = vsub.s32 4, %v3913
      %v3915 = vrot.slane %v2189, %v3914
      %v3916 = vlaneseq
      %v3917 = vshrl.u32 %v3916, 7
      %v3918 = vsub.s32 4, %v3917
      %v3919 = vrot.slane %v2199, %v3918
      %v3920 = vlaneseq
      %v3921 = vshrl.u32 %v3920, 7
      %v3922 = vsub.s32 4, %v3921
      %v3923 = vrot.slane %v2209, %v3922
      %v3924 = vlaneseq
      %v3925 = vshrl.u32 %v3924, 7
      %v3926 = vsub.s32 4, %v3925
      %v3927 = vrot.slane %v2219, %v3926
      %v3928 = vlaneseq
      %v3929 = vshrl.u32 %v3928, 7
      %v3930 = vsub.s32 4, %v3929
      %v3931 = vrot.slane %v2229, %v3930
      %v3932 = vlaneseq
      %v3933 = vshrl.u32 %v3932, 7
      %v3934 = vsub.s32 4, %v3933
      %v3935 = vrot.slane %v2239, %v3934
      %v3936 = vlaneseq
      %v3937 = vshrl.u32 %v3936, 7
      %v3938 = vsub.s32 4, %v3937
      %v3939 = vrot.slane %v2249, %v3938
      %v3940 = vlaneseq
      %v3941 = vshrl.u32 %v3940, 7
      %v3942 = vsub.s32 4, %v3941
      %v3943 = vrot.slane %v2259, %v3942
      %v3944 = vlaneseq
      %v3945 = vshrl.u32 %v3944, 7
      %v3946 = vsub.s32 4, %v3945
      %v3947 = vrot.slane %v2269, %v3946
      %v3948 = vlaneseq
      %v3949 = vshrl.u32 %v3948, 7
      %v3950 = vsub.s32 4, %v3949
      %v3951 = vrot.slane %v2279, %v3950
      %v3952 = vlaneseq
      %v3953 = vshrl.u32 %v3952, 7
      %v3954 = vsub.s32 4, %v3953
      %v3955 = vrot.slane %v2289, %v3954
      %3958 = vrot.lane.b32.xlu0 %v2254, 96
      %v3959 = vpop.permute.xlu0 %3958
      %3960 = vrot.lane.b32.xlu0 %v2259, 96
      %v3961 = vpop.permute.xlu0 %3960
      %v3964 = vmul.f32 %v3895, %v3959
      %v3965 = vmul.f32 %v3895, %v3961
      %v3966 = vmul.f32 %v3899, %v3959
      %v3967 = vmul.f32 %v3899, %v3961
      %v3968 = vmul.f32 %v3903, %v3959
      %v3969 = vmul.f32 %v3903, %v3961
      %v3970 = vmul.f32 %v3907, %v3959
      %v3971 = vmul.f32 %v3907, %v3961
      %v3972 = vmul.f32 %v3911, %v3959
      %v3973 = vmul.f32 %v3911, %v3961
      %v3974 = vmul.f32 %v3915, %v3959
      %v3975 = vmul.f32 %v3915, %v3961
      %v3976 = vmul.f32 %v3919, %v3959
      %v3977 = vmul.f32 %v3919, %v3961
      %v3978 = vmul.f32 %v3923, %v3959
      %v3979 = vmul.f32 %v3923, %v3961
      %v3980 = vmul.f32 %v3927, %v3959
      %v3981 = vmul.f32 %v3927, %v3961
      %v3982 = vmul.f32 %v3931, %v3959
      %v3983 = vmul.f32 %v3931, %v3961
      %v3984 = vmul.f32 %v3935, %v3959
      %v3985 = vmul.f32 %v3935, %v3961
      %v3986 = vmul.f32 %v3939, %v3959
      %v3987 = vmul.f32 %v3939, %v3961
      %v3988 = vmul.f32 %v3943, %v3959
      %v3989 = vmul.f32 %v3943, %v3961
      %v3990 = vmul.f32 %v3947, %v3959
      %v3991 = vmul.f32 %v3947, %v3961
      %v3992 = vmul.f32 %v3951, %v3959
      %v3993 = vmul.f32 %v3951, %v3961
      %v3994 = vmul.f32 %v3955, %v3959
      %v3995 = vmul.f32 %v3955, %v3961
      %v3996 = vadd.f32 %v3860, %v3964
      %v3997 = vadd.f32 %v3861, %v3965
      %v3998 = vadd.f32 %v3862, %v3966
      %v3999 = vadd.f32 %v3863, %v3967
      %v4000 = vadd.f32 %v3864, %v3968
      %v4001 = vadd.f32 %v3865, %v3969
      %v4002 = vadd.f32 %v3866, %v3970
      %v4003 = vadd.f32 %v3867, %v3971
      %v4004 = vadd.f32 %v3868, %v3972
      %v4005 = vadd.f32 %v3869, %v3973
      %v4006 = vadd.f32 %v3870, %v3974
      %v4007 = vadd.f32 %v3871, %v3975
      %v4008 = vadd.f32 %v3872, %v3976
      %v4009 = vadd.f32 %v3873, %v3977
      %v4010 = vadd.f32 %v3874, %v3978
      %v4011 = vadd.f32 %v3875, %v3979
      %v4012 = vadd.f32 %v3876, %v3980
      %v4013 = vadd.f32 %v3877, %v3981
      %v4014 = vadd.f32 %v3878, %v3982
      %v4015 = vadd.f32 %v3879, %v3983
      %v4016 = vadd.f32 %v3880, %v3984
      %v4017 = vadd.f32 %v3881, %v3985
      %v4018 = vadd.f32 %v3882, %v3986
      %v4019 = vadd.f32 %v3883, %v3987
      %v4020 = vadd.f32 %v3884, %v3988
      %v4021 = vadd.f32 %v3885, %v3989
      %v4022 = vadd.f32 %v3886, %v3990
      %v4023 = vadd.f32 %v3887, %v3991
      %v4024 = vadd.f32 %v3888, %v3992
      %v4025 = vadd.f32 %v3889, %v3993
      %v4026 = vadd.f32 %v3890, %v3994
      %v4027 = vadd.f32 %v3891, %v3995
      %v4028 = vlaneseq
      %v4029 = vshrl.u32 %v4028, 7
      %v4030 = vsub.s32 5, %v4029
      %v4031 = vrot.slane %v2139, %v4030
      %v4032 = vlaneseq
      %v4033 = vshrl.u32 %v4032, 7
      %v4034 = vsub.s32 5, %v4033
      %v4035 = vrot.slane %v2149, %v4034
      %v4036 = vlaneseq
      %v4037 = vshrl.u32 %v4036, 7
      %v4038 = vsub.s32 5, %v4037
      %v4039 = vrot.slane %v2159, %v4038
      %v4040 = vlaneseq
      %v4041 = vshrl.u32 %v4040, 7
      %v4042 = vsub.s32 5, %v4041
      %v4043 = vrot.slane %v2169, %v4042
      %v4044 = vlaneseq
      %v4045 = vshrl.u32 %v4044, 7
      %v4046 = vsub.s32 5, %v4045
      %v4047 = vrot.slane %v2179, %v4046
      %v4048 = vlaneseq
      %v4049 = vshrl.u32 %v4048, 7
      %v4050 = vsub.s32 5, %v4049
      %v4051 = vrot.slane %v2189, %v4050
      %v4052 = vlaneseq
      %v4053 = vshrl.u32 %v4052, 7
      %v4054 = vsub.s32 5, %v4053
      %v4055 = vrot.slane %v2199, %v4054
      %v4056 = vlaneseq
      %v4057 = vshrl.u32 %v4056, 7
      %v4058 = vsub.s32 5, %v4057
      %v4059 = vrot.slane %v2209, %v4058
      %v4060 = vlaneseq
      %v4061 = vshrl.u32 %v4060, 7
      %v4062 = vsub.s32 5, %v4061
      %v4063 = vrot.slane %v2219, %v4062
      %v4064 = vlaneseq
      %v4065 = vshrl.u32 %v4064, 7
      %v4066 = vsub.s32 5, %v4065
      %v4067 = vrot.slane %v2229, %v4066
      %v4068 = vlaneseq
      %v4069 = vshrl.u32 %v4068, 7
      %v4070 = vsub.s32 5, %v4069
      %v4071 = vrot.slane %v2239, %v4070
      %v4072 = vlaneseq
      %v4073 = vshrl.u32 %v4072, 7
      %v4074 = vsub.s32 5, %v4073
      %v4075 = vrot.slane %v2249, %v4074
      %v4076 = vlaneseq
      %v4077 = vshrl.u32 %v4076, 7
      %v4078 = vsub.s32 5, %v4077
      %v4079 = vrot.slane %v2259, %v4078
      %v4080 = vlaneseq
      %v4081 = vshrl.u32 %v4080, 7
      %v4082 = vsub.s32 5, %v4081
      %v4083 = vrot.slane %v2269, %v4082
      %v4084 = vlaneseq
      %v4085 = vshrl.u32 %v4084, 7
      %v4086 = vsub.s32 5, %v4085
      %v4087 = vrot.slane %v2279, %v4086
      %v4088 = vlaneseq
      %v4089 = vshrl.u32 %v4088, 7
      %v4090 = vsub.s32 5, %v4089
      %v4091 = vrot.slane %v2289, %v4090
      %4094 = vrot.lane.b32.xlu0 %v2264, 96
      %v4095 = vpop.permute.xlu0 %4094
      %4096 = vrot.lane.b32.xlu0 %v2269, 96
      %v4097 = vpop.permute.xlu0 %4096
      %v4100 = vmul.f32 %v4031, %v4095
      %v4101 = vmul.f32 %v4031, %v4097
      %v4102 = vmul.f32 %v4035, %v4095
      %v4103 = vmul.f32 %v4035, %v4097
      %v4104 = vmul.f32 %v4039, %v4095
      %v4105 = vmul.f32 %v4039, %v4097
      %v4106 = vmul.f32 %v4043, %v4095
      %v4107 = vmul.f32 %v4043, %v4097
      %v4108 = vmul.f32 %v4047, %v4095
      %v4109 = vmul.f32 %v4047, %v4097
      %v4110 = vmul.f32 %v4051, %v4095
      %v4111 = vmul.f32 %v4051, %v4097
      %v4112 = vmul.f32 %v4055, %v4095
      %v4113 = vmul.f32 %v4055, %v4097
      %v4114 = vmul.f32 %v4059, %v4095
      %v4115 = vmul.f32 %v4059, %v4097
      %v4116 = vmul.f32 %v4063, %v4095
      %v4117 = vmul.f32 %v4063, %v4097
      %v4118 = vmul.f32 %v4067, %v4095
      %v4119 = vmul.f32 %v4067, %v4097
      %v4120 = vmul.f32 %v4071, %v4095
      %v4121 = vmul.f32 %v4071, %v4097
      %v4122 = vmul.f32 %v4075, %v4095
      %v4123 = vmul.f32 %v4075, %v4097
      %v4124 = vmul.f32 %v4079, %v4095
      %v4125 = vmul.f32 %v4079, %v4097
      %v4126 = vmul.f32 %v4083, %v4095
      %v4127 = vmul.f32 %v4083, %v4097
      %v4128 = vmul.f32 %v4087, %v4095
      %v4129 = vmul.f32 %v4087, %v4097
      %v4130 = vmul.f32 %v4091, %v4095
      %v4131 = vmul.f32 %v4091, %v4097
      %v4132 = vadd.f32 %v3996, %v4100
      %v4133 = vadd.f32 %v3997, %v4101
      %v4134 = vadd.f32 %v3998, %v4102
      %v4135 = vadd.f32 %v3999, %v4103
      %v4136 = vadd.f32 %v4000, %v4104
      %v4137 = vadd.f32 %v4001, %v4105
      %v4138 = vadd.f32 %v4002, %v4106
      %v4139 = vadd.f32 %v4003, %v4107
      %v4140 = vadd.f32 %v4004, %v4108
      %v4141 = vadd.f32 %v4005, %v4109
      %v4142 = vadd.f32 %v4006, %v4110
      %v4143 = vadd.f32 %v4007, %v4111
      %v4144 = vadd.f32 %v4008, %v4112
      %v4145 = vadd.f32 %v4009, %v4113
      %v4146 = vadd.f32 %v4010, %v4114
      %v4147 = vadd.f32 %v4011, %v4115
      %v4148 = vadd.f32 %v4012, %v4116
      %v4149 = vadd.f32 %v4013, %v4117
      %v4150 = vadd.f32 %v4014, %v4118
      %v4151 = vadd.f32 %v4015, %v4119
      %v4152 = vadd.f32 %v4016, %v4120
      %v4153 = vadd.f32 %v4017, %v4121
      %v4154 = vadd.f32 %v4018, %v4122
      %v4155 = vadd.f32 %v4019, %v4123
      %v4156 = vadd.f32 %v4020, %v4124
      %v4157 = vadd.f32 %v4021, %v4125
      %v4158 = vadd.f32 %v4022, %v4126
      %v4159 = vadd.f32 %v4023, %v4127
      %v4160 = vadd.f32 %v4024, %v4128
      %v4161 = vadd.f32 %v4025, %v4129
      %v4162 = vadd.f32 %v4026, %v4130
      %v4163 = vadd.f32 %v4027, %v4131
      %v4164 = vlaneseq
      %v4165 = vshrl.u32 %v4164, 7
      %v4166 = vsub.s32 6, %v4165
      %v4167 = vrot.slane %v2139, %v4166
      %v4168 = vlaneseq
      %v4169 = vshrl.u32 %v4168, 7
      %v4170 = vsub.s32 6, %v4169
      %v4171 = vrot.slane %v2149, %v4170
      %v4172 = vlaneseq
      %v4173 = vshrl.u32 %v4172, 7
      %v4174 = vsub.s32 6, %v4173
      %v4175 = vrot.slane %v2159, %v4174
      %v4176 = vlaneseq
      %v4177 = vshrl.u32 %v4176, 7
      %v4178 = vsub.s32 6, %v4177
      %v4179 = vrot.slane %v2169, %v4178
      %v4180 = vlaneseq
      %v4181 = vshrl.u32 %v4180, 7
      %v4182 = vsub.s32 6, %v4181
      %v4183 = vrot.slane %v2179, %v4182
      %v4184 = vlaneseq
      %v4185 = vshrl.u32 %v4184, 7
      %v4186 = vsub.s32 6, %v4185
      %v4187 = vrot.slane %v2189, %v4186
      %v4188 = vlaneseq
      %v4189 = vshrl.u32 %v4188, 7
      %v4190 = vsub.s32 6, %v4189
      %v4191 = vrot.slane %v2199, %v4190
      %v4192 = vlaneseq
      %v4193 = vshrl.u32 %v4192, 7
      %v4194 = vsub.s32 6, %v4193
      %v4195 = vrot.slane %v2209, %v4194
      %v4196 = vlaneseq
      %v4197 = vshrl.u32 %v4196, 7
      %v4198 = vsub.s32 6, %v4197
      %v4199 = vrot.slane %v2219, %v4198
      %v4200 = vlaneseq
      %v4201 = vshrl.u32 %v4200, 7
      %v4202 = vsub.s32 6, %v4201
      %v4203 = vrot.slane %v2229, %v4202
      %v4204 = vlaneseq
      %v4205 = vshrl.u32 %v4204, 7
      %v4206 = vsub.s32 6, %v4205
      %v4207 = vrot.slane %v2239, %v4206
      %v4208 = vlaneseq
      %v4209 = vshrl.u32 %v4208, 7
      %v4210 = vsub.s32 6, %v4209
      %v4211 = vrot.slane %v2249, %v4210
      %v4212 = vlaneseq
      %v4213 = vshrl.u32 %v4212, 7
      %v4214 = vsub.s32 6, %v4213
      %v4215 = vrot.slane %v2259, %v4214
      %v4216 = vlaneseq
      %v4217 = vshrl.u32 %v4216, 7
      %v4218 = vsub.s32 6, %v4217
      %v4219 = vrot.slane %v2269, %v4218
      %v4220 = vlaneseq
      %v4221 = vshrl.u32 %v4220, 7
      %v4222 = vsub.s32 6, %v4221
      %v4223 = vrot.slane %v2279, %v4222
      %v4224 = vlaneseq
      %v4225 = vshrl.u32 %v4224, 7
      %v4226 = vsub.s32 6, %v4225
      %v4227 = vrot.slane %v2289, %v4226
      %4230 = vrot.lane.b32.xlu0 %v2274, 96
      %v4231 = vpop.permute.xlu0 %4230
      %4232 = vrot.lane.b32.xlu0 %v2279, 96
      %v4233 = vpop.permute.xlu0 %4232
      %v4236 = vmul.f32 %v4167, %v4231
      %v4237 = vmul.f32 %v4167, %v4233
      %v4238 = vmul.f32 %v4171, %v4231
      %v4239 = vmul.f32 %v4171, %v4233
      %v4240 = vmul.f32 %v4175, %v4231
      %v4241 = vmul.f32 %v4175, %v4233
      %v4242 = vmul.f32 %v4179, %v4231
      %v4243 = vmul.f32 %v4179, %v4233
      %v4244 = vmul.f32 %v4183, %v4231
      %v4245 = vmul.f32 %v4183, %v4233
      %v4246 = vmul.f32 %v4187, %v4231
      %v4247 = vmul.f32 %v4187, %v4233
      %v4248 = vmul.f32 %v4191, %v4231
      %v4249 = vmul.f32 %v4191, %v4233
      %v4250 = vmul.f32 %v4195, %v4231
      %v4251 = vmul.f32 %v4195, %v4233
      %v4252 = vmul.f32 %v4199, %v4231
      %v4253 = vmul.f32 %v4199, %v4233
      %v4254 = vmul.f32 %v4203, %v4231
      %v4255 = vmul.f32 %v4203, %v4233
      %v4256 = vmul.f32 %v4207, %v4231
      %v4257 = vmul.f32 %v4207, %v4233
      %v4258 = vmul.f32 %v4211, %v4231
      %v4259 = vmul.f32 %v4211, %v4233
      %v4260 = vmul.f32 %v4215, %v4231
      %v4261 = vmul.f32 %v4215, %v4233
      %v4262 = vmul.f32 %v4219, %v4231
      %v4263 = vmul.f32 %v4219, %v4233
      %v4264 = vmul.f32 %v4223, %v4231
      %v4265 = vmul.f32 %v4223, %v4233
      %v4266 = vmul.f32 %v4227, %v4231
      %v4267 = vmul.f32 %v4227, %v4233
      %v4268 = vadd.f32 %v4132, %v4236
      %v4269 = vadd.f32 %v4133, %v4237
      %v4270 = vadd.f32 %v4134, %v4238
      %v4271 = vadd.f32 %v4135, %v4239
      %v4272 = vadd.f32 %v4136, %v4240
      %v4273 = vadd.f32 %v4137, %v4241
      %v4274 = vadd.f32 %v4138, %v4242
      %v4275 = vadd.f32 %v4139, %v4243
      %v4276 = vadd.f32 %v4140, %v4244
      %v4277 = vadd.f32 %v4141, %v4245
      %v4278 = vadd.f32 %v4142, %v4246
      %v4279 = vadd.f32 %v4143, %v4247
      %v4280 = vadd.f32 %v4144, %v4248
      %v4281 = vadd.f32 %v4145, %v4249
      %v4282 = vadd.f32 %v4146, %v4250
      %v4283 = vadd.f32 %v4147, %v4251
      %v4284 = vadd.f32 %v4148, %v4252
      %v4285 = vadd.f32 %v4149, %v4253
      %v4286 = vadd.f32 %v4150, %v4254
      %v4287 = vadd.f32 %v4151, %v4255
      %v4288 = vadd.f32 %v4152, %v4256
      %v4289 = vadd.f32 %v4153, %v4257
      %v4290 = vadd.f32 %v4154, %v4258
      %v4291 = vadd.f32 %v4155, %v4259
      %v4292 = vadd.f32 %v4156, %v4260
      %v4293 = vadd.f32 %v4157, %v4261
      %v4294 = vadd.f32 %v4158, %v4262
      %v4295 = vadd.f32 %v4159, %v4263
      %v4296 = vadd.f32 %v4160, %v4264
      %v4297 = vadd.f32 %v4161, %v4265
      %v4298 = vadd.f32 %v4162, %v4266
      %v4299 = vadd.f32 %v4163, %v4267
      %v4300 = vlaneseq
      %v4301 = vshrl.u32 %v4300, 7
      %v4302 = vsub.s32 7, %v4301
      %v4303 = vrot.slane %v2139, %v4302
      %v4304 = vlaneseq
      %v4305 = vshrl.u32 %v4304, 7
      %v4306 = vsub.s32 7, %v4305
      %v4307 = vrot.slane %v2149, %v4306
      %v4308 = vlaneseq
      %v4309 = vshrl.u32 %v4308, 7
      %v4310 = vsub.s32 7, %v4309
      %v4311 = vrot.slane %v2159, %v4310
      %v4312 = vlaneseq
      %v4313 = vshrl.u32 %v4312, 7
      %v4314 = vsub.s32 7, %v4313
      %v4315 = vrot.slane %v2169, %v4314
      %v4316 = vlaneseq
      %v4317 = vshrl.u32 %v4316, 7
      %v4318 = vsub.s32 7, %v4317
      %v4319 = vrot.slane %v2179, %v4318
      %v4320 = vlaneseq
      %v4321 = vshrl.u32 %v4320, 7
      %v4322 = vsub.s32 7, %v4321
      %v4323 = vrot.slane %v2189, %v4322
      %v4324 = vlaneseq
      %v4325 = vshrl.u32 %v4324, 7
      %v4326 = vsub.s32 7, %v4325
      %v4327 = vrot.slane %v2199, %v4326
      %v4328 = vlaneseq
      %v4329 = vshrl.u32 %v4328, 7
      %v4330 = vsub.s32 7, %v4329
      %v4331 = vrot.slane %v2209, %v4330
      %v4332 = vlaneseq
      %v4333 = vshrl.u32 %v4332, 7
      %v4334 = vsub.s32 7, %v4333
      %v4335 = vrot.slane %v2219, %v4334
      %v4336 = vlaneseq
      %v4337 = vshrl.u32 %v4336, 7
      %v4338 = vsub.s32 7, %v4337
      %v4339 = vrot.slane %v2229, %v4338
      %v4340 = vlaneseq
      %v4341 = vshrl.u32 %v4340, 7
      %v4342 = vsub.s32 7, %v4341
      %v4343 = vrot.slane %v2239, %v4342
      %v4344 = vlaneseq
      %v4345 = vshrl.u32 %v4344, 7
      %v4346 = vsub.s32 7, %v4345
      %v4347 = vrot.slane %v2249, %v4346
      %v4348 = vlaneseq
      %v4349 = vshrl.u32 %v4348, 7
      %v4350 = vsub.s32 7, %v4349
      %v4351 = vrot.slane %v2259, %v4350
      %v4352 = vlaneseq
      %v4353 = vshrl.u32 %v4352, 7
      %v4354 = vsub.s32 7, %v4353
      %v4355 = vrot.slane %v2269, %v4354
      %v4356 = vlaneseq
      %v4357 = vshrl.u32 %v4356, 7
      %v4358 = vsub.s32 7, %v4357
      %v4359 = vrot.slane %v2279, %v4358
      %v4360 = vlaneseq
      %v4361 = vshrl.u32 %v4360, 7
      %v4362 = vsub.s32 7, %v4361
      %v4363 = vrot.slane %v2289, %v4362
      %4366 = vrot.lane.b32.xlu0 %v2284, 96
      %v4367 = vpop.permute.xlu0 %4366
      %4368 = vrot.lane.b32.xlu0 %v2289, 96
      %v4369 = vpop.permute.xlu0 %4368
      %v4372 = vmul.f32 %v4303, %v4367
      %v4373 = vmul.f32 %v4303, %v4369
      %v4374 = vmul.f32 %v4307, %v4367
      %v4375 = vmul.f32 %v4307, %v4369
      %v4376 = vmul.f32 %v4311, %v4367
      %v4377 = vmul.f32 %v4311, %v4369
      %v4378 = vmul.f32 %v4315, %v4367
      %v4379 = vmul.f32 %v4315, %v4369
      %v4380 = vmul.f32 %v4319, %v4367
      %v4381 = vmul.f32 %v4319, %v4369
      %v4382 = vmul.f32 %v4323, %v4367
      %v4383 = vmul.f32 %v4323, %v4369
      %v4384 = vmul.f32 %v4327, %v4367
      %v4385 = vmul.f32 %v4327, %v4369
      %v4386 = vmul.f32 %v4331, %v4367
      %v4387 = vmul.f32 %v4331, %v4369
      %v4388 = vmul.f32 %v4335, %v4367
      %v4389 = vmul.f32 %v4335, %v4369
      %v4390 = vmul.f32 %v4339, %v4367
      %v4391 = vmul.f32 %v4339, %v4369
      %v4392 = vmul.f32 %v4343, %v4367
      %v4393 = vmul.f32 %v4343, %v4369
      %v4394 = vmul.f32 %v4347, %v4367
      %v4395 = vmul.f32 %v4347, %v4369
      %v4396 = vmul.f32 %v4351, %v4367
      %v4397 = vmul.f32 %v4351, %v4369
      %v4398 = vmul.f32 %v4355, %v4367
      %v4399 = vmul.f32 %v4355, %v4369
      %v4400 = vmul.f32 %v4359, %v4367
      %v4401 = vmul.f32 %v4359, %v4369
      %v4402 = vmul.f32 %v4363, %v4367
      %v4403 = vmul.f32 %v4363, %v4369
      %v4404 = vadd.f32 %v4268, %v4372
      %v4405 = vadd.f32 %v4269, %v4373
      %v4406 = vadd.f32 %v4270, %v4374
      %v4407 = vadd.f32 %v4271, %v4375
      %v4408 = vadd.f32 %v4272, %v4376
      %v4409 = vadd.f32 %v4273, %v4377
      %v4410 = vadd.f32 %v4274, %v4378
      %v4411 = vadd.f32 %v4275, %v4379
      %v4412 = vadd.f32 %v4276, %v4380
      %v4413 = vadd.f32 %v4277, %v4381
      %v4414 = vadd.f32 %v4278, %v4382
      %v4415 = vadd.f32 %v4279, %v4383
      %v4416 = vadd.f32 %v4280, %v4384
      %v4417 = vadd.f32 %v4281, %v4385
      %v4418 = vadd.f32 %v4282, %v4386
      %v4419 = vadd.f32 %v4283, %v4387
      %v4420 = vadd.f32 %v4284, %v4388
      %v4421 = vadd.f32 %v4285, %v4389
      %v4422 = vadd.f32 %v4286, %v4390
      %v4423 = vadd.f32 %v4287, %v4391
      %v4424 = vadd.f32 %v4288, %v4392
      %v4425 = vadd.f32 %v4289, %v4393
      %v4426 = vadd.f32 %v4290, %v4394
      %v4427 = vadd.f32 %v4291, %v4395
      %v4428 = vadd.f32 %v4292, %v4396
      %v4429 = vadd.f32 %v4293, %v4397
      %v4430 = vadd.f32 %v4294, %v4398
      %v4431 = vadd.f32 %v4295, %v4399
      %v4432 = vadd.f32 %v4296, %v4400
      %v4433 = vadd.f32 %v4297, %v4401
      %v4434 = vadd.f32 %v4298, %v4402
      %v4435 = vadd.f32 %v4299, %v4403
      %v4436 = vmul.f32 %v4404, 0.25
      %v4437 = vmul.f32 %v4405, 0.25
      %v4438 = vmul.f32 %v4406, 0.25
      %v4439 = vmul.f32 %v4407, 0.25
      %v4440 = vmul.f32 %v4408, 0.25
      %v4441 = vmul.f32 %v4409, 0.25
      %v4442 = vmul.f32 %v4410, 0.25
      %v4443 = vmul.f32 %v4411, 0.25
      %v4444 = vmul.f32 %v4412, 0.25
      %v4445 = vmul.f32 %v4413, 0.25
      %v4446 = vmul.f32 %v4414, 0.25
      %v4447 = vmul.f32 %v4415, 0.25
      %v4448 = vmul.f32 %v4416, 0.25
      %v4449 = vmul.f32 %v4417, 0.25
      %v4450 = vmul.f32 %v4418, 0.25
      %v4451 = vmul.f32 %v4419, 0.25
      %v4452 = vmul.f32 %v4420, 0.25
      %v4453 = vmul.f32 %v4421, 0.25
      %v4454 = vmul.f32 %v4422, 0.25
      %v4455 = vmul.f32 %v4423, 0.25
      %v4456 = vmul.f32 %v4424, 0.25
      %v4457 = vmul.f32 %v4425, 0.25
      %v4458 = vmul.f32 %v4426, 0.25
      %v4459 = vmul.f32 %v4427, 0.25
      %v4460 = vmul.f32 %v4428, 0.25
      %v4461 = vmul.f32 %v4429, 0.25
      %v4462 = vmul.f32 %v4430, 0.25
      %v4463 = vmul.f32 %v4431, 0.25
      %v4464 = vmul.f32 %v4432, 0.25
      %v4465 = vmul.f32 %v4433, 0.25
      %v4466 = vmul.f32 %v4434, 0.25
      %v4467 = vmul.f32 %v4435, 0.25
      %4468 = vmatprep.subr.mxu0 0.0
      %4469 = vmatpush1.msra.mxu0 %v1535
      %4470 = vmatprep.subr.mxu0 0.0
      %4471 = vmatpush1.msra.mxu0 %v1536
      %4472 = vmatprep.subr.mxu0 0.0
      %4473 = vmatpush1.msra.mxu0 %v1537
      %4474 = vmatprep.subr.mxu0 0.0
      %4475 = vmatpush1.msra.mxu0 %v1538
      %4476 = vmatprep.subr.mxu0 0.0
      %4477 = vmatpush1.msra.mxu0 0.0
      %4478 = vmatprep.subr.mxu0 0.0
      %4479 = vmatpush1.msra.mxu0 0.0
      %4480 = vmatprep.subr.mxu0 0.0
      %4481 = vmatpush1.msra.mxu0 0.0
      %4482 = vmatprep.subr.mxu0 0.0
      %4483 = vmatpush1.msra.mxu0 0.0
      %4484 = vmatprep.subr.mxu0 0.0
      %4485 = vmatpush1.msra.mxu0 0.0
      %4486 = vmatprep.subr.mxu0 0.0
      %4487 = vmatpush1.msra.mxu0 0.0
      %4488 = vmatprep.subr.mxu0 0.0
      %4489 = vmatpush1.msra.mxu0 0.0
      %4490 = vmatprep.subr.mxu0 0.0
      %4491 = vmatpush1.msra.mxu0 0.0
      %4492 = vmatprep.subr.mxu0 0.0
      %4493 = vmatpush1.msra.mxu0 0.0
      %4494 = vmatprep.subr.mxu0 0.0
      %4495 = vmatpush1.msra.mxu0 0.0
      %4496 = vmatprep.subr.mxu0 0.0
      %4497 = vmatpush1.msra.mxu0 0.0
      %4498 = vmatprep.subr.mxu0 0.0
      %4499 = vmatpush1.msra.mxu0 0.0
      %4500 = vmatprep.subr.mxu0 0.0
      %4501 = vmatpush1.msra.mxu0 0.0
      %4502 = vmatprep.subr.mxu0 0.0
      %4503 = vmatpush1.msra.mxu0 0.0
      %4504 = vmatprep.subr.mxu0 0.0
      %4505 = vmatpush1.msra.mxu0 0.0
      %4506 = vmatprep.subr.mxu0 0.0
      %4507 = vmatpush1.msra.mxu0 0.0
      %4508 = vmatprep.subr.mxu0 0.0
      %4509 = vmatpush1.msra.mxu0 0.0
      %4510 = vmatprep.subr.mxu0 0.0
      %4511 = vmatpush1.msra.mxu0 0.0
      %4512 = vmatprep.subr.mxu0 0.0
      %4513 = vmatpush1.msra.mxu0 0.0
      %4514 = vmatprep.subr.mxu0 0.0
      %4515 = vmatpush1.msra.mxu0 0.0
      %4516 = vmatprep.subr.mxu0 0.0
      %4517 = vmatpush1.msra.mxu0 0.0
      %4518 = vmatprep.subr.mxu0 0.0
      %4519 = vmatpush1.msra.mxu0 0.0
      %4520 = vmatprep.subr.mxu0 0.0
      %4521 = vmatpush1.msra.mxu0 0.0
      %4522 = vmatprep.subr.mxu0 0.0
      %4523 = vmatpush1.msra.mxu0 0.0
      %4524 = vmatprep.subr.mxu0 0.0
      %4525 = vmatpush1.msra.mxu0 0.0
      %4526 = vmatprep.subr.mxu0 0.0
      %4527 = vmatpush1.msra.mxu0 0.0
      %4528 = vmatprep.subr.mxu0 0.0
      %4529 = vmatpush1.msra.mxu0 0.0
      %4530 = vmatprep.subr.mxu0 0.0
      %4531 = vmatpush1.msra.mxu0 0.0
      %4532 = vmatprep.mubr.f32.mxu0 0.0
      %4533 = vmatmul.mubr.f32.gmra.mrb[0].mxu0 %v1548
      %v4534 = vpop.f32.mrb[0].mxu0
      %v4535 = vadd.f32 0.0, %v4534
      %v4536 = vpop.f32.mrb[0].mxu0
      %4537 = vmatprep.mubr.f32.mxu0 0.0
      %4538 = vmatmul.mubr.f32.gmra.mrb[0].mxu0 %v1551
      %v4539 = vpop.f32.mrb[0].mxu0
      %v4540 = vadd.f32 0.0, %v4539
      %v4541 = vpop.f32.mrb[0].mxu0
      %4542 = vmatprep.mubr.f32.mxu0 0.0
      %4543 = vmatmul.mubr.f32.gmra.mrb[0].mxu0 %v1554
      %v4544 = vpop.f32.mrb[0].mxu0
      %v4545 = vadd.f32 0.0, %v4544
      %v4546 = vpop.f32.mrb[0].mxu0
      %4547 = vmatprep.mubr.f32.mxu0 0.0
      %4548 = vmatmul.mubr.f32.gmra.mrb[0].mxu0 %v1557
      %v4549 = vpop.f32.mrb[0].mxu0
      %v4550 = vadd.f32 0.0, %v4549
      %v4551 = vpop.f32.mrb[0].mxu0
      %4552 = vmatprep.mubr.f32.mxu0 0.0
      %4553 = vmatmul.mubr.f32.gmra.mrb[0].mxu0 %v1560
      %v4554 = vpop.f32.mrb[0].mxu0
      %v4555 = vadd.f32 0.0, %v4554
      %v4556 = vpop.f32.mrb[0].mxu0
      %4557 = vmatprep.mubr.f32.mxu0 0.0
      %4558 = vmatmul.mubr.f32.gmra.mrb[0].mxu0 %v1563
      %v4559 = vpop.f32.mrb[0].mxu0
      %v4560 = vadd.f32 0.0, %v4559
      %v4561 = vpop.f32.mrb[0].mxu0
      %4562 = vmatprep.mubr.f32.mxu0 0.0
      %4563 = vmatmul.mubr.f32.gmra.mrb[0].mxu0 %v1566
      %v4564 = vpop.f32.mrb[0].mxu0
      %v4565 = vadd.f32 0.0, %v4564
      %v4566 = vpop.f32.mrb[0].mxu0
      %4567 = vmatprep.mubr.f32.mxu0 0.0
      %4568 = vmatmul.mubr.f32.gmra.mrb[0].mxu0 %v1569
      %v4569 = vpop.f32.mrb[0].mxu0
      %v4570 = vadd.f32 0.0, %v4569
      %v4571 = vpop.f32.mrb[0].mxu0
      %4572 = vmatprep.mubr.f32.mxu0 0.0
      %4573 = vmatmul.mubr.f32.gmra.mrb[0].mxu0 %v1572
      %v4574 = vpop.f32.mrb[0].mxu0
      %v4575 = vadd.f32 0.0, %v4574
      %v4576 = vpop.f32.mrb[0].mxu0
      %4577 = vmatprep.mubr.f32.mxu0 0.0
      %4578 = vmatmul.mubr.f32.gmra.mrb[0].mxu0 %v1575
      %v4579 = vpop.f32.mrb[0].mxu0
      %v4580 = vadd.f32 0.0, %v4579
      %v4581 = vpop.f32.mrb[0].mxu0
      %4582 = vmatprep.mubr.f32.mxu0 0.0
      %4583 = vmatmul.mubr.f32.gmra.mrb[0].mxu0 %v1578
      %v4584 = vpop.f32.mrb[0].mxu0
      %v4585 = vadd.f32 0.0, %v4584
      %v4586 = vpop.f32.mrb[0].mxu0
      %4587 = vmatprep.mubr.f32.mxu0 0.0
      %4588 = vmatmul.mubr.f32.gmra.mrb[0].mxu0 %v1581
      %v4589 = vpop.f32.mrb[0].mxu0
      %v4590 = vadd.f32 0.0, %v4589
      %v4591 = vpop.f32.mrb[0].mxu0
      %4592 = vmatprep.mubr.f32.mxu0 0.0
      %4593 = vmatmul.mubr.f32.gmra.mrb[0].mxu0 %v1584
      %v4594 = vpop.f32.mrb[0].mxu0
      %v4595 = vadd.f32 0.0, %v4594
      %v4596 = vpop.f32.mrb[0].mxu0
      %4597 = vmatprep.mubr.f32.mxu0 0.0
      %4598 = vmatmul.mubr.f32.gmra.mrb[0].mxu0 %v1587
      %v4599 = vpop.f32.mrb[0].mxu0
      %v4600 = vadd.f32 0.0, %v4599
      %v4601 = vpop.f32.mrb[0].mxu0
      %4602 = vmatprep.mubr.f32.mxu0 0.0
      %4603 = vmatmul.mubr.f32.gmra.mrb[0].mxu0 %v1590
      %v4604 = vpop.f32.mrb[0].mxu0
      %v4605 = vadd.f32 0.0, %v4604
      %v4606 = vpop.f32.mrb[0].mxu0
      %4607 = vmatprep.mubr.f32.mxu0 0.0
      %4608 = vmatmul.mubr.f32.gmra.mrb[0].mxu0 %v1593
      %v4609 = vpop.f32.mrb[0].mxu0
      %v4610 = vadd.f32 0.0, %v4609
      %v4611 = vpop.f32.mrb[0].mxu0
      %4612 = vmatprep.mubr.f32.mxu0 0.0
      %4613 = vmatmul.mubr.f32.gmra.mrb[0].mxu0 %v1596
      %v4614 = vpop.f32.mrb[0].mxu0
      %v4615 = vadd.f32 0.0, %v4614
      %v4616 = vpop.f32.mrb[0].mxu0
      %4617 = vmatprep.mubr.f32.mxu0 0.0
      %4618 = vmatmul.mubr.f32.gmra.mrb[0].mxu0 %v1599
      %v4619 = vpop.f32.mrb[0].mxu0
      %v4620 = vadd.f32 0.0, %v4619
      %v4621 = vpop.f32.mrb[0].mxu0
      %4622 = vmatprep.mubr.f32.mxu0 0.0
      %4623 = vmatmul.mubr.f32.gmra.mrb[0].mxu0 %v1602
      %v4624 = vpop.f32.mrb[0].mxu0
      %v4625 = vadd.f32 0.0, %v4624
      %v4626 = vpop.f32.mrb[0].mxu0
      %4627 = vmatprep.mubr.f32.mxu0 0.0
      %4628 = vmatmul.mubr.f32.gmra.mrb[0].mxu0 %v1605
      %v4629 = vpop.f32.mrb[0].mxu0
      %v4630 = vadd.f32 0.0, %v4629
      %v4631 = vpop.f32.mrb[0].mxu0
      %4632 = vmatprep.mubr.f32.mxu0 0.0
      %4633 = vmatmul.mubr.f32.gmra.mrb[0].mxu0 %v1608
      %v4634 = vpop.f32.mrb[0].mxu0
      %v4635 = vadd.f32 0.0, %v4634
      %v4636 = vpop.f32.mrb[0].mxu0
      %4637 = vmatprep.mubr.f32.mxu0 0.0
      %4638 = vmatmul.mubr.f32.gmra.mrb[0].mxu0 %v1611
      %v4639 = vpop.f32.mrb[0].mxu0
      %v4640 = vadd.f32 0.0, %v4639
      %v4641 = vpop.f32.mrb[0].mxu0
      %4642 = vmatprep.mubr.f32.mxu0 0.0
      %4643 = vmatmul.mubr.f32.gmra.mrb[0].mxu0 %v1614
      %v4644 = vpop.f32.mrb[0].mxu0
      %v4645 = vadd.f32 0.0, %v4644
      %v4646 = vpop.f32.mrb[0].mxu0
      %4647 = vmatprep.mubr.f32.mxu0 0.0
      %4648 = vmatmul.mubr.f32.gmra.mrb[0].mxu0 %v1617
      %v4649 = vpop.f32.mrb[0].mxu0
      %v4650 = vadd.f32 0.0, %v4649
      %v4651 = vpop.f32.mrb[0].mxu0
      %4652 = vmatprep.mubr.f32.mxu0 0.0
      %4653 = vmatmul.mubr.f32.gmra.mrb[0].mxu0 %v1620
      %v4654 = vpop.f32.mrb[0].mxu0
      %v4655 = vadd.f32 0.0, %v4654
      %v4656 = vpop.f32.mrb[0].mxu0
      %4657 = vmatprep.mubr.f32.mxu0 0.0
      %4658 = vmatmul.mubr.f32.gmra.mrb[0].mxu0 %v1623
      %v4659 = vpop.f32.mrb[0].mxu0
      %v4660 = vadd.f32 0.0, %v4659
      %v4661 = vpop.f32.mrb[0].mxu0
      %4662 = vmatprep.mubr.f32.mxu0 0.0
      %4663 = vmatmul.mubr.f32.gmra.mrb[0].mxu0 %v1626
      %v4664 = vpop.f32.mrb[0].mxu0
      %v4665 = vadd.f32 0.0, %v4664
      %v4666 = vpop.f32.mrb[0].mxu0
      %4667 = vmatprep.mubr.f32.mxu0 0.0
      %4668 = vmatmul.mubr.f32.gmra.mrb[0].mxu0 %v1629
      %v4669 = vpop.f32.mrb[0].mxu0
      %v4670 = vadd.f32 0.0, %v4669
      %v4671 = vpop.f32.mrb[0].mxu0
      %4672 = vmatprep.mubr.f32.mxu0 0.0
      %4673 = vmatmul.mubr.f32.gmra.mrb[0].mxu0 %v1632
      %v4674 = vpop.f32.mrb[0].mxu0
      %v4675 = vadd.f32 0.0, %v4674
      %v4676 = vpop.f32.mrb[0].mxu0
      %4677 = vmatprep.mubr.f32.mxu0 0.0
      %4678 = vmatmul.mubr.f32.gmra.mrb[0].mxu0 %v1635
      %v4679 = vpop.f32.mrb[0].mxu0
      %v4680 = vadd.f32 0.0, %v4679
      %v4681 = vpop.f32.mrb[0].mxu0
      %4682 = vmatprep.mubr.f32.mxu0 0.0
      %4683 = vmatmul.mubr.f32.gmra.mrb[0].mxu0 %v1638
      %v4684 = vpop.f32.mrb[0].mxu0
      %v4685 = vadd.f32 0.0, %v4684
      %v4686 = vpop.f32.mrb[0].mxu0
      %4687 = vmatprep.mubr.f32.mxu0 0.0
      %4688 = vmatmul.mubr.f32.gmra.mrb[0].mxu0 %v1641
      %v4689 = vpop.f32.mrb[0].mxu0
      %v4690 = vadd.f32 0.0, %v4689
      %v4691 = vpop.f32.mrb[0].mxu0
      %4692 = vdwg.mxu0
      %v4694 = vsel %vm1546, %v4436, 0
      %v4697 = vsel %vm1546, %v4437, 0
      %v4700 = vsel %vm1546, %v4438, 0
      %v4703 = vsel %vm1546, %v4439, 0
      %v4706 = vsel %vm1546, %v4440, 0
      %v4709 = vsel %vm1546, %v4441, 0
      %v4712 = vsel %vm1546, %v4442, 0
      %v4715 = vsel %vm1546, %v4443, 0
      %v4718 = vsel %vm1546, %v4444, 0
      %v4721 = vsel %vm1546, %v4445, 0
      %v4724 = vsel %vm1546, %v4446, 0
      %v4727 = vsel %vm1546, %v4447, 0
      %v4730 = vsel %vm1546, %v4448, 0
      %v4733 = vsel %vm1546, %v4449, 0
      %v4736 = vsel %vm1546, %v4450, 0
      %v4739 = vsel %vm1546, %v4451, 0
      %v4742 = vsel %vm1546, %v4452, 0
      %v4745 = vsel %vm1546, %v4453, 0
      %v4748 = vsel %vm1546, %v4454, 0
      %v4751 = vsel %vm1546, %v4455, 0
      %v4754 = vsel %vm1546, %v4456, 0
      %v4757 = vsel %vm1546, %v4457, 0
      %v4760 = vsel %vm1546, %v4458, 0
      %v4763 = vsel %vm1546, %v4459, 0
      %v4766 = vsel %vm1546, %v4460, 0
      %v4769 = vsel %vm1546, %v4461, 0
      %v4772 = vsel %vm1546, %v4462, 0
      %v4775 = vsel %vm1546, %v4463, 0
      %v4778 = vsel %vm1546, %v4464, 0
      %v4781 = vsel %vm1546, %v4465, 0
      %v4784 = vsel %vm1546, %v4466, 0
      %v4787 = vsel %vm1546, %v4467, 0
      %4789 = vmatprep.subr.mxu0 0.0
      %4790 = vmatpush1.msra.mxu0 %v1531
      %4791 = vmatprep.subr.mxu0 0.0
      %4792 = vmatpush1.msra.mxu0 %v1532
      %4793 = vmatprep.subr.mxu0 0.0
      %4794 = vmatpush1.msra.mxu0 %v1533
      %4795 = vmatprep.subr.mxu0 0.0
      %4796 = vmatpush1.msra.mxu0 %v1534
      %4797 = vmatprep.subr.mxu0 0.0
      %4798 = vmatpush1.msra.mxu0 0.0
      %4799 = vmatprep.subr.mxu0 0.0
      %4800 = vmatpush1.msra.mxu0 0.0
      %4801 = vmatprep.subr.mxu0 0.0
      %4802 = vmatpush1.msra.mxu0 0.0
      %4803 = vmatprep.subr.mxu0 0.0
      %4804 = vmatpush1.msra.mxu0 0.0
      %4805 = vmatprep.subr.mxu0 0.0
      %4806 = vmatpush1.msra.mxu0 0.0
      %4807 = vmatprep.subr.mxu0 0.0
      %4808 = vmatpush1.msra.mxu0 0.0
      %4809 = vmatprep.subr.mxu0 0.0
      %4810 = vmatpush1.msra.mxu0 0.0
      %4811 = vmatprep.subr.mxu0 0.0
      %4812 = vmatpush1.msra.mxu0 0.0
      %4813 = vmatprep.subr.mxu0 0.0
      %4814 = vmatpush1.msra.mxu0 0.0
      %4815 = vmatprep.subr.mxu0 0.0
      %4816 = vmatpush1.msra.mxu0 0.0
      %4817 = vmatprep.subr.mxu0 0.0
      %4818 = vmatpush1.msra.mxu0 0.0
      %4819 = vmatprep.subr.mxu0 0.0
      %4820 = vmatpush1.msra.mxu0 0.0
      %4821 = vmatprep.subr.mxu0 0.0
      %4822 = vmatpush1.msra.mxu0 0.0
      %4823 = vmatprep.subr.mxu0 0.0
      %4824 = vmatpush1.msra.mxu0 0.0
      %4825 = vmatprep.subr.mxu0 0.0
      %4826 = vmatpush1.msra.mxu0 0.0
      %4827 = vmatprep.subr.mxu0 0.0
      %4828 = vmatpush1.msra.mxu0 0.0
      %4829 = vmatprep.subr.mxu0 0.0
      %4830 = vmatpush1.msra.mxu0 0.0
      %4831 = vmatprep.subr.mxu0 0.0
      %4832 = vmatpush1.msra.mxu0 0.0
      %4833 = vmatprep.subr.mxu0 0.0
      %4834 = vmatpush1.msra.mxu0 0.0
      %4835 = vmatprep.subr.mxu0 0.0
      %4836 = vmatpush1.msra.mxu0 0.0
      %4837 = vmatprep.subr.mxu0 0.0
      %4838 = vmatpush1.msra.mxu0 0.0
      %4839 = vmatprep.subr.mxu0 0.0
      %4840 = vmatpush1.msra.mxu0 0.0
      %4841 = vmatprep.subr.mxu0 0.0
      %4842 = vmatpush1.msra.mxu0 0.0
      %4843 = vmatprep.subr.mxu0 0.0
      %4844 = vmatpush1.msra.mxu0 0.0
      %4845 = vmatprep.subr.mxu0 0.0
      %4846 = vmatpush1.msra.mxu0 0.0
      %4847 = vmatprep.subr.mxu0 0.0
      %4848 = vmatpush1.msra.mxu0 0.0
      %4849 = vmatprep.subr.mxu0 0.0
      %4850 = vmatpush1.msra.mxu0 0.0
      %4851 = vmatprep.subr.mxu0 0.0
      %4852 = vmatpush1.msra.mxu0 0.0
      %4853 = vmatprep.mubr.f32.mxu0 0.0
      %4854 = vmatmul.mubr.f32.gmra.mrb[0].mxu0 %v4694
      %v4855 = vpop.f32.mrb[0].mxu0
      %v4856 = vadd.f32 %v4535, %v4855
      %v4857 = vpop.f32.mrb[0].mxu0
      %4858 = vmatprep.mubr.f32.mxu0 0.0
      %4859 = vmatmul.mubr.f32.gmra.mrb[0].mxu0 %v4697
      %v4860 = vpop.f32.mrb[0].mxu0
      %v4861 = vadd.f32 %v4540, %v4860
      %v4862 = vpop.f32.mrb[0].mxu0
      %4863 = vmatprep.mubr.f32.mxu0 0.0
      %4864 = vmatmul.mubr.f32.gmra.mrb[0].mxu0 %v4700
      %v4865 = vpop.f32.mrb[0].mxu0
      %v4866 = vadd.f32 %v4545, %v4865
      %v4867 = vpop.f32.mrb[0].mxu0
      %4868 = vmatprep.mubr.f32.mxu0 0.0
      %4869 = vmatmul.mubr.f32.gmra.mrb[0].mxu0 %v4703
      %v4870 = vpop.f32.mrb[0].mxu0
      %v4871 = vadd.f32 %v4550, %v4870
      %v4872 = vpop.f32.mrb[0].mxu0
      %4873 = vmatprep.mubr.f32.mxu0 0.0
      %4874 = vmatmul.mubr.f32.gmra.mrb[0].mxu0 %v4706
      %v4875 = vpop.f32.mrb[0].mxu0
      %v4876 = vadd.f32 %v4555, %v4875
      %v4877 = vpop.f32.mrb[0].mxu0
      %4878 = vmatprep.mubr.f32.mxu0 0.0
      %4879 = vmatmul.mubr.f32.gmra.mrb[0].mxu0 %v4709
      %v4880 = vpop.f32.mrb[0].mxu0
      %v4881 = vadd.f32 %v4560, %v4880
      %v4882 = vpop.f32.mrb[0].mxu0
      %4883 = vmatprep.mubr.f32.mxu0 0.0
      %4884 = vmatmul.mubr.f32.gmra.mrb[0].mxu0 %v4712
      %v4885 = vpop.f32.mrb[0].mxu0
      %v4886 = vadd.f32 %v4565, %v4885
      %v4887 = vpop.f32.mrb[0].mxu0
      %4888 = vmatprep.mubr.f32.mxu0 0.0
      %4889 = vmatmul.mubr.f32.gmra.mrb[0].mxu0 %v4715
      %v4890 = vpop.f32.mrb[0].mxu0
      %v4891 = vadd.f32 %v4570, %v4890
      %v4892 = vpop.f32.mrb[0].mxu0
      %4893 = vmatprep.mubr.f32.mxu0 0.0
      %4894 = vmatmul.mubr.f32.gmra.mrb[0].mxu0 %v4718
      %v4895 = vpop.f32.mrb[0].mxu0
      %v4896 = vadd.f32 %v4575, %v4895
      %v4897 = vpop.f32.mrb[0].mxu0
      %4898 = vmatprep.mubr.f32.mxu0 0.0
      %4899 = vmatmul.mubr.f32.gmra.mrb[0].mxu0 %v4721
      %v4900 = vpop.f32.mrb[0].mxu0
      %v4901 = vadd.f32 %v4580, %v4900
      %v4902 = vpop.f32.mrb[0].mxu0
      %4903 = vmatprep.mubr.f32.mxu0 0.0
      %4904 = vmatmul.mubr.f32.gmra.mrb[0].mxu0 %v4724
      %v4905 = vpop.f32.mrb[0].mxu0
      %v4906 = vadd.f32 %v4585, %v4905
      %v4907 = vpop.f32.mrb[0].mxu0
      %4908 = vmatprep.mubr.f32.mxu0 0.0
      %4909 = vmatmul.mubr.f32.gmra.mrb[0].mxu0 %v4727
      %v4910 = vpop.f32.mrb[0].mxu0
      %v4911 = vadd.f32 %v4590, %v4910
      %v4912 = vpop.f32.mrb[0].mxu0
      %4913 = vmatprep.mubr.f32.mxu0 0.0
      %4914 = vmatmul.mubr.f32.gmra.mrb[0].mxu0 %v4730
      %v4915 = vpop.f32.mrb[0].mxu0
      %v4916 = vadd.f32 %v4595, %v4915
      %v4917 = vpop.f32.mrb[0].mxu0
      %4918 = vmatprep.mubr.f32.mxu0 0.0
      %4919 = vmatmul.mubr.f32.gmra.mrb[0].mxu0 %v4733
      %v4920 = vpop.f32.mrb[0].mxu0
      %v4921 = vadd.f32 %v4600, %v4920
      %v4922 = vpop.f32.mrb[0].mxu0
      %4923 = vmatprep.mubr.f32.mxu0 0.0
      %4924 = vmatmul.mubr.f32.gmra.mrb[0].mxu0 %v4736
      %v4925 = vpop.f32.mrb[0].mxu0
      %v4926 = vadd.f32 %v4605, %v4925
      %v4927 = vpop.f32.mrb[0].mxu0
      %4928 = vmatprep.mubr.f32.mxu0 0.0
      %4929 = vmatmul.mubr.f32.gmra.mrb[0].mxu0 %v4739
      %v4930 = vpop.f32.mrb[0].mxu0
      %v4931 = vadd.f32 %v4610, %v4930
      %v4932 = vpop.f32.mrb[0].mxu0
      %4933 = vmatprep.mubr.f32.mxu0 0.0
      %4934 = vmatmul.mubr.f32.gmra.mrb[0].mxu0 %v4742
      %v4935 = vpop.f32.mrb[0].mxu0
      %v4936 = vadd.f32 %v4615, %v4935
      %v4937 = vpop.f32.mrb[0].mxu0
      %4938 = vmatprep.mubr.f32.mxu0 0.0
      %4939 = vmatmul.mubr.f32.gmra.mrb[0].mxu0 %v4745
      %v4940 = vpop.f32.mrb[0].mxu0
      %v4941 = vadd.f32 %v4620, %v4940
      %v4942 = vpop.f32.mrb[0].mxu0
      %4943 = vmatprep.mubr.f32.mxu0 0.0
      %4944 = vmatmul.mubr.f32.gmra.mrb[0].mxu0 %v4748
      %v4945 = vpop.f32.mrb[0].mxu0
      %v4946 = vadd.f32 %v4625, %v4945
      %v4947 = vpop.f32.mrb[0].mxu0
      %4948 = vmatprep.mubr.f32.mxu0 0.0
      %4949 = vmatmul.mubr.f32.gmra.mrb[0].mxu0 %v4751
      %v4950 = vpop.f32.mrb[0].mxu0
      %v4951 = vadd.f32 %v4630, %v4950
      %v4952 = vpop.f32.mrb[0].mxu0
      %4953 = vmatprep.mubr.f32.mxu0 0.0
      %4954 = vmatmul.mubr.f32.gmra.mrb[0].mxu0 %v4754
      %v4955 = vpop.f32.mrb[0].mxu0
      %v4956 = vadd.f32 %v4635, %v4955
      %v4957 = vpop.f32.mrb[0].mxu0
      %4958 = vmatprep.mubr.f32.mxu0 0.0
      %4959 = vmatmul.mubr.f32.gmra.mrb[0].mxu0 %v4757
      %v4960 = vpop.f32.mrb[0].mxu0
      %v4961 = vadd.f32 %v4640, %v4960
      %v4962 = vpop.f32.mrb[0].mxu0
      %4963 = vmatprep.mubr.f32.mxu0 0.0
      %4964 = vmatmul.mubr.f32.gmra.mrb[0].mxu0 %v4760
      %v4965 = vpop.f32.mrb[0].mxu0
      %v4966 = vadd.f32 %v4645, %v4965
      %v4967 = vpop.f32.mrb[0].mxu0
      %4968 = vmatprep.mubr.f32.mxu0 0.0
      %4969 = vmatmul.mubr.f32.gmra.mrb[0].mxu0 %v4763
      %v4970 = vpop.f32.mrb[0].mxu0
      %v4971 = vadd.f32 %v4650, %v4970
      %v4972 = vpop.f32.mrb[0].mxu0
      %4973 = vmatprep.mubr.f32.mxu0 0.0
      %4974 = vmatmul.mubr.f32.gmra.mrb[0].mxu0 %v4766
      %v4975 = vpop.f32.mrb[0].mxu0
      %v4976 = vadd.f32 %v4655, %v4975
      %v4977 = vpop.f32.mrb[0].mxu0
      %4978 = vmatprep.mubr.f32.mxu0 0.0
      %4979 = vmatmul.mubr.f32.gmra.mrb[0].mxu0 %v4769
      %v4980 = vpop.f32.mrb[0].mxu0
      %v4981 = vadd.f32 %v4660, %v4980
      %v4982 = vpop.f32.mrb[0].mxu0
      %4983 = vmatprep.mubr.f32.mxu0 0.0
      %4984 = vmatmul.mubr.f32.gmra.mrb[0].mxu0 %v4772
      %v4985 = vpop.f32.mrb[0].mxu0
      %v4986 = vadd.f32 %v4665, %v4985
      %v4987 = vpop.f32.mrb[0].mxu0
      %4988 = vmatprep.mubr.f32.mxu0 0.0
      %4989 = vmatmul.mubr.f32.gmra.mrb[0].mxu0 %v4775
      %v4990 = vpop.f32.mrb[0].mxu0
      %v4991 = vadd.f32 %v4670, %v4990
      %v4992 = vpop.f32.mrb[0].mxu0
      %4993 = vmatprep.mubr.f32.mxu0 0.0
      %4994 = vmatmul.mubr.f32.gmra.mrb[0].mxu0 %v4778
      %v4995 = vpop.f32.mrb[0].mxu0
      %v4996 = vadd.f32 %v4675, %v4995
      %v4997 = vpop.f32.mrb[0].mxu0
      %4998 = vmatprep.mubr.f32.mxu0 0.0
      %4999 = vmatmul.mubr.f32.gmra.mrb[0].mxu0 %v4781
      %v5000 = vpop.f32.mrb[0].mxu0
      %v5001 = vadd.f32 %v4680, %v5000
      %v5002 = vpop.f32.mrb[0].mxu0
      %5003 = vmatprep.mubr.f32.mxu0 0.0
      %5004 = vmatmul.mubr.f32.gmra.mrb[0].mxu0 %v4784
      %v5005 = vpop.f32.mrb[0].mxu0
      %v5006 = vadd.f32 %v4685, %v5005
      %v5007 = vpop.f32.mrb[0].mxu0
      %5008 = vmatprep.mubr.f32.mxu0 0.0
      %5009 = vmatmul.mubr.f32.gmra.mrb[0].mxu0 %v4787
      %v5010 = vpop.f32.mrb[0].mxu0
      %v5011 = vadd.f32 %v4690, %v5010
      %v5012 = vpop.f32.mrb[0].mxu0
      %5013 = vdwg.mxu0
      %v5015 = vlaneseq
      %v5016 = vshrl.u32 %v5015, 7
      %v5017 = vsub.s32 0, %v5016
      %v5018 = vrot.slane %v1539, %v5017
      %v5020 = vadd.f32 %v4856, %v5018
      %v5021 = vadd.f32 %v4861, %v5018
      %v5022 = vadd.f32 %v4866, %v5018
      %v5023 = vadd.f32 %v4871, %v5018
      %v5024 = vadd.f32 %v4876, %v5018
      %v5025 = vadd.f32 %v4881, %v5018
      %v5026 = vadd.f32 %v4886, %v5018
      %v5027 = vadd.f32 %v4891, %v5018
      %v5028 = vadd.f32 %v4896, %v5018
      %v5029 = vadd.f32 %v4901, %v5018
      %v5030 = vadd.f32 %v4906, %v5018
      %v5031 = vadd.f32 %v4911, %v5018
      %v5032 = vadd.f32 %v4916, %v5018
      %v5033 = vadd.f32 %v4921, %v5018
      %v5034 = vadd.f32 %v4926, %v5018
      %v5035 = vadd.f32 %v4931, %v5018
      %v5036 = vadd.f32 %v4936, %v5018
      %v5037 = vadd.f32 %v4941, %v5018
      %v5038 = vadd.f32 %v4946, %v5018
      %v5039 = vadd.f32 %v4951, %v5018
      %v5040 = vadd.f32 %v4956, %v5018
      %v5041 = vadd.f32 %v4961, %v5018
      %v5042 = vadd.f32 %v4966, %v5018
      %v5043 = vadd.f32 %v4971, %v5018
      %v5044 = vadd.f32 %v4976, %v5018
      %v5045 = vadd.f32 %v4981, %v5018
      %v5046 = vadd.f32 %v4986, %v5018
      %v5047 = vadd.f32 %v4991, %v5018
      %v5048 = vadd.f32 %v4996, %v5018
      %v5049 = vadd.f32 %v5001, %v5018
      %v5050 = vadd.f32 %v5006, %v5018
      %v5051 = vadd.f32 %v5011, %v5018
      %v5052 = vld [vmem:[%s25] sm:$0xff]
      %v5053 = vld [vmem:[%s25 + $0x8] sm:$0xff]
      %v5054 = vld [vmem:[%s25 + $0x10] sm:$0xff]
      %v5055 = vld [vmem:[%s25 + $0x18] sm:$0xff]
      %v5056 = vld [vmem:[%s27] sm:$0x1]
      %v5057 = vld [vmem:[%s29] sm:$0xff]
      %v5058 = vld [vmem:[%s29 + $0x8] sm:$0xff]
      %v5059 = vld [vmem:[%s29 + $0x10] sm:$0xff]
      %v5060 = vld [vmem:[%s29 + $0x18] sm:$0xff]
      %v5061 = vld [vmem:[%s29 + $0x20] sm:$0xff]
      %v5062 = vld [vmem:[%s29 + $0x28] sm:$0xff]
      %v5063 = vld [vmem:[%s29 + $0x30] sm:$0xff]
      %v5064 = vld [vmem:[%s29 + $0x38] sm:$0xff]
      %v5065 = vld [vmem:[%s31] sm:$0x1]
      %v5066 = vld [vmem:[%s33] sm:$0xff]
      %v5067 = vld [vmem:[%s33 + $0x8] sm:$0xff]
      %v5068 = vld [vmem:[%s33 + $0x10] sm:$0xff]
      %v5069 = vld [vmem:[%s33 + $0x18] sm:$0xff]
      %v5070 = vld [vmem:[%s35] sm:$0xff]
      %v5071 = vld [vmem:[%s35 + $0x8] sm:$0xff]
      %v5072 = vld [vmem:[%s35 + $0x10] sm:$0xff]
      %v5073 = vld [vmem:[%s35 + $0x18] sm:$0xff]
      %v5074 = vld [vmem:[%s37] sm:$0x1]
      %v5076 = vlaneseq
      %v5077 = vshrl.u32 %v5076, 7
      %v5078 = vsub.s32 0, %v5077
      %v5079 = vrot.slane %v5056, %v5078
      %v5082 = vsel %vm1546, %v5020, 0
      %v5085 = vsel %vm1546, %v5021, 0
      %v5088 = vsel %vm1546, %v5022, 0
      %v5091 = vsel %vm1546, %v5023, 0
      %v5094 = vsel %vm1546, %v5024, 0
      %v5097 = vsel %vm1546, %v5025, 0
      %v5100 = vsel %vm1546, %v5026, 0
      %v5103 = vsel %vm1546, %v5027, 0
      %v5106 = vsel %vm1546, %v5028, 0
      %v5109 = vsel %vm1546, %v5029, 0
      %v5112 = vsel %vm1546, %v5030, 0
      %v5115 = vsel %vm1546, %v5031, 0
      %v5118 = vsel %vm1546, %v5032, 0
      %v5121 = vsel %vm1546, %v5033, 0
      %v5124 = vsel %vm1546, %v5034, 0
      %v5127 = vsel %vm1546, %v5035, 0
      %v5130 = vsel %vm1546, %v5036, 0
      %v5133 = vsel %vm1546, %v5037, 0
      %v5136 = vsel %vm1546, %v5038, 0
      %v5139 = vsel %vm1546, %v5039, 0
      %v5142 = vsel %vm1546, %v5040, 0
      %v5145 = vsel %vm1546, %v5041, 0
      %v5148 = vsel %vm1546, %v5042, 0
      %v5151 = vsel %vm1546, %v5043, 0
      %v5154 = vsel %vm1546, %v5044, 0
      %v5157 = vsel %vm1546, %v5045, 0
      %v5160 = vsel %vm1546, %v5046, 0
      %v5163 = vsel %vm1546, %v5047, 0
      %v5166 = vsel %vm1546, %v5048, 0
      %v5169 = vsel %vm1546, %v5049, 0
      %v5172 = vsel %vm1546, %v5050, 0
      %v5175 = vsel %vm1546, %v5051, 0
      %5177 = vmatprep.subr.mxu0 0.0
      %5178 = vmatpush1.msra.mxu0 %v5052
      %5179 = vmatprep.subr.mxu0 0.0
      %5180 = vmatpush1.msra.mxu0 %v5053
      %5181 = vmatprep.subr.mxu0 0.0
      %5182 = vmatpush1.msra.mxu0 %v5054
      %5183 = vmatprep.subr.mxu0 0.0
      %5184 = vmatpush1.msra.mxu0 %v5055
      %5185 = vmatprep.subr.mxu0 0.0
      %5186 = vmatpush1.msra.mxu0 0.0
      %5187 = vmatprep.subr.mxu0 0.0
      %5188 = vmatpush1.msra.mxu0 0.0
      %5189 = vmatprep.subr.mxu0 0.0
      %5190 = vmatpush1.msra.mxu0 0.0
      %5191 = vmatprep.subr.mxu0 0.0
      %5192 = vmatpush1.msra.mxu0 0.0
      %5193 = vmatprep.subr.mxu0 0.0
      %5194 = vmatpush1.msra.mxu0 0.0
      %5195 = vmatprep.subr.mxu0 0.0
      %5196 = vmatpush1.msra.mxu0 0.0
      %5197 = vmatprep.subr.mxu0 0.0
      %5198 = vmatpush1.msra.mxu0 0.0
      %5199 = vmatprep.subr.mxu0 0.0
      %5200 = vmatpush1.msra.mxu0 0.0
      %5201 = vmatprep.subr.mxu0 0.0
      %5202 = vmatpush1.msra.mxu0 0.0
      %5203 = vmatprep.subr.mxu0 0.0
      %5204 = vmatpush1.msra.mxu0 0.0
      %5205 = vmatprep.subr.mxu0 0.0
      %5206 = vmatpush1.msra.mxu0 0.0
      %5207 = vmatprep.subr.mxu0 0.0
      %5208 = vmatpush1.msra.mxu0 0.0
      %5209 = vmatprep.subr.mxu0 0.0
      %5210 = vmatpush1.msra.mxu0 0.0
      %5211 = vmatprep.subr.mxu0 0.0
      %5212 = vmatpush1.msra.mxu0 0.0
      %5213 = vmatprep.subr.mxu0 0.0
      %5214 = vmatpush1.msra.mxu0 0.0
      %5215 = vmatprep.subr.mxu0 0.0
      %5216 = vmatpush1.msra.mxu0 0.0
      %5217 = vmatprep.subr.mxu0 0.0
      %5218 = vmatpush1.msra.mxu0 0.0
      %5219 = vmatprep.subr.mxu0 0.0
      %5220 = vmatpush1.msra.mxu0 0.0
      %5221 = vmatprep.subr.mxu0 0.0
      %5222 = vmatpush1.msra.mxu0 0.0
      %5223 = vmatprep.subr.mxu0 0.0
      %5224 = vmatpush1.msra.mxu0 0.0
      %5225 = vmatprep.subr.mxu0 0.0
      %5226 = vmatpush1.msra.mxu0 0.0
      %5227 = vmatprep.subr.mxu0 0.0
      %5228 = vmatpush1.msra.mxu0 0.0
      %5229 = vmatprep.subr.mxu0 0.0
      %5230 = vmatpush1.msra.mxu0 0.0
      %5231 = vmatprep.subr.mxu0 0.0
      %5232 = vmatpush1.msra.mxu0 0.0
      %5233 = vmatprep.subr.mxu0 0.0
      %5234 = vmatpush1.msra.mxu0 0.0
      %5235 = vmatprep.subr.mxu0 0.0
      %5236 = vmatpush1.msra.mxu0 0.0
      %5237 = vmatprep.subr.mxu0 0.0
      %5238 = vmatpush1.msra.mxu0 0.0
      %5239 = vmatprep.subr.mxu0 0.0
      %5240 = vmatpush1.msra.mxu0 0.0
      %5241 = vmatprep.mubr.f32.mxu0 0.0
      %5242 = vmatmul.mubr.f32.gmra.mrb[0].mxu0 %v5082
      %v5243 = vpop.f32.mrb[0].mxu0
      %v5244 = vadd.f32 %v5079, %v5243
      %v5245 = vpop.f32.mrb[0].mxu0
      %5246 = vmatprep.mubr.f32.mxu0 0.0
      %5247 = vmatmul.mubr.f32.gmra.mrb[0].mxu0 %v5085
      %v5248 = vpop.f32.mrb[0].mxu0
      %v5249 = vadd.f32 %v5079, %v5248
      %v5250 = vpop.f32.mrb[0].mxu0
      %5251 = vmatprep.mubr.f32.mxu0 0.0
      %5252 = vmatmul.mubr.f32.gmra.mrb[0].mxu0 %v5088
      %v5253 = vpop.f32.mrb[0].mxu0
      %v5254 = vadd.f32 %v5079, %v5253
      %v5255 = vpop.f32.mrb[0].mxu0
      %5256 = vmatprep.mubr.f32.mxu0 0.0
      %5257 = vmatmul.mubr.f32.gmra.mrb[0].mxu0 %v5091
      %v5258 = vpop.f32.mrb[0].mxu0
      %v5259 = vadd.f32 %v5079, %v5258
      %v5260 = vpop.f32.mrb[0].mxu0
      %5261 = vmatprep.mubr.f32.mxu0 0.0
      %5262 = vmatmul.mubr.f32.gmra.mrb[0].mxu0 %v5094
      %v5263 = vpop.f32.mrb[0].mxu0
      %v5264 = vadd.f32 %v5079, %v5263
      %v5265 = vpop.f32.mrb[0].mxu0
      %5266 = vmatprep.mubr.f32.mxu0 0.0
      %5267 = vmatmul.mubr.f32.gmra.mrb[0].mxu0 %v5097
      %v5268 = vpop.f32.mrb[0].mxu0
      %v5269 = vadd.f32 %v5079, %v5268
      %v5270 = vpop.f32.mrb[0].mxu0
      %5271 = vmatprep.mubr.f32.mxu0 0.0
      %5272 = vmatmul.mubr.f32.gmra.mrb[0].mxu0 %v5100
      %v5273 = vpop.f32.mrb[0].mxu0
      %v5274 = vadd.f32 %v5079, %v5273
      %v5275 = vpop.f32.mrb[0].mxu0
      %5276 = vmatprep.mubr.f32.mxu0 0.0
      %5277 = vmatmul.mubr.f32.gmra.mrb[0].mxu0 %v5103
      %v5278 = vpop.f32.mrb[0].mxu0
      %v5279 = vadd.f32 %v5079, %v5278
      %v5280 = vpop.f32.mrb[0].mxu0
      %5281 = vmatprep.mubr.f32.mxu0 0.0
      %5282 = vmatmul.mubr.f32.gmra.mrb[0].mxu0 %v5106
      %v5283 = vpop.f32.mrb[0].mxu0
      %v5284 = vadd.f32 %v5079, %v5283
      %v5285 = vpop.f32.mrb[0].mxu0
      %5286 = vmatprep.mubr.f32.mxu0 0.0
      %5287 = vmatmul.mubr.f32.gmra.mrb[0].mxu0 %v5109
      %v5288 = vpop.f32.mrb[0].mxu0
      %v5289 = vadd.f32 %v5079, %v5288
      %v5290 = vpop.f32.mrb[0].mxu0
      %5291 = vmatprep.mubr.f32.mxu0 0.0
      %5292 = vmatmul.mubr.f32.gmra.mrb[0].mxu0 %v5112
      %v5293 = vpop.f32.mrb[0].mxu0
      %v5294 = vadd.f32 %v5079, %v5293
      %v5295 = vpop.f32.mrb[0].mxu0
      %5296 = vmatprep.mubr.f32.mxu0 0.0
      %5297 = vmatmul.mubr.f32.gmra.mrb[0].mxu0 %v5115
      %v5298 = vpop.f32.mrb[0].mxu0
      %v5299 = vadd.f32 %v5079, %v5298
      %v5300 = vpop.f32.mrb[0].mxu0
      %5301 = vmatprep.mubr.f32.mxu0 0.0
      %5302 = vmatmul.mubr.f32.gmra.mrb[0].mxu0 %v5118
      %v5303 = vpop.f32.mrb[0].mxu0
      %v5304 = vadd.f32 %v5079, %v5303
      %v5305 = vpop.f32.mrb[0].mxu0
      %5306 = vmatprep.mubr.f32.mxu0 0.0
      %5307 = vmatmul.mubr.f32.gmra.mrb[0].mxu0 %v5121
      %v5308 = vpop.f32.mrb[0].mxu0
      %v5309 = vadd.f32 %v5079, %v5308
      %v5310 = vpop.f32.mrb[0].mxu0
      %5311 = vmatprep.mubr.f32.mxu0 0.0
      %5312 = vmatmul.mubr.f32.gmra.mrb[0].mxu0 %v5124
      %v5313 = vpop.f32.mrb[0].mxu0
      %v5314 = vadd.f32 %v5079, %v5313
      %v5315 = vpop.f32.mrb[0].mxu0
      %5316 = vmatprep.mubr.f32.mxu0 0.0
      %5317 = vmatmul.mubr.f32.gmra.mrb[0].mxu0 %v5127
      %v5318 = vpop.f32.mrb[0].mxu0
      %v5319 = vadd.f32 %v5079, %v5318
      %v5320 = vpop.f32.mrb[0].mxu0
      %5321 = vmatprep.mubr.f32.mxu0 0.0
      %5322 = vmatmul.mubr.f32.gmra.mrb[0].mxu0 %v5130
      %v5323 = vpop.f32.mrb[0].mxu0
      %v5324 = vadd.f32 %v5079, %v5323
      %v5325 = vpop.f32.mrb[0].mxu0
      %5326 = vmatprep.mubr.f32.mxu0 0.0
      %5327 = vmatmul.mubr.f32.gmra.mrb[0].mxu0 %v5133
      %v5328 = vpop.f32.mrb[0].mxu0
      %v5329 = vadd.f32 %v5079, %v5328
      %v5330 = vpop.f32.mrb[0].mxu0
      %5331 = vmatprep.mubr.f32.mxu0 0.0
      %5332 = vmatmul.mubr.f32.gmra.mrb[0].mxu0 %v5136
      %v5333 = vpop.f32.mrb[0].mxu0
      %v5334 = vadd.f32 %v5079, %v5333
      %v5335 = vpop.f32.mrb[0].mxu0
      %5336 = vmatprep.mubr.f32.mxu0 0.0
      %5337 = vmatmul.mubr.f32.gmra.mrb[0].mxu0 %v5139
      %v5338 = vpop.f32.mrb[0].mxu0
      %v5339 = vadd.f32 %v5079, %v5338
      %v5340 = vpop.f32.mrb[0].mxu0
      %5341 = vmatprep.mubr.f32.mxu0 0.0
      %5342 = vmatmul.mubr.f32.gmra.mrb[0].mxu0 %v5142
      %v5343 = vpop.f32.mrb[0].mxu0
      %v5344 = vadd.f32 %v5079, %v5343
      %v5345 = vpop.f32.mrb[0].mxu0
      %5346 = vmatprep.mubr.f32.mxu0 0.0
      %5347 = vmatmul.mubr.f32.gmra.mrb[0].mxu0 %v5145
      %v5348 = vpop.f32.mrb[0].mxu0
      %v5349 = vadd.f32 %v5079, %v5348
      %v5350 = vpop.f32.mrb[0].mxu0
      %5351 = vmatprep.mubr.f32.mxu0 0.0
      %5352 = vmatmul.mubr.f32.gmra.mrb[0].mxu0 %v5148
      %v5353 = vpop.f32.mrb[0].mxu0
      %v5354 = vadd.f32 %v5079, %v5353
      %v5355 = vpop.f32.mrb[0].mxu0
      %5356 = vmatprep.mubr.f32.mxu0 0.0
      %5357 = vmatmul.mubr.f32.gmra.mrb[0].mxu0 %v5151
      %v5358 = vpop.f32.mrb[0].mxu0
      %v5359 = vadd.f32 %v5079, %v5358
      %v5360 = vpop.f32.mrb[0].mxu0
      %5361 = vmatprep.mubr.f32.mxu0 0.0
      %5362 = vmatmul.mubr.f32.gmra.mrb[0].mxu0 %v5154
      %v5363 = vpop.f32.mrb[0].mxu0
      %v5364 = vadd.f32 %v5079, %v5363
      %v5365 = vpop.f32.mrb[0].mxu0
      %5366 = vmatprep.mubr.f32.mxu0 0.0
      %5367 = vmatmul.mubr.f32.gmra.mrb[0].mxu0 %v5157
      %v5368 = vpop.f32.mrb[0].mxu0
      %v5369 = vadd.f32 %v5079, %v5368
      %v5370 = vpop.f32.mrb[0].mxu0
      %5371 = vmatprep.mubr.f32.mxu0 0.0
      %5372 = vmatmul.mubr.f32.gmra.mrb[0].mxu0 %v5160
      %v5373 = vpop.f32.mrb[0].mxu0
      %v5374 = vadd.f32 %v5079, %v5373
      %v5375 = vpop.f32.mrb[0].mxu0
      %5376 = vmatprep.mubr.f32.mxu0 0.0
      %5377 = vmatmul.mubr.f32.gmra.mrb[0].mxu0 %v5163
      %v5378 = vpop.f32.mrb[0].mxu0
      %v5379 = vadd.f32 %v5079, %v5378
      %v5380 = vpop.f32.mrb[0].mxu0
      %5381 = vmatprep.mubr.f32.mxu0 0.0
      %5382 = vmatmul.mubr.f32.gmra.mrb[0].mxu0 %v5166
      %v5383 = vpop.f32.mrb[0].mxu0
      %v5384 = vadd.f32 %v5079, %v5383
      %v5385 = vpop.f32.mrb[0].mxu0
      %5386 = vmatprep.mubr.f32.mxu0 0.0
      %5387 = vmatmul.mubr.f32.gmra.mrb[0].mxu0 %v5169
      %v5388 = vpop.f32.mrb[0].mxu0
      %v5389 = vadd.f32 %v5079, %v5388
      %v5390 = vpop.f32.mrb[0].mxu0
      %5391 = vmatprep.mubr.f32.mxu0 0.0
      %5392 = vmatmul.mubr.f32.gmra.mrb[0].mxu0 %v5172
      %v5393 = vpop.f32.mrb[0].mxu0
      %v5394 = vadd.f32 %v5079, %v5393
      %v5395 = vpop.f32.mrb[0].mxu0
      %5396 = vmatprep.mubr.f32.mxu0 0.0
      %5397 = vmatmul.mubr.f32.gmra.mrb[0].mxu0 %v5175
      %v5398 = vpop.f32.mrb[0].mxu0
      %v5399 = vadd.f32 %v5079, %v5398
      %v5400 = vpop.f32.mrb[0].mxu0
      %5401 = vdwg.mxu0
      %vm5402 = vcmp.ge.f32.partialorder %v5244, 0.0
      %vm5403 = vcmp.ge.f32.partialorder %v5249, 0.0
      %vm5404 = vcmp.ge.f32.partialorder %v5254, 0.0
      %vm5405 = vcmp.ge.f32.partialorder %v5259, 0.0
      %vm5406 = vcmp.ge.f32.partialorder %v5264, 0.0
      %vm5407 = vcmp.ge.f32.partialorder %v5269, 0.0
      %vm5408 = vcmp.ge.f32.partialorder %v5274, 0.0
      %vm5409 = vcmp.ge.f32.partialorder %v5279, 0.0
      %vm5410 = vcmp.ge.f32.partialorder %v5284, 0.0
      %vm5411 = vcmp.ge.f32.partialorder %v5289, 0.0
      %vm5412 = vcmp.ge.f32.partialorder %v5294, 0.0
      %vm5413 = vcmp.ge.f32.partialorder %v5299, 0.0
      %vm5414 = vcmp.ge.f32.partialorder %v5304, 0.0
      %vm5415 = vcmp.ge.f32.partialorder %v5309, 0.0
      %vm5416 = vcmp.ge.f32.partialorder %v5314, 0.0
      %vm5417 = vcmp.ge.f32.partialorder %v5319, 0.0
      %vm5418 = vcmp.ge.f32.partialorder %v5324, 0.0
      %vm5419 = vcmp.ge.f32.partialorder %v5329, 0.0
      %vm5420 = vcmp.ge.f32.partialorder %v5334, 0.0
      %vm5421 = vcmp.ge.f32.partialorder %v5339, 0.0
      %vm5422 = vcmp.ge.f32.partialorder %v5344, 0.0
      %vm5423 = vcmp.ge.f32.partialorder %v5349, 0.0
      %vm5424 = vcmp.ge.f32.partialorder %v5354, 0.0
      %vm5425 = vcmp.ge.f32.partialorder %v5359, 0.0
      %vm5426 = vcmp.ge.f32.partialorder %v5364, 0.0
      %vm5427 = vcmp.ge.f32.partialorder %v5369, 0.0
      %vm5428 = vcmp.ge.f32.partialorder %v5374, 0.0
      %vm5429 = vcmp.ge.f32.partialorder %v5379, 0.0
      %vm5430 = vcmp.ge.f32.partialorder %v5384, 0.0
      %vm5431 = vcmp.ge.f32.partialorder %v5389, 0.0
      %vm5432 = vcmp.ge.f32.partialorder %v5394, 0.0
      %vm5433 = vcmp.ge.f32.partialorder %v5399, 0.0
      %v5434 = vmul.f32 %v5244, 0.01
      %v5435 = vmul.f32 %v5249, 0.01
      %v5436 = vmul.f32 %v5254, 0.01
      %v5437 = vmul.f32 %v5259, 0.01
      %v5438 = vmul.f32 %v5264, 0.01
      %v5439 = vmul.f32 %v5269, 0.01
      %v5440 = vmul.f32 %v5274, 0.01
      %v5441 = vmul.f32 %v5279, 0.01
      %v5442 = vmul.f32 %v5284, 0.01
      %v5443 = vmul.f32 %v5289, 0.01
      %v5444 = vmul.f32 %v5294, 0.01
      %v5445 = vmul.f32 %v5299, 0.01
      %v5446 = vmul.f32 %v5304, 0.01
      %v5447 = vmul.f32 %v5309, 0.01
      %v5448 = vmul.f32 %v5314, 0.01
      %v5449 = vmul.f32 %v5319, 0.01
      %v5450 = vmul.f32 %v5324, 0.01
      %v5451 = vmul.f32 %v5329, 0.01
      %v5452 = vmul.f32 %v5334, 0.01
      %v5453 = vmul.f32 %v5339, 0.01
      %v5454 = vmul.f32 %v5344, 0.01
      %v5455 = vmul.f32 %v5349, 0.01
      %v5456 = vmul.f32 %v5354, 0.01
      %v5457 = vmul.f32 %v5359, 0.01
      %v5458 = vmul.f32 %v5364, 0.01
      %v5459 = vmul.f32 %v5369, 0.01
      %v5460 = vmul.f32 %v5374, 0.01
      %v5461 = vmul.f32 %v5379, 0.01
      %v5462 = vmul.f32 %v5384, 0.01
      %v5463 = vmul.f32 %v5389, 0.01
      %v5464 = vmul.f32 %v5394, 0.01
      %v5465 = vmul.f32 %v5399, 0.01
      %v5466 = vsel %vm5402, %v5244, %v5434
      %v5467 = vsel %vm5403, %v5249, %v5435
      %v5468 = vsel %vm5404, %v5254, %v5436
      %v5469 = vsel %vm5405, %v5259, %v5437
      %v5470 = vsel %vm5406, %v5264, %v5438
      %v5471 = vsel %vm5407, %v5269, %v5439
      %v5472 = vsel %vm5408, %v5274, %v5440
      %v5473 = vsel %vm5409, %v5279, %v5441
      %v5474 = vsel %vm5410, %v5284, %v5442
      %v5475 = vsel %vm5411, %v5289, %v5443
      %v5476 = vsel %vm5412, %v5294, %v5444
      %v5477 = vsel %vm5413, %v5299, %v5445
      %v5478 = vsel %vm5414, %v5304, %v5446
      %v5479 = vsel %vm5415, %v5309, %v5447
      %v5480 = vsel %vm5416, %v5314, %v5448
      %v5481 = vsel %vm5417, %v5319, %v5449
      %v5482 = vsel %vm5418, %v5324, %v5450
      %v5483 = vsel %vm5419, %v5329, %v5451
      %v5484 = vsel %vm5420, %v5334, %v5452
      %v5485 = vsel %vm5421, %v5339, %v5453
      %v5486 = vsel %vm5422, %v5344, %v5454
      %v5487 = vsel %vm5423, %v5349, %v5455
      %v5488 = vsel %vm5424, %v5354, %v5456
      %v5489 = vsel %vm5425, %v5359, %v5457
      %v5490 = vsel %vm5426, %v5364, %v5458
      %v5491 = vsel %vm5427, %v5369, %v5459
      %v5492 = vsel %vm5428, %v5374, %v5460
      %v5493 = vsel %vm5429, %v5379, %v5461
      %v5494 = vsel %vm5430, %v5384, %v5462
      %v5495 = vsel %vm5431, %v5389, %v5463
      %v5496 = vsel %vm5432, %v5394, %v5464
      %v5497 = vsel %vm5433, %v5399, %v5465
      %v5499 = vlaneseq
      %v5500 = vshrl.u32 %v5499, 7
      %v5501 = vsub.s32 0, %v5500
      %v5502 = vrot.slane %v5065, %v5501
      %v5505 = vsel %vm1970, %v5466, 0
      %v5508 = vsel %vm1970, %v5467, 0
      %v5511 = vsel %vm1970, %v5468, 0
      %v5514 = vsel %vm1970, %v5469, 0
      %v5517 = vsel %vm1970, %v5470, 0
      %v5520 = vsel %vm1970, %v5471, 0
      %v5523 = vsel %vm1970, %v5472, 0
      %v5526 = vsel %vm1970, %v5473, 0
      %v5529 = vsel %vm1970, %v5474, 0
      %v5532 = vsel %vm1970, %v5475, 0
      %v5535 = vsel %vm1970, %v5476, 0
      %v5538 = vsel %vm1970, %v5477, 0
      %v5541 = vsel %vm1970, %v5478, 0
      %v5544 = vsel %vm1970, %v5479, 0
      %v5547 = vsel %vm1970, %v5480, 0
      %v5550 = vsel %vm1970, %v5481, 0
      %v5553 = vsel %vm1970, %v5482, 0
      %v5556 = vsel %vm1970, %v5483, 0
      %v5559 = vsel %vm1970, %v5484, 0
      %v5562 = vsel %vm1970, %v5485, 0
      %v5565 = vsel %vm1970, %v5486, 0
      %v5568 = vsel %vm1970, %v5487, 0
      %v5571 = vsel %vm1970, %v5488, 0
      %v5574 = vsel %vm1970, %v5489, 0
      %v5577 = vsel %vm1970, %v5490, 0
      %v5580 = vsel %vm1970, %v5491, 0
      %v5583 = vsel %vm1970, %v5492, 0
      %v5586 = vsel %vm1970, %v5493, 0
      %v5589 = vsel %vm1970, %v5494, 0
      %v5592 = vsel %vm1970, %v5495, 0
      %v5595 = vsel %vm1970, %v5496, 0
      %v5598 = vsel %vm1970, %v5497, 0
      %5600 = vmatprep.subr.mxu0 0.0
      %5601 = vmatpush1.msra.mxu0 %v5057
      %5602 = vmatprep.subr.mxu0 0.0
      %5603 = vmatpush1.msra.mxu0 %v5058
      %5604 = vmatprep.subr.mxu0 0.0
      %5605 = vmatpush1.msra.mxu0 %v5059
      %5606 = vmatprep.subr.mxu0 0.0
      %5607 = vmatpush1.msra.mxu0 %v5060
      %5608 = vmatprep.subr.mxu0 0.0
      %5609 = vmatpush1.msra.mxu0 %v5061
      %5610 = vmatprep.subr.mxu0 0.0
      %5611 = vmatpush1.msra.mxu0 %v5062
      %5612 = vmatprep.subr.mxu0 0.0
      %5613 = vmatpush1.msra.mxu0 %v5063
      %5614 = vmatprep.subr.mxu0 0.0
      %5615 = vmatpush1.msra.mxu0 %v5064
      %5616 = vmatprep.subr.mxu0 0.0
      %5617 = vmatpush1.msra.mxu0 0.0
      %5618 = vmatprep.subr.mxu0 0.0
      %5619 = vmatpush1.msra.mxu0 0.0
      %5620 = vmatprep.subr.mxu0 0.0
      %5621 = vmatpush1.msra.mxu0 0.0
      %5622 = vmatprep.subr.mxu0 0.0
      %5623 = vmatpush1.msra.mxu0 0.0
      %5624 = vmatprep.subr.mxu0 0.0
      %5625 = vmatpush1.msra.mxu0 0.0
      %5626 = vmatprep.subr.mxu0 0.0
      %5627 = vmatpush1.msra.mxu0 0.0
      %5628 = vmatprep.subr.mxu0 0.0
      %5629 = vmatpush1.msra.mxu0 0.0
      %5630 = vmatprep.subr.mxu0 0.0
      %5631 = vmatpush1.msra.mxu0 0.0
      %5632 = vmatprep.subr.mxu0 0.0
      %5633 = vmatpush1.msra.mxu0 0.0
      %5634 = vmatprep.subr.mxu0 0.0
      %5635 = vmatpush1.msra.mxu0 0.0
      %5636 = vmatprep.subr.mxu0 0.0
      %5637 = vmatpush1.msra.mxu0 0.0
      %5638 = vmatprep.subr.mxu0 0.0
      %5639 = vmatpush1.msra.mxu0 0.0
      %5640 = vmatprep.subr.mxu0 0.0
      %5641 = vmatpush1.msra.mxu0 0.0
      %5642 = vmatprep.subr.mxu0 0.0
      %5643 = vmatpush1.msra.mxu0 0.0
      %5644 = vmatprep.subr.mxu0 0.0
      %5645 = vmatpush1.msra.mxu0 0.0
      %5646 = vmatprep.subr.mxu0 0.0
      %5647 = vmatpush1.msra.mxu0 0.0
      %5648 = vmatprep.subr.mxu0 0.0
      %5649 = vmatpush1.msra.mxu0 0.0
      %5650 = vmatprep.subr.mxu0 0.0
      %5651 = vmatpush1.msra.mxu0 0.0
      %5652 = vmatprep.subr.mxu0 0.0
      %5653 = vmatpush1.msra.mxu0 0.0
      %5654 = vmatprep.subr.mxu0 0.0
      %5655 = vmatpush1.msra.mxu0 0.0
      %5656 = vmatprep.subr.mxu0 0.0
      %5657 = vmatpush1.msra.mxu0 0.0
      %5658 = vmatprep.subr.mxu0 0.0
      %5659 = vmatpush1.msra.mxu0 0.0
      %5660 = vmatprep.subr.mxu0 0.0
      %5661 = vmatpush1.msra.mxu0 0.0
      %5662 = vmatprep.subr.mxu0 0.0
      %5663 = vmatpush1.msra.mxu0 0.0
      %5664 = vmatprep.mubr.f32.mxu0 0.0
      %5665 = vmatmul.mubr.f32.gmra.mrb[0].mxu0 %v5505
      %v5666 = vpop.f32.mrb[0].mxu0
      %v5667 = vadd.f32 %v5502, %v5666
      %v5668 = vpop.f32.mrb[0].mxu0
      %5669 = vmatprep.mubr.f32.mxu0 0.0
      %5670 = vmatmul.mubr.f32.gmra.mrb[0].mxu0 %v5508
      %v5671 = vpop.f32.mrb[0].mxu0
      %v5672 = vadd.f32 %v5502, %v5671
      %v5673 = vpop.f32.mrb[0].mxu0
      %5674 = vmatprep.mubr.f32.mxu0 0.0
      %5675 = vmatmul.mubr.f32.gmra.mrb[0].mxu0 %v5511
      %v5676 = vpop.f32.mrb[0].mxu0
      %v5677 = vadd.f32 %v5502, %v5676
      %v5678 = vpop.f32.mrb[0].mxu0
      %5679 = vmatprep.mubr.f32.mxu0 0.0
      %5680 = vmatmul.mubr.f32.gmra.mrb[0].mxu0 %v5514
      %v5681 = vpop.f32.mrb[0].mxu0
      %v5682 = vadd.f32 %v5502, %v5681
      %v5683 = vpop.f32.mrb[0].mxu0
      %5684 = vmatprep.mubr.f32.mxu0 0.0
      %5685 = vmatmul.mubr.f32.gmra.mrb[0].mxu0 %v5517
      %v5686 = vpop.f32.mrb[0].mxu0
      %v5687 = vadd.f32 %v5502, %v5686
      %v5688 = vpop.f32.mrb[0].mxu0
      %5689 = vmatprep.mubr.f32.mxu0 0.0
      %5690 = vmatmul.mubr.f32.gmra.mrb[0].mxu0 %v5520
      %v5691 = vpop.f32.mrb[0].mxu0
      %v5692 = vadd.f32 %v5502, %v5691
      %v5693 = vpop.f32.mrb[0].mxu0
      %5694 = vmatprep.mubr.f32.mxu0 0.0
      %5695 = vmatmul.mubr.f32.gmra.mrb[0].mxu0 %v5523
      %v5696 = vpop.f32.mrb[0].mxu0
      %v5697 = vadd.f32 %v5502, %v5696
      %v5698 = vpop.f32.mrb[0].mxu0
      %5699 = vmatprep.mubr.f32.mxu0 0.0
      %5700 = vmatmul.mubr.f32.gmra.mrb[0].mxu0 %v5526
      %v5701 = vpop.f32.mrb[0].mxu0
      %v5702 = vadd.f32 %v5502, %v5701
      %v5703 = vpop.f32.mrb[0].mxu0
      %5704 = vmatprep.mubr.f32.mxu0 0.0
      %5705 = vmatmul.mubr.f32.gmra.mrb[0].mxu0 %v5529
      %v5706 = vpop.f32.mrb[0].mxu0
      %v5707 = vadd.f32 %v5502, %v5706
      %v5708 = vpop.f32.mrb[0].mxu0
      %5709 = vmatprep.mubr.f32.mxu0 0.0
      %5710 = vmatmul.mubr.f32.gmra.mrb[0].mxu0 %v5532
      %v5711 = vpop.f32.mrb[0].mxu0
      %v5712 = vadd.f32 %v5502, %v5711
      %v5713 = vpop.f32.mrb[0].mxu0
      %5714 = vmatprep.mubr.f32.mxu0 0.0
      %5715 = vmatmul.mubr.f32.gmra.mrb[0].mxu0 %v5535
      %v5716 = vpop.f32.mrb[0].mxu0
      %v5717 = vadd.f32 %v5502, %v5716
      %v5718 = vpop.f32.mrb[0].mxu0
      %5719 = vmatprep.mubr.f32.mxu0 0.0
      %5720 = vmatmul.mubr.f32.gmra.mrb[0].mxu0 %v5538
      %v5721 = vpop.f32.mrb[0].mxu0
      %v5722 = vadd.f32 %v5502, %v5721
      %v5723 = vpop.f32.mrb[0].mxu0
      %5724 = vmatprep.mubr.f32.mxu0 0.0
      %5725 = vmatmul.mubr.f32.gmra.mrb[0].mxu0 %v5541
      %v5726 = vpop.f32.mrb[0].mxu0
      %v5727 = vadd.f32 %v5502, %v5726
      %v5728 = vpop.f32.mrb[0].mxu0
      %5729 = vmatprep.mubr.f32.mxu0 0.0
      %5730 = vmatmul.mubr.f32.gmra.mrb[0].mxu0 %v5544
      %v5731 = vpop.f32.mrb[0].mxu0
      %v5732 = vadd.f32 %v5502, %v5731
      %v5733 = vpop.f32.mrb[0].mxu0
      %5734 = vmatprep.mubr.f32.mxu0 0.0
      %5735 = vmatmul.mubr.f32.gmra.mrb[0].mxu0 %v5547
      %v5736 = vpop.f32.mrb[0].mxu0
      %v5737 = vadd.f32 %v5502, %v5736
      %v5738 = vpop.f32.mrb[0].mxu0
      %5739 = vmatprep.mubr.f32.mxu0 0.0
      %5740 = vmatmul.mubr.f32.gmra.mrb[0].mxu0 %v5550
      %v5741 = vpop.f32.mrb[0].mxu0
      %v5742 = vadd.f32 %v5502, %v5741
      %v5743 = vpop.f32.mrb[0].mxu0
      %5744 = vmatprep.mubr.f32.mxu0 0.0
      %5745 = vmatmul.mubr.f32.gmra.mrb[0].mxu0 %v5553
      %v5746 = vpop.f32.mrb[0].mxu0
      %v5747 = vadd.f32 %v5502, %v5746
      %v5748 = vpop.f32.mrb[0].mxu0
      %5749 = vmatprep.mubr.f32.mxu0 0.0
      %5750 = vmatmul.mubr.f32.gmra.mrb[0].mxu0 %v5556
      %v5751 = vpop.f32.mrb[0].mxu0
      %v5752 = vadd.f32 %v5502, %v5751
      %v5753 = vpop.f32.mrb[0].mxu0
      %5754 = vmatprep.mubr.f32.mxu0 0.0
      %5755 = vmatmul.mubr.f32.gmra.mrb[0].mxu0 %v5559
      %v5756 = vpop.f32.mrb[0].mxu0
      %v5757 = vadd.f32 %v5502, %v5756
      %v5758 = vpop.f32.mrb[0].mxu0
      %5759 = vmatprep.mubr.f32.mxu0 0.0
      %5760 = vmatmul.mubr.f32.gmra.mrb[0].mxu0 %v5562
      %v5761 = vpop.f32.mrb[0].mxu0
      %v5762 = vadd.f32 %v5502, %v5761
      %v5763 = vpop.f32.mrb[0].mxu0
      %5764 = vmatprep.mubr.f32.mxu0 0.0
      %5765 = vmatmul.mubr.f32.gmra.mrb[0].mxu0 %v5565
      %v5766 = vpop.f32.mrb[0].mxu0
      %v5767 = vadd.f32 %v5502, %v5766
      %v5768 = vpop.f32.mrb[0].mxu0
      %5769 = vmatprep.mubr.f32.mxu0 0.0
      %5770 = vmatmul.mubr.f32.gmra.mrb[0].mxu0 %v5568
      %v5771 = vpop.f32.mrb[0].mxu0
      %v5772 = vadd.f32 %v5502, %v5771
      %v5773 = vpop.f32.mrb[0].mxu0
      %5774 = vmatprep.mubr.f32.mxu0 0.0
      %5775 = vmatmul.mubr.f32.gmra.mrb[0].mxu0 %v5571
      %v5776 = vpop.f32.mrb[0].mxu0
      %v5777 = vadd.f32 %v5502, %v5776
      %v5778 = vpop.f32.mrb[0].mxu0
      %5779 = vmatprep.mubr.f32.mxu0 0.0
      %5780 = vmatmul.mubr.f32.gmra.mrb[0].mxu0 %v5574
      %v5781 = vpop.f32.mrb[0].mxu0
      %v5782 = vadd.f32 %v5502, %v5781
      %v5783 = vpop.f32.mrb[0].mxu0
      %5784 = vmatprep.mubr.f32.mxu0 0.0
      %5785 = vmatmul.mubr.f32.gmra.mrb[0].mxu0 %v5577
      %v5786 = vpop.f32.mrb[0].mxu0
      %v5787 = vadd.f32 %v5502, %v5786
      %v5788 = vpop.f32.mrb[0].mxu0
      %5789 = vmatprep.mubr.f32.mxu0 0.0
      %5790 = vmatmul.mubr.f32.gmra.mrb[0].mxu0 %v5580
      %v5791 = vpop.f32.mrb[0].mxu0
      %v5792 = vadd.f32 %v5502, %v5791
      %v5793 = vpop.f32.mrb[0].mxu0
      %5794 = vmatprep.mubr.f32.mxu0 0.0
      %5795 = vmatmul.mubr.f32.gmra.mrb[0].mxu0 %v5583
      %v5796 = vpop.f32.mrb[0].mxu0
      %v5797 = vadd.f32 %v5502, %v5796
      %v5798 = vpop.f32.mrb[0].mxu0
      %5799 = vmatprep.mubr.f32.mxu0 0.0
      %5800 = vmatmul.mubr.f32.gmra.mrb[0].mxu0 %v5586
      %v5801 = vpop.f32.mrb[0].mxu0
      %v5802 = vadd.f32 %v5502, %v5801
      %v5803 = vpop.f32.mrb[0].mxu0
      %5804 = vmatprep.mubr.f32.mxu0 0.0
      %5805 = vmatmul.mubr.f32.gmra.mrb[0].mxu0 %v5589
      %v5806 = vpop.f32.mrb[0].mxu0
      %v5807 = vadd.f32 %v5502, %v5806
      %v5808 = vpop.f32.mrb[0].mxu0
      %5809 = vmatprep.mubr.f32.mxu0 0.0
      %5810 = vmatmul.mubr.f32.gmra.mrb[0].mxu0 %v5592
      %v5811 = vpop.f32.mrb[0].mxu0
      %v5812 = vadd.f32 %v5502, %v5811
      %v5813 = vpop.f32.mrb[0].mxu0
      %5814 = vmatprep.mubr.f32.mxu0 0.0
      %5815 = vmatmul.mubr.f32.gmra.mrb[0].mxu0 %v5595
      %v5816 = vpop.f32.mrb[0].mxu0
      %v5817 = vadd.f32 %v5502, %v5816
      %v5818 = vpop.f32.mrb[0].mxu0
      %5819 = vmatprep.mubr.f32.mxu0 0.0
      %5820 = vmatmul.mubr.f32.gmra.mrb[0].mxu0 %v5598
      %v5821 = vpop.f32.mrb[0].mxu0
      %v5822 = vadd.f32 %v5502, %v5821
      %v5823 = vpop.f32.mrb[0].mxu0
      %5824 = vdwg.mxu0
      %v5825 = vlaneseq
      %v5826 = vshrl.u32 %v5825, 7
      %v5827 = vsub.s32 0, %v5826
      %v5828 = vrot.slane %v5667, %v5827
      %v5829 = vlaneseq
      %v5830 = vshrl.u32 %v5829, 7
      %v5831 = vsub.s32 0, %v5830
      %v5832 = vrot.slane %v5677, %v5831
      %v5833 = vlaneseq
      %v5834 = vshrl.u32 %v5833, 7
      %v5835 = vsub.s32 0, %v5834
      %v5836 = vrot.slane %v5687, %v5835
      %v5837 = vlaneseq
      %v5838 = vshrl.u32 %v5837, 7
      %v5839 = vsub.s32 0, %v5838
      %v5840 = vrot.slane %v5697, %v5839
      %v5841 = vlaneseq
      %v5842 = vshrl.u32 %v5841, 7
      %v5843 = vsub.s32 0, %v5842
      %v5844 = vrot.slane %v5707, %v5843
      %v5845 = vlaneseq
      %v5846 = vshrl.u32 %v5845, 7
      %v5847 = vsub.s32 0, %v5846
      %v5848 = vrot.slane %v5717, %v5847
      %v5849 = vlaneseq
      %v5850 = vshrl.u32 %v5849, 7
      %v5851 = vsub.s32 0, %v5850
      %v5852 = vrot.slane %v5727, %v5851
      %v5853 = vlaneseq
      %v5854 = vshrl.u32 %v5853, 7
      %v5855 = vsub.s32 0, %v5854
      %v5856 = vrot.slane %v5737, %v5855
      %v5857 = vlaneseq
      %v5858 = vshrl.u32 %v5857, 7
      %v5859 = vsub.s32 0, %v5858
      %v5860 = vrot.slane %v5747, %v5859
      %v5861 = vlaneseq
      %v5862 = vshrl.u32 %v5861, 7
      %v5863 = vsub.s32 0, %v5862
      %v5864 = vrot.slane %v5757, %v5863
      %v5865 = vlaneseq
      %v5866 = vshrl.u32 %v5865, 7
      %v5867 = vsub.s32 0, %v5866
      %v5868 = vrot.slane %v5767, %v5867
      %v5869 = vlaneseq
      %v5870 = vshrl.u32 %v5869, 7
      %v5871 = vsub.s32 0, %v5870
      %v5872 = vrot.slane %v5777, %v5871
      %v5873 = vlaneseq
      %v5874 = vshrl.u32 %v5873, 7
      %v5875 = vsub.s32 0, %v5874
      %v5876 = vrot.slane %v5787, %v5875
      %v5877 = vlaneseq
      %v5878 = vshrl.u32 %v5877, 7
      %v5879 = vsub.s32 0, %v5878
      %v5880 = vrot.slane %v5797, %v5879
      %v5881 = vlaneseq
      %v5882 = vshrl.u32 %v5881, 7
      %v5883 = vsub.s32 0, %v5882
      %v5884 = vrot.slane %v5807, %v5883
      %v5885 = vlaneseq
      %v5886 = vshrl.u32 %v5885, 7
      %v5887 = vsub.s32 0, %v5886
      %v5888 = vrot.slane %v5817, %v5887
      %5891 = vrot.lane.b32.xlu0 %v5667, 96
      %v5892 = vpop.permute.xlu0 %5891
      %5893 = vrot.lane.b32.xlu0 %v5672, 96
      %v5894 = vpop.permute.xlu0 %5893
      %v5897 = vmul.f32 %v5828, %v5892
      %v5898 = vmul.f32 %v5828, %v5894
      %v5899 = vmul.f32 %v5832, %v5892
      %v5900 = vmul.f32 %v5832, %v5894
      %v5901 = vmul.f32 %v5836, %v5892
      %v5902 = vmul.f32 %v5836, %v5894
      %v5903 = vmul.f32 %v5840, %v5892
      %v5904 = vmul.f32 %v5840, %v5894
      %v5905 = vmul.f32 %v5844, %v5892
      %v5906 = vmul.f32 %v5844, %v5894
      %v5907 = vmul.f32 %v5848, %v5892
      %v5908 = vmul.f32 %v5848, %v5894
      %v5909 = vmul.f32 %v5852, %v5892
      %v5910 = vmul.f32 %v5852, %v5894
      %v5911 = vmul.f32 %v5856, %v5892
      %v5912 = vmul.f32 %v5856, %v5894
      %v5913 = vmul.f32 %v5860, %v5892
      %v5914 = vmul.f32 %v5860, %v5894
      %v5915 = vmul.f32 %v5864, %v5892
      %v5916 = vmul.f32 %v5864, %v5894
      %v5917 = vmul.f32 %v5868, %v5892
      %v5918 = vmul.f32 %v5868, %v5894
      %v5919 = vmul.f32 %v5872, %v5892
      %v5920 = vmul.f32 %v5872, %v5894
      %v5921 = vmul.f32 %v5876, %v5892
      %v5922 = vmul.f32 %v5876, %v5894
      %v5923 = vmul.f32 %v5880, %v5892
      %v5924 = vmul.f32 %v5880, %v5894
      %v5925 = vmul.f32 %v5884, %v5892
      %v5926 = vmul.f32 %v5884, %v5894
      %v5927 = vmul.f32 %v5888, %v5892
      %v5928 = vmul.f32 %v5888, %v5894
      %v5929 = vlaneseq
      %v5930 = vshrl.u32 %v5929, 7
      %v5931 = vsub.s32 1, %v5930
      %v5932 = vrot.slane %v5667, %v5931
      %v5933 = vlaneseq
      %v5934 = vshrl.u32 %v5933, 7
      %v5935 = vsub.s32 1, %v5934
      %v5936 = vrot.slane %v5677, %v5935
      %v5937 = vlaneseq
      %v5938 = vshrl.u32 %v5937, 7
      %v5939 = vsub.s32 1, %v5938
      %v5940 = vrot.slane %v5687, %v5939
      %v5941 = vlaneseq
      %v5942 = vshrl.u32 %v5941, 7
      %v5943 = vsub.s32 1, %v5942
      %v5944 = vrot.slane %v5697, %v5943
      %v5945 = vlaneseq
      %v5946 = vshrl.u32 %v5945, 7
      %v5947 = vsub.s32 1, %v5946
      %v5948 = vrot.slane %v5707, %v5947
      %v5949 = vlaneseq
      %v5950 = vshrl.u32 %v5949, 7
      %v5951 = vsub.s32 1, %v5950
      %v5952 = vrot.slane %v5717, %v5951
      %v5953 = vlaneseq
      %v5954 = vshrl.u32 %v5953, 7
      %v5955 = vsub.s32 1, %v5954
      %v5956 = vrot.slane %v5727, %v5955
      %v5957 = vlaneseq
      %v5958 = vshrl.u32 %v5957, 7
      %v5959 = vsub.s32 1, %v5958
      %v5960 = vrot.slane %v5737, %v5959
      %v5961 = vlaneseq
      %v5962 = vshrl.u32 %v5961, 7
      %v5963 = vsub.s32 1, %v5962
      %v5964 = vrot.slane %v5747, %v5963
      %v5965 = vlaneseq
      %v5966 = vshrl.u32 %v5965, 7
      %v5967 = vsub.s32 1, %v5966
      %v5968 = vrot.slane %v5757, %v5967
      %v5969 = vlaneseq
      %v5970 = vshrl.u32 %v5969, 7
      %v5971 = vsub.s32 1, %v5970
      %v5972 = vrot.slane %v5767, %v5971
      %v5973 = vlaneseq
      %v5974 = vshrl.u32 %v5973, 7
      %v5975 = vsub.s32 1, %v5974
      %v5976 = vrot.slane %v5777, %v5975
      %v5977 = vlaneseq
      %v5978 = vshrl.u32 %v5977, 7
      %v5979 = vsub.s32 1, %v5978
      %v5980 = vrot.slane %v5787, %v5979
      %v5981 = vlaneseq
      %v5982 = vshrl.u32 %v5981, 7
      %v5983 = vsub.s32 1, %v5982
      %v5984 = vrot.slane %v5797, %v5983
      %v5985 = vlaneseq
      %v5986 = vshrl.u32 %v5985, 7
      %v5987 = vsub.s32 1, %v5986
      %v5988 = vrot.slane %v5807, %v5987
      %v5989 = vlaneseq
      %v5990 = vshrl.u32 %v5989, 7
      %v5991 = vsub.s32 1, %v5990
      %v5992 = vrot.slane %v5817, %v5991
      %5995 = vrot.lane.b32.xlu0 %v5677, 96
      %v5996 = vpop.permute.xlu0 %5995
      %5997 = vrot.lane.b32.xlu0 %v5682, 96
      %v5998 = vpop.permute.xlu0 %5997
      %v6001 = vmul.f32 %v5932, %v5996
      %v6002 = vmul.f32 %v5932, %v5998
      %v6003 = vmul.f32 %v5936, %v5996
      %v6004 = vmul.f32 %v5936, %v5998
      %v6005 = vmul.f32 %v5940, %v5996
      %v6006 = vmul.f32 %v5940, %v5998
      %v6007 = vmul.f32 %v5944, %v5996
      %v6008 = vmul.f32 %v5944, %v5998
      %v6009 = vmul.f32 %v5948, %v5996
      %v6010 = vmul.f32 %v5948, %v5998
      %v6011 = vmul.f32 %v5952, %v5996
      %v6012 = vmul.f32 %v5952, %v5998
      %v6013 = vmul.f32 %v5956, %v5996
      %v6014 = vmul.f32 %v5956, %v5998
      %v6015 = vmul.f32 %v5960, %v5996
      %v6016 = vmul.f32 %v5960, %v5998
      %v6017 = vmul.f32 %v5964, %v5996
      %v6018 = vmul.f32 %v5964, %v5998
      %v6019 = vmul.f32 %v5968, %v5996
      %v6020 = vmul.f32 %v5968, %v5998
      %v6021 = vmul.f32 %v5972, %v5996
      %v6022 = vmul.f32 %v5972, %v5998
      %v6023 = vmul.f32 %v5976, %v5996
      %v6024 = vmul.f32 %v5976, %v5998
      %v6025 = vmul.f32 %v5980, %v5996
      %v6026 = vmul.f32 %v5980, %v5998
      %v6027 = vmul.f32 %v5984, %v5996
      %v6028 = vmul.f32 %v5984, %v5998
      %v6029 = vmul.f32 %v5988, %v5996
      %v6030 = vmul.f32 %v5988, %v5998
      %v6031 = vmul.f32 %v5992, %v5996
      %v6032 = vmul.f32 %v5992, %v5998
      %v6033 = vadd.f32 %v5897, %v6001
      %v6034 = vadd.f32 %v5898, %v6002
      %v6035 = vadd.f32 %v5899, %v6003
      %v6036 = vadd.f32 %v5900, %v6004
      %v6037 = vadd.f32 %v5901, %v6005
      %v6038 = vadd.f32 %v5902, %v6006
      %v6039 = vadd.f32 %v5903, %v6007
      %v6040 = vadd.f32 %v5904, %v6008
      %v6041 = vadd.f32 %v5905, %v6009
      %v6042 = vadd.f32 %v5906, %v6010
      %v6043 = vadd.f32 %v5907, %v6011
      %v6044 = vadd.f32 %v5908, %v6012
      %v6045 = vadd.f32 %v5909, %v6013
      %v6046 = vadd.f32 %v5910, %v6014
      %v6047 = vadd.f32 %v5911, %v6015
      %v6048 = vadd.f32 %v5912, %v6016
      %v6049 = vadd.f32 %v5913, %v6017
      %v6050 = vadd.f32 %v5914, %v6018
      %v6051 = vadd.f32 %v5915, %v6019
      %v6052 = vadd.f32 %v5916, %v6020
      %v6053 = vadd.f32 %v5917, %v6021
      %v6054 = vadd.f32 %v5918, %v6022
      %v6055 = vadd.f32 %v5919, %v6023
      %v6056 = vadd.f32 %v5920, %v6024
      %v6057 = vadd.f32 %v5921, %v6025
      %v6058 = vadd.f32 %v5922, %v6026
      %v6059 = vadd.f32 %v5923, %v6027
      %v6060 = vadd.f32 %v5924, %v6028
      %v6061 = vadd.f32 %v5925, %v6029
      %v6062 = vadd.f32 %v5926, %v6030
      %v6063 = vadd.f32 %v5927, %v6031
      %v6064 = vadd.f32 %v5928, %v6032
      %v6065 = vlaneseq
      %v6066 = vshrl.u32 %v6065, 7
      %v6067 = vsub.s32 2, %v6066
      %v6068 = vrot.slane %v5667, %v6067
      %v6069 = vlaneseq
      %v6070 = vshrl.u32 %v6069, 7
      %v6071 = vsub.s32 2, %v6070
      %v6072 = vrot.slane %v5677, %v6071
      %v6073 = vlaneseq
      %v6074 = vshrl.u32 %v6073, 7
      %v6075 = vsub.s32 2, %v6074
      %v6076 = vrot.slane %v5687, %v6075
      %v6077 = vlaneseq
      %v6078 = vshrl.u32 %v6077, 7
      %v6079 = vsub.s32 2, %v6078
      %v6080 = vrot.slane %v5697, %v6079
      %v6081 = vlaneseq
      %v6082 = vshrl.u32 %v6081, 7
      %v6083 = vsub.s32 2, %v6082
      %v6084 = vrot.slane %v5707, %v6083
      %v6085 = vlaneseq
      %v6086 = vshrl.u32 %v6085, 7
      %v6087 = vsub.s32 2, %v6086
      %v6088 = vrot.slane %v5717, %v6087
      %v6089 = vlaneseq
      %v6090 = vshrl.u32 %v6089, 7
      %v6091 = vsub.s32 2, %v6090
      %v6092 = vrot.slane %v5727, %v6091
      %v6093 = vlaneseq
      %v6094 = vshrl.u32 %v6093, 7
      %v6095 = vsub.s32 2, %v6094
      %v6096 = vrot.slane %v5737, %v6095
      %v6097 = vlaneseq
      %v6098 = vshrl.u32 %v6097, 7
      %v6099 = vsub.s32 2, %v6098
      %v6100 = vrot.slane %v5747, %v6099
      %v6101 = vlaneseq
      %v6102 = vshrl.u32 %v6101, 7
      %v6103 = vsub.s32 2, %v6102
      %v6104 = vrot.slane %v5757, %v6103
      %v6105 = vlaneseq
      %v6106 = vshrl.u32 %v6105, 7
      %v6107 = vsub.s32 2, %v6106
      %v6108 = vrot.slane %v5767, %v6107
      %v6109 = vlaneseq
      %v6110 = vshrl.u32 %v6109, 7
      %v6111 = vsub.s32 2, %v6110
      %v6112 = vrot.slane %v5777, %v6111
      %v6113 = vlaneseq
      %v6114 = vshrl.u32 %v6113, 7
      %v6115 = vsub.s32 2, %v6114
      %v6116 = vrot.slane %v5787, %v6115
      %v6117 = vlaneseq
      %v6118 = vshrl.u32 %v6117, 7
      %v6119 = vsub.s32 2, %v6118
      %v6120 = vrot.slane %v5797, %v6119
      %v6121 = vlaneseq
      %v6122 = vshrl.u32 %v6121, 7
      %v6123 = vsub.s32 2, %v6122
      %v6124 = vrot.slane %v5807, %v6123
      %v6125 = vlaneseq
      %v6126 = vshrl.u32 %v6125, 7
      %v6127 = vsub.s32 2, %v6126
      %v6128 = vrot.slane %v5817, %v6127
      %6131 = vrot.lane.b32.xlu0 %v5687, 96
      %v6132 = vpop.permute.xlu0 %6131
      %6133 = vrot.lane.b32.xlu0 %v5692, 96
      %v6134 = vpop.permute.xlu0 %6133
      %v6137 = vmul.f32 %v6068, %v6132
      %v6138 = vmul.f32 %v6068, %v6134
      %v6139 = vmul.f32 %v6072, %v6132
      %v6140 = vmul.f32 %v6072, %v6134
      %v6141 = vmul.f32 %v6076, %v6132
      %v6142 = vmul.f32 %v6076, %v6134
      %v6143 = vmul.f32 %v6080, %v6132
      %v6144 = vmul.f32 %v6080, %v6134
      %v6145 = vmul.f32 %v6084, %v6132
      %v6146 = vmul.f32 %v6084, %v6134
      %v6147 = vmul.f32 %v6088, %v6132
      %v6148 = vmul.f32 %v6088, %v6134
      %v6149 = vmul.f32 %v6092, %v6132
      %v6150 = vmul.f32 %v6092, %v6134
      %v6151 = vmul.f32 %v6096, %v6132
      %v6152 = vmul.f32 %v6096, %v6134
      %v6153 = vmul.f32 %v6100, %v6132
      %v6154 = vmul.f32 %v6100, %v6134
      %v6155 = vmul.f32 %v6104, %v6132
      %v6156 = vmul.f32 %v6104, %v6134
      %v6157 = vmul.f32 %v6108, %v6132
      %v6158 = vmul.f32 %v6108, %v6134
      %v6159 = vmul.f32 %v6112, %v6132
      %v6160 = vmul.f32 %v6112, %v6134
      %v6161 = vmul.f32 %v6116, %v6132
      %v6162 = vmul.f32 %v6116, %v6134
      %v6163 = vmul.f32 %v6120, %v6132
      %v6164 = vmul.f32 %v6120, %v6134
      %v6165 = vmul.f32 %v6124, %v6132
      %v6166 = vmul.f32 %v6124, %v6134
      %v6167 = vmul.f32 %v6128, %v6132
      %v6168 = vmul.f32 %v6128, %v6134
      %v6169 = vadd.f32 %v6033, %v6137
      %v6170 = vadd.f32 %v6034, %v6138
      %v6171 = vadd.f32 %v6035, %v6139
      %v6172 = vadd.f32 %v6036, %v6140
      %v6173 = vadd.f32 %v6037, %v6141
      %v6174 = vadd.f32 %v6038, %v6142
      %v6175 = vadd.f32 %v6039, %v6143
      %v6176 = vadd.f32 %v6040, %v6144
      %v6177 = vadd.f32 %v6041, %v6145
      %v6178 = vadd.f32 %v6042, %v6146
      %v6179 = vadd.f32 %v6043, %v6147
      %v6180 = vadd.f32 %v6044, %v6148
      %v6181 = vadd.f32 %v6045, %v6149
      %v6182 = vadd.f32 %v6046, %v6150
      %v6183 = vadd.f32 %v6047, %v6151
      %v6184 = vadd.f32 %v6048, %v6152
      %v6185 = vadd.f32 %v6049, %v6153
      %v6186 = vadd.f32 %v6050, %v6154
      %v6187 = vadd.f32 %v6051, %v6155
      %v6188 = vadd.f32 %v6052, %v6156
      %v6189 = vadd.f32 %v6053, %v6157
      %v6190 = vadd.f32 %v6054, %v6158
      %v6191 = vadd.f32 %v6055, %v6159
      %v6192 = vadd.f32 %v6056, %v6160
      %v6193 = vadd.f32 %v6057, %v6161
      %v6194 = vadd.f32 %v6058, %v6162
      %v6195 = vadd.f32 %v6059, %v6163
      %v6196 = vadd.f32 %v6060, %v6164
      %v6197 = vadd.f32 %v6061, %v6165
      %v6198 = vadd.f32 %v6062, %v6166
      %v6199 = vadd.f32 %v6063, %v6167
      %v6200 = vadd.f32 %v6064, %v6168
      %v6201 = vlaneseq
      %v6202 = vshrl.u32 %v6201, 7
      %v6203 = vsub.s32 3, %v6202
      %v6204 = vrot.slane %v5667, %v6203
      %v6205 = vlaneseq
      %v6206 = vshrl.u32 %v6205, 7
      %v6207 = vsub.s32 3, %v6206
      %v6208 = vrot.slane %v5677, %v6207
      %v6209 = vlaneseq
      %v6210 = vshrl.u32 %v6209, 7
      %v6211 = vsub.s32 3, %v6210
      %v6212 = vrot.slane %v5687, %v6211
      %v6213 = vlaneseq
      %v6214 = vshrl.u32 %v6213, 7
      %v6215 = vsub.s32 3, %v6214
      %v6216 = vrot.slane %v5697, %v6215
      %v6217 = vlaneseq
      %v6218 = vshrl.u32 %v6217, 7
      %v6219 = vsub.s32 3, %v6218
      %v6220 = vrot.slane %v5707, %v6219
      %v6221 = vlaneseq
      %v6222 = vshrl.u32 %v6221, 7
      %v6223 = vsub.s32 3, %v6222
      %v6224 = vrot.slane %v5717, %v6223
      %v6225 = vlaneseq
      %v6226 = vshrl.u32 %v6225, 7
      %v6227 = vsub.s32 3, %v6226
      %v6228 = vrot.slane %v5727, %v6227
      %v6229 = vlaneseq
      %v6230 = vshrl.u32 %v6229, 7
      %v6231 = vsub.s32 3, %v6230
      %v6232 = vrot.slane %v5737, %v6231
      %v6233 = vlaneseq
      %v6234 = vshrl.u32 %v6233, 7
      %v6235 = vsub.s32 3, %v6234
      %v6236 = vrot.slane %v5747, %v6235
      %v6237 = vlaneseq
      %v6238 = vshrl.u32 %v6237, 7
      %v6239 = vsub.s32 3, %v6238
      %v6240 = vrot.slane %v5757, %v6239
      %v6241 = vlaneseq
      %v6242 = vshrl.u32 %v6241, 7
      %v6243 = vsub.s32 3, %v6242
      %v6244 = vrot.slane %v5767, %v6243
      %v6245 = vlaneseq
      %v6246 = vshrl.u32 %v6245, 7
      %v6247 = vsub.s32 3, %v6246
      %v6248 = vrot.slane %v5777, %v6247
      %v6249 = vlaneseq
      %v6250 = vshrl.u32 %v6249, 7
      %v6251 = vsub.s32 3, %v6250
      %v6252 = vrot.slane %v5787, %v6251
      %v6253 = vlaneseq
      %v6254 = vshrl.u32 %v6253, 7
      %v6255 = vsub.s32 3, %v6254
      %v6256 = vrot.slane %v5797, %v6255
      %v6257 = vlaneseq
      %v6258 = vshrl.u32 %v6257, 7
      %v6259 = vsub.s32 3, %v6258
      %v6260 = vrot.slane %v5807, %v6259
      %v6261 = vlaneseq
      %v6262 = vshrl.u32 %v6261, 7
      %v6263 = vsub.s32 3, %v6262
      %v6264 = vrot.slane %v5817, %v6263
      %6267 = vrot.lane.b32.xlu0 %v5697, 96
      %v6268 = vpop.permute.xlu0 %6267
      %6269 = vrot.lane.b32.xlu0 %v5702, 96
      %v6270 = vpop.permute.xlu0 %6269
      %v6273 = vmul.f32 %v6204, %v6268
      %v6274 = vmul.f32 %v6204, %v6270
      %v6275 = vmul.f32 %v6208, %v6268
      %v6276 = vmul.f32 %v6208, %v6270
      %v6277 = vmul.f32 %v6212, %v6268
      %v6278 = vmul.f32 %v6212, %v6270
      %v6279 = vmul.f32 %v6216, %v6268
      %v6280 = vmul.f32 %v6216, %v6270
      %v6281 = vmul.f32 %v6220, %v6268
      %v6282 = vmul.f32 %v6220, %v6270
      %v6283 = vmul.f32 %v6224, %v6268
      %v6284 = vmul.f32 %v6224, %v6270
      %v6285 = vmul.f32 %v6228, %v6268
      %v6286 = vmul.f32 %v6228, %v6270
      %v6287 = vmul.f32 %v6232, %v6268
      %v6288 = vmul.f32 %v6232, %v6270
      %v6289 = vmul.f32 %v6236, %v6268
      %v6290 = vmul.f32 %v6236, %v6270
      %v6291 = vmul.f32 %v6240, %v6268
      %v6292 = vmul.f32 %v6240, %v6270
      %v6293 = vmul.f32 %v6244, %v6268
      %v6294 = vmul.f32 %v6244, %v6270
      %v6295 = vmul.f32 %v6248, %v6268
      %v6296 = vmul.f32 %v6248, %v6270
      %v6297 = vmul.f32 %v6252, %v6268
      %v6298 = vmul.f32 %v6252, %v6270
      %v6299 = vmul.f32 %v6256, %v6268
      %v6300 = vmul.f32 %v6256, %v6270
      %v6301 = vmul.f32 %v6260, %v6268
      %v6302 = vmul.f32 %v6260, %v6270
      %v6303 = vmul.f32 %v6264, %v6268
      %v6304 = vmul.f32 %v6264, %v6270
      %v6305 = vadd.f32 %v6169, %v6273
      %v6306 = vadd.f32 %v6170, %v6274
      %v6307 = vadd.f32 %v6171, %v6275
      %v6308 = vadd.f32 %v6172, %v6276
      %v6309 = vadd.f32 %v6173, %v6277
      %v6310 = vadd.f32 %v6174, %v6278
      %v6311 = vadd.f32 %v6175, %v6279
      %v6312 = vadd.f32 %v6176, %v6280
      %v6313 = vadd.f32 %v6177, %v6281
      %v6314 = vadd.f32 %v6178, %v6282
      %v6315 = vadd.f32 %v6179, %v6283
      %v6316 = vadd.f32 %v6180, %v6284
      %v6317 = vadd.f32 %v6181, %v6285
      %v6318 = vadd.f32 %v6182, %v6286
      %v6319 = vadd.f32 %v6183, %v6287
      %v6320 = vadd.f32 %v6184, %v6288
      %v6321 = vadd.f32 %v6185, %v6289
      %v6322 = vadd.f32 %v6186, %v6290
      %v6323 = vadd.f32 %v6187, %v6291
      %v6324 = vadd.f32 %v6188, %v6292
      %v6325 = vadd.f32 %v6189, %v6293
      %v6326 = vadd.f32 %v6190, %v6294
      %v6327 = vadd.f32 %v6191, %v6295
      %v6328 = vadd.f32 %v6192, %v6296
      %v6329 = vadd.f32 %v6193, %v6297
      %v6330 = vadd.f32 %v6194, %v6298
      %v6331 = vadd.f32 %v6195, %v6299
      %v6332 = vadd.f32 %v6196, %v6300
      %v6333 = vadd.f32 %v6197, %v6301
      %v6334 = vadd.f32 %v6198, %v6302
      %v6335 = vadd.f32 %v6199, %v6303
      %v6336 = vadd.f32 %v6200, %v6304
      %v6337 = vlaneseq
      %v6338 = vshrl.u32 %v6337, 7
      %v6339 = vsub.s32 4, %v6338
      %v6340 = vrot.slane %v5667, %v6339
      %v6341 = vlaneseq
      %v6342 = vshrl.u32 %v6341, 7
      %v6343 = vsub.s32 4, %v6342
      %v6344 = vrot.slane %v5677, %v6343
      %v6345 = vlaneseq
      %v6346 = vshrl.u32 %v6345, 7
      %v6347 = vsub.s32 4, %v6346
      %v6348 = vrot.slane %v5687, %v6347
      %v6349 = vlaneseq
      %v6350 = vshrl.u32 %v6349, 7
      %v6351 = vsub.s32 4, %v6350
      %v6352 = vrot.slane %v5697, %v6351
      %v6353 = vlaneseq
      %v6354 = vshrl.u32 %v6353, 7
      %v6355 = vsub.s32 4, %v6354
      %v6356 = vrot.slane %v5707, %v6355
      %v6357 = vlaneseq
      %v6358 = vshrl.u32 %v6357, 7
      %v6359 = vsub.s32 4, %v6358
      %v6360 = vrot.slane %v5717, %v6359
      %v6361 = vlaneseq
      %v6362 = vshrl.u32 %v6361, 7
      %v6363 = vsub.s32 4, %v6362
      %v6364 = vrot.slane %v5727, %v6363
      %v6365 = vlaneseq
      %v6366 = vshrl.u32 %v6365, 7
      %v6367 = vsub.s32 4, %v6366
      %v6368 = vrot.slane %v5737, %v6367
      %v6369 = vlaneseq
      %v6370 = vshrl.u32 %v6369, 7
      %v6371 = vsub.s32 4, %v6370
      %v6372 = vrot.slane %v5747, %v6371
      %v6373 = vlaneseq
      %v6374 = vshrl.u32 %v6373, 7
      %v6375 = vsub.s32 4, %v6374
      %v6376 = vrot.slane %v5757, %v6375
      %v6377 = vlaneseq
      %v6378 = vshrl.u32 %v6377, 7
      %v6379 = vsub.s32 4, %v6378
      %v6380 = vrot.slane %v5767, %v6379
      %v6381 = vlaneseq
      %v6382 = vshrl.u32 %v6381, 7
      %v6383 = vsub.s32 4, %v6382
      %v6384 = vrot.slane %v5777, %v6383
      %v6385 = vlaneseq
      %v6386 = vshrl.u32 %v6385, 7
      %v6387 = vsub.s32 4, %v6386
      %v6388 = vrot.slane %v5787, %v6387
      %v6389 = vlaneseq
      %v6390 = vshrl.u32 %v6389, 7
      %v6391 = vsub.s32 4, %v6390
      %v6392 = vrot.slane %v5797, %v6391
      %v6393 = vlaneseq
      %v6394 = vshrl.u32 %v6393, 7
      %v6395 = vsub.s32 4, %v6394
      %v6396 = vrot.slane %v5807, %v6395
      %v6397 = vlaneseq
      %v6398 = vshrl.u32 %v6397, 7
      %v6399 = vsub.s32 4, %v6398
      %v6400 = vrot.slane %v5817, %v6399
      %6403 = vrot.lane.b32.xlu0 %v5707, 96
      %v6404 = vpop.permute.xlu0 %6403
      %6405 = vrot.lane.b32.xlu0 %v5712, 96
      %v6406 = vpop.permute.xlu0 %6405
      %v6409 = vmul.f32 %v6340, %v6404
      %v6410 = vmul.f32 %v6340, %v6406
      %v6411 = vmul.f32 %v6344, %v6404
      %v6412 = vmul.f32 %v6344, %v6406
      %v6413 = vmul.f32 %v6348, %v6404
      %v6414 = vmul.f32 %v6348, %v6406
      %v6415 = vmul.f32 %v6352, %v6404
      %v6416 = vmul.f32 %v6352, %v6406
      %v6417 = vmul.f32 %v6356, %v6404
      %v6418 = vmul.f32 %v6356, %v6406
      %v6419 = vmul.f32 %v6360, %v6404
      %v6420 = vmul.f32 %v6360, %v6406
      %v6421 = vmul.f32 %v6364, %v6404
      %v6422 = vmul.f32 %v6364, %v6406
      %v6423 = vmul.f32 %v6368, %v6404
      %v6424 = vmul.f32 %v6368, %v6406
      %v6425 = vmul.f32 %v6372, %v6404
      %v6426 = vmul.f32 %v6372, %v6406
      %v6427 = vmul.f32 %v6376, %v6404
      %v6428 = vmul.f32 %v6376, %v6406
      %v6429 = vmul.f32 %v6380, %v6404
      %v6430 = vmul.f32 %v6380, %v6406
      %v6431 = vmul.f32 %v6384, %v6404
      %v6432 = vmul.f32 %v6384, %v6406
      %v6433 = vmul.f32 %v6388, %v6404
      %v6434 = vmul.f32 %v6388, %v6406
      %v6435 = vmul.f32 %v6392, %v6404
      %v6436 = vmul.f32 %v6392, %v6406
      %v6437 = vmul.f32 %v6396, %v6404
      %v6438 = vmul.f32 %v6396, %v6406
      %v6439 = vmul.f32 %v6400, %v6404
      %v6440 = vmul.f32 %v6400, %v6406
      %v6441 = vadd.f32 %v6305, %v6409
      %v6442 = vadd.f32 %v6306, %v6410
      %v6443 = vadd.f32 %v6307, %v6411
      %v6444 = vadd.f32 %v6308, %v6412
      %v6445 = vadd.f32 %v6309, %v6413
      %v6446 = vadd.f32 %v6310, %v6414
      %v6447 = vadd.f32 %v6311, %v6415
      %v6448 = vadd.f32 %v6312, %v6416
      %v6449 = vadd.f32 %v6313, %v6417
      %v6450 = vadd.f32 %v6314, %v6418
      %v6451 = vadd.f32 %v6315, %v6419
      %v6452 = vadd.f32 %v6316, %v6420
      %v6453 = vadd.f32 %v6317, %v6421
      %v6454 = vadd.f32 %v6318, %v6422
      %v6455 = vadd.f32 %v6319, %v6423
      %v6456 = vadd.f32 %v6320, %v6424
      %v6457 = vadd.f32 %v6321, %v6425
      %v6458 = vadd.f32 %v6322, %v6426
      %v6459 = vadd.f32 %v6323, %v6427
      %v6460 = vadd.f32 %v6324, %v6428
      %v6461 = vadd.f32 %v6325, %v6429
      %v6462 = vadd.f32 %v6326, %v6430
      %v6463 = vadd.f32 %v6327, %v6431
      %v6464 = vadd.f32 %v6328, %v6432
      %v6465 = vadd.f32 %v6329, %v6433
      %v6466 = vadd.f32 %v6330, %v6434
      %v6467 = vadd.f32 %v6331, %v6435
      %v6468 = vadd.f32 %v6332, %v6436
      %v6469 = vadd.f32 %v6333, %v6437
      %v6470 = vadd.f32 %v6334, %v6438
      %v6471 = vadd.f32 %v6335, %v6439
      %v6472 = vadd.f32 %v6336, %v6440
      %v6473 = vlaneseq
      %v6474 = vshrl.u32 %v6473, 7
      %v6475 = vsub.s32 5, %v6474
      %v6476 = vrot.slane %v5667, %v6475
      %v6477 = vlaneseq
      %v6478 = vshrl.u32 %v6477, 7
      %v6479 = vsub.s32 5, %v6478
      %v6480 = vrot.slane %v5677, %v6479
      %v6481 = vlaneseq
      %v6482 = vshrl.u32 %v6481, 7
      %v6483 = vsub.s32 5, %v6482
      %v6484 = vrot.slane %v5687, %v6483
      %v6485 = vlaneseq
      %v6486 = vshrl.u32 %v6485, 7
      %v6487 = vsub.s32 5, %v6486
      %v6488 = vrot.slane %v5697, %v6487
      %v6489 = vlaneseq
      %v6490 = vshrl.u32 %v6489, 7
      %v6491 = vsub.s32 5, %v6490
      %v6492 = vrot.slane %v5707, %v6491
      %v6493 = vlaneseq
      %v6494 = vshrl.u32 %v6493, 7
      %v6495 = vsub.s32 5, %v6494
      %v6496 = vrot.slane %v5717, %v6495
      %v6497 = vlaneseq
      %v6498 = vshrl.u32 %v6497, 7
      %v6499 = vsub.s32 5, %v6498
      %v6500 = vrot.slane %v5727, %v6499
      %v6501 = vlaneseq
      %v6502 = vshrl.u32 %v6501, 7
      %v6503 = vsub.s32 5, %v6502
      %v6504 = vrot.slane %v5737, %v6503
      %v6505 = vlaneseq
      %v6506 = vshrl.u32 %v6505, 7
      %v6507 = vsub.s32 5, %v6506
      %v6508 = vrot.slane %v5747, %v6507
      %v6509 = vlaneseq
      %v6510 = vshrl.u32 %v6509, 7
      %v6511 = vsub.s32 5, %v6510
      %v6512 = vrot.slane %v5757, %v6511
      %v6513 = vlaneseq
      %v6514 = vshrl.u32 %v6513, 7
      %v6515 = vsub.s32 5, %v6514
      %v6516 = vrot.slane %v5767, %v6515
      %v6517 = vlaneseq
      %v6518 = vshrl.u32 %v6517, 7
      %v6519 = vsub.s32 5, %v6518
      %v6520 = vrot.slane %v5777, %v6519
      %v6521 = vlaneseq
      %v6522 = vshrl.u32 %v6521, 7
      %v6523 = vsub.s32 5, %v6522
      %v6524 = vrot.slane %v5787, %v6523
      %v6525 = vlaneseq
      %v6526 = vshrl.u32 %v6525, 7
      %v6527 = vsub.s32 5, %v6526
      %v6528 = vrot.slane %v5797, %v6527
      %v6529 = vlaneseq
      %v6530 = vshrl.u32 %v6529, 7
      %v6531 = vsub.s32 5, %v6530
      %v6532 = vrot.slane %v5807, %v6531
      %v6533 = vlaneseq
      %v6534 = vshrl.u32 %v6533, 7
      %v6535 = vsub.s32 5, %v6534
      %v6536 = vrot.slane %v5817, %v6535
      %6539 = vrot.lane.b32.xlu0 %v5717, 96
      %v6540 = vpop.permute.xlu0 %6539
      %6541 = vrot.lane.b32.xlu0 %v5722, 96
      %v6542 = vpop.permute.xlu0 %6541
      %v6545 = vmul.f32 %v6476, %v6540
      %v6546 = vmul.f32 %v6476, %v6542
      %v6547 = vmul.f32 %v6480, %v6540
      %v6548 = vmul.f32 %v6480, %v6542
      %v6549 = vmul.f32 %v6484, %v6540
      %v6550 = vmul.f32 %v6484, %v6542
      %v6551 = vmul.f32 %v6488, %v6540
      %v6552 = vmul.f32 %v6488, %v6542
      %v6553 = vmul.f32 %v6492, %v6540
      %v6554 = vmul.f32 %v6492, %v6542
      %v6555 = vmul.f32 %v6496, %v6540
      %v6556 = vmul.f32 %v6496, %v6542
      %v6557 = vmul.f32 %v6500, %v6540
      %v6558 = vmul.f32 %v6500, %v6542
      %v6559 = vmul.f32 %v6504, %v6540
      %v6560 = vmul.f32 %v6504, %v6542
      %v6561 = vmul.f32 %v6508, %v6540
      %v6562 = vmul.f32 %v6508, %v6542
      %v6563 = vmul.f32 %v6512, %v6540
      %v6564 = vmul.f32 %v6512, %v6542
      %v6565 = vmul.f32 %v6516, %v6540
      %v6566 = vmul.f32 %v6516, %v6542
      %v6567 = vmul.f32 %v6520, %v6540
      %v6568 = vmul.f32 %v6520, %v6542
      %v6569 = vmul.f32 %v6524, %v6540
      %v6570 = vmul.f32 %v6524, %v6542
      %v6571 = vmul.f32 %v6528, %v6540
      %v6572 = vmul.f32 %v6528, %v6542
      %v6573 = vmul.f32 %v6532, %v6540
      %v6574 = vmul.f32 %v6532, %v6542
      %v6575 = vmul.f32 %v6536, %v6540
      %v6576 = vmul.f32 %v6536, %v6542
      %v6577 = vadd.f32 %v6441, %v6545
      %v6578 = vadd.f32 %v6442, %v6546
      %v6579 = vadd.f32 %v6443, %v6547
      %v6580 = vadd.f32 %v6444, %v6548
      %v6581 = vadd.f32 %v6445, %v6549
      %v6582 = vadd.f32 %v6446, %v6550
      %v6583 = vadd.f32 %v6447, %v6551
      %v6584 = vadd.f32 %v6448, %v6552
      %v6585 = vadd.f32 %v6449, %v6553
      %v6586 = vadd.f32 %v6450, %v6554
      %v6587 = vadd.f32 %v6451, %v6555
      %v6588 = vadd.f32 %v6452, %v6556
      %v6589 = vadd.f32 %v6453, %v6557
      %v6590 = vadd.f32 %v6454, %v6558
      %v6591 = vadd.f32 %v6455, %v6559
      %v6592 = vadd.f32 %v6456, %v6560
      %v6593 = vadd.f32 %v6457, %v6561
      %v6594 = vadd.f32 %v6458, %v6562
      %v6595 = vadd.f32 %v6459, %v6563
      %v6596 = vadd.f32 %v6460, %v6564
      %v6597 = vadd.f32 %v6461, %v6565
      %v6598 = vadd.f32 %v6462, %v6566
      %v6599 = vadd.f32 %v6463, %v6567
      %v6600 = vadd.f32 %v6464, %v6568
      %v6601 = vadd.f32 %v6465, %v6569
      %v6602 = vadd.f32 %v6466, %v6570
      %v6603 = vadd.f32 %v6467, %v6571
      %v6604 = vadd.f32 %v6468, %v6572
      %v6605 = vadd.f32 %v6469, %v6573
      %v6606 = vadd.f32 %v6470, %v6574
      %v6607 = vadd.f32 %v6471, %v6575
      %v6608 = vadd.f32 %v6472, %v6576
      %v6609 = vlaneseq
      %v6610 = vshrl.u32 %v6609, 7
      %v6611 = vsub.s32 6, %v6610
      %v6612 = vrot.slane %v5667, %v6611
      %v6613 = vlaneseq
      %v6614 = vshrl.u32 %v6613, 7
      %v6615 = vsub.s32 6, %v6614
      %v6616 = vrot.slane %v5677, %v6615
      %v6617 = vlaneseq
      %v6618 = vshrl.u32 %v6617, 7
      %v6619 = vsub.s32 6, %v6618
      %v6620 = vrot.slane %v5687, %v6619
      %v6621 = vlaneseq
      %v6622 = vshrl.u32 %v6621, 7
      %v6623 = vsub.s32 6, %v6622
      %v6624 = vrot.slane %v5697, %v6623
      %v6625 = vlaneseq
      %v6626 = vshrl.u32 %v6625, 7
      %v6627 = vsub.s32 6, %v6626
      %v6628 = vrot.slane %v5707, %v6627
      %v6629 = vlaneseq
      %v6630 = vshrl.u32 %v6629, 7
      %v6631 = vsub.s32 6, %v6630
      %v6632 = vrot.slane %v5717, %v6631
      %v6633 = vlaneseq
      %v6634 = vshrl.u32 %v6633, 7
      %v6635 = vsub.s32 6, %v6634
      %v6636 = vrot.slane %v5727, %v6635
      %v6637 = vlaneseq
      %v6638 = vshrl.u32 %v6637, 7
      %v6639 = vsub.s32 6, %v6638
      %v6640 = vrot.slane %v5737, %v6639
      %v6641 = vlaneseq
      %v6642 = vshrl.u32 %v6641, 7
      %v6643 = vsub.s32 6, %v6642
      %v6644 = vrot.slane %v5747, %v6643
      %v6645 = vlaneseq
      %v6646 = vshrl.u32 %v6645, 7
      %v6647 = vsub.s32 6, %v6646
      %v6648 = vrot.slane %v5757, %v6647
      %v6649 = vlaneseq
      %v6650 = vshrl.u32 %v6649, 7
      %v6651 = vsub.s32 6, %v6650
      %v6652 = vrot.slane %v5767, %v6651
      %v6653 = vlaneseq
      %v6654 = vshrl.u32 %v6653, 7
      %v6655 = vsub.s32 6, %v6654
      %v6656 = vrot.slane %v5777, %v6655
      %v6657 = vlaneseq
      %v6658 = vshrl.u32 %v6657, 7
      %v6659 = vsub.s32 6, %v6658
      %v6660 = vrot.slane %v5787, %v6659
      %v6661 = vlaneseq
      %v6662 = vshrl.u32 %v6661, 7
      %v6663 = vsub.s32 6, %v6662
      %v6664 = vrot.slane %v5797, %v6663
      %v6665 = vlaneseq
      %v6666 = vshrl.u32 %v6665, 7
      %v6667 = vsub.s32 6, %v6666
      %v6668 = vrot.slane %v5807, %v6667
      %v6669 = vlaneseq
      %v6670 = vshrl.u32 %v6669, 7
      %v6671 = vsub.s32 6, %v6670
      %v6672 = vrot.slane %v5817, %v6671
      %6675 = vrot.lane.b32.xlu0 %v5727, 96
      %v6676 = vpop.permute.xlu0 %6675
      %6677 = vrot.lane.b32.xlu0 %v5732, 96
      %v6678 = vpop.permute.xlu0 %6677
      %v6681 = vmul.f32 %v6612, %v6676
      %v6682 = vmul.f32 %v6612, %v6678
      %v6683 = vmul.f32 %v6616, %v6676
      %v6684 = vmul.f32 %v6616, %v6678
      %v6685 = vmul.f32 %v6620, %v6676
      %v6686 = vmul.f32 %v6620, %v6678
      %v6687 = vmul.f32 %v6624, %v6676
      %v6688 = vmul.f32 %v6624, %v6678
      %v6689 = vmul.f32 %v6628, %v6676
      %v6690 = vmul.f32 %v6628, %v6678
      %v6691 = vmul.f32 %v6632, %v6676
      %v6692 = vmul.f32 %v6632, %v6678
      %v6693 = vmul.f32 %v6636, %v6676
      %v6694 = vmul.f32 %v6636, %v6678
      %v6695 = vmul.f32 %v6640, %v6676
      %v6696 = vmul.f32 %v6640, %v6678
      %v6697 = vmul.f32 %v6644, %v6676
      %v6698 = vmul.f32 %v6644, %v6678
      %v6699 = vmul.f32 %v6648, %v6676
      %v6700 = vmul.f32 %v6648, %v6678
      %v6701 = vmul.f32 %v6652, %v6676
      %v6702 = vmul.f32 %v6652, %v6678
      %v6703 = vmul.f32 %v6656, %v6676
      %v6704 = vmul.f32 %v6656, %v6678
      %v6705 = vmul.f32 %v6660, %v6676
      %v6706 = vmul.f32 %v6660, %v6678
      %v6707 = vmul.f32 %v6664, %v6676
      %v6708 = vmul.f32 %v6664, %v6678
      %v6709 = vmul.f32 %v6668, %v6676
      %v6710 = vmul.f32 %v6668, %v6678
      %v6711 = vmul.f32 %v6672, %v6676
      %v6712 = vmul.f32 %v6672, %v6678
      %v6713 = vadd.f32 %v6577, %v6681
      %v6714 = vadd.f32 %v6578, %v6682
      %v6715 = vadd.f32 %v6579, %v6683
      %v6716 = vadd.f32 %v6580, %v6684
      %v6717 = vadd.f32 %v6581, %v6685
      %v6718 = vadd.f32 %v6582, %v6686
      %v6719 = vadd.f32 %v6583, %v6687
      %v6720 = vadd.f32 %v6584, %v6688
      %v6721 = vadd.f32 %v6585, %v6689
      %v6722 = vadd.f32 %v6586, %v6690
      %v6723 = vadd.f32 %v6587, %v6691
      %v6724 = vadd.f32 %v6588, %v6692
      %v6725 = vadd.f32 %v6589, %v6693
      %v6726 = vadd.f32 %v6590, %v6694
      %v6727 = vadd.f32 %v6591, %v6695
      %v6728 = vadd.f32 %v6592, %v6696
      %v6729 = vadd.f32 %v6593, %v6697
      %v6730 = vadd.f32 %v6594, %v6698
      %v6731 = vadd.f32 %v6595, %v6699
      %v6732 = vadd.f32 %v6596, %v6700
      %v6733 = vadd.f32 %v6597, %v6701
      %v6734 = vadd.f32 %v6598, %v6702
      %v6735 = vadd.f32 %v6599, %v6703
      %v6736 = vadd.f32 %v6600, %v6704
      %v6737 = vadd.f32 %v6601, %v6705
      %v6738 = vadd.f32 %v6602, %v6706
      %v6739 = vadd.f32 %v6603, %v6707
      %v6740 = vadd.f32 %v6604, %v6708
      %v6741 = vadd.f32 %v6605, %v6709
      %v6742 = vadd.f32 %v6606, %v6710
      %v6743 = vadd.f32 %v6607, %v6711
      %v6744 = vadd.f32 %v6608, %v6712
      %v6745 = vlaneseq
      %v6746 = vshrl.u32 %v6745, 7
      %v6747 = vsub.s32 7, %v6746
      %v6748 = vrot.slane %v5667, %v6747
      %v6749 = vlaneseq
      %v6750 = vshrl.u32 %v6749, 7
      %v6751 = vsub.s32 7, %v6750
      %v6752 = vrot.slane %v5677, %v6751
      %v6753 = vlaneseq
      %v6754 = vshrl.u32 %v6753, 7
      %v6755 = vsub.s32 7, %v6754
      %v6756 = vrot.slane %v5687, %v6755
      %v6757 = vlaneseq
      %v6758 = vshrl.u32 %v6757, 7
      %v6759 = vsub.s32 7, %v6758
      %v6760 = vrot.slane %v5697, %v6759
      %v6761 = vlaneseq
      %v6762 = vshrl.u32 %v6761, 7
      %v6763 = vsub.s32 7, %v6762
      %v6764 = vrot.slane %v5707, %v6763
      %v6765 = vlaneseq
      %v6766 = vshrl.u32 %v6765, 7
      %v6767 = vsub.s32 7, %v6766
      %v6768 = vrot.slane %v5717, %v6767
      %v6769 = vlaneseq
      %v6770 = vshrl.u32 %v6769, 7
      %v6771 = vsub.s32 7, %v6770
      %v6772 = vrot.slane %v5727, %v6771
      %v6773 = vlaneseq
      %v6774 = vshrl.u32 %v6773, 7
      %v6775 = vsub.s32 7, %v6774
      %v6776 = vrot.slane %v5737, %v6775
      %v6777 = vlaneseq
      %v6778 = vshrl.u32 %v6777, 7
      %v6779 = vsub.s32 7, %v6778
      %v6780 = vrot.slane %v5747, %v6779
      %v6781 = vlaneseq
      %v6782 = vshrl.u32 %v6781, 7
      %v6783 = vsub.s32 7, %v6782
      %v6784 = vrot.slane %v5757, %v6783
      %v6785 = vlaneseq
      %v6786 = vshrl.u32 %v6785, 7
      %v6787 = vsub.s32 7, %v6786
      %v6788 = vrot.slane %v5767, %v6787
      %v6789 = vlaneseq
      %v6790 = vshrl.u32 %v6789, 7
      %v6791 = vsub.s32 7, %v6790
      %v6792 = vrot.slane %v5777, %v6791
      %v6793 = vlaneseq
      %v6794 = vshrl.u32 %v6793, 7
      %v6795 = vsub.s32 7, %v6794
      %v6796 = vrot.slane %v5787, %v6795
      %v6797 = vlaneseq
      %v6798 = vshrl.u32 %v6797, 7
      %v6799 = vsub.s32 7, %v6798
      %v6800 = vrot.slane %v5797, %v6799
      %v6801 = vlaneseq
      %v6802 = vshrl.u32 %v6801, 7
      %v6803 = vsub.s32 7, %v6802
      %v6804 = vrot.slane %v5807, %v6803
      %v6805 = vlaneseq
      %v6806 = vshrl.u32 %v6805, 7
      %v6807 = vsub.s32 7, %v6806
      %v6808 = vrot.slane %v5817, %v6807
      %6811 = vrot.lane.b32.xlu0 %v5737, 96
      %v6812 = vpop.permute.xlu0 %6811
      %6813 = vrot.lane.b32.xlu0 %v5742, 96
      %v6814 = vpop.permute.xlu0 %6813
      %v6817 = vmul.f32 %v6748, %v6812
      %v6818 = vmul.f32 %v6748, %v6814
      %v6819 = vmul.f32 %v6752, %v6812
      %v6820 = vmul.f32 %v6752, %v6814
      %v6821 = vmul.f32 %v6756, %v6812
      %v6822 = vmul.f32 %v6756, %v6814
      %v6823 = vmul.f32 %v6760, %v6812
      %v6824 = vmul.f32 %v6760, %v6814
      %v6825 = vmul.f32 %v6764, %v6812
      %v6826 = vmul.f32 %v6764, %v6814
      %v6827 = vmul.f32 %v6768, %v6812
      %v6828 = vmul.f32 %v6768, %v6814
      %v6829 = vmul.f32 %v6772, %v6812
      %v6830 = vmul.f32 %v6772, %v6814
      %v6831 = vmul.f32 %v6776, %v6812
      %v6832 = vmul.f32 %v6776, %v6814
      %v6833 = vmul.f32 %v6780, %v6812
      %v6834 = vmul.f32 %v6780, %v6814
      %v6835 = vmul.f32 %v6784, %v6812
      %v6836 = vmul.f32 %v6784, %v6814
      %v6837 = vmul.f32 %v6788, %v6812
      %v6838 = vmul.f32 %v6788, %v6814
      %v6839 = vmul.f32 %v6792, %v6812
      %v6840 = vmul.f32 %v6792, %v6814
      %v6841 = vmul.f32 %v6796, %v6812
      %v6842 = vmul.f32 %v6796, %v6814
      %v6843 = vmul.f32 %v6800, %v6812
      %v6844 = vmul.f32 %v6800, %v6814
      %v6845 = vmul.f32 %v6804, %v6812
      %v6846 = vmul.f32 %v6804, %v6814
      %v6847 = vmul.f32 %v6808, %v6812
      %v6848 = vmul.f32 %v6808, %v6814
      %v6849 = vadd.f32 %v6713, %v6817
      %v6850 = vadd.f32 %v6714, %v6818
      %v6851 = vadd.f32 %v6715, %v6819
      %v6852 = vadd.f32 %v6716, %v6820
      %v6853 = vadd.f32 %v6717, %v6821
      %v6854 = vadd.f32 %v6718, %v6822
      %v6855 = vadd.f32 %v6719, %v6823
      %v6856 = vadd.f32 %v6720, %v6824
      %v6857 = vadd.f32 %v6721, %v6825
      %v6858 = vadd.f32 %v6722, %v6826
      %v6859 = vadd.f32 %v6723, %v6827
      %v6860 = vadd.f32 %v6724, %v6828
      %v6861 = vadd.f32 %v6725, %v6829
      %v6862 = vadd.f32 %v6726, %v6830
      %v6863 = vadd.f32 %v6727, %v6831
      %v6864 = vadd.f32 %v6728, %v6832
      %v6865 = vadd.f32 %v6729, %v6833
      %v6866 = vadd.f32 %v6730, %v6834
      %v6867 = vadd.f32 %v6731, %v6835
      %v6868 = vadd.f32 %v6732, %v6836
      %v6869 = vadd.f32 %v6733, %v6837
      %v6870 = vadd.f32 %v6734, %v6838
      %v6871 = vadd.f32 %v6735, %v6839
      %v6872 = vadd.f32 %v6736, %v6840
      %v6873 = vadd.f32 %v6737, %v6841
      %v6874 = vadd.f32 %v6738, %v6842
      %v6875 = vadd.f32 %v6739, %v6843
      %v6876 = vadd.f32 %v6740, %v6844
      %v6877 = vadd.f32 %v6741, %v6845
      %v6878 = vadd.f32 %v6742, %v6846
      %v6879 = vadd.f32 %v6743, %v6847
      %v6880 = vadd.f32 %v6744, %v6848
      %v6881 = vlaneseq
      %v6882 = vshrl.u32 %v6881, 7
      %v6883 = vsub.s32 0, %v6882
      %v6884 = vrot.slane %v5672, %v6883
      %v6885 = vlaneseq
      %v6886 = vshrl.u32 %v6885, 7
      %v6887 = vsub.s32 0, %v6886
      %v6888 = vrot.slane %v5682, %v6887
      %v6889 = vlaneseq
      %v6890 = vshrl.u32 %v6889, 7
      %v6891 = vsub.s32 0, %v6890
      %v6892 = vrot.slane %v5692, %v6891
      %v6893 = vlaneseq
      %v6894 = vshrl.u32 %v6893, 7
      %v6895 = vsub.s32 0, %v6894
      %v6896 = vrot.slane %v5702, %v6895
      %v6897 = vlaneseq
      %v6898 = vshrl.u32 %v6897, 7
      %v6899 = vsub.s32 0, %v6898
      %v6900 = vrot.slane %v5712, %v6899
      %v6901 = vlaneseq
      %v6902 = vshrl.u32 %v6901, 7
      %v6903 = vsub.s32 0, %v6902
      %v6904 = vrot.slane %v5722, %v6903
      %v6905 = vlaneseq
      %v6906 = vshrl.u32 %v6905, 7
      %v6907 = vsub.s32 0, %v6906
      %v6908 = vrot.slane %v5732, %v6907
      %v6909 = vlaneseq
      %v6910 = vshrl.u32 %v6909, 7
      %v6911 = vsub.s32 0, %v6910
      %v6912 = vrot.slane %v5742, %v6911
      %v6913 = vlaneseq
      %v6914 = vshrl.u32 %v6913, 7
      %v6915 = vsub.s32 0, %v6914
      %v6916 = vrot.slane %v5752, %v6915
      %v6917 = vlaneseq
      %v6918 = vshrl.u32 %v6917, 7
      %v6919 = vsub.s32 0, %v6918
      %v6920 = vrot.slane %v5762, %v6919
      %v6921 = vlaneseq
      %v6922 = vshrl.u32 %v6921, 7
      %v6923 = vsub.s32 0, %v6922
      %v6924 = vrot.slane %v5772, %v6923
      %v6925 = vlaneseq
      %v6926 = vshrl.u32 %v6925, 7
      %v6927 = vsub.s32 0, %v6926
      %v6928 = vrot.slane %v5782, %v6927
      %v6929 = vlaneseq
      %v6930 = vshrl.u32 %v6929, 7
      %v6931 = vsub.s32 0, %v6930
      %v6932 = vrot.slane %v5792, %v6931
      %v6933 = vlaneseq
      %v6934 = vshrl.u32 %v6933, 7
      %v6935 = vsub.s32 0, %v6934
      %v6936 = vrot.slane %v5802, %v6935
      %v6937 = vlaneseq
      %v6938 = vshrl.u32 %v6937, 7
      %v6939 = vsub.s32 0, %v6938
      %v6940 = vrot.slane %v5812, %v6939
      %v6941 = vlaneseq
      %v6942 = vshrl.u32 %v6941, 7
      %v6943 = vsub.s32 0, %v6942
      %v6944 = vrot.slane %v5822, %v6943
      %6947 = vrot.lane.b32.xlu0 %v5747, 96
      %v6948 = vpop.permute.xlu0 %6947
      %6949 = vrot.lane.b32.xlu0 %v5752, 96
      %v6950 = vpop.permute.xlu0 %6949
      %v6953 = vmul.f32 %v6884, %v6948
      %v6954 = vmul.f32 %v6884, %v6950
      %v6955 = vmul.f32 %v6888, %v6948
      %v6956 = vmul.f32 %v6888, %v6950
      %v6957 = vmul.f32 %v6892, %v6948
      %v6958 = vmul.f32 %v6892, %v6950
      %v6959 = vmul.f32 %v6896, %v6948
      %v6960 = vmul.f32 %v6896, %v6950
      %v6961 = vmul.f32 %v6900, %v6948
      %v6962 = vmul.f32 %v6900, %v6950
      %v6963 = vmul.f32 %v6904, %v6948
      %v6964 = vmul.f32 %v6904, %v6950
      %v6965 = vmul.f32 %v6908, %v6948
      %v6966 = vmul.f32 %v6908, %v6950
      %v6967 = vmul.f32 %v6912, %v6948
      %v6968 = vmul.f32 %v6912, %v6950
      %v6969 = vmul.f32 %v6916, %v6948
      %v6970 = vmul.f32 %v6916, %v6950
      %v6971 = vmul.f32 %v6920, %v6948
      %v6972 = vmul.f32 %v6920, %v6950
      %v6973 = vmul.f32 %v6924, %v6948
      %v6974 = vmul.f32 %v6924, %v6950
      %v6975 = vmul.f32 %v6928, %v6948
      %v6976 = vmul.f32 %v6928, %v6950
      %v6977 = vmul.f32 %v6932, %v6948
      %v6978 = vmul.f32 %v6932, %v6950
      %v6979 = vmul.f32 %v6936, %v6948
      %v6980 = vmul.f32 %v6936, %v6950
      %v6981 = vmul.f32 %v6940, %v6948
      %v6982 = vmul.f32 %v6940, %v6950
      %v6983 = vmul.f32 %v6944, %v6948
      %v6984 = vmul.f32 %v6944, %v6950
      %v6985 = vadd.f32 %v6849, %v6953
      %v6986 = vadd.f32 %v6850, %v6954
      %v6987 = vadd.f32 %v6851, %v6955
      %v6988 = vadd.f32 %v6852, %v6956
      %v6989 = vadd.f32 %v6853, %v6957
      %v6990 = vadd.f32 %v6854, %v6958
      %v6991 = vadd.f32 %v6855, %v6959
      %v6992 = vadd.f32 %v6856, %v6960
      %v6993 = vadd.f32 %v6857, %v6961
      %v6994 = vadd.f32 %v6858, %v6962
      %v6995 = vadd.f32 %v6859, %v6963
      %v6996 = vadd.f32 %v6860, %v6964
      %v6997 = vadd.f32 %v6861, %v6965
      %v6998 = vadd.f32 %v6862, %v6966
      %v6999 = vadd.f32 %v6863, %v6967
      %v7000 = vadd.f32 %v6864, %v6968
      %v7001 = vadd.f32 %v6865, %v6969
      %v7002 = vadd.f32 %v6866, %v6970
      %v7003 = vadd.f32 %v6867, %v6971
      %v7004 = vadd.f32 %v6868, %v6972
      %v7005 = vadd.f32 %v6869, %v6973
      %v7006 = vadd.f32 %v6870, %v6974
      %v7007 = vadd.f32 %v6871, %v6975
      %v7008 = vadd.f32 %v6872, %v6976
      %v7009 = vadd.f32 %v6873, %v6977
      %v7010 = vadd.f32 %v6874, %v6978
      %v7011 = vadd.f32 %v6875, %v6979
      %v7012 = vadd.f32 %v6876, %v6980
      %v7013 = vadd.f32 %v6877, %v6981
      %v7014 = vadd.f32 %v6878, %v6982
      %v7015 = vadd.f32 %v6879, %v6983
      %v7016 = vadd.f32 %v6880, %v6984
      %v7017 = vlaneseq
      %v7018 = vshrl.u32 %v7017, 7
      %v7019 = vsub.s32 1, %v7018
      %v7020 = vrot.slane %v5672, %v7019
      %v7021 = vlaneseq
      %v7022 = vshrl.u32 %v7021, 7
      %v7023 = vsub.s32 1, %v7022
      %v7024 = vrot.slane %v5682, %v7023
      %v7025 = vlaneseq
      %v7026 = vshrl.u32 %v7025, 7
      %v7027 = vsub.s32 1, %v7026
      %v7028 = vrot.slane %v5692, %v7027
      %v7029 = vlaneseq
      %v7030 = vshrl.u32 %v7029, 7
      %v7031 = vsub.s32 1, %v7030
      %v7032 = vrot.slane %v5702, %v7031
      %v7033 = vlaneseq
      %v7034 = vshrl.u32 %v7033, 7
      %v7035 = vsub.s32 1, %v7034
      %v7036 = vrot.slane %v5712, %v7035
      %v7037 = vlaneseq
      %v7038 = vshrl.u32 %v7037, 7
      %v7039 = vsub.s32 1, %v7038
      %v7040 = vrot.slane %v5722, %v7039
      %v7041 = vlaneseq
      %v7042 = vshrl.u32 %v7041, 7
      %v7043 = vsub.s32 1, %v7042
      %v7044 = vrot.slane %v5732, %v7043
      %v7045 = vlaneseq
      %v7046 = vshrl.u32 %v7045, 7
      %v7047 = vsub.s32 1, %v7046
      %v7048 = vrot.slane %v5742, %v7047
      %v7049 = vlaneseq
      %v7050 = vshrl.u32 %v7049, 7
      %v7051 = vsub.s32 1, %v7050
      %v7052 = vrot.slane %v5752, %v7051
      %v7053 = vlaneseq
      %v7054 = vshrl.u32 %v7053, 7
      %v7055 = vsub.s32 1, %v7054
      %v7056 = vrot.slane %v5762, %v7055
      %v7057 = vlaneseq
      %v7058 = vshrl.u32 %v7057, 7
      %v7059 = vsub.s32 1, %v7058
      %v7060 = vrot.slane %v5772, %v7059
      %v7061 = vlaneseq
      %v7062 = vshrl.u32 %v7061, 7
      %v7063 = vsub.s32 1, %v7062
      %v7064 = vrot.slane %v5782, %v7063
      %v7065 = vlaneseq
      %v7066 = vshrl.u32 %v7065, 7
      %v7067 = vsub.s32 1, %v7066
      %v7068 = vrot.slane %v5792, %v7067
      %v7069 = vlaneseq
      %v7070 = vshrl.u32 %v7069, 7
      %v7071 = vsub.s32 1, %v7070
      %v7072 = vrot.slane %v5802, %v7071
      %v7073 = vlaneseq
      %v7074 = vshrl.u32 %v7073, 7
      %v7075 = vsub.s32 1, %v7074
      %v7076 = vrot.slane %v5812, %v7075
      %v7077 = vlaneseq
      %v7078 = vshrl.u32 %v7077, 7
      %v7079 = vsub.s32 1, %v7078
      %v7080 = vrot.slane %v5822, %v7079
      %7083 = vrot.lane.b32.xlu0 %v5757, 96
      %v7084 = vpop.permute.xlu0 %7083
      %7085 = vrot.lane.b32.xlu0 %v5762, 96
      %v7086 = vpop.permute.xlu0 %7085
      %v7089 = vmul.f32 %v7020, %v7084
      %v7090 = vmul.f32 %v7020, %v7086
      %v7091 = vmul.f32 %v7024, %v7084
      %v7092 = vmul.f32 %v7024, %v7086
      %v7093 = vmul.f32 %v7028, %v7084
      %v7094 = vmul.f32 %v7028, %v7086
      %v7095 = vmul.f32 %v7032, %v7084
      %v7096 = vmul.f32 %v7032, %v7086
      %v7097 = vmul.f32 %v7036, %v7084
      %v7098 = vmul.f32 %v7036, %v7086
      %v7099 = vmul.f32 %v7040, %v7084
      %v7100 = vmul.f32 %v7040, %v7086
      %v7101 = vmul.f32 %v7044, %v7084
      %v7102 = vmul.f32 %v7044, %v7086
      %v7103 = vmul.f32 %v7048, %v7084
      %v7104 = vmul.f32 %v7048, %v7086
      %v7105 = vmul.f32 %v7052, %v7084
      %v7106 = vmul.f32 %v7052, %v7086
      %v7107 = vmul.f32 %v7056, %v7084
      %v7108 = vmul.f32 %v7056, %v7086
      %v7109 = vmul.f32 %v7060, %v7084
      %v7110 = vmul.f32 %v7060, %v7086
      %v7111 = vmul.f32 %v7064, %v7084
      %v7112 = vmul.f32 %v7064, %v7086
      %v7113 = vmul.f32 %v7068, %v7084
      %v7114 = vmul.f32 %v7068, %v7086
      %v7115 = vmul.f32 %v7072, %v7084
      %v7116 = vmul.f32 %v7072, %v7086
      %v7117 = vmul.f32 %v7076, %v7084
      %v7118 = vmul.f32 %v7076, %v7086
      %v7119 = vmul.f32 %v7080, %v7084
      %v7120 = vmul.f32 %v7080, %v7086
      %v7121 = vadd.f32 %v6985, %v7089
      %v7122 = vadd.f32 %v6986, %v7090
      %v7123 = vadd.f32 %v6987, %v7091
      %v7124 = vadd.f32 %v6988, %v7092
      %v7125 = vadd.f32 %v6989, %v7093
      %v7126 = vadd.f32 %v6990, %v7094
      %v7127 = vadd.f32 %v6991, %v7095
      %v7128 = vadd.f32 %v6992, %v7096
      %v7129 = vadd.f32 %v6993, %v7097
      %v7130 = vadd.f32 %v6994, %v7098
      %v7131 = vadd.f32 %v6995, %v7099
      %v7132 = vadd.f32 %v6996, %v7100
      %v7133 = vadd.f32 %v6997, %v7101
      %v7134 = vadd.f32 %v6998, %v7102
      %v7135 = vadd.f32 %v6999, %v7103
      %v7136 = vadd.f32 %v7000, %v7104
      %v7137 = vadd.f32 %v7001, %v7105
      %v7138 = vadd.f32 %v7002, %v7106
      %v7139 = vadd.f32 %v7003, %v7107
      %v7140 = vadd.f32 %v7004, %v7108
      %v7141 = vadd.f32 %v7005, %v7109
      %v7142 = vadd.f32 %v7006, %v7110
      %v7143 = vadd.f32 %v7007, %v7111
      %v7144 = vadd.f32 %v7008, %v7112
      %v7145 = vadd.f32 %v7009, %v7113
      %v7146 = vadd.f32 %v7010, %v7114
      %v7147 = vadd.f32 %v7011, %v7115
      %v7148 = vadd.f32 %v7012, %v7116
      %v7149 = vadd.f32 %v7013, %v7117
      %v7150 = vadd.f32 %v7014, %v7118
      %v7151 = vadd.f32 %v7015, %v7119
      %v7152 = vadd.f32 %v7016, %v7120
      %v7153 = vlaneseq
      %v7154 = vshrl.u32 %v7153, 7
      %v7155 = vsub.s32 2, %v7154
      %v7156 = vrot.slane %v5672, %v7155
      %v7157 = vlaneseq
      %v7158 = vshrl.u32 %v7157, 7
      %v7159 = vsub.s32 2, %v7158
      %v7160 = vrot.slane %v5682, %v7159
      %v7161 = vlaneseq
      %v7162 = vshrl.u32 %v7161, 7
      %v7163 = vsub.s32 2, %v7162
      %v7164 = vrot.slane %v5692, %v7163
      %v7165 = vlaneseq
      %v7166 = vshrl.u32 %v7165, 7
      %v7167 = vsub.s32 2, %v7166
      %v7168 = vrot.slane %v5702, %v7167
      %v7169 = vlaneseq
      %v7170 = vshrl.u32 %v7169, 7
      %v7171 = vsub.s32 2, %v7170
      %v7172 = vrot.slane %v5712, %v7171
      %v7173 = vlaneseq
      %v7174 = vshrl.u32 %v7173, 7
      %v7175 = vsub.s32 2, %v7174
      %v7176 = vrot.slane %v5722, %v7175
      %v7177 = vlaneseq
      %v7178 = vshrl.u32 %v7177, 7
      %v7179 = vsub.s32 2, %v7178
      %v7180 = vrot.slane %v5732, %v7179
      %v7181 = vlaneseq
      %v7182 = vshrl.u32 %v7181, 7
      %v7183 = vsub.s32 2, %v7182
      %v7184 = vrot.slane %v5742, %v7183
      %v7185 = vlaneseq
      %v7186 = vshrl.u32 %v7185, 7
      %v7187 = vsub.s32 2, %v7186
      %v7188 = vrot.slane %v5752, %v7187
      %v7189 = vlaneseq
      %v7190 = vshrl.u32 %v7189, 7
      %v7191 = vsub.s32 2, %v7190
      %v7192 = vrot.slane %v5762, %v7191
      %v7193 = vlaneseq
      %v7194 = vshrl.u32 %v7193, 7
      %v7195 = vsub.s32 2, %v7194
      %v7196 = vrot.slane %v5772, %v7195
      %v7197 = vlaneseq
      %v7198 = vshrl.u32 %v7197, 7
      %v7199 = vsub.s32 2, %v7198
      %v7200 = vrot.slane %v5782, %v7199
      %v7201 = vlaneseq
      %v7202 = vshrl.u32 %v7201, 7
      %v7203 = vsub.s32 2, %v7202
      %v7204 = vrot.slane %v5792, %v7203
      %v7205 = vlaneseq
      %v7206 = vshrl.u32 %v7205, 7
      %v7207 = vsub.s32 2, %v7206
      %v7208 = vrot.slane %v5802, %v7207
      %v7209 = vlaneseq
      %v7210 = vshrl.u32 %v7209, 7
      %v7211 = vsub.s32 2, %v7210
      %v7212 = vrot.slane %v5812, %v7211
      %v7213 = vlaneseq
      %v7214 = vshrl.u32 %v7213, 7
      %v7215 = vsub.s32 2, %v7214
      %v7216 = vrot.slane %v5822, %v7215
      %7219 = vrot.lane.b32.xlu0 %v5767, 96
      %v7220 = vpop.permute.xlu0 %7219
      %7221 = vrot.lane.b32.xlu0 %v5772, 96
      %v7222 = vpop.permute.xlu0 %7221
      %v7225 = vmul.f32 %v7156, %v7220
      %v7226 = vmul.f32 %v7156, %v7222
      %v7227 = vmul.f32 %v7160, %v7220
      %v7228 = vmul.f32 %v7160, %v7222
      %v7229 = vmul.f32 %v7164, %v7220
      %v7230 = vmul.f32 %v7164, %v7222
      %v7231 = vmul.f32 %v7168, %v7220
      %v7232 = vmul.f32 %v7168, %v7222
      %v7233 = vmul.f32 %v7172, %v7220
      %v7234 = vmul.f32 %v7172, %v7222
      %v7235 = vmul.f32 %v7176, %v7220
      %v7236 = vmul.f32 %v7176, %v7222
      %v7237 = vmul.f32 %v7180, %v7220
      %v7238 = vmul.f32 %v7180, %v7222
      %v7239 = vmul.f32 %v7184, %v7220
      %v7240 = vmul.f32 %v7184, %v7222
      %v7241 = vmul.f32 %v7188, %v7220
      %v7242 = vmul.f32 %v7188, %v7222
      %v7243 = vmul.f32 %v7192, %v7220
      %v7244 = vmul.f32 %v7192, %v7222
      %v7245 = vmul.f32 %v7196, %v7220
      %v7246 = vmul.f32 %v7196, %v7222
      %v7247 = vmul.f32 %v7200, %v7220
      %v7248 = vmul.f32 %v7200, %v7222
      %v7249 = vmul.f32 %v7204, %v7220
      %v7250 = vmul.f32 %v7204, %v7222
      %v7251 = vmul.f32 %v7208, %v7220
      %v7252 = vmul.f32 %v7208, %v7222
      %v7253 = vmul.f32 %v7212, %v7220
      %v7254 = vmul.f32 %v7212, %v7222
      %v7255 = vmul.f32 %v7216, %v7220
      %v7256 = vmul.f32 %v7216, %v7222
      %v7257 = vadd.f32 %v7121, %v7225
      %v7258 = vadd.f32 %v7122, %v7226
      %v7259 = vadd.f32 %v7123, %v7227
      %v7260 = vadd.f32 %v7124, %v7228
      %v7261 = vadd.f32 %v7125, %v7229
      %v7262 = vadd.f32 %v7126, %v7230
      %v7263 = vadd.f32 %v7127, %v7231
      %v7264 = vadd.f32 %v7128, %v7232
      %v7265 = vadd.f32 %v7129, %v7233
      %v7266 = vadd.f32 %v7130, %v7234
      %v7267 = vadd.f32 %v7131, %v7235
      %v7268 = vadd.f32 %v7132, %v7236
      %v7269 = vadd.f32 %v7133, %v7237
      %v7270 = vadd.f32 %v7134, %v7238
      %v7271 = vadd.f32 %v7135, %v7239
      %v7272 = vadd.f32 %v7136, %v7240
      %v7273 = vadd.f32 %v7137, %v7241
      %v7274 = vadd.f32 %v7138, %v7242
      %v7275 = vadd.f32 %v7139, %v7243
      %v7276 = vadd.f32 %v7140, %v7244
      %v7277 = vadd.f32 %v7141, %v7245
      %v7278 = vadd.f32 %v7142, %v7246
      %v7279 = vadd.f32 %v7143, %v7247
      %v7280 = vadd.f32 %v7144, %v7248
      %v7281 = vadd.f32 %v7145, %v7249
      %v7282 = vadd.f32 %v7146, %v7250
      %v7283 = vadd.f32 %v7147, %v7251
      %v7284 = vadd.f32 %v7148, %v7252
      %v7285 = vadd.f32 %v7149, %v7253
      %v7286 = vadd.f32 %v7150, %v7254
      %v7287 = vadd.f32 %v7151, %v7255
      %v7288 = vadd.f32 %v7152, %v7256
      %v7289 = vlaneseq
      %v7290 = vshrl.u32 %v7289, 7
      %v7291 = vsub.s32 3, %v7290
      %v7292 = vrot.slane %v5672, %v7291
      %v7293 = vlaneseq
      %v7294 = vshrl.u32 %v7293, 7
      %v7295 = vsub.s32 3, %v7294
      %v7296 = vrot.slane %v5682, %v7295
      %v7297 = vlaneseq
      %v7298 = vshrl.u32 %v7297, 7
      %v7299 = vsub.s32 3, %v7298
      %v7300 = vrot.slane %v5692, %v7299
      %v7301 = vlaneseq
      %v7302 = vshrl.u32 %v7301, 7
      %v7303 = vsub.s32 3, %v7302
      %v7304 = vrot.slane %v5702, %v7303
      %v7305 = vlaneseq
      %v7306 = vshrl.u32 %v7305, 7
      %v7307 = vsub.s32 3, %v7306
      %v7308 = vrot.slane %v5712, %v7307
      %v7309 = vlaneseq
      %v7310 = vshrl.u32 %v7309, 7
      %v7311 = vsub.s32 3, %v7310
      %v7312 = vrot.slane %v5722, %v7311
      %v7313 = vlaneseq
      %v7314 = vshrl.u32 %v7313, 7
      %v7315 = vsub.s32 3, %v7314
      %v7316 = vrot.slane %v5732, %v7315
      %v7317 = vlaneseq
      %v7318 = vshrl.u32 %v7317, 7
      %v7319 = vsub.s32 3, %v7318
      %v7320 = vrot.slane %v5742, %v7319
      %v7321 = vlaneseq
      %v7322 = vshrl.u32 %v7321, 7
      %v7323 = vsub.s32 3, %v7322
      %v7324 = vrot.slane %v5752, %v7323
      %v7325 = vlaneseq
      %v7326 = vshrl.u32 %v7325, 7
      %v7327 = vsub.s32 3, %v7326
      %v7328 = vrot.slane %v5762, %v7327
      %v7329 = vlaneseq
      %v7330 = vshrl.u32 %v7329, 7
      %v7331 = vsub.s32 3, %v7330
      %v7332 = vrot.slane %v5772, %v7331
      %v7333 = vlaneseq
      %v7334 = vshrl.u32 %v7333, 7
      %v7335 = vsub.s32 3, %v7334
      %v7336 = vrot.slane %v5782, %v7335
      %v7337 = vlaneseq
      %v7338 = vshrl.u32 %v7337, 7
      %v7339 = vsub.s32 3, %v7338
      %v7340 = vrot.slane %v5792, %v7339
      %v7341 = vlaneseq
      %v7342 = vshrl.u32 %v7341, 7
      %v7343 = vsub.s32 3, %v7342
      %v7344 = vrot.slane %v5802, %v7343
      %v7345 = vlaneseq
      %v7346 = vshrl.u32 %v7345, 7
      %v7347 = vsub.s32 3, %v7346
      %v7348 = vrot.slane %v5812, %v7347
      %v7349 = vlaneseq
      %v7350 = vshrl.u32 %v7349, 7
      %v7351 = vsub.s32 3, %v7350
      %v7352 = vrot.slane %v5822, %v7351
      %7355 = vrot.lane.b32.xlu0 %v5777, 96
      %v7356 = vpop.permute.xlu0 %7355
      %7357 = vrot.lane.b32.xlu0 %v5782, 96
      %v7358 = vpop.permute.xlu0 %7357
      %v7361 = vmul.f32 %v7292, %v7356
      %v7362 = vmul.f32 %v7292, %v7358
      %v7363 = vmul.f32 %v7296, %v7356
      %v7364 = vmul.f32 %v7296, %v7358
      %v7365 = vmul.f32 %v7300, %v7356
      %v7366 = vmul.f32 %v7300, %v7358
      %v7367 = vmul.f32 %v7304, %v7356
      %v7368 = vmul.f32 %v7304, %v7358
      %v7369 = vmul.f32 %v7308, %v7356
      %v7370 = vmul.f32 %v7308, %v7358
      %v7371 = vmul.f32 %v7312, %v7356
      %v7372 = vmul.f32 %v7312, %v7358
      %v7373 = vmul.f32 %v7316, %v7356
      %v7374 = vmul.f32 %v7316, %v7358
      %v7375 = vmul.f32 %v7320, %v7356
      %v7376 = vmul.f32 %v7320, %v7358
      %v7377 = vmul.f32 %v7324, %v7356
      %v7378 = vmul.f32 %v7324, %v7358
      %v7379 = vmul.f32 %v7328, %v7356
      %v7380 = vmul.f32 %v7328, %v7358
      %v7381 = vmul.f32 %v7332, %v7356
      %v7382 = vmul.f32 %v7332, %v7358
      %v7383 = vmul.f32 %v7336, %v7356
      %v7384 = vmul.f32 %v7336, %v7358
      %v7385 = vmul.f32 %v7340, %v7356
      %v7386 = vmul.f32 %v7340, %v7358
      %v7387 = vmul.f32 %v7344, %v7356
      %v7388 = vmul.f32 %v7344, %v7358
      %v7389 = vmul.f32 %v7348, %v7356
      %v7390 = vmul.f32 %v7348, %v7358
      %v7391 = vmul.f32 %v7352, %v7356
      %v7392 = vmul.f32 %v7352, %v7358
      %v7393 = vadd.f32 %v7257, %v7361
      %v7394 = vadd.f32 %v7258, %v7362
      %v7395 = vadd.f32 %v7259, %v7363
      %v7396 = vadd.f32 %v7260, %v7364
      %v7397 = vadd.f32 %v7261, %v7365
      %v7398 = vadd.f32 %v7262, %v7366
      %v7399 = vadd.f32 %v7263, %v7367
      %v7400 = vadd.f32 %v7264, %v7368
      %v7401 = vadd.f32 %v7265, %v7369
      %v7402 = vadd.f32 %v7266, %v7370
      %v7403 = vadd.f32 %v7267, %v7371
      %v7404 = vadd.f32 %v7268, %v7372
      %v7405 = vadd.f32 %v7269, %v7373
      %v7406 = vadd.f32 %v7270, %v7374
      %v7407 = vadd.f32 %v7271, %v7375
      %v7408 = vadd.f32 %v7272, %v7376
      %v7409 = vadd.f32 %v7273, %v7377
      %v7410 = vadd.f32 %v7274, %v7378
      %v7411 = vadd.f32 %v7275, %v7379
      %v7412 = vadd.f32 %v7276, %v7380
      %v7413 = vadd.f32 %v7277, %v7381
      %v7414 = vadd.f32 %v7278, %v7382
      %v7415 = vadd.f32 %v7279, %v7383
      %v7416 = vadd.f32 %v7280, %v7384
      %v7417 = vadd.f32 %v7281, %v7385
      %v7418 = vadd.f32 %v7282, %v7386
      %v7419 = vadd.f32 %v7283, %v7387
      %v7420 = vadd.f32 %v7284, %v7388
      %v7421 = vadd.f32 %v7285, %v7389
      %v7422 = vadd.f32 %v7286, %v7390
      %v7423 = vadd.f32 %v7287, %v7391
      %v7424 = vadd.f32 %v7288, %v7392
      %v7425 = vlaneseq
      %v7426 = vshrl.u32 %v7425, 7
      %v7427 = vsub.s32 4, %v7426
      %v7428 = vrot.slane %v5672, %v7427
      %v7429 = vlaneseq
      %v7430 = vshrl.u32 %v7429, 7
      %v7431 = vsub.s32 4, %v7430
      %v7432 = vrot.slane %v5682, %v7431
      %v7433 = vlaneseq
      %v7434 = vshrl.u32 %v7433, 7
      %v7435 = vsub.s32 4, %v7434
      %v7436 = vrot.slane %v5692, %v7435
      %v7437 = vlaneseq
      %v7438 = vshrl.u32 %v7437, 7
      %v7439 = vsub.s32 4, %v7438
      %v7440 = vrot.slane %v5702, %v7439
      %v7441 = vlaneseq
      %v7442 = vshrl.u32 %v7441, 7
      %v7443 = vsub.s32 4, %v7442
      %v7444 = vrot.slane %v5712, %v7443
      %v7445 = vlaneseq
      %v7446 = vshrl.u32 %v7445, 7
      %v7447 = vsub.s32 4, %v7446
      %v7448 = vrot.slane %v5722, %v7447
      %v7449 = vlaneseq
      %v7450 = vshrl.u32 %v7449, 7
      %v7451 = vsub.s32 4, %v7450
      %v7452 = vrot.slane %v5732, %v7451
      %v7453 = vlaneseq
      %v7454 = vshrl.u32 %v7453, 7
      %v7455 = vsub.s32 4, %v7454
      %v7456 = vrot.slane %v5742, %v7455
      %v7457 = vlaneseq
      %v7458 = vshrl.u32 %v7457, 7
      %v7459 = vsub.s32 4, %v7458
      %v7460 = vrot.slane %v5752, %v7459
      %v7461 = vlaneseq
      %v7462 = vshrl.u32 %v7461, 7
      %v7463 = vsub.s32 4, %v7462
      %v7464 = vrot.slane %v5762, %v7463
      %v7465 = vlaneseq
      %v7466 = vshrl.u32 %v7465, 7
      %v7467 = vsub.s32 4, %v7466
      %v7468 = vrot.slane %v5772, %v7467
      %v7469 = vlaneseq
      %v7470 = vshrl.u32 %v7469, 7
      %v7471 = vsub.s32 4, %v7470
      %v7472 = vrot.slane %v5782, %v7471
      %v7473 = vlaneseq
      %v7474 = vshrl.u32 %v7473, 7
      %v7475 = vsub.s32 4, %v7474
      %v7476 = vrot.slane %v5792, %v7475
      %v7477 = vlaneseq
      %v7478 = vshrl.u32 %v7477, 7
      %v7479 = vsub.s32 4, %v7478
      %v7480 = vrot.slane %v5802, %v7479
      %v7481 = vlaneseq
      %v7482 = vshrl.u32 %v7481, 7
      %v7483 = vsub.s32 4, %v7482
      %v7484 = vrot.slane %v5812, %v7483
      %v7485 = vlaneseq
      %v7486 = vshrl.u32 %v7485, 7
      %v7487 = vsub.s32 4, %v7486
      %v7488 = vrot.slane %v5822, %v7487
      %7491 = vrot.lane.b32.xlu0 %v5787, 96
      %v7492 = vpop.permute.xlu0 %7491
      %7493 = vrot.lane.b32.xlu0 %v5792, 96
      %v7494 = vpop.permute.xlu0 %7493
      %v7497 = vmul.f32 %v7428, %v7492
      %v7498 = vmul.f32 %v7428, %v7494
      %v7499 = vmul.f32 %v7432, %v7492
      %v7500 = vmul.f32 %v7432, %v7494
      %v7501 = vmul.f32 %v7436, %v7492
      %v7502 = vmul.f32 %v7436, %v7494
      %v7503 = vmul.f32 %v7440, %v7492
      %v7504 = vmul.f32 %v7440, %v7494
      %v7505 = vmul.f32 %v7444, %v7492
      %v7506 = vmul.f32 %v7444, %v7494
      %v7507 = vmul.f32 %v7448, %v7492
      %v7508 = vmul.f32 %v7448, %v7494
      %v7509 = vmul.f32 %v7452, %v7492
      %v7510 = vmul.f32 %v7452, %v7494
      %v7511 = vmul.f32 %v7456, %v7492
      %v7512 = vmul.f32 %v7456, %v7494
      %v7513 = vmul.f32 %v7460, %v7492
      %v7514 = vmul.f32 %v7460, %v7494
      %v7515 = vmul.f32 %v7464, %v7492
      %v7516 = vmul.f32 %v7464, %v7494
      %v7517 = vmul.f32 %v7468, %v7492
      %v7518 = vmul.f32 %v7468, %v7494
      %v7519 = vmul.f32 %v7472, %v7492
      %v7520 = vmul.f32 %v7472, %v7494
      %v7521 = vmul.f32 %v7476, %v7492
      %v7522 = vmul.f32 %v7476, %v7494
      %v7523 = vmul.f32 %v7480, %v7492
      %v7524 = vmul.f32 %v7480, %v7494
      %v7525 = vmul.f32 %v7484, %v7492
      %v7526 = vmul.f32 %v7484, %v7494
      %v7527 = vmul.f32 %v7488, %v7492
      %v7528 = vmul.f32 %v7488, %v7494
      %v7529 = vadd.f32 %v7393, %v7497
      %v7530 = vadd.f32 %v7394, %v7498
      %v7531 = vadd.f32 %v7395, %v7499
      %v7532 = vadd.f32 %v7396, %v7500
      %v7533 = vadd.f32 %v7397, %v7501
      %v7534 = vadd.f32 %v7398, %v7502
      %v7535 = vadd.f32 %v7399, %v7503
      %v7536 = vadd.f32 %v7400, %v7504
      %v7537 = vadd.f32 %v7401, %v7505
      %v7538 = vadd.f32 %v7402, %v7506
      %v7539 = vadd.f32 %v7403, %v7507
      %v7540 = vadd.f32 %v7404, %v7508
      %v7541 = vadd.f32 %v7405, %v7509
      %v7542 = vadd.f32 %v7406, %v7510
      %v7543 = vadd.f32 %v7407, %v7511
      %v7544 = vadd.f32 %v7408, %v7512
      %v7545 = vadd.f32 %v7409, %v7513
      %v7546 = vadd.f32 %v7410, %v7514
      %v7547 = vadd.f32 %v7411, %v7515
      %v7548 = vadd.f32 %v7412, %v7516
      %v7549 = vadd.f32 %v7413, %v7517
      %v7550 = vadd.f32 %v7414, %v7518
      %v7551 = vadd.f32 %v7415, %v7519
      %v7552 = vadd.f32 %v7416, %v7520
      %v7553 = vadd.f32 %v7417, %v7521
      %v7554 = vadd.f32 %v7418, %v7522
      %v7555 = vadd.f32 %v7419, %v7523
      %v7556 = vadd.f32 %v7420, %v7524
      %v7557 = vadd.f32 %v7421, %v7525
      %v7558 = vadd.f32 %v7422, %v7526
      %v7559 = vadd.f32 %v7423, %v7527
      %v7560 = vadd.f32 %v7424, %v7528
      %v7561 = vlaneseq
      %v7562 = vshrl.u32 %v7561, 7
      %v7563 = vsub.s32 5, %v7562
      %v7564 = vrot.slane %v5672, %v7563
      %v7565 = vlaneseq
      %v7566 = vshrl.u32 %v7565, 7
      %v7567 = vsub.s32 5, %v7566
      %v7568 = vrot.slane %v5682, %v7567
      %v7569 = vlaneseq
      %v7570 = vshrl.u32 %v7569, 7
      %v7571 = vsub.s32 5, %v7570
      %v7572 = vrot.slane %v5692, %v7571
      %v7573 = vlaneseq
      %v7574 = vshrl.u32 %v7573, 7
      %v7575 = vsub.s32 5, %v7574
      %v7576 = vrot.slane %v5702, %v7575
      %v7577 = vlaneseq
      %v7578 = vshrl.u32 %v7577, 7
      %v7579 = vsub.s32 5, %v7578
      %v7580 = vrot.slane %v5712, %v7579
      %v7581 = vlaneseq
      %v7582 = vshrl.u32 %v7581, 7
      %v7583 = vsub.s32 5, %v7582
      %v7584 = vrot.slane %v5722, %v7583
      %v7585 = vlaneseq
      %v7586 = vshrl.u32 %v7585, 7
      %v7587 = vsub.s32 5, %v7586
      %v7588 = vrot.slane %v5732, %v7587
      %v7589 = vlaneseq
      %v7590 = vshrl.u32 %v7589, 7
      %v7591 = vsub.s32 5, %v7590
      %v7592 = vrot.slane %v5742, %v7591
      %v7593 = vlaneseq
      %v7594 = vshrl.u32 %v7593, 7
      %v7595 = vsub.s32 5, %v7594
      %v7596 = vrot.slane %v5752, %v7595
      %v7597 = vlaneseq
      %v7598 = vshrl.u32 %v7597, 7
      %v7599 = vsub.s32 5, %v7598
      %v7600 = vrot.slane %v5762, %v7599
      %v7601 = vlaneseq
      %v7602 = vshrl.u32 %v7601, 7
      %v7603 = vsub.s32 5, %v7602
      %v7604 = vrot.slane %v5772, %v7603
      %v7605 = vlaneseq
      %v7606 = vshrl.u32 %v7605, 7
      %v7607 = vsub.s32 5, %v7606
      %v7608 = vrot.slane %v5782, %v7607
      %v7609 = vlaneseq
      %v7610 = vshrl.u32 %v7609, 7
      %v7611 = vsub.s32 5, %v7610
      %v7612 = vrot.slane %v5792, %v7611
      %v7613 = vlaneseq
      %v7614 = vshrl.u32 %v7613, 7
      %v7615 = vsub.s32 5, %v7614
      %v7616 = vrot.slane %v5802, %v7615
      %v7617 = vlaneseq
      %v7618 = vshrl.u32 %v7617, 7
      %v7619 = vsub.s32 5, %v7618
      %v7620 = vrot.slane %v5812, %v7619
      %v7621 = vlaneseq
      %v7622 = vshrl.u32 %v7621, 7
      %v7623 = vsub.s32 5, %v7622
      %v7624 = vrot.slane %v5822, %v7623
      %7627 = vrot.lane.b32.xlu0 %v5797, 96
      %v7628 = vpop.permute.xlu0 %7627
      %7629 = vrot.lane.b32.xlu0 %v5802, 96
      %v7630 = vpop.permute.xlu0 %7629
      %v7633 = vmul.f32 %v7564, %v7628
      %v7634 = vmul.f32 %v7564, %v7630
      %v7635 = vmul.f32 %v7568, %v7628
      %v7636 = vmul.f32 %v7568, %v7630
      %v7637 = vmul.f32 %v7572, %v7628
      %v7638 = vmul.f32 %v7572, %v7630
      %v7639 = vmul.f32 %v7576, %v7628
      %v7640 = vmul.f32 %v7576, %v7630
      %v7641 = vmul.f32 %v7580, %v7628
      %v7642 = vmul.f32 %v7580, %v7630
      %v7643 = vmul.f32 %v7584, %v7628
      %v7644 = vmul.f32 %v7584, %v7630
      %v7645 = vmul.f32 %v7588, %v7628
      %v7646 = vmul.f32 %v7588, %v7630
      %v7647 = vmul.f32 %v7592, %v7628
      %v7648 = vmul.f32 %v7592, %v7630
      %v7649 = vmul.f32 %v7596, %v7628
      %v7650 = vmul.f32 %v7596, %v7630
      %v7651 = vmul.f32 %v7600, %v7628
      %v7652 = vmul.f32 %v7600, %v7630
      %v7653 = vmul.f32 %v7604, %v7628
      %v7654 = vmul.f32 %v7604, %v7630
      %v7655 = vmul.f32 %v7608, %v7628
      %v7656 = vmul.f32 %v7608, %v7630
      %v7657 = vmul.f32 %v7612, %v7628
      %v7658 = vmul.f32 %v7612, %v7630
      %v7659 = vmul.f32 %v7616, %v7628
      %v7660 = vmul.f32 %v7616, %v7630
      %v7661 = vmul.f32 %v7620, %v7628
      %v7662 = vmul.f32 %v7620, %v7630
      %v7663 = vmul.f32 %v7624, %v7628
      %v7664 = vmul.f32 %v7624, %v7630
      %v7665 = vadd.f32 %v7529, %v7633
      %v7666 = vadd.f32 %v7530, %v7634
      %v7667 = vadd.f32 %v7531, %v7635
      %v7668 = vadd.f32 %v7532, %v7636
      %v7669 = vadd.f32 %v7533, %v7637
      %v7670 = vadd.f32 %v7534, %v7638
      %v7671 = vadd.f32 %v7535, %v7639
      %v7672 = vadd.f32 %v7536, %v7640
      %v7673 = vadd.f32 %v7537, %v7641
      %v7674 = vadd.f32 %v7538, %v7642
      %v7675 = vadd.f32 %v7539, %v7643
      %v7676 = vadd.f32 %v7540, %v7644
      %v7677 = vadd.f32 %v7541, %v7645
      %v7678 = vadd.f32 %v7542, %v7646
      %v7679 = vadd.f32 %v7543, %v7647
      %v7680 = vadd.f32 %v7544, %v7648
      %v7681 = vadd.f32 %v7545, %v7649
      %v7682 = vadd.f32 %v7546, %v7650
      %v7683 = vadd.f32 %v7547, %v7651
      %v7684 = vadd.f32 %v7548, %v7652
      %v7685 = vadd.f32 %v7549, %v7653
      %v7686 = vadd.f32 %v7550, %v7654
      %v7687 = vadd.f32 %v7551, %v7655
      %v7688 = vadd.f32 %v7552, %v7656
      %v7689 = vadd.f32 %v7553, %v7657
      %v7690 = vadd.f32 %v7554, %v7658
      %v7691 = vadd.f32 %v7555, %v7659
      %v7692 = vadd.f32 %v7556, %v7660
      %v7693 = vadd.f32 %v7557, %v7661
      %v7694 = vadd.f32 %v7558, %v7662
      %v7695 = vadd.f32 %v7559, %v7663
      %v7696 = vadd.f32 %v7560, %v7664
      %v7697 = vlaneseq
      %v7698 = vshrl.u32 %v7697, 7
      %v7699 = vsub.s32 6, %v7698
      %v7700 = vrot.slane %v5672, %v7699
      %v7701 = vlaneseq
      %v7702 = vshrl.u32 %v7701, 7
      %v7703 = vsub.s32 6, %v7702
      %v7704 = vrot.slane %v5682, %v7703
      %v7705 = vlaneseq
      %v7706 = vshrl.u32 %v7705, 7
      %v7707 = vsub.s32 6, %v7706
      %v7708 = vrot.slane %v5692, %v7707
      %v7709 = vlaneseq
      %v7710 = vshrl.u32 %v7709, 7
      %v7711 = vsub.s32 6, %v7710
      %v7712 = vrot.slane %v5702, %v7711
      %v7713 = vlaneseq
      %v7714 = vshrl.u32 %v7713, 7
      %v7715 = vsub.s32 6, %v7714
      %v7716 = vrot.slane %v5712, %v7715
      %v7717 = vlaneseq
      %v7718 = vshrl.u32 %v7717, 7
      %v7719 = vsub.s32 6, %v7718
      %v7720 = vrot.slane %v5722, %v7719
      %v7721 = vlaneseq
      %v7722 = vshrl.u32 %v7721, 7
      %v7723 = vsub.s32 6, %v7722
      %v7724 = vrot.slane %v5732, %v7723
      %v7725 = vlaneseq
      %v7726 = vshrl.u32 %v7725, 7
      %v7727 = vsub.s32 6, %v7726
      %v7728 = vrot.slane %v5742, %v7727
      %v7729 = vlaneseq
      %v7730 = vshrl.u32 %v7729, 7
      %v7731 = vsub.s32 6, %v7730
      %v7732 = vrot.slane %v5752, %v7731
      %v7733 = vlaneseq
      %v7734 = vshrl.u32 %v7733, 7
      %v7735 = vsub.s32 6, %v7734
      %v7736 = vrot.slane %v5762, %v7735
      %v7737 = vlaneseq
      %v7738 = vshrl.u32 %v7737, 7
      %v7739 = vsub.s32 6, %v7738
      %v7740 = vrot.slane %v5772, %v7739
      %v7741 = vlaneseq
      %v7742 = vshrl.u32 %v7741, 7
      %v7743 = vsub.s32 6, %v7742
      %v7744 = vrot.slane %v5782, %v7743
      %v7745 = vlaneseq
      %v7746 = vshrl.u32 %v7745, 7
      %v7747 = vsub.s32 6, %v7746
      %v7748 = vrot.slane %v5792, %v7747
      %v7749 = vlaneseq
      %v7750 = vshrl.u32 %v7749, 7
      %v7751 = vsub.s32 6, %v7750
      %v7752 = vrot.slane %v5802, %v7751
      %v7753 = vlaneseq
      %v7754 = vshrl.u32 %v7753, 7
      %v7755 = vsub.s32 6, %v7754
      %v7756 = vrot.slane %v5812, %v7755
      %v7757 = vlaneseq
      %v7758 = vshrl.u32 %v7757, 7
      %v7759 = vsub.s32 6, %v7758
      %v7760 = vrot.slane %v5822, %v7759
      %7763 = vrot.lane.b32.xlu0 %v5807, 96
      %v7764 = vpop.permute.xlu0 %7763
      %7765 = vrot.lane.b32.xlu0 %v5812, 96
      %v7766 = vpop.permute.xlu0 %7765
      %v7769 = vmul.f32 %v7700, %v7764
      %v7770 = vmul.f32 %v7700, %v7766
      %v7771 = vmul.f32 %v7704, %v7764
      %v7772 = vmul.f32 %v7704, %v7766
      %v7773 = vmul.f32 %v7708, %v7764
      %v7774 = vmul.f32 %v7708, %v7766
      %v7775 = vmul.f32 %v7712, %v7764
      %v7776 = vmul.f32 %v7712, %v7766
      %v7777 = vmul.f32 %v7716, %v7764
      %v7778 = vmul.f32 %v7716, %v7766
      %v7779 = vmul.f32 %v7720, %v7764
      %v7780 = vmul.f32 %v7720, %v7766
      %v7781 = vmul.f32 %v7724, %v7764
      %v7782 = vmul.f32 %v7724, %v7766
      %v7783 = vmul.f32 %v7728, %v7764
      %v7784 = vmul.f32 %v7728, %v7766
      %v7785 = vmul.f32 %v7732, %v7764
      %v7786 = vmul.f32 %v7732, %v7766
      %v7787 = vmul.f32 %v7736, %v7764
      %v7788 = vmul.f32 %v7736, %v7766
      %v7789 = vmul.f32 %v7740, %v7764
      %v7790 = vmul.f32 %v7740, %v7766
      %v7791 = vmul.f32 %v7744, %v7764
      %v7792 = vmul.f32 %v7744, %v7766
      %v7793 = vmul.f32 %v7748, %v7764
      %v7794 = vmul.f32 %v7748, %v7766
      %v7795 = vmul.f32 %v7752, %v7764
      %v7796 = vmul.f32 %v7752, %v7766
      %v7797 = vmul.f32 %v7756, %v7764
      %v7798 = vmul.f32 %v7756, %v7766
      %v7799 = vmul.f32 %v7760, %v7764
      %v7800 = vmul.f32 %v7760, %v7766
      %v7801 = vadd.f32 %v7665, %v7769
      %v7802 = vadd.f32 %v7666, %v7770
      %v7803 = vadd.f32 %v7667, %v7771
      %v7804 = vadd.f32 %v7668, %v7772
      %v7805 = vadd.f32 %v7669, %v7773
      %v7806 = vadd.f32 %v7670, %v7774
      %v7807 = vadd.f32 %v7671, %v7775
      %v7808 = vadd.f32 %v7672, %v7776
      %v7809 = vadd.f32 %v7673, %v7777
      %v7810 = vadd.f32 %v7674, %v7778
      %v7811 = vadd.f32 %v7675, %v7779
      %v7812 = vadd.f32 %v7676, %v7780
      %v7813 = vadd.f32 %v7677, %v7781
      %v7814 = vadd.f32 %v7678, %v7782
      %v7815 = vadd.f32 %v7679, %v7783
      %v7816 = vadd.f32 %v7680, %v7784
      %v7817 = vadd.f32 %v7681, %v7785
      %v7818 = vadd.f32 %v7682, %v7786
      %v7819 = vadd.f32 %v7683, %v7787
      %v7820 = vadd.f32 %v7684, %v7788
      %v7821 = vadd.f32 %v7685, %v7789
      %v7822 = vadd.f32 %v7686, %v7790
      %v7823 = vadd.f32 %v7687, %v7791
      %v7824 = vadd.f32 %v7688, %v7792
      %v7825 = vadd.f32 %v7689, %v7793
      %v7826 = vadd.f32 %v7690, %v7794
      %v7827 = vadd.f32 %v7691, %v7795
      %v7828 = vadd.f32 %v7692, %v7796
      %v7829 = vadd.f32 %v7693, %v7797
      %v7830 = vadd.f32 %v7694, %v7798
      %v7831 = vadd.f32 %v7695, %v7799
      %v7832 = vadd.f32 %v7696, %v7800
      %v7833 = vlaneseq
      %v7834 = vshrl.u32 %v7833, 7
      %v7835 = vsub.s32 7, %v7834
      %v7836 = vrot.slane %v5672, %v7835
      %v7837 = vlaneseq
      %v7838 = vshrl.u32 %v7837, 7
      %v7839 = vsub.s32 7, %v7838
      %v7840 = vrot.slane %v5682, %v7839
      %v7841 = vlaneseq
      %v7842 = vshrl.u32 %v7841, 7
      %v7843 = vsub.s32 7, %v7842
      %v7844 = vrot.slane %v5692, %v7843
      %v7845 = vlaneseq
      %v7846 = vshrl.u32 %v7845, 7
      %v7847 = vsub.s32 7, %v7846
      %v7848 = vrot.slane %v5702, %v7847
      %v7849 = vlaneseq
      %v7850 = vshrl.u32 %v7849, 7
      %v7851 = vsub.s32 7, %v7850
      %v7852 = vrot.slane %v5712, %v7851
      %v7853 = vlaneseq
      %v7854 = vshrl.u32 %v7853, 7
      %v7855 = vsub.s32 7, %v7854
      %v7856 = vrot.slane %v5722, %v7855
      %v7857 = vlaneseq
      %v7858 = vshrl.u32 %v7857, 7
      %v7859 = vsub.s32 7, %v7858
      %v7860 = vrot.slane %v5732, %v7859
      %v7861 = vlaneseq
      %v7862 = vshrl.u32 %v7861, 7
      %v7863 = vsub.s32 7, %v7862
      %v7864 = vrot.slane %v5742, %v7863
      %v7865 = vlaneseq
      %v7866 = vshrl.u32 %v7865, 7
      %v7867 = vsub.s32 7, %v7866
      %v7868 = vrot.slane %v5752, %v7867
      %v7869 = vlaneseq
      %v7870 = vshrl.u32 %v7869, 7
      %v7871 = vsub.s32 7, %v7870
      %v7872 = vrot.slane %v5762, %v7871
      %v7873 = vlaneseq
      %v7874 = vshrl.u32 %v7873, 7
      %v7875 = vsub.s32 7, %v7874
      %v7876 = vrot.slane %v5772, %v7875
      %v7877 = vlaneseq
      %v7878 = vshrl.u32 %v7877, 7
      %v7879 = vsub.s32 7, %v7878
      %v7880 = vrot.slane %v5782, %v7879
      %v7881 = vlaneseq
      %v7882 = vshrl.u32 %v7881, 7
      %v7883 = vsub.s32 7, %v7882
      %v7884 = vrot.slane %v5792, %v7883
      %v7885 = vlaneseq
      %v7886 = vshrl.u32 %v7885, 7
      %v7887 = vsub.s32 7, %v7886
      %v7888 = vrot.slane %v5802, %v7887
      %v7889 = vlaneseq
      %v7890 = vshrl.u32 %v7889, 7
      %v7891 = vsub.s32 7, %v7890
      %v7892 = vrot.slane %v5812, %v7891
      %v7893 = vlaneseq
      %v7894 = vshrl.u32 %v7893, 7
      %v7895 = vsub.s32 7, %v7894
      %v7896 = vrot.slane %v5822, %v7895
      %7899 = vrot.lane.b32.xlu0 %v5817, 96
      %v7900 = vpop.permute.xlu0 %7899
      %7901 = vrot.lane.b32.xlu0 %v5822, 96
      %v7902 = vpop.permute.xlu0 %7901
      %v7905 = vmul.f32 %v7836, %v7900
      %v7906 = vmul.f32 %v7836, %v7902
      %v7907 = vmul.f32 %v7840, %v7900
      %v7908 = vmul.f32 %v7840, %v7902
      %v7909 = vmul.f32 %v7844, %v7900
      %v7910 = vmul.f32 %v7844, %v7902
      %v7911 = vmul.f32 %v7848, %v7900
      %v7912 = vmul.f32 %v7848, %v7902
      %v7913 = vmul.f32 %v7852, %v7900
      %v7914 = vmul.f32 %v7852, %v7902
      %v7915 = vmul.f32 %v7856, %v7900
      %v7916 = vmul.f32 %v7856, %v7902
      %v7917 = vmul.f32 %v7860, %v7900
      %v7918 = vmul.f32 %v7860, %v7902
      %v7919 = vmul.f32 %v7864, %v7900
      %v7920 = vmul.f32 %v7864, %v7902
      %v7921 = vmul.f32 %v7868, %v7900
      %v7922 = vmul.f32 %v7868, %v7902
      %v7923 = vmul.f32 %v7872, %v7900
      %v7924 = vmul.f32 %v7872, %v7902
      %v7925 = vmul.f32 %v7876, %v7900
      %v7926 = vmul.f32 %v7876, %v7902
      %v7927 = vmul.f32 %v7880, %v7900
      %v7928 = vmul.f32 %v7880, %v7902
      %v7929 = vmul.f32 %v7884, %v7900
      %v7930 = vmul.f32 %v7884, %v7902
      %v7931 = vmul.f32 %v7888, %v7900
      %v7932 = vmul.f32 %v7888, %v7902
      %v7933 = vmul.f32 %v7892, %v7900
      %v7934 = vmul.f32 %v7892, %v7902
      %v7935 = vmul.f32 %v7896, %v7900
      %v7936 = vmul.f32 %v7896, %v7902
      %v7937 = vadd.f32 %v7801, %v7905
      %v7938 = vadd.f32 %v7802, %v7906
      %v7939 = vadd.f32 %v7803, %v7907
      %v7940 = vadd.f32 %v7804, %v7908
      %v7941 = vadd.f32 %v7805, %v7909
      %v7942 = vadd.f32 %v7806, %v7910
      %v7943 = vadd.f32 %v7807, %v7911
      %v7944 = vadd.f32 %v7808, %v7912
      %v7945 = vadd.f32 %v7809, %v7913
      %v7946 = vadd.f32 %v7810, %v7914
      %v7947 = vadd.f32 %v7811, %v7915
      %v7948 = vadd.f32 %v7812, %v7916
      %v7949 = vadd.f32 %v7813, %v7917
      %v7950 = vadd.f32 %v7814, %v7918
      %v7951 = vadd.f32 %v7815, %v7919
      %v7952 = vadd.f32 %v7816, %v7920
      %v7953 = vadd.f32 %v7817, %v7921
      %v7954 = vadd.f32 %v7818, %v7922
      %v7955 = vadd.f32 %v7819, %v7923
      %v7956 = vadd.f32 %v7820, %v7924
      %v7957 = vadd.f32 %v7821, %v7925
      %v7958 = vadd.f32 %v7822, %v7926
      %v7959 = vadd.f32 %v7823, %v7927
      %v7960 = vadd.f32 %v7824, %v7928
      %v7961 = vadd.f32 %v7825, %v7929
      %v7962 = vadd.f32 %v7826, %v7930
      %v7963 = vadd.f32 %v7827, %v7931
      %v7964 = vadd.f32 %v7828, %v7932
      %v7965 = vadd.f32 %v7829, %v7933
      %v7966 = vadd.f32 %v7830, %v7934
      %v7967 = vadd.f32 %v7831, %v7935
      %v7968 = vadd.f32 %v7832, %v7936
      %v7969 = vmul.f32 %v7937, 0.25
      %v7970 = vmul.f32 %v7938, 0.25
      %v7971 = vmul.f32 %v7939, 0.25
      %v7972 = vmul.f32 %v7940, 0.25
      %v7973 = vmul.f32 %v7941, 0.25
      %v7974 = vmul.f32 %v7942, 0.25
      %v7975 = vmul.f32 %v7943, 0.25
      %v7976 = vmul.f32 %v7944, 0.25
      %v7977 = vmul.f32 %v7945, 0.25
      %v7978 = vmul.f32 %v7946, 0.25
      %v7979 = vmul.f32 %v7947, 0.25
      %v7980 = vmul.f32 %v7948, 0.25
      %v7981 = vmul.f32 %v7949, 0.25
      %v7982 = vmul.f32 %v7950, 0.25
      %v7983 = vmul.f32 %v7951, 0.25
      %v7984 = vmul.f32 %v7952, 0.25
      %v7985 = vmul.f32 %v7953, 0.25
      %v7986 = vmul.f32 %v7954, 0.25
      %v7987 = vmul.f32 %v7955, 0.25
      %v7988 = vmul.f32 %v7956, 0.25
      %v7989 = vmul.f32 %v7957, 0.25
      %v7990 = vmul.f32 %v7958, 0.25
      %v7991 = vmul.f32 %v7959, 0.25
      %v7992 = vmul.f32 %v7960, 0.25
      %v7993 = vmul.f32 %v7961, 0.25
      %v7994 = vmul.f32 %v7962, 0.25
      %v7995 = vmul.f32 %v7963, 0.25
      %v7996 = vmul.f32 %v7964, 0.25
      %v7997 = vmul.f32 %v7965, 0.25
      %v7998 = vmul.f32 %v7966, 0.25
      %v7999 = vmul.f32 %v7967, 0.25
      %v8000 = vmul.f32 %v7968, 0.25
      %8001 = vmatprep.subr.mxu0 0.0
      %8002 = vmatpush1.msra.mxu0 %v5070
      %8003 = vmatprep.subr.mxu0 0.0
      %8004 = vmatpush1.msra.mxu0 %v5071
      %8005 = vmatprep.subr.mxu0 0.0
      %8006 = vmatpush1.msra.mxu0 %v5072
      %8007 = vmatprep.subr.mxu0 0.0
      %8008 = vmatpush1.msra.mxu0 %v5073
      %8009 = vmatprep.subr.mxu0 0.0
      %8010 = vmatpush1.msra.mxu0 0.0
      %8011 = vmatprep.subr.mxu0 0.0
      %8012 = vmatpush1.msra.mxu0 0.0
      %8013 = vmatprep.subr.mxu0 0.0
      %8014 = vmatpush1.msra.mxu0 0.0
      %8015 = vmatprep.subr.mxu0 0.0
      %8016 = vmatpush1.msra.mxu0 0.0
      %8017 = vmatprep.subr.mxu0 0.0
      %8018 = vmatpush1.msra.mxu0 0.0
      %8019 = vmatprep.subr.mxu0 0.0
      %8020 = vmatpush1.msra.mxu0 0.0
      %8021 = vmatprep.subr.mxu0 0.0
      %8022 = vmatpush1.msra.mxu0 0.0
      %8023 = vmatprep.subr.mxu0 0.0
      %8024 = vmatpush1.msra.mxu0 0.0
      %8025 = vmatprep.subr.mxu0 0.0
      %8026 = vmatpush1.msra.mxu0 0.0
      %8027 = vmatprep.subr.mxu0 0.0
      %8028 = vmatpush1.msra.mxu0 0.0
      %8029 = vmatprep.subr.mxu0 0.0
      %8030 = vmatpush1.msra.mxu0 0.0
      %8031 = vmatprep.subr.mxu0 0.0
      %8032 = vmatpush1.msra.mxu0 0.0
      %8033 = vmatprep.subr.mxu0 0.0
      %8034 = vmatpush1.msra.mxu0 0.0
      %8035 = vmatprep.subr.mxu0 0.0
      %8036 = vmatpush1.msra.mxu0 0.0
      %8037 = vmatprep.subr.mxu0 0.0
      %8038 = vmatpush1.msra.mxu0 0.0
      %8039 = vmatprep.subr.mxu0 0.0
      %8040 = vmatpush1.msra.mxu0 0.0
      %8041 = vmatprep.subr.mxu0 0.0
      %8042 = vmatpush1.msra.mxu0 0.0
      %8043 = vmatprep.subr.mxu0 0.0
      %8044 = vmatpush1.msra.mxu0 0.0
      %8045 = vmatprep.subr.mxu0 0.0
      %8046 = vmatpush1.msra.mxu0 0.0
      %8047 = vmatprep.subr.mxu0 0.0
      %8048 = vmatpush1.msra.mxu0 0.0
      %8049 = vmatprep.subr.mxu0 0.0
      %8050 = vmatpush1.msra.mxu0 0.0
      %8051 = vmatprep.subr.mxu0 0.0
      %8052 = vmatpush1.msra.mxu0 0.0
      %8053 = vmatprep.subr.mxu0 0.0
      %8054 = vmatpush1.msra.mxu0 0.0
      %8055 = vmatprep.subr.mxu0 0.0
      %8056 = vmatpush1.msra.mxu0 0.0
      %8057 = vmatprep.subr.mxu0 0.0
      %8058 = vmatpush1.msra.mxu0 0.0
      %8059 = vmatprep.subr.mxu0 0.0
      %8060 = vmatpush1.msra.mxu0 0.0
      %8061 = vmatprep.subr.mxu0 0.0
      %8062 = vmatpush1.msra.mxu0 0.0
      %8063 = vmatprep.subr.mxu0 0.0
      %8064 = vmatpush1.msra.mxu0 0.0
      %8065 = vmatprep.mubr.f32.mxu0 0.0
      %8066 = vmatmul.mubr.f32.gmra.mrb[0].mxu0 %v5082
      %v8067 = vpop.f32.mrb[0].mxu0
      %v8068 = vadd.f32 0.0, %v8067
      %v8069 = vpop.f32.mrb[0].mxu0
      %8070 = vmatprep.mubr.f32.mxu0 0.0
      %8071 = vmatmul.mubr.f32.gmra.mrb[0].mxu0 %v5085
      %v8072 = vpop.f32.mrb[0].mxu0
      %v8073 = vadd.f32 0.0, %v8072
      %v8074 = vpop.f32.mrb[0].mxu0
      %8075 = vmatprep.mubr.f32.mxu0 0.0
      %8076 = vmatmul.mubr.f32.gmra.mrb[0].mxu0 %v5088
      %v8077 = vpop.f32.mrb[0].mxu0
      %v8078 = vadd.f32 0.0, %v8077
      %v8079 = vpop.f32.mrb[0].mxu0
      %8080 = vmatprep.mubr.f32.mxu0 0.0
      %8081 = vmatmul.mubr.f32.gmra.mrb[0].mxu0 %v5091
      %v8082 = vpop.f32.mrb[0].mxu0
      %v8083 = vadd.f32 0.0, %v8082
      %v8084 = vpop.f32.mrb[0].mxu0
      %8085 = vmatprep.mubr.f32.mxu0 0.0
      %8086 = vmatmul.mubr.f32.gmra.mrb[0].mxu0 %v5094
      %v8087 = vpop.f32.mrb[0].mxu0
      %v8088 = vadd.f32 0.0, %v8087
      %v8089 = vpop.f32.mrb[0].mxu0
      %8090 = vmatprep.mubr.f32.mxu0 0.0
      %8091 = vmatmul.mubr.f32.gmra.mrb[0].mxu0 %v5097
      %v8092 = vpop.f32.mrb[0].mxu0
      %v8093 = vadd.f32 0.0, %v8092
      %v8094 = vpop.f32.mrb[0].mxu0
      %8095 = vmatprep.mubr.f32.mxu0 0.0
      %8096 = vmatmul.mubr.f32.gmra.mrb[0].mxu0 %v5100
      %v8097 = vpop.f32.mrb[0].mxu0
      %v8098 = vadd.f32 0.0, %v8097
      %v8099 = vpop.f32.mrb[0].mxu0
      %8100 = vmatprep.mubr.f32.mxu0 0.0
      %8101 = vmatmul.mubr.f32.gmra.mrb[0].mxu0 %v5103
      %v8102 = vpop.f32.mrb[0].mxu0
      %v8103 = vadd.f32 0.0, %v8102
      %v8104 = vpop.f32.mrb[0].mxu0
      %8105 = vmatprep.mubr.f32.mxu0 0.0
      %8106 = vmatmul.mubr.f32.gmra.mrb[0].mxu0 %v5106
      %v8107 = vpop.f32.mrb[0].mxu0
      %v8108 = vadd.f32 0.0, %v8107
      %v8109 = vpop.f32.mrb[0].mxu0
      %8110 = vmatprep.mubr.f32.mxu0 0.0
      %8111 = vmatmul.mubr.f32.gmra.mrb[0].mxu0 %v5109
      %v8112 = vpop.f32.mrb[0].mxu0
      %v8113 = vadd.f32 0.0, %v8112
      %v8114 = vpop.f32.mrb[0].mxu0
      %8115 = vmatprep.mubr.f32.mxu0 0.0
      %8116 = vmatmul.mubr.f32.gmra.mrb[0].mxu0 %v5112
      %v8117 = vpop.f32.mrb[0].mxu0
      %v8118 = vadd.f32 0.0, %v8117
      %v8119 = vpop.f32.mrb[0].mxu0
      %8120 = vmatprep.mubr.f32.mxu0 0.0
      %8121 = vmatmul.mubr.f32.gmra.mrb[0].mxu0 %v5115
      %v8122 = vpop.f32.mrb[0].mxu0
      %v8123 = vadd.f32 0.0, %v8122
      %v8124 = vpop.f32.mrb[0].mxu0
      %8125 = vmatprep.mubr.f32.mxu0 0.0
      %8126 = vmatmul.mubr.f32.gmra.mrb[0].mxu0 %v5118
      %v8127 = vpop.f32.mrb[0].mxu0
      %v8128 = vadd.f32 0.0, %v8127
      %v8129 = vpop.f32.mrb[0].mxu0
      %8130 = vmatprep.mubr.f32.mxu0 0.0
      %8131 = vmatmul.mubr.f32.gmra.mrb[0].mxu0 %v5121
      %v8132 = vpop.f32.mrb[0].mxu0
      %v8133 = vadd.f32 0.0, %v8132
      %v8134 = vpop.f32.mrb[0].mxu0
      %8135 = vmatprep.mubr.f32.mxu0 0.0
      %8136 = vmatmul.mubr.f32.gmra.mrb[0].mxu0 %v5124
      %v8137 = vpop.f32.mrb[0].mxu0
      %v8138 = vadd.f32 0.0, %v8137
      %v8139 = vpop.f32.mrb[0].mxu0
      %8140 = vmatprep.mubr.f32.mxu0 0.0
      %8141 = vmatmul.mubr.f32.gmra.mrb[0].mxu0 %v5127
      %v8142 = vpop.f32.mrb[0].mxu0
      %v8143 = vadd.f32 0.0, %v8142
      %v8144 = vpop.f32.mrb[0].mxu0
      %8145 = vmatprep.mubr.f32.mxu0 0.0
      %8146 = vmatmul.mubr.f32.gmra.mrb[0].mxu0 %v5130
      %v8147 = vpop.f32.mrb[0].mxu0
      %v8148 = vadd.f32 0.0, %v8147
      %v8149 = vpop.f32.mrb[0].mxu0
      %8150 = vmatprep.mubr.f32.mxu0 0.0
      %8151 = vmatmul.mubr.f32.gmra.mrb[0].mxu0 %v5133
      %v8152 = vpop.f32.mrb[0].mxu0
      %v8153 = vadd.f32 0.0, %v8152
      %v8154 = vpop.f32.mrb[0].mxu0
      %8155 = vmatprep.mubr.f32.mxu0 0.0
      %8156 = vmatmul.mubr.f32.gmra.mrb[0].mxu0 %v5136
      %v8157 = vpop.f32.mrb[0].mxu0
      %v8158 = vadd.f32 0.0, %v8157
      %v8159 = vpop.f32.mrb[0].mxu0
      %8160 = vmatprep.mubr.f32.mxu0 0.0
      %8161 = vmatmul.mubr.f32.gmra.mrb[0].mxu0 %v5139
      %v8162 = vpop.f32.mrb[0].mxu0
      %v8163 = vadd.f32 0.0, %v8162
      %v8164 = vpop.f32.mrb[0].mxu0
      %8165 = vmatprep.mubr.f32.mxu0 0.0
      %8166 = vmatmul.mubr.f32.gmra.mrb[0].mxu0 %v5142
      %v8167 = vpop.f32.mrb[0].mxu0
      %v8168 = vadd.f32 0.0, %v8167
      %v8169 = vpop.f32.mrb[0].mxu0
      %8170 = vmatprep.mubr.f32.mxu0 0.0
      %8171 = vmatmul.mubr.f32.gmra.mrb[0].mxu0 %v5145
      %v8172 = vpop.f32.mrb[0].mxu0
      %v8173 = vadd.f32 0.0, %v8172
      %v8174 = vpop.f32.mrb[0].mxu0
      %8175 = vmatprep.mubr.f32.mxu0 0.0
      %8176 = vmatmul.mubr.f32.gmra.mrb[0].mxu0 %v5148
      %v8177 = vpop.f32.mrb[0].mxu0
      %v8178 = vadd.f32 0.0, %v8177
      %v8179 = vpop.f32.mrb[0].mxu0
      %8180 = vmatprep.mubr.f32.mxu0 0.0
      %8181 = vmatmul.mubr.f32.gmra.mrb[0].mxu0 %v5151
      %v8182 = vpop.f32.mrb[0].mxu0
      %v8183 = vadd.f32 0.0, %v8182
      %v8184 = vpop.f32.mrb[0].mxu0
      %8185 = vmatprep.mubr.f32.mxu0 0.0
      %8186 = vmatmul.mubr.f32.gmra.mrb[0].mxu0 %v5154
      %v8187 = vpop.f32.mrb[0].mxu0
      %v8188 = vadd.f32 0.0, %v8187
      %v8189 = vpop.f32.mrb[0].mxu0
      %8190 = vmatprep.mubr.f32.mxu0 0.0
      %8191 = vmatmul.mubr.f32.gmra.mrb[0].mxu0 %v5157
      %v8192 = vpop.f32.mrb[0].mxu0
      %v8193 = vadd.f32 0.0, %v8192
      %v8194 = vpop.f32.mrb[0].mxu0
      %8195 = vmatprep.mubr.f32.mxu0 0.0
      %8196 = vmatmul.mubr.f32.gmra.mrb[0].mxu0 %v5160
      %v8197 = vpop.f32.mrb[0].mxu0
      %v8198 = vadd.f32 0.0, %v8197
      %v8199 = vpop.f32.mrb[0].mxu0
      %8200 = vmatprep.mubr.f32.mxu0 0.0
      %8201 = vmatmul.mubr.f32.gmra.mrb[0].mxu0 %v5163
      %v8202 = vpop.f32.mrb[0].mxu0
      %v8203 = vadd.f32 0.0, %v8202
      %v8204 = vpop.f32.mrb[0].mxu0
      %8205 = vmatprep.mubr.f32.mxu0 0.0
      %8206 = vmatmul.mubr.f32.gmra.mrb[0].mxu0 %v5166
      %v8207 = vpop.f32.mrb[0].mxu0
      %v8208 = vadd.f32 0.0, %v8207
      %v8209 = vpop.f32.mrb[0].mxu0
      %8210 = vmatprep.mubr.f32.mxu0 0.0
      %8211 = vmatmul.mubr.f32.gmra.mrb[0].mxu0 %v5169
      %v8212 = vpop.f32.mrb[0].mxu0
      %v8213 = vadd.f32 0.0, %v8212
      %v8214 = vpop.f32.mrb[0].mxu0
      %8215 = vmatprep.mubr.f32.mxu0 0.0
      %8216 = vmatmul.mubr.f32.gmra.mrb[0].mxu0 %v5172
      %v8217 = vpop.f32.mrb[0].mxu0
      %v8218 = vadd.f32 0.0, %v8217
      %v8219 = vpop.f32.mrb[0].mxu0
      %8220 = vmatprep.mubr.f32.mxu0 0.0
      %8221 = vmatmul.mubr.f32.gmra.mrb[0].mxu0 %v5175
      %v8222 = vpop.f32.mrb[0].mxu0
      %v8223 = vadd.f32 0.0, %v8222
      %v8224 = vpop.f32.mrb[0].mxu0
      %8225 = vdwg.mxu0
      %v8227 = vsel %vm1546, %v7969, 0
      %v8230 = vsel %vm1546, %v7970, 0
      %v8233 = vsel %vm1546, %v7971, 0
      %v8236 = vsel %vm1546, %v7972, 0
      %v8239 = vsel %vm1546, %v7973, 0
      %v8242 = vsel %vm1546, %v7974, 0
      %v8245 = vsel %vm1546, %v7975, 0
      %v8248 = vsel %vm1546, %v7976, 0
      %v8251 = vsel %vm1546, %v7977, 0
      %v8254 = vsel %vm1546, %v7978, 0
      %v8257 = vsel %vm1546, %v7979, 0
      %v8260 = vsel %vm1546, %v7980, 0
      %v8263 = vsel %vm1546, %v7981, 0
      %v8266 = vsel %vm1546, %v7982, 0
      %v8269 = vsel %vm1546, %v7983, 0
      %v8272 = vsel %vm1546, %v7984, 0
      %v8275 = vsel %vm1546, %v7985, 0
      %v8278 = vsel %vm1546, %v7986, 0
      %v8281 = vsel %vm1546, %v7987, 0
      %v8284 = vsel %vm1546, %v7988, 0
      %v8287 = vsel %vm1546, %v7989, 0
      %v8290 = vsel %vm1546, %v7990, 0
      %v8293 = vsel %vm1546, %v7991, 0
      %v8296 = vsel %vm1546, %v7992, 0
      %v8299 = vsel %vm1546, %v7993, 0
      %v8302 = vsel %vm1546, %v7994, 0
      %v8305 = vsel %vm1546, %v7995, 0
      %v8308 = vsel %vm1546, %v7996, 0
      %v8311 = vsel %vm1546, %v7997, 0
      %v8314 = vsel %vm1546, %v7998, 0
      %v8317 = vsel %vm1546, %v7999, 0
      %v8320 = vsel %vm1546, %v8000, 0
      %8322 = vmatprep.subr.mxu0 0.0
      %8323 = vmatpush1.msra.mxu0 %v5066
      %8324 = vmatprep.subr.mxu0 0.0
      %8325 = vmatpush1.msra.mxu0 %v5067
      %8326 = vmatprep.subr.mxu0 0.0
      %8327 = vmatpush1.msra.mxu0 %v5068
      %8328 = vmatprep.subr.mxu0 0.0
      %8329 = vmatpush1.msra.mxu0 %v5069
      %8330 = vmatprep.subr.mxu0 0.0
      %8331 = vmatpush1.msra.mxu0 0.0
      %8332 = vmatprep.subr.mxu0 0.0
      %8333 = vmatpush1.msra.mxu0 0.0
      %8334 = vmatprep.subr.mxu0 0.0
      %8335 = vmatpush1.msra.mxu0 0.0
      %8336 = vmatprep.subr.mxu0 0.0
      %8337 = vmatpush1.msra.mxu0 0.0
      %8338 = vmatprep.subr.mxu0 0.0
      %8339 = vmatpush1.msra.mxu0 0.0
      %8340 = vmatprep.subr.mxu0 0.0
      %8341 = vmatpush1.msra.mxu0 0.0
      %8342 = vmatprep.subr.mxu0 0.0
      %8343 = vmatpush1.msra.mxu0 0.0
      %8344 = vmatprep.subr.mxu0 0.0
      %8345 = vmatpush1.msra.mxu0 0.0
      %8346 = vmatprep.subr.mxu0 0.0
      %8347 = vmatpush1.msra.mxu0 0.0
      %8348 = vmatprep.subr.mxu0 0.0
      %8349 = vmatpush1.msra.mxu0 0.0
      %8350 = vmatprep.subr.mxu0 0.0
      %8351 = vmatpush1.msra.mxu0 0.0
      %8352 = vmatprep.subr.mxu0 0.0
      %8353 = vmatpush1.msra.mxu0 0.0
      %8354 = vmatprep.subr.mxu0 0.0
      %8355 = vmatpush1.msra.mxu0 0.0
      %8356 = vmatprep.subr.mxu0 0.0
      %8357 = vmatpush1.msra.mxu0 0.0
      %8358 = vmatprep.subr.mxu0 0.0
      %8359 = vmatpush1.msra.mxu0 0.0
      %8360 = vmatprep.subr.mxu0 0.0
      %8361 = vmatpush1.msra.mxu0 0.0
      %8362 = vmatprep.subr.mxu0 0.0
      %8363 = vmatpush1.msra.mxu0 0.0
      %8364 = vmatprep.subr.mxu0 0.0
      %8365 = vmatpush1.msra.mxu0 0.0
      %8366 = vmatprep.subr.mxu0 0.0
      %8367 = vmatpush1.msra.mxu0 0.0
      %8368 = vmatprep.subr.mxu0 0.0
      %8369 = vmatpush1.msra.mxu0 0.0
      %8370 = vmatprep.subr.mxu0 0.0
      %8371 = vmatpush1.msra.mxu0 0.0
      %8372 = vmatprep.subr.mxu0 0.0
      %8373 = vmatpush1.msra.mxu0 0.0
      %8374 = vmatprep.subr.mxu0 0.0
      %8375 = vmatpush1.msra.mxu0 0.0
      %8376 = vmatprep.subr.mxu0 0.0
      %8377 = vmatpush1.msra.mxu0 0.0
      %8378 = vmatprep.subr.mxu0 0.0
      %8379 = vmatpush1.msra.mxu0 0.0
      %8380 = vmatprep.subr.mxu0 0.0
      %8381 = vmatpush1.msra.mxu0 0.0
      %8382 = vmatprep.subr.mxu0 0.0
      %8383 = vmatpush1.msra.mxu0 0.0
      %8384 = vmatprep.subr.mxu0 0.0
      %8385 = vmatpush1.msra.mxu0 0.0
      %8386 = vmatprep.mubr.f32.mxu0 0.0
      %8387 = vmatmul.mubr.f32.gmra.mrb[0].mxu0 %v8227
      %v8388 = vpop.f32.mrb[0].mxu0
      %v8389 = vadd.f32 %v8068, %v8388
      %v8390 = vpop.f32.mrb[0].mxu0
      %8391 = vmatprep.mubr.f32.mxu0 0.0
      %8392 = vmatmul.mubr.f32.gmra.mrb[0].mxu0 %v8230
      %v8393 = vpop.f32.mrb[0].mxu0
      %v8394 = vadd.f32 %v8073, %v8393
      %v8395 = vpop.f32.mrb[0].mxu0
      %8396 = vmatprep.mubr.f32.mxu0 0.0
      %8397 = vmatmul.mubr.f32.gmra.mrb[0].mxu0 %v8233
      %v8398 = vpop.f32.mrb[0].mxu0
      %v8399 = vadd.f32 %v8078, %v8398
      %v8400 = vpop.f32.mrb[0].mxu0
      %8401 = vmatprep.mubr.f32.mxu0 0.0
      %8402 = vmatmul.mubr.f32.gmra.mrb[0].mxu0 %v8236
      %v8403 = vpop.f32.mrb[0].mxu0
      %v8404 = vadd.f32 %v8083, %v8403
      %v8405 = vpop.f32.mrb[0].mxu0
      %8406 = vmatprep.mubr.f32.mxu0 0.0
      %8407 = vmatmul.mubr.f32.gmra.mrb[0].mxu0 %v8239
      %v8408 = vpop.f32.mrb[0].mxu0
      %v8409 = vadd.f32 %v8088, %v8408
      %v8410 = vpop.f32.mrb[0].mxu0
      %8411 = vmatprep.mubr.f32.mxu0 0.0
      %8412 = vmatmul.mubr.f32.gmra.mrb[0].mxu0 %v8242
      %v8413 = vpop.f32.mrb[0].mxu0
      %v8414 = vadd.f32 %v8093, %v8413
      %v8415 = vpop.f32.mrb[0].mxu0
      %8416 = vmatprep.mubr.f32.mxu0 0.0
      %8417 = vmatmul.mubr.f32.gmra.mrb[0].mxu0 %v8245
      %v8418 = vpop.f32.mrb[0].mxu0
      %v8419 = vadd.f32 %v8098, %v8418
      %v8420 = vpop.f32.mrb[0].mxu0
      %8421 = vmatprep.mubr.f32.mxu0 0.0
      %8422 = vmatmul.mubr.f32.gmra.mrb[0].mxu0 %v8248
      %v8423 = vpop.f32.mrb[0].mxu0
      %v8424 = vadd.f32 %v8103, %v8423
      %v8425 = vpop.f32.mrb[0].mxu0
      %8426 = vmatprep.mubr.f32.mxu0 0.0
      %8427 = vmatmul.mubr.f32.gmra.mrb[0].mxu0 %v8251
      %v8428 = vpop.f32.mrb[0].mxu0
      %v8429 = vadd.f32 %v8108, %v8428
      %v8430 = vpop.f32.mrb[0].mxu0
      %8431 = vmatprep.mubr.f32.mxu0 0.0
      %8432 = vmatmul.mubr.f32.gmra.mrb[0].mxu0 %v8254
      %v8433 = vpop.f32.mrb[0].mxu0
      %v8434 = vadd.f32 %v8113, %v8433
      %v8435 = vpop.f32.mrb[0].mxu0
      %8436 = vmatprep.mubr.f32.mxu0 0.0
      %8437 = vmatmul.mubr.f32.gmra.mrb[0].mxu0 %v8257
      %v8438 = vpop.f32.mrb[0].mxu0
      %v8439 = vadd.f32 %v8118, %v8438
      %v8440 = vpop.f32.mrb[0].mxu0
      %8441 = vmatprep.mubr.f32.mxu0 0.0
      %8442 = vmatmul.mubr.f32.gmra.mrb[0].mxu0 %v8260
      %v8443 = vpop.f32.mrb[0].mxu0
      %v8444 = vadd.f32 %v8123, %v8443
      %v8445 = vpop.f32.mrb[0].mxu0
      %8446 = vmatprep.mubr.f32.mxu0 0.0
      %8447 = vmatmul.mubr.f32.gmra.mrb[0].mxu0 %v8263
      %v8448 = vpop.f32.mrb[0].mxu0
      %v8449 = vadd.f32 %v8128, %v8448
      %v8450 = vpop.f32.mrb[0].mxu0
      %8451 = vmatprep.mubr.f32.mxu0 0.0
      %8452 = vmatmul.mubr.f32.gmra.mrb[0].mxu0 %v8266
      %v8453 = vpop.f32.mrb[0].mxu0
      %v8454 = vadd.f32 %v8133, %v8453
      %v8455 = vpop.f32.mrb[0].mxu0
      %8456 = vmatprep.mubr.f32.mxu0 0.0
      %8457 = vmatmul.mubr.f32.gmra.mrb[0].mxu0 %v8269
      %v8458 = vpop.f32.mrb[0].mxu0
      %v8459 = vadd.f32 %v8138, %v8458
      %v8460 = vpop.f32.mrb[0].mxu0
      %8461 = vmatprep.mubr.f32.mxu0 0.0
      %8462 = vmatmul.mubr.f32.gmra.mrb[0].mxu0 %v8272
      %v8463 = vpop.f32.mrb[0].mxu0
      %v8464 = vadd.f32 %v8143, %v8463
      %v8465 = vpop.f32.mrb[0].mxu0
      %8466 = vmatprep.mubr.f32.mxu0 0.0
      %8467 = vmatmul.mubr.f32.gmra.mrb[0].mxu0 %v8275
      %v8468 = vpop.f32.mrb[0].mxu0
      %v8469 = vadd.f32 %v8148, %v8468
      %v8470 = vpop.f32.mrb[0].mxu0
      %8471 = vmatprep.mubr.f32.mxu0 0.0
      %8472 = vmatmul.mubr.f32.gmra.mrb[0].mxu0 %v8278
      %v8473 = vpop.f32.mrb[0].mxu0
      %v8474 = vadd.f32 %v8153, %v8473
      %v8475 = vpop.f32.mrb[0].mxu0
      %8476 = vmatprep.mubr.f32.mxu0 0.0
      %8477 = vmatmul.mubr.f32.gmra.mrb[0].mxu0 %v8281
      %v8478 = vpop.f32.mrb[0].mxu0
      %v8479 = vadd.f32 %v8158, %v8478
      %v8480 = vpop.f32.mrb[0].mxu0
      %8481 = vmatprep.mubr.f32.mxu0 0.0
      %8482 = vmatmul.mubr.f32.gmra.mrb[0].mxu0 %v8284
      %v8483 = vpop.f32.mrb[0].mxu0
      %v8484 = vadd.f32 %v8163, %v8483
      %v8485 = vpop.f32.mrb[0].mxu0
      %8486 = vmatprep.mubr.f32.mxu0 0.0
      %8487 = vmatmul.mubr.f32.gmra.mrb[0].mxu0 %v8287
      %v8488 = vpop.f32.mrb[0].mxu0
      %v8489 = vadd.f32 %v8168, %v8488
      %v8490 = vpop.f32.mrb[0].mxu0
      %8491 = vmatprep.mubr.f32.mxu0 0.0
      %8492 = vmatmul.mubr.f32.gmra.mrb[0].mxu0 %v8290
      %v8493 = vpop.f32.mrb[0].mxu0
      %v8494 = vadd.f32 %v8173, %v8493
      %v8495 = vpop.f32.mrb[0].mxu0
      %8496 = vmatprep.mubr.f32.mxu0 0.0
      %8497 = vmatmul.mubr.f32.gmra.mrb[0].mxu0 %v8293
      %v8498 = vpop.f32.mrb[0].mxu0
      %v8499 = vadd.f32 %v8178, %v8498
      %v8500 = vpop.f32.mrb[0].mxu0
      %8501 = vmatprep.mubr.f32.mxu0 0.0
      %8502 = vmatmul.mubr.f32.gmra.mrb[0].mxu0 %v8296
      %v8503 = vpop.f32.mrb[0].mxu0
      %v8504 = vadd.f32 %v8183, %v8503
      %v8505 = vpop.f32.mrb[0].mxu0
      %8506 = vmatprep.mubr.f32.mxu0 0.0
      %8507 = vmatmul.mubr.f32.gmra.mrb[0].mxu0 %v8299
      %v8508 = vpop.f32.mrb[0].mxu0
      %v8509 = vadd.f32 %v8188, %v8508
      %v8510 = vpop.f32.mrb[0].mxu0
      %8511 = vmatprep.mubr.f32.mxu0 0.0
      %8512 = vmatmul.mubr.f32.gmra.mrb[0].mxu0 %v8302
      %v8513 = vpop.f32.mrb[0].mxu0
      %v8514 = vadd.f32 %v8193, %v8513
      %v8515 = vpop.f32.mrb[0].mxu0
      %8516 = vmatprep.mubr.f32.mxu0 0.0
      %8517 = vmatmul.mubr.f32.gmra.mrb[0].mxu0 %v8305
      %v8518 = vpop.f32.mrb[0].mxu0
      %v8519 = vadd.f32 %v8198, %v8518
      %v8520 = vpop.f32.mrb[0].mxu0
      %8521 = vmatprep.mubr.f32.mxu0 0.0
      %8522 = vmatmul.mubr.f32.gmra.mrb[0].mxu0 %v8308
      %v8523 = vpop.f32.mrb[0].mxu0
      %v8524 = vadd.f32 %v8203, %v8523
      %v8525 = vpop.f32.mrb[0].mxu0
      %8526 = vmatprep.mubr.f32.mxu0 0.0
      %8527 = vmatmul.mubr.f32.gmra.mrb[0].mxu0 %v8311
      %v8528 = vpop.f32.mrb[0].mxu0
      %v8529 = vadd.f32 %v8208, %v8528
      %v8530 = vpop.f32.mrb[0].mxu0
      %8531 = vmatprep.mubr.f32.mxu0 0.0
      %8532 = vmatmul.mubr.f32.gmra.mrb[0].mxu0 %v8314
      %v8533 = vpop.f32.mrb[0].mxu0
      %v8534 = vadd.f32 %v8213, %v8533
      %v8535 = vpop.f32.mrb[0].mxu0
      %8536 = vmatprep.mubr.f32.mxu0 0.0
      %8537 = vmatmul.mubr.f32.gmra.mrb[0].mxu0 %v8317
      %v8538 = vpop.f32.mrb[0].mxu0
      %v8539 = vadd.f32 %v8218, %v8538
      %v8540 = vpop.f32.mrb[0].mxu0
      %8541 = vmatprep.mubr.f32.mxu0 0.0
      %8542 = vmatmul.mubr.f32.gmra.mrb[0].mxu0 %v8320
      %v8543 = vpop.f32.mrb[0].mxu0
      %v8544 = vadd.f32 %v8223, %v8543
      %v8545 = vpop.f32.mrb[0].mxu0
      %8546 = vdwg.mxu0
      %v8548 = vlaneseq
      %v8549 = vshrl.u32 %v8548, 7
      %v8550 = vsub.s32 0, %v8549
      %v8551 = vrot.slane %v5074, %v8550
      %v8553 = vadd.f32 %v8389, %v8551
      %v8554 = vadd.f32 %v8394, %v8551
      %v8555 = vadd.f32 %v8399, %v8551
      %v8556 = vadd.f32 %v8404, %v8551
      %v8557 = vadd.f32 %v8409, %v8551
      %v8558 = vadd.f32 %v8414, %v8551
      %v8559 = vadd.f32 %v8419, %v8551
      %v8560 = vadd.f32 %v8424, %v8551
      %v8561 = vadd.f32 %v8429, %v8551
      %v8562 = vadd.f32 %v8434, %v8551
      %v8563 = vadd.f32 %v8439, %v8551
      %v8564 = vadd.f32 %v8444, %v8551
      %v8565 = vadd.f32 %v8449, %v8551
      %v8566 = vadd.f32 %v8454, %v8551
      %v8567 = vadd.f32 %v8459, %v8551
      %v8568 = vadd.f32 %v8464, %v8551
      %v8569 = vadd.f32 %v8469, %v8551
      %v8570 = vadd.f32 %v8474, %v8551
      %v8571 = vadd.f32 %v8479, %v8551
      %v8572 = vadd.f32 %v8484, %v8551
      %v8573 = vadd.f32 %v8489, %v8551
      %v8574 = vadd.f32 %v8494, %v8551
      %v8575 = vadd.f32 %v8499, %v8551
      %v8576 = vadd.f32 %v8504, %v8551
      %v8577 = vadd.f32 %v8509, %v8551
      %v8578 = vadd.f32 %v8514, %v8551
      %v8579 = vadd.f32 %v8519, %v8551
      %v8580 = vadd.f32 %v8524, %v8551
      %v8581 = vadd.f32 %v8529, %v8551
      %v8582 = vadd.f32 %v8534, %v8551
      %v8583 = vadd.f32 %v8539, %v8551
      %v8584 = vadd.f32 %v8544, %v8551
      %v8585 = vld [vmem:[%s39] sm:$0x3]
      %v8586 = vld [vmem:[%s41] sm:$0xff]
      %v8587 = vld [vmem:[%s41 + $0x8] sm:$0xff]
      %v8588 = vld [vmem:[%s41 + $0x10] sm:$0xff]
      %v8589 = vld [vmem:[%s41 + $0x18] sm:$0xff]
      %v8590 = vld [vmem:[%s43] sm:$0xff]
      %v8591 = vld [vmem:[%s43 + $0x8] sm:$0xff]
      %v8592 = vld [vmem:[%s43 + $0x10] sm:$0xff]
      %v8593 = vld [vmem:[%s43 + $0x18] sm:$0xff]
      %v8594 = vld [vmem:[%s45] sm:$0x1]
      %v8595 = vlaneseq
      %v8596 = vshrl.u32 %v8595, 7
      %v8597 = vsub.s32 0, %v8596
      %v8598 = vrot.slane %v8585, %v8597
      %v8599 = vmul.f32 %v1058, %v8598
      %v8600 = vmul.f32 %v1063, %v8598
      %v8601 = vmul.f32 %v1068, %v8598
      %v8602 = vmul.f32 %v1073, %v8598
      %v8603 = vmul.f32 %v1078, %v8598
      %v8604 = vmul.f32 %v1083, %v8598
      %v8605 = vmul.f32 %v1088, %v8598
      %v8606 = vmul.f32 %v1093, %v8598
      %v8607 = vmul.f32 %v1098, %v8598
      %v8608 = vmul.f32 %v1103, %v8598
      %v8609 = vmul.f32 %v1108, %v8598
      %v8610 = vmul.f32 %v1113, %v8598
      %v8611 = vmul.f32 %v1118, %v8598
      %v8612 = vmul.f32 %v1123, %v8598
      %v8613 = vmul.f32 %v1128, %v8598
      %v8614 = vmul.f32 %v1133, %v8598
      %v8615 = vmul.f32 %v1138, %v8598
      %v8616 = vmul.f32 %v1143, %v8598
      %v8617 = vmul.f32 %v1148, %v8598
      %v8618 = vmul.f32 %v1153, %v8598
      %v8619 = vmul.f32 %v1158, %v8598
      %v8620 = vmul.f32 %v1163, %v8598
      %v8621 = vmul.f32 %v1168, %v8598
      %v8622 = vmul.f32 %v1173, %v8598
      %v8623 = vmul.f32 %v1178, %v8598
      %v8624 = vmul.f32 %v1183, %v8598
      %v8625 = vmul.f32 %v1188, %v8598
      %v8626 = vmul.f32 %v1193, %v8598
      %v8627 = vmul.f32 %v1198, %v8598
      %v8628 = vmul.f32 %v1203, %v8598
      %v8629 = vmul.f32 %v1208, %v8598
      %v8630 = vmul.f32 %v1213, %v8598
      %v8631 = vlaneseq
      %v8632 = vshrl.u32 %v8631, 7
      %v8633 = vsub.s32 1, %v8632
      %v8634 = vrot.slane %v8585, %v8633
      %v8635 = vmul.f32 %v1254, %v8634
      %v8636 = vmul.f32 %v1259, %v8634
      %v8637 = vmul.f32 %v1264, %v8634
      %v8638 = vmul.f32 %v1269, %v8634
      %v8639 = vmul.f32 %v1274, %v8634
      %v8640 = vmul.f32 %v1279, %v8634
      %v8641 = vmul.f32 %v1284, %v8634
      %v8642 = vmul.f32 %v1289, %v8634
      %v8643 = vmul.f32 %v1294, %v8634
      %v8644 = vmul.f32 %v1299, %v8634
      %v8645 = vmul.f32 %v1304, %v8634
      %v8646 = vmul.f32 %v1309, %v8634
      %v8647 = vmul.f32 %v1314, %v8634
      %v8648 = vmul.f32 %v1319, %v8634
      %v8649 = vmul.f32 %v1324, %v8634
      %v8650 = vmul.f32 %v1329, %v8634
      %v8651 = vmul.f32 %v1334, %v8634
      %v8652 = vmul.f32 %v1339, %v8634
      %v8653 = vmul.f32 %v1344, %v8634
      %v8654 = vmul.f32 %v1349, %v8634
      %v8655 = vmul.f32 %v1354, %v8634
      %v8656 = vmul.f32 %v1359, %v8634
      %v8657 = vmul.f32 %v1364, %v8634
      %v8658 = vmul.f32 %v1369, %v8634
      %v8659 = vmul.f32 %v1374, %v8634
      %v8660 = vmul.f32 %v1379, %v8634
      %v8661 = vmul.f32 %v1384, %v8634
      %v8662 = vmul.f32 %v1389, %v8634
      %v8663 = vmul.f32 %v1394, %v8634
      %v8664 = vmul.f32 %v1399, %v8634
      %v8665 = vmul.f32 %v1404, %v8634
      %v8666 = vmul.f32 %v1409, %v8634
      %v8667 = vadd.f32 %v8599, %v8635
      %v8668 = vadd.f32 %v8600, %v8636
      %v8669 = vadd.f32 %v8601, %v8637
      %v8670 = vadd.f32 %v8602, %v8638
      %v8671 = vadd.f32 %v8603, %v8639
      %v8672 = vadd.f32 %v8604, %v8640
      %v8673 = vadd.f32 %v8605, %v8641
      %v8674 = vadd.f32 %v8606, %v8642
      %v8675 = vadd.f32 %v8607, %v8643
      %v8676 = vadd.f32 %v8608, %v8644
      %v8677 = vadd.f32 %v8609, %v8645
      %v8678 = vadd.f32 %v8610, %v8646
      %v8679 = vadd.f32 %v8611, %v8647
      %v8680 = vadd.f32 %v8612, %v8648
      %v8681 = vadd.f32 %v8613, %v8649
      %v8682 = vadd.f32 %v8614, %v8650
      %v8683 = vadd.f32 %v8615, %v8651
      %v8684 = vadd.f32 %v8616, %v8652
      %v8685 = vadd.f32 %v8617, %v8653
      %v8686 = vadd.f32 %v8618, %v8654
      %v8687 = vadd.f32 %v8619, %v8655
      %v8688 = vadd.f32 %v8620, %v8656
      %v8689 = vadd.f32 %v8621, %v8657
      %v8690 = vadd.f32 %v8622, %v8658
      %v8691 = vadd.f32 %v8623, %v8659
      %v8692 = vadd.f32 %v8624, %v8660
      %v8693 = vadd.f32 %v8625, %v8661
      %v8694 = vadd.f32 %v8626, %v8662
      %v8695 = vadd.f32 %v8627, %v8663
      %v8696 = vadd.f32 %v8628, %v8664
      %v8697 = vadd.f32 %v8629, %v8665
      %v8698 = vadd.f32 %v8630, %v8666
      %v8700 = vlaneseq
      %v8701 = vshrl.u32 %v8700, 7
      %v8702 = vsub.s32 0, %v8701
      %v8703 = vrot.slane %v8594, %v8702
      %v8705 = vadd.f32 %v8667, %v8703
      %v8706 = vadd.f32 %v8668, %v8703
      %v8707 = vadd.f32 %v8669, %v8703
      %v8708 = vadd.f32 %v8670, %v8703
      %v8709 = vadd.f32 %v8671, %v8703
      %v8710 = vadd.f32 %v8672, %v8703
      %v8711 = vadd.f32 %v8673, %v8703
      %v8712 = vadd.f32 %v8674, %v8703
      %v8713 = vadd.f32 %v8675, %v8703
      %v8714 = vadd.f32 %v8676, %v8703
      %v8715 = vadd.f32 %v8677, %v8703
      %v8716 = vadd.f32 %v8678, %v8703
      %v8717 = vadd.f32 %v8679, %v8703
      %v8718 = vadd.f32 %v8680, %v8703
      %v8719 = vadd.f32 %v8681, %v8703
      %v8720 = vadd.f32 %v8682, %v8703
      %v8721 = vadd.f32 %v8683, %v8703
      %v8722 = vadd.f32 %v8684, %v8703
      %v8723 = vadd.f32 %v8685, %v8703
      %v8724 = vadd.f32 %v8686, %v8703
      %v8725 = vadd.f32 %v8687, %v8703
      %v8726 = vadd.f32 %v8688, %v8703
      %v8727 = vadd.f32 %v8689, %v8703
      %v8728 = vadd.f32 %v8690, %v8703
      %v8729 = vadd.f32 %v8691, %v8703
      %v8730 = vadd.f32 %v8692, %v8703
      %v8731 = vadd.f32 %v8693, %v8703
      %v8732 = vadd.f32 %v8694, %v8703
      %v8733 = vadd.f32 %v8695, %v8703
      %v8734 = vadd.f32 %v8696, %v8703
      %v8735 = vadd.f32 %v8697, %v8703
      %v8736 = vadd.f32 %v8698, %v8703
      %8737 = vmatprep.subr.mxu0 0.0
      %8738 = vmatpush1.msra.mxu0 %v8586
      %8739 = vmatprep.subr.mxu0 0.0
      %8740 = vmatpush1.msra.mxu0 %v8587
      %8741 = vmatprep.subr.mxu0 0.0
      %8742 = vmatpush1.msra.mxu0 %v8588
      %8743 = vmatprep.subr.mxu0 0.0
      %8744 = vmatpush1.msra.mxu0 %v8589
      %8745 = vmatprep.subr.mxu0 0.0
      %8746 = vmatpush1.msra.mxu0 0.0
      %8747 = vmatprep.subr.mxu0 0.0
      %8748 = vmatpush1.msra.mxu0 0.0
      %8749 = vmatprep.subr.mxu0 0.0
      %8750 = vmatpush1.msra.mxu0 0.0
      %8751 = vmatprep.subr.mxu0 0.0
      %8752 = vmatpush1.msra.mxu0 0.0
      %8753 = vmatprep.subr.mxu0 0.0
      %8754 = vmatpush1.msra.mxu0 0.0
      %8755 = vmatprep.subr.mxu0 0.0
      %8756 = vmatpush1.msra.mxu0 0.0
      %8757 = vmatprep.subr.mxu0 0.0
      %8758 = vmatpush1.msra.mxu0 0.0
      %8759 = vmatprep.subr.mxu0 0.0
      %8760 = vmatpush1.msra.mxu0 0.0
      %8761 = vmatprep.subr.mxu0 0.0
      %8762 = vmatpush1.msra.mxu0 0.0
      %8763 = vmatprep.subr.mxu0 0.0
      %8764 = vmatpush1.msra.mxu0 0.0
      %8765 = vmatprep.subr.mxu0 0.0
      %8766 = vmatpush1.msra.mxu0 0.0
      %8767 = vmatprep.subr.mxu0 0.0
      %8768 = vmatpush1.msra.mxu0 0.0
      %8769 = vmatprep.subr.mxu0 0.0
      %8770 = vmatpush1.msra.mxu0 0.0
      %8771 = vmatprep.subr.mxu0 0.0
      %8772 = vmatpush1.msra.mxu0 0.0
      %8773 = vmatprep.subr.mxu0 0.0
      %8774 = vmatpush1.msra.mxu0 0.0
      %8775 = vmatprep.subr.mxu0 0.0
      %8776 = vmatpush1.msra.mxu0 0.0
      %8777 = vmatprep.subr.mxu0 0.0
      %8778 = vmatpush1.msra.mxu0 0.0
      %8779 = vmatprep.subr.mxu0 0.0
      %8780 = vmatpush1.msra.mxu0 0.0
      %8781 = vmatprep.subr.mxu0 0.0
      %8782 = vmatpush1.msra.mxu0 0.0
      %8783 = vmatprep.subr.mxu0 0.0
      %8784 = vmatpush1.msra.mxu0 0.0
      %8785 = vmatprep.subr.mxu0 0.0
      %8786 = vmatpush1.msra.mxu0 0.0
      %8787 = vmatprep.subr.mxu0 0.0
      %8788 = vmatpush1.msra.mxu0 0.0
      %8789 = vmatprep.subr.mxu0 0.0
      %8790 = vmatpush1.msra.mxu0 0.0
      %8791 = vmatprep.subr.mxu0 0.0
      %8792 = vmatpush1.msra.mxu0 0.0
      %8793 = vmatprep.subr.mxu0 0.0
      %8794 = vmatpush1.msra.mxu0 0.0
      %8795 = vmatprep.subr.mxu0 0.0
      %8796 = vmatpush1.msra.mxu0 0.0
      %8797 = vmatprep.subr.mxu0 0.0
      %8798 = vmatpush1.msra.mxu0 0.0
      %8799 = vmatprep.subr.mxu0 0.0
      %8800 = vmatpush1.msra.mxu0 0.0
      %8801 = vmatprep.mubr.f32.mxu0 0.0
      %8802 = vmatmul.mubr.f32.gmra.mrb[0].mxu0 %v5082
      %v8803 = vpop.f32.mrb[0].mxu0
      %v8804 = vadd.f32 0.0, %v8803
      %v8805 = vpop.f32.mrb[0].mxu0
      %8806 = vmatprep.mubr.f32.mxu0 0.0
      %8807 = vmatmul.mubr.f32.gmra.mrb[0].mxu0 %v5085
      %v8808 = vpop.f32.mrb[0].mxu0
      %v8809 = vadd.f32 0.0, %v8808
      %v8810 = vpop.f32.mrb[0].mxu0
      %8811 = vmatprep.mubr.f32.mxu0 0.0
      %8812 = vmatmul.mubr.f32.gmra.mrb[0].mxu0 %v5088
      %v8813 = vpop.f32.mrb[0].mxu0
      %v8814 = vadd.f32 0.0, %v8813
      %v8815 = vpop.f32.mrb[0].mxu0
      %8816 = vmatprep.mubr.f32.mxu0 0.0
      %8817 = vmatmul.mubr.f32.gmra.mrb[0].mxu0 %v5091
      %v8818 = vpop.f32.mrb[0].mxu0
      %v8819 = vadd.f32 0.0, %v8818
      %v8820 = vpop.f32.mrb[0].mxu0
      %8821 = vmatprep.mubr.f32.mxu0 0.0
      %8822 = vmatmul.mubr.f32.gmra.mrb[0].mxu0 %v5094
      %v8823 = vpop.f32.mrb[0].mxu0
      %v8824 = vadd.f32 0.0, %v8823
      %v8825 = vpop.f32.mrb[0].mxu0
      %8826 = vmatprep.mubr.f32.mxu0 0.0
      %8827 = vmatmul.mubr.f32.gmra.mrb[0].mxu0 %v5097
      %v8828 = vpop.f32.mrb[0].mxu0
      %v8829 = vadd.f32 0.0, %v8828
      %v8830 = vpop.f32.mrb[0].mxu0
      %8831 = vmatprep.mubr.f32.mxu0 0.0
      %8832 = vmatmul.mubr.f32.gmra.mrb[0].mxu0 %v5100
      %v8833 = vpop.f32.mrb[0].mxu0
      %v8834 = vadd.f32 0.0, %v8833
      %v8835 = vpop.f32.mrb[0].mxu0
      %8836 = vmatprep.mubr.f32.mxu0 0.0
      %8837 = vmatmul.mubr.f32.gmra.mrb[0].mxu0 %v5103
      %v8838 = vpop.f32.mrb[0].mxu0
      %v8839 = vadd.f32 0.0, %v8838
      %v8840 = vpop.f32.mrb[0].mxu0
      %8841 = vmatprep.mubr.f32.mxu0 0.0
      %8842 = vmatmul.mubr.f32.gmra.mrb[0].mxu0 %v5106
      %v8843 = vpop.f32.mrb[0].mxu0
      %v8844 = vadd.f32 0.0, %v8843
      %v8845 = vpop.f32.mrb[0].mxu0
      %8846 = vmatprep.mubr.f32.mxu0 0.0
      %8847 = vmatmul.mubr.f32.gmra.mrb[0].mxu0 %v5109
      %v8848 = vpop.f32.mrb[0].mxu0
      %v8849 = vadd.f32 0.0, %v8848
      %v8850 = vpop.f32.mrb[0].mxu0
      %8851 = vmatprep.mubr.f32.mxu0 0.0
      %8852 = vmatmul.mubr.f32.gmra.mrb[0].mxu0 %v5112
      %v8853 = vpop.f32.mrb[0].mxu0
      %v8854 = vadd.f32 0.0, %v8853
      %v8855 = vpop.f32.mrb[0].mxu0
      %8856 = vmatprep.mubr.f32.mxu0 0.0
      %8857 = vmatmul.mubr.f32.gmra.mrb[0].mxu0 %v5115
      %v8858 = vpop.f32.mrb[0].mxu0
      %v8859 = vadd.f32 0.0, %v8858
      %v8860 = vpop.f32.mrb[0].mxu0
      %8861 = vmatprep.mubr.f32.mxu0 0.0
      %8862 = vmatmul.mubr.f32.gmra.mrb[0].mxu0 %v5118
      %v8863 = vpop.f32.mrb[0].mxu0
      %v8864 = vadd.f32 0.0, %v8863
      %v8865 = vpop.f32.mrb[0].mxu0
      %8866 = vmatprep.mubr.f32.mxu0 0.0
      %8867 = vmatmul.mubr.f32.gmra.mrb[0].mxu0 %v5121
      %v8868 = vpop.f32.mrb[0].mxu0
      %v8869 = vadd.f32 0.0, %v8868
      %v8870 = vpop.f32.mrb[0].mxu0
      %8871 = vmatprep.mubr.f32.mxu0 0.0
      %8872 = vmatmul.mubr.f32.gmra.mrb[0].mxu0 %v5124
      %v8873 = vpop.f32.mrb[0].mxu0
      %v8874 = vadd.f32 0.0, %v8873
      %v8875 = vpop.f32.mrb[0].mxu0
      %8876 = vmatprep.mubr.f32.mxu0 0.0
      %8877 = vmatmul.mubr.f32.gmra.mrb[0].mxu0 %v5127
      %v8878 = vpop.f32.mrb[0].mxu0
      %v8879 = vadd.f32 0.0, %v8878
      %v8880 = vpop.f32.mrb[0].mxu0
      %8881 = vmatprep.mubr.f32.mxu0 0.0
      %8882 = vmatmul.mubr.f32.gmra.mrb[0].mxu0 %v5130
      %v8883 = vpop.f32.mrb[0].mxu0
      %v8884 = vadd.f32 0.0, %v8883
      %v8885 = vpop.f32.mrb[0].mxu0
      %8886 = vmatprep.mubr.f32.mxu0 0.0
      %8887 = vmatmul.mubr.f32.gmra.mrb[0].mxu0 %v5133
      %v8888 = vpop.f32.mrb[0].mxu0
      %v8889 = vadd.f32 0.0, %v8888
      %v8890 = vpop.f32.mrb[0].mxu0
      %8891 = vmatprep.mubr.f32.mxu0 0.0
      %8892 = vmatmul.mubr.f32.gmra.mrb[0].mxu0 %v5136
      %v8893 = vpop.f32.mrb[0].mxu0
      %v8894 = vadd.f32 0.0, %v8893
      %v8895 = vpop.f32.mrb[0].mxu0
      %8896 = vmatprep.mubr.f32.mxu0 0.0
      %8897 = vmatmul.mubr.f32.gmra.mrb[0].mxu0 %v5139
      %v8898 = vpop.f32.mrb[0].mxu0
      %v8899 = vadd.f32 0.0, %v8898
      %v8900 = vpop.f32.mrb[0].mxu0
      %8901 = vmatprep.mubr.f32.mxu0 0.0
      %8902 = vmatmul.mubr.f32.gmra.mrb[0].mxu0 %v5142
      %v8903 = vpop.f32.mrb[0].mxu0
      %v8904 = vadd.f32 0.0, %v8903
      %v8905 = vpop.f32.mrb[0].mxu0
      %8906 = vmatprep.mubr.f32.mxu0 0.0
      %8907 = vmatmul.mubr.f32.gmra.mrb[0].mxu0 %v5145
      %v8908 = vpop.f32.mrb[0].mxu0
      %v8909 = vadd.f32 0.0, %v8908
      %v8910 = vpop.f32.mrb[0].mxu0
      %8911 = vmatprep.mubr.f32.mxu0 0.0
      %8912 = vmatmul.mubr.f32.gmra.mrb[0].mxu0 %v5148
      %v8913 = vpop.f32.mrb[0].mxu0
      %v8914 = vadd.f32 0.0, %v8913
      %v8915 = vpop.f32.mrb[0].mxu0
      %8916 = vmatprep.mubr.f32.mxu0 0.0
      %8917 = vmatmul.mubr.f32.gmra.mrb[0].mxu0 %v5151
      %v8918 = vpop.f32.mrb[0].mxu0
      %v8919 = vadd.f32 0.0, %v8918
      %v8920 = vpop.f32.mrb[0].mxu0
      %8921 = vmatprep.mubr.f32.mxu0 0.0
      %8922 = vmatmul.mubr.f32.gmra.mrb[0].mxu0 %v5154
      %v8923 = vpop.f32.mrb[0].mxu0
      %v8924 = vadd.f32 0.0, %v8923
      %v8925 = vpop.f32.mrb[0].mxu0
      %8926 = vmatprep.mubr.f32.mxu0 0.0
      %8927 = vmatmul.mubr.f32.gmra.mrb[0].mxu0 %v5157
      %v8928 = vpop.f32.mrb[0].mxu0
      %v8929 = vadd.f32 0.0, %v8928
      %v8930 = vpop.f32.mrb[0].mxu0
      %8931 = vmatprep.mubr.f32.mxu0 0.0
      %8932 = vmatmul.mubr.f32.gmra.mrb[0].mxu0 %v5160
      %v8933 = vpop.f32.mrb[0].mxu0
      %v8934 = vadd.f32 0.0, %v8933
      %v8935 = vpop.f32.mrb[0].mxu0
      %8936 = vmatprep.mubr.f32.mxu0 0.0
      %8937 = vmatmul.mubr.f32.gmra.mrb[0].mxu0 %v5163
      %v8938 = vpop.f32.mrb[0].mxu0
      %v8939 = vadd.f32 0.0, %v8938
      %v8940 = vpop.f32.mrb[0].mxu0
      %8941 = vmatprep.mubr.f32.mxu0 0.0
      %8942 = vmatmul.mubr.f32.gmra.mrb[0].mxu0 %v5166
      %v8943 = vpop.f32.mrb[0].mxu0
      %v8944 = vadd.f32 0.0, %v8943
      %v8945 = vpop.f32.mrb[0].mxu0
      %8946 = vmatprep.mubr.f32.mxu0 0.0
      %8947 = vmatmul.mubr.f32.gmra.mrb[0].mxu0 %v5169
      %v8948 = vpop.f32.mrb[0].mxu0
      %v8949 = vadd.f32 0.0, %v8948
      %v8950 = vpop.f32.mrb[0].mxu0
      %8951 = vmatprep.mubr.f32.mxu0 0.0
      %8952 = vmatmul.mubr.f32.gmra.mrb[0].mxu0 %v5172
      %v8953 = vpop.f32.mrb[0].mxu0
      %v8954 = vadd.f32 0.0, %v8953
      %v8955 = vpop.f32.mrb[0].mxu0
      %8956 = vmatprep.mubr.f32.mxu0 0.0
      %8957 = vmatmul.mubr.f32.gmra.mrb[0].mxu0 %v5175
      %v8958 = vpop.f32.mrb[0].mxu0
      %v8959 = vadd.f32 0.0, %v8958
      %v8960 = vpop.f32.mrb[0].mxu0
      %8961 = vdwg.mxu0
      %v8962 = vadd.f32 %v8705, %v8804
      %v8963 = vadd.f32 %v8706, %v8809
      %v8964 = vadd.f32 %v8707, %v8814
      %v8965 = vadd.f32 %v8708, %v8819
      %v8966 = vadd.f32 %v8709, %v8824
      %v8967 = vadd.f32 %v8710, %v8829
      %v8968 = vadd.f32 %v8711, %v8834
      %v8969 = vadd.f32 %v8712, %v8839
      %v8970 = vadd.f32 %v8713, %v8844
      %v8971 = vadd.f32 %v8714, %v8849
      %v8972 = vadd.f32 %v8715, %v8854
      %v8973 = vadd.f32 %v8716, %v8859
      %v8974 = vadd.f32 %v8717, %v8864
      %v8975 = vadd.f32 %v8718, %v8869
      %v8976 = vadd.f32 %v8719, %v8874
      %v8977 = vadd.f32 %v8720, %v8879
      %v8978 = vadd.f32 %v8721, %v8884
      %v8979 = vadd.f32 %v8722, %v8889
      %v8980 = vadd.f32 %v8723, %v8894
      %v8981 = vadd.f32 %v8724, %v8899
      %v8982 = vadd.f32 %v8725, %v8904
      %v8983 = vadd.f32 %v8726, %v8909
      %v8984 = vadd.f32 %v8727, %v8914
      %v8985 = vadd.f32 %v8728, %v8919
      %v8986 = vadd.f32 %v8729, %v8924
      %v8987 = vadd.f32 %v8730, %v8929
      %v8988 = vadd.f32 %v8731, %v8934
      %v8989 = vadd.f32 %v8732, %v8939
      %v8990 = vadd.f32 %v8733, %v8944
      %v8991 = vadd.f32 %v8734, %v8949
      %v8992 = vadd.f32 %v8735, %v8954
      %v8993 = vadd.f32 %v8736, %v8959
      %v8995 = vsel %vm1546, %v8553, 0
      %v8998 = vsel %vm1546, %v8554, 0
      %v9001 = vsel %vm1546, %v8555, 0
      %v9004 = vsel %vm1546, %v8556, 0
      %v9007 = vsel %vm1546, %v8557, 0
      %v9010 = vsel %vm1546, %v8558, 0
      %v9013 = vsel %vm1546, %v8559, 0
      %v9016 = vsel %vm1546, %v8560, 0
      %v9019 = vsel %vm1546, %v8561, 0
      %v9022 = vsel %vm1546, %v8562, 0
      %v9025 = vsel %vm1546, %v8563, 0
      %v9028 = vsel %vm1546, %v8564, 0
      %v9031 = vsel %vm1546, %v8565, 0
      %v9034 = vsel %vm1546, %v8566, 0
      %v9037 = vsel %vm1546, %v8567, 0
      %v9040 = vsel %vm1546, %v8568, 0
      %v9043 = vsel %vm1546, %v8569, 0
      %v9046 = vsel %vm1546, %v8570, 0
      %v9049 = vsel %vm1546, %v8571, 0
      %v9052 = vsel %vm1546, %v8572, 0
      %v9055 = vsel %vm1546, %v8573, 0
      %v9058 = vsel %vm1546, %v8574, 0
      %v9061 = vsel %vm1546, %v8575, 0
      %v9064 = vsel %vm1546, %v8576, 0
      %v9067 = vsel %vm1546, %v8577, 0
      %v9070 = vsel %vm1546, %v8578, 0
      %v9073 = vsel %vm1546, %v8579, 0
      %v9076 = vsel %vm1546, %v8580, 0
      %v9079 = vsel %vm1546, %v8581, 0
      %v9082 = vsel %vm1546, %v8582, 0
      %v9085 = vsel %vm1546, %v8583, 0
      %v9088 = vsel %vm1546, %v8584, 0
      %9090 = vmatprep.subr.mxu0 0.0
      %9091 = vmatpush1.msra.mxu0 %v8590
      %9092 = vmatprep.subr.mxu0 0.0
      %9093 = vmatpush1.msra.mxu0 %v8591
      %9094 = vmatprep.subr.mxu0 0.0
      %9095 = vmatpush1.msra.mxu0 %v8592
      %9096 = vmatprep.subr.mxu0 0.0
      %9097 = vmatpush1.msra.mxu0 %v8593
      %9098 = vmatprep.subr.mxu0 0.0
      %9099 = vmatpush1.msra.mxu0 0.0
      %9100 = vmatprep.subr.mxu0 0.0
      %9101 = vmatpush1.msra.mxu0 0.0
      %9102 = vmatprep.subr.mxu0 0.0
      %9103 = vmatpush1.msra.mxu0 0.0
      %9104 = vmatprep.subr.mxu0 0.0
      %9105 = vmatpush1.msra.mxu0 0.0
      %9106 = vmatprep.subr.mxu0 0.0
      %9107 = vmatpush1.msra.mxu0 0.0
      %9108 = vmatprep.subr.mxu0 0.0
      %9109 = vmatpush1.msra.mxu0 0.0
      %9110 = vmatprep.subr.mxu0 0.0
      %9111 = vmatpush1.msra.mxu0 0.0
      %9112 = vmatprep.subr.mxu0 0.0
      %9113 = vmatpush1.msra.mxu0 0.0
      %9114 = vmatprep.subr.mxu0 0.0
      %9115 = vmatpush1.msra.mxu0 0.0
      %9116 = vmatprep.subr.mxu0 0.0
      %9117 = vmatpush1.msra.mxu0 0.0
      %9118 = vmatprep.subr.mxu0 0.0
      %9119 = vmatpush1.msra.mxu0 0.0
      %9120 = vmatprep.subr.mxu0 0.0
      %9121 = vmatpush1.msra.mxu0 0.0
      %9122 = vmatprep.subr.mxu0 0.0
      %9123 = vmatpush1.msra.mxu0 0.0
      %9124 = vmatprep.subr.mxu0 0.0
      %9125 = vmatpush1.msra.mxu0 0.0
      %9126 = vmatprep.subr.mxu0 0.0
      %9127 = vmatpush1.msra.mxu0 0.0
      %9128 = vmatprep.subr.mxu0 0.0
      %9129 = vmatpush1.msra.mxu0 0.0
      %9130 = vmatprep.subr.mxu0 0.0
      %9131 = vmatpush1.msra.mxu0 0.0
      %9132 = vmatprep.subr.mxu0 0.0
      %9133 = vmatpush1.msra.mxu0 0.0
      %9134 = vmatprep.subr.mxu0 0.0
      %9135 = vmatpush1.msra.mxu0 0.0
      %9136 = vmatprep.subr.mxu0 0.0
      %9137 = vmatpush1.msra.mxu0 0.0
      %9138 = vmatprep.subr.mxu0 0.0
      %9139 = vmatpush1.msra.mxu0 0.0
      %9140 = vmatprep.subr.mxu0 0.0
      %9141 = vmatpush1.msra.mxu0 0.0
      %9142 = vmatprep.subr.mxu0 0.0
      %9143 = vmatpush1.msra.mxu0 0.0
      %9144 = vmatprep.subr.mxu0 0.0
      %9145 = vmatpush1.msra.mxu0 0.0
      %9146 = vmatprep.subr.mxu0 0.0
      %9147 = vmatpush1.msra.mxu0 0.0
      %9148 = vmatprep.subr.mxu0 0.0
      %9149 = vmatpush1.msra.mxu0 0.0
      %9150 = vmatprep.subr.mxu0 0.0
      %9151 = vmatpush1.msra.mxu0 0.0
      %9152 = vmatprep.subr.mxu0 0.0
      %9153 = vmatpush1.msra.mxu0 0.0
      %9154 = vmatprep.mubr.f32.mxu0 0.0
      %9155 = vmatmul.mubr.f32.gmra.mrb[0].mxu0 %v8995
      %v9156 = vpop.f32.mrb[0].mxu0
      %v9157 = vadd.f32 0.0, %v9156
      %v9158 = vpop.f32.mrb[0].mxu0
      %9159 = vmatprep.mubr.f32.mxu0 0.0
      %9160 = vmatmul.mubr.f32.gmra.mrb[0].mxu0 %v8998
      %v9161 = vpop.f32.mrb[0].mxu0
      %v9162 = vadd.f32 0.0, %v9161
      %v9163 = vpop.f32.mrb[0].mxu0
      %9164 = vmatprep.mubr.f32.mxu0 0.0
      %9165 = vmatmul.mubr.f32.gmra.mrb[0].mxu0 %v9001
      %v9166 = vpop.f32.mrb[0].mxu0
      %v9167 = vadd.f32 0.0, %v9166
      %v9168 = vpop.f32.mrb[0].mxu0
      %9169 = vmatprep.mubr.f32.mxu0 0.0
      %9170 = vmatmul.mubr.f32.gmra.mrb[0].mxu0 %v9004
      %v9171 = vpop.f32.mrb[0].mxu0
      %v9172 = vadd.f32 0.0, %v9171
      %v9173 = vpop.f32.mrb[0].mxu0
      %9174 = vmatprep.mubr.f32.mxu0 0.0
      %9175 = vmatmul.mubr.f32.gmra.mrb[0].mxu0 %v9007
      %v9176 = vpop.f32.mrb[0].mxu0
      %v9177 = vadd.f32 0.0, %v9176
      %v9178 = vpop.f32.mrb[0].mxu0
      %9179 = vmatprep.mubr.f32.mxu0 0.0
      %9180 = vmatmul.mubr.f32.gmra.mrb[0].mxu0 %v9010
      %v9181 = vpop.f32.mrb[0].mxu0
      %v9182 = vadd.f32 0.0, %v9181
      %v9183 = vpop.f32.mrb[0].mxu0
      %9184 = vmatprep.mubr.f32.mxu0 0.0
      %9185 = vmatmul.mubr.f32.gmra.mrb[0].mxu0 %v9013
      %v9186 = vpop.f32.mrb[0].mxu0
      %v9187 = vadd.f32 0.0, %v9186
      %v9188 = vpop.f32.mrb[0].mxu0
      %9189 = vmatprep.mubr.f32.mxu0 0.0
      %9190 = vmatmul.mubr.f32.gmra.mrb[0].mxu0 %v9016
      %v9191 = vpop.f32.mrb[0].mxu0
      %v9192 = vadd.f32 0.0, %v9191
      %v9193 = vpop.f32.mrb[0].mxu0
      %9194 = vmatprep.mubr.f32.mxu0 0.0
      %9195 = vmatmul.mubr.f32.gmra.mrb[0].mxu0 %v9019
      %v9196 = vpop.f32.mrb[0].mxu0
      %v9197 = vadd.f32 0.0, %v9196
      %v9198 = vpop.f32.mrb[0].mxu0
      %9199 = vmatprep.mubr.f32.mxu0 0.0
      %9200 = vmatmul.mubr.f32.gmra.mrb[0].mxu0 %v9022
      %v9201 = vpop.f32.mrb[0].mxu0
      %v9202 = vadd.f32 0.0, %v9201
      %v9203 = vpop.f32.mrb[0].mxu0
      %9204 = vmatprep.mubr.f32.mxu0 0.0
      %9205 = vmatmul.mubr.f32.gmra.mrb[0].mxu0 %v9025
      %v9206 = vpop.f32.mrb[0].mxu0
      %v9207 = vadd.f32 0.0, %v9206
      %v9208 = vpop.f32.mrb[0].mxu0
      %9209 = vmatprep.mubr.f32.mxu0 0.0
      %9210 = vmatmul.mubr.f32.gmra.mrb[0].mxu0 %v9028
      %v9211 = vpop.f32.mrb[0].mxu0
      %v9212 = vadd.f32 0.0, %v9211
      %v9213 = vpop.f32.mrb[0].mxu0
      %9214 = vmatprep.mubr.f32.mxu0 0.0
      %9215 = vmatmul.mubr.f32.gmra.mrb[0].mxu0 %v9031
      %v9216 = vpop.f32.mrb[0].mxu0
      %v9217 = vadd.f32 0.0, %v9216
      %v9218 = vpop.f32.mrb[0].mxu0
      %9219 = vmatprep.mubr.f32.mxu0 0.0
      %9220 = vmatmul.mubr.f32.gmra.mrb[0].mxu0 %v9034
      %v9221 = vpop.f32.mrb[0].mxu0
      %v9222 = vadd.f32 0.0, %v9221
      %v9223 = vpop.f32.mrb[0].mxu0
      %9224 = vmatprep.mubr.f32.mxu0 0.0
      %9225 = vmatmul.mubr.f32.gmra.mrb[0].mxu0 %v9037
      %v9226 = vpop.f32.mrb[0].mxu0
      %v9227 = vadd.f32 0.0, %v9226
      %v9228 = vpop.f32.mrb[0].mxu0
      %9229 = vmatprep.mubr.f32.mxu0 0.0
      %9230 = vmatmul.mubr.f32.gmra.mrb[0].mxu0 %v9040
      %v9231 = vpop.f32.mrb[0].mxu0
      %v9232 = vadd.f32 0.0, %v9231
      %v9233 = vpop.f32.mrb[0].mxu0
      %9234 = vmatprep.mubr.f32.mxu0 0.0
      %9235 = vmatmul.mubr.f32.gmra.mrb[0].mxu0 %v9043
      %v9236 = vpop.f32.mrb[0].mxu0
      %v9237 = vadd.f32 0.0, %v9236
      %v9238 = vpop.f32.mrb[0].mxu0
      %9239 = vmatprep.mubr.f32.mxu0 0.0
      %9240 = vmatmul.mubr.f32.gmra.mrb[0].mxu0 %v9046
      %v9241 = vpop.f32.mrb[0].mxu0
      %v9242 = vadd.f32 0.0, %v9241
      %v9243 = vpop.f32.mrb[0].mxu0
      %9244 = vmatprep.mubr.f32.mxu0 0.0
      %9245 = vmatmul.mubr.f32.gmra.mrb[0].mxu0 %v9049
      %v9246 = vpop.f32.mrb[0].mxu0
      %v9247 = vadd.f32 0.0, %v9246
      %v9248 = vpop.f32.mrb[0].mxu0
      %9249 = vmatprep.mubr.f32.mxu0 0.0
      %9250 = vmatmul.mubr.f32.gmra.mrb[0].mxu0 %v9052
      %v9251 = vpop.f32.mrb[0].mxu0
      %v9252 = vadd.f32 0.0, %v9251
      %v9253 = vpop.f32.mrb[0].mxu0
      %9254 = vmatprep.mubr.f32.mxu0 0.0
      %9255 = vmatmul.mubr.f32.gmra.mrb[0].mxu0 %v9055
      %v9256 = vpop.f32.mrb[0].mxu0
      %v9257 = vadd.f32 0.0, %v9256
      %v9258 = vpop.f32.mrb[0].mxu0
      %9259 = vmatprep.mubr.f32.mxu0 0.0
      %9260 = vmatmul.mubr.f32.gmra.mrb[0].mxu0 %v9058
      %v9261 = vpop.f32.mrb[0].mxu0
      %v9262 = vadd.f32 0.0, %v9261
      %v9263 = vpop.f32.mrb[0].mxu0
      %9264 = vmatprep.mubr.f32.mxu0 0.0
      %9265 = vmatmul.mubr.f32.gmra.mrb[0].mxu0 %v9061
      %v9266 = vpop.f32.mrb[0].mxu0
      %v9267 = vadd.f32 0.0, %v9266
      %v9268 = vpop.f32.mrb[0].mxu0
      %9269 = vmatprep.mubr.f32.mxu0 0.0
      %9270 = vmatmul.mubr.f32.gmra.mrb[0].mxu0 %v9064
      %v9271 = vpop.f32.mrb[0].mxu0
      %v9272 = vadd.f32 0.0, %v9271
      %v9273 = vpop.f32.mrb[0].mxu0
      %9274 = vmatprep.mubr.f32.mxu0 0.0
      %9275 = vmatmul.mubr.f32.gmra.mrb[0].mxu0 %v9067
      %v9276 = vpop.f32.mrb[0].mxu0
      %v9277 = vadd.f32 0.0, %v9276
      %v9278 = vpop.f32.mrb[0].mxu0
      %9279 = vmatprep.mubr.f32.mxu0 0.0
      %9280 = vmatmul.mubr.f32.gmra.mrb[0].mxu0 %v9070
      %v9281 = vpop.f32.mrb[0].mxu0
      %v9282 = vadd.f32 0.0, %v9281
      %v9283 = vpop.f32.mrb[0].mxu0
      %9284 = vmatprep.mubr.f32.mxu0 0.0
      %9285 = vmatmul.mubr.f32.gmra.mrb[0].mxu0 %v9073
      %v9286 = vpop.f32.mrb[0].mxu0
      %v9287 = vadd.f32 0.0, %v9286
      %v9288 = vpop.f32.mrb[0].mxu0
      %9289 = vmatprep.mubr.f32.mxu0 0.0
      %9290 = vmatmul.mubr.f32.gmra.mrb[0].mxu0 %v9076
      %v9291 = vpop.f32.mrb[0].mxu0
      %v9292 = vadd.f32 0.0, %v9291
      %v9293 = vpop.f32.mrb[0].mxu0
      %9294 = vmatprep.mubr.f32.mxu0 0.0
      %9295 = vmatmul.mubr.f32.gmra.mrb[0].mxu0 %v9079
      %v9296 = vpop.f32.mrb[0].mxu0
      %v9297 = vadd.f32 0.0, %v9296
      %v9298 = vpop.f32.mrb[0].mxu0
      %9299 = vmatprep.mubr.f32.mxu0 0.0
      %9300 = vmatmul.mubr.f32.gmra.mrb[0].mxu0 %v9082
      %v9301 = vpop.f32.mrb[0].mxu0
      %v9302 = vadd.f32 0.0, %v9301
      %v9303 = vpop.f32.mrb[0].mxu0
      %9304 = vmatprep.mubr.f32.mxu0 0.0
      %9305 = vmatmul.mubr.f32.gmra.mrb[0].mxu0 %v9085
      %v9306 = vpop.f32.mrb[0].mxu0
      %v9307 = vadd.f32 0.0, %v9306
      %v9308 = vpop.f32.mrb[0].mxu0
      %9309 = vmatprep.mubr.f32.mxu0 0.0
      %9310 = vmatmul.mubr.f32.gmra.mrb[0].mxu0 %v9088
      %v9311 = vpop.f32.mrb[0].mxu0
      %v9312 = vadd.f32 0.0, %v9311
      %v9313 = vpop.f32.mrb[0].mxu0
      %9314 = vdwg.mxu0
      %v9315 = vadd.f32 %v8962, %v9157
      %v9316 = vadd.f32 %v8963, %v9162
      %v9317 = vadd.f32 %v8964, %v9167
      %v9318 = vadd.f32 %v8965, %v9172
      %v9319 = vadd.f32 %v8966, %v9177
      %v9320 = vadd.f32 %v8967, %v9182
      %v9321 = vadd.f32 %v8968, %v9187
      %v9322 = vadd.f32 %v8969, %v9192
      %v9323 = vadd.f32 %v8970, %v9197
      %v9324 = vadd.f32 %v8971, %v9202
      %v9325 = vadd.f32 %v8972, %v9207
      %v9326 = vadd.f32 %v8973, %v9212
      %v9327 = vadd.f32 %v8974, %v9217
      %v9328 = vadd.f32 %v8975, %v9222
      %v9329 = vadd.f32 %v8976, %v9227
      %v9330 = vadd.f32 %v8977, %v9232
      %v9331 = vadd.f32 %v8978, %v9237
      %v9332 = vadd.f32 %v8979, %v9242
      %v9333 = vadd.f32 %v8980, %v9247
      %v9334 = vadd.f32 %v8981, %v9252
      %v9335 = vadd.f32 %v8982, %v9257
      %v9336 = vadd.f32 %v8983, %v9262
      %v9337 = vadd.f32 %v8984, %v9267
      %v9338 = vadd.f32 %v8985, %v9272
      %v9339 = vadd.f32 %v8986, %v9277
      %v9340 = vadd.f32 %v8987, %v9282
      %v9341 = vadd.f32 %v8988, %v9287
      %v9342 = vadd.f32 %v8989, %v9292
      %v9343 = vadd.f32 %v8990, %v9297
      %v9344 = vadd.f32 %v8991, %v9302
      %v9345 = vadd.f32 %v8992, %v9307
      %v9346 = vadd.f32 %v8993, %v9312
      %v9347 = vld [vmem:[%s47] sm:$0xff]
      %v9348 = vld [vmem:[%s47 + $0x8] sm:$0xff]
      %v9349 = vld [vmem:[%s47 + $0x10] sm:$0xff]
      %v9350 = vld [vmem:[%s47 + $0x18] sm:$0xff]
      %v9351 = vld [vmem:[%s49] sm:$0x1]
      %v9352 = vld [vmem:[%s51] sm:$0xff]
      %v9353 = vld [vmem:[%s51 + $0x8] sm:$0xff]
      %v9354 = vld [vmem:[%s51 + $0x10] sm:$0xff]
      %v9355 = vld [vmem:[%s51 + $0x18] sm:$0xff]
      %v9356 = vld [vmem:[%s53] sm:$0xff]
      %v9357 = vld [vmem:[%s53 + $0x8] sm:$0xff]
      %v9358 = vld [vmem:[%s53 + $0x10] sm:$0xff]
      %v9359 = vld [vmem:[%s53 + $0x18] sm:$0xff]
      %v9360 = vld [vmem:[%s55] sm:$0xff]
      %v9361 = vld [vmem:[%s55 + $0x8] sm:$0xff]
      %v9362 = vld [vmem:[%s55 + $0x10] sm:$0xff]
      %v9363 = vld [vmem:[%s55 + $0x18] sm:$0xff]
      %v9364 = vld [vmem:[%s57] sm:$0x1]
      %v9365 = vld [vmem:[%s59] sm:$0xff]
      %v9366 = vld [vmem:[%s59 + $0x8] sm:$0xff]
      %v9367 = vld [vmem:[%s59 + $0x10] sm:$0xff]
      %v9368 = vld [vmem:[%s59 + $0x18] sm:$0xff]
      %v9369 = vld [vmem:[#allocation2] sm:$0x1]
      %9371 = vset.pattern.permute.xlu0 0
      %9372 = vperm.xlu0 %9371, %v1021
      %v9373 = vpop.permute.xlu0 %9372
      %9376 = vset.pattern.permute.xlu0 0
      %9377 = vperm.xlu0 %9376, %v1022
      %v9378 = vpop.permute.xlu0 %9377
      %9381 = vset.pattern.permute.xlu0 0
      %9382 = vperm.xlu0 %9381, %v1023
      %v9383 = vpop.permute.xlu0 %9382
      %9386 = vset.pattern.permute.xlu0 0
      %9387 = vperm.xlu0 %9386, %v1024
      %v9388 = vpop.permute.xlu0 %9387
      %9391 = vset.pattern.permute.xlu0 0
      %9392 = vperm.xlu0 %9391, %v1025
      %v9393 = vpop.permute.xlu0 %9392
      %9396 = vset.pattern.permute.xlu0 0
      %9397 = vperm.xlu0 %9396, %v1026
      %v9398 = vpop.permute.xlu0 %9397
      %9401 = vset.pattern.permute.xlu0 0
      %9402 = vperm.xlu0 %9401, %v1027
      %v9403 = vpop.permute.xlu0 %9402
      %9406 = vset.pattern.permute.xlu0 0
      %9407 = vperm.xlu0 %9406, %v1028
      %v9408 = vpop.permute.xlu0 %9407
      %9411 = vset.pattern.permute.xlu0 0
      %9412 = vperm.xlu0 %9411, %v1029
      %v9413 = vpop.permute.xlu0 %9412
      %9416 = vset.pattern.permute.xlu0 0
      %9417 = vperm.xlu0 %9416, %v1030
      %v9418 = vpop.permute.xlu0 %9417
      %9421 = vset.pattern.permute.xlu0 0
      %9422 = vperm.xlu0 %9421, %v1031
      %v9423 = vpop.permute.xlu0 %9422
      %9426 = vset.pattern.permute.xlu0 0
      %9427 = vperm.xlu0 %9426, %v1032
      %v9428 = vpop.permute.xlu0 %9427
      %9431 = vset.pattern.permute.xlu0 0
      %9432 = vperm.xlu0 %9431, %v1033
      %v9433 = vpop.permute.xlu0 %9432
      %9436 = vset.pattern.permute.xlu0 0
      %9437 = vperm.xlu0 %9436, %v1034
      %v9438 = vpop.permute.xlu0 %9437
      %9441 = vset.pattern.permute.xlu0 0
      %9442 = vperm.xlu0 %9441, %v1035
      %v9443 = vpop.permute.xlu0 %9442
      %9446 = vset.pattern.permute.xlu0 0
      %9447 = vperm.xlu0 %9446, %v1036
      %v9448 = vpop.permute.xlu0 %9447
      %9451 = vset.pattern.permute.xlu0 0
      %9452 = vperm.xlu0 %9451, %v1037
      %v9453 = vpop.permute.xlu0 %9452
      %9456 = vset.pattern.permute.xlu0 0
      %9457 = vperm.xlu0 %9456, %v1038
      %v9458 = vpop.permute.xlu0 %9457
      %9461 = vset.pattern.permute.xlu0 0
      %9462 = vperm.xlu0 %9461, %v1039
      %v9463 = vpop.permute.xlu0 %9462
      %9466 = vset.pattern.permute.xlu0 0
      %9467 = vperm.xlu0 %9466, %v1040
      %v9468 = vpop.permute.xlu0 %9467
      %9471 = vset.pattern.permute.xlu0 0
      %9472 = vperm.xlu0 %9471, %v1041
      %v9473 = vpop.permute.xlu0 %9472
      %9476 = vset.pattern.permute.xlu0 0
      %9477 = vperm.xlu0 %9476, %v1042
      %v9478 = vpop.permute.xlu0 %9477
      %9481 = vset.pattern.permute.xlu0 0
      %9482 = vperm.xlu0 %9481, %v1043
      %v9483 = vpop.permute.xlu0 %9482
      %9486 = vset.pattern.permute.xlu0 0
      %9487 = vperm.xlu0 %9486, %v1044
      %v9488 = vpop.permute.xlu0 %9487
      %9491 = vset.pattern.permute.xlu0 0
      %9492 = vperm.xlu0 %9491, %v1045
      %v9493 = vpop.permute.xlu0 %9492
      %9496 = vset.pattern.permute.xlu0 0
      %9497 = vperm.xlu0 %9496, %v1046
      %v9498 = vpop.permute.xlu0 %9497
      %9501 = vset.pattern.permute.xlu0 0
      %9502 = vperm.xlu0 %9501, %v1047
      %v9503 = vpop.permute.xlu0 %9502
      %9506 = vset.pattern.permute.xlu0 0
      %9507 = vperm.xlu0 %9506, %v1048
      %v9508 = vpop.permute.xlu0 %9507
      %9511 = vset.pattern.permute.xlu0 0
      %9512 = vperm.xlu0 %9511, %v1049
      %v9513 = vpop.permute.xlu0 %9512
      %9516 = vset.pattern.permute.xlu0 0
      %9517 = vperm.xlu0 %9516, %v1050
      %v9518 = vpop.permute.xlu0 %9517
      %9521 = vset.pattern.permute.xlu0 0
      %9522 = vperm.xlu0 %9521, %v1051
      %v9523 = vpop.permute.xlu0 %9522
      %9526 = vset.pattern.permute.xlu0 0
      %9527 = vperm.xlu0 %9526, %v1052
      %v9528 = vpop.permute.xlu0 %9527
      %v9530 = vmul.f32 %v9315, %v9373
      %v9531 = vmul.f32 %v9316, %v9378
      %v9532 = vmul.f32 %v9317, %v9383
      %v9533 = vmul.f32 %v9318, %v9388
      %v9534 = vmul.f32 %v9319, %v9393
      %v9535 = vmul.f32 %v9320, %v9398
      %v9536 = vmul.f32 %v9321, %v9403
      %v9537 = vmul.f32 %v9322, %v9408
      %v9538 = vmul.f32 %v9323, %v9413
      %v9539 = vmul.f32 %v9324, %v9418
      %v9540 = vmul.f32 %v9325, %v9423
      %v9541 = vmul.f32 %v9326, %v9428
      %v9542 = vmul.f32 %v9327, %v9433
      %v9543 = vmul.f32 %v9328, %v9438
      %v9544 = vmul.f32 %v9329, %v9443
      %v9545 = vmul.f32 %v9330, %v9448
      %v9546 = vmul.f32 %v9331, %v9453
      %v9547 = vmul.f32 %v9332, %v9458
      %v9548 = vmul.f32 %v9333, %v9463
      %v9549 = vmul.f32 %v9334, %v9468
      %v9550 = vmul.f32 %v9335, %v9473
      %v9551 = vmul.f32 %v9336, %v9478
      %v9552 = vmul.f32 %v9337, %v9483
      %v9553 = vmul.f32 %v9338, %v9488
      %v9554 = vmul.f32 %v9339, %v9493
      %v9555 = vmul.f32 %v9340, %v9498
      %v9556 = vmul.f32 %v9341, %v9503
      %v9557 = vmul.f32 %v9342, %v9508
      %v9558 = vmul.f32 %v9343, %v9513
      %v9559 = vmul.f32 %v9344, %v9518
      %v9560 = vmul.f32 %v9345, %v9523
      %v9561 = vmul.f32 %v9346, %v9528
      %v9562 = vsel %vm1546, %v9530, 0.0
      %v9563 = vsel %vm1546, %v9531, 0.0
      %v9564 = vadd.f32 %v9562, %v9563
      %v9565 = vsel %vm1546, %v9532, 0.0
      %v9566 = vadd.f32 %v9564, %v9565
      %v9567 = vsel %vm1546, %v9533, 0.0
      %v9568 = vadd.f32 %v9566, %v9567
      %v9569 = vsel %vm1546, %v9534, 0.0
      %v9570 = vadd.f32 %v9568, %v9569
      %v9571 = vsel %vm1546, %v9535, 0.0
      %v9572 = vadd.f32 %v9570, %v9571
      %v9573 = vsel %vm1546, %v9536, 0.0
      %v9574 = vadd.f32 %v9572, %v9573
      %v9575 = vsel %vm1546, %v9537, 0.0
      %v9576 = vadd.f32 %v9574, %v9575
      %v9577 = vsel %vm1546, %v9538, 0.0
      %v9578 = vadd.f32 %v9576, %v9577
      %v9579 = vsel %vm1546, %v9539, 0.0
      %v9580 = vadd.f32 %v9578, %v9579
      %v9581 = vsel %vm1546, %v9540, 0.0
      %v9582 = vadd.f32 %v9580, %v9581
      %v9583 = vsel %vm1546, %v9541, 0.0
      %v9584 = vadd.f32 %v9582, %v9583
      %v9585 = vsel %vm1546, %v9542, 0.0
      %v9586 = vadd.f32 %v9584, %v9585
      %v9587 = vsel %vm1546, %v9543, 0.0
      %v9588 = vadd.f32 %v9586, %v9587
      %v9589 = vsel %vm1546, %v9544, 0.0
      %v9590 = vadd.f32 %v9588, %v9589
      %v9591 = vsel %vm1546, %v9545, 0.0
      %v9592 = vadd.f32 %v9590, %v9591
      %v9593 = vsel %vm1546, %v9546, 0.0
      %v9594 = vadd.f32 %v9592, %v9593
      %v9595 = vsel %vm1546, %v9547, 0.0
      %v9596 = vadd.f32 %v9594, %v9595
      %v9597 = vsel %vm1546, %v9548, 0.0
      %v9598 = vadd.f32 %v9596, %v9597
      %v9599 = vsel %vm1546, %v9549, 0.0
      %v9600 = vadd.f32 %v9598, %v9599
      %v9601 = vsel %vm1546, %v9550, 0.0
      %v9602 = vadd.f32 %v9600, %v9601
      %v9603 = vsel %vm1546, %v9551, 0.0
      %v9604 = vadd.f32 %v9602, %v9603
      %v9605 = vsel %vm1546, %v9552, 0.0
      %v9606 = vadd.f32 %v9604, %v9605
      %v9607 = vsel %vm1546, %v9553, 0.0
      %v9608 = vadd.f32 %v9606, %v9607
      %v9609 = vsel %vm1546, %v9554, 0.0
      %v9610 = vadd.f32 %v9608, %v9609
      %v9611 = vsel %vm1546, %v9555, 0.0
      %v9612 = vadd.f32 %v9610, %v9611
      %v9613 = vsel %vm1546, %v9556, 0.0
      %v9614 = vadd.f32 %v9612, %v9613
      %v9615 = vsel %vm1546, %v9557, 0.0
      %v9616 = vadd.f32 %v9614, %v9615
      %v9617 = vsel %vm1546, %v9558, 0.0
      %v9618 = vadd.f32 %v9616, %v9617
      %v9619 = vsel %vm1546, %v9559, 0.0
      %v9620 = vadd.f32 %v9618, %v9619
      %v9621 = vsel %vm1546, %v9560, 0.0
      %v9622 = vadd.f32 %v9620, %v9621
      %v9623 = vsel %vm1546, %v9561, 0.0
      %v9624 = vadd.f32 %v9622, %v9623
      %v9625 = vrot.slane %v9624, 4
      %v9626 = vadd.f32 %v9624, %v9625
      %v9627 = vrot.slane %v9626, 2
      %v9628 = vadd.f32 %v9626, %v9627
      %v9629 = vrot.slane %v9628, 1
      %v9630 = vadd.f32 %v9628, %v9629
      %v9631 = vsel %vm1546, %v9315, 0.0
      %v9632 = vsel %vm1546, %v9316, 0.0
      %v9633 = vadd.f32 %v9631, %v9632
      %v9634 = vsel %vm1546, %v9317, 0.0
      %v9635 = vadd.f32 %v9633, %v9634
      %v9636 = vsel %vm1546, %v9318, 0.0
      %v9637 = vadd.f32 %v9635, %v9636
      %v9638 = vsel %vm1546, %v9319, 0.0
      %v9639 = vadd.f32 %v9637, %v9638
      %v9640 = vsel %vm1546, %v9320, 0.0
      %v9641 = vadd.f32 %v9639, %v9640
      %v9642 = vsel %vm1546, %v9321, 0.0
      %v9643 = vadd.f32 %v9641, %v9642
      %v9644 = vsel %vm1546, %v9322, 0.0
      %v9645 = vadd.f32 %v9643, %v9644
      %v9646 = vsel %vm1546, %v9323, 0.0
      %v9647 = vadd.f32 %v9645, %v9646
      %v9648 = vsel %vm1546, %v9324, 0.0
      %v9649 = vadd.f32 %v9647, %v9648
      %v9650 = vsel %vm1546, %v9325, 0.0
      %v9651 = vadd.f32 %v9649, %v9650
      %v9652 = vsel %vm1546, %v9326, 0.0
      %v9653 = vadd.f32 %v9651, %v9652
      %v9654 = vsel %vm1546, %v9327, 0.0
      %v9655 = vadd.f32 %v9653, %v9654
      %v9656 = vsel %vm1546, %v9328, 0.0
      %v9657 = vadd.f32 %v9655, %v9656
      %v9658 = vsel %vm1546, %v9329, 0.0
      %v9659 = vadd.f32 %v9657, %v9658
      %v9660 = vsel %vm1546, %v9330, 0.0
      %v9661 = vadd.f32 %v9659, %v9660
      %v9662 = vsel %vm1546, %v9331, 0.0
      %v9663 = vadd.f32 %v9661, %v9662
      %v9664 = vsel %vm1546, %v9332, 0.0
      %v9665 = vadd.f32 %v9663, %v9664
      %v9666 = vsel %vm1546, %v9333, 0.0
      %v9667 = vadd.f32 %v9665, %v9666
      %v9668 = vsel %vm1546, %v9334, 0.0
      %v9669 = vadd.f32 %v9667, %v9668
      %v9670 = vsel %vm1546, %v9335, 0.0
      %v9671 = vadd.f32 %v9669, %v9670
      %v9672 = vsel %vm1546, %v9336, 0.0
      %v9673 = vadd.f32 %v9671, %v9672
      %v9674 = vsel %vm1546, %v9337, 0.0
      %v9675 = vadd.f32 %v9673, %v9674
      %v9676 = vsel %vm1546, %v9338, 0.0
      %v9677 = vadd.f32 %v9675, %v9676
      %v9678 = vsel %vm1546, %v9339, 0.0
      %v9679 = vadd.f32 %v9677, %v9678
      %v9680 = vsel %vm1546, %v9340, 0.0
      %v9681 = vadd.f32 %v9679, %v9680
      %v9682 = vsel %vm1546, %v9341, 0.0
      %v9683 = vadd.f32 %v9681, %v9682
      %v9684 = vsel %vm1546, %v9342, 0.0
      %v9685 = vadd.f32 %v9683, %v9684
      %v9686 = vsel %vm1546, %v9343, 0.0
      %v9687 = vadd.f32 %v9685, %v9686
      %v9688 = vsel %vm1546, %v9344, 0.0
      %v9689 = vadd.f32 %v9687, %v9688
      %v9690 = vsel %vm1546, %v9345, 0.0
      %v9691 = vadd.f32 %v9689, %v9690
      %v9692 = vsel %vm1546, %v9346, 0.0
      %v9693 = vadd.f32 %v9691, %v9692
      %v9694 = vrot.slane %v9693, 4
      %v9695 = vadd.f32 %v9693, %v9694
      %v9696 = vrot.slane %v9695, 2
      %v9697 = vadd.f32 %v9695, %v9696
      %v9698 = vrot.slane %v9697, 1
      %v9699 = vadd.f32 %v9697, %v9698
      %v9700 = vmul.f32 %v9630, 0.0625
      %v9702 = vsel %vm1546, %v9700, 0
      %9704 = vmatprep.subr.mxu0 0.0
      %9705 = vmatpush1.msra.mxu0 %v9347
      %9706 = vmatprep.subr.mxu0 0.0
      %9707 = vmatpush1.msra.mxu0 %v9348
      %9708 = vmatprep.subr.mxu0 0.0
      %9709 = vmatpush1.msra.mxu0 %v9349
      %9710 = vmatprep.subr.mxu0 0.0
      %9711 = vmatpush1.msra.mxu0 %v9350
      %9712 = vmatprep.subr.mxu0 0.0
      %9713 = vmatpush1.msra.mxu0 0.0
      %9714 = vmatprep.subr.mxu0 0.0
      %9715 = vmatpush1.msra.mxu0 0.0
      %9716 = vmatprep.subr.mxu0 0.0
      %9717 = vmatpush1.msra.mxu0 0.0
      %9718 = vmatprep.subr.mxu0 0.0
      %9719 = vmatpush1.msra.mxu0 0.0
      %9720 = vmatprep.subr.mxu0 0.0
      %9721 = vmatpush1.msra.mxu0 0.0
      %9722 = vmatprep.subr.mxu0 0.0
      %9723 = vmatpush1.msra.mxu0 0.0
      %9724 = vmatprep.subr.mxu0 0.0
      %9725 = vmatpush1.msra.mxu0 0.0
      %9726 = vmatprep.subr.mxu0 0.0
      %9727 = vmatpush1.msra.mxu0 0.0
      %9728 = vmatprep.subr.mxu0 0.0
      %9729 = vmatpush1.msra.mxu0 0.0
      %9730 = vmatprep.subr.mxu0 0.0
      %9731 = vmatpush1.msra.mxu0 0.0
      %9732 = vmatprep.subr.mxu0 0.0
      %9733 = vmatpush1.msra.mxu0 0.0
      %9734 = vmatprep.subr.mxu0 0.0
      %9735 = vmatpush1.msra.mxu0 0.0
      %9736 = vmatprep.subr.mxu0 0.0
      %9737 = vmatpush1.msra.mxu0 0.0
      %9738 = vmatprep.subr.mxu0 0.0
      %9739 = vmatpush1.msra.mxu0 0.0
      %9740 = vmatprep.subr.mxu0 0.0
      %9741 = vmatpush1.msra.mxu0 0.0
      %9742 = vmatprep.subr.mxu0 0.0
      %9743 = vmatpush1.msra.mxu0 0.0
      %9744 = vmatprep.subr.mxu0 0.0
      %9745 = vmatpush1.msra.mxu0 0.0
      %9746 = vmatprep.subr.mxu0 0.0
      %9747 = vmatpush1.msra.mxu0 0.0
      %9748 = vmatprep.subr.mxu0 0.0
      %9749 = vmatpush1.msra.mxu0 0.0
      %9750 = vmatprep.subr.mxu0 0.0
      %9751 = vmatpush1.msra.mxu0 0.0
      %9752 = vmatprep.subr.mxu0 0.0
      %9753 = vmatpush1.msra.mxu0 0.0
      %9754 = vmatprep.subr.mxu0 0.0
      %9755 = vmatpush1.msra.mxu0 0.0
      %9756 = vmatprep.subr.mxu0 0.0
      %9757 = vmatpush1.msra.mxu0 0.0
      %9758 = vmatprep.subr.mxu0 0.0
      %9759 = vmatpush1.msra.mxu0 0.0
      %9760 = vmatprep.subr.mxu0 0.0
      %9761 = vmatpush1.msra.mxu0 0.0
      %9762 = vmatprep.subr.mxu0 0.0
      %9763 = vmatpush1.msra.mxu0 0.0
      %9764 = vmatprep.subr.mxu0 0.0
      %9765 = vmatpush1.msra.mxu0 0.0
      %9766 = vmatprep.subr.mxu0 0.0
      %9767 = vmatpush1.msra.mxu0 0.0
      %9768 = vmatprep.mubr.f32.mxu0 0.0
      %9769 = vmatmul.mubr.f32.gmra.mrb[0].mxu0 %v9702
      %v9770 = vpop.f32.mrb[0].mxu0
      %v9771 = vadd.f32 %v9351, %v9770
      %v9772 = vpop.f32.mrb[0].mxu0
      %9773 = vdwg.mxu0
      %v9774 = vsub.f32 %v9699, %v9630
      %v9775 = vmul.f32 %v9774, 0.004166667
      %v9777 = vsel %vm1546, %v9775, 0
      %9779 = vmatprep.subr.mxu0 0.0
      %9780 = vmatpush1.msra.mxu0 %v9352
      %9781 = vmatprep.subr.mxu0 0.0
      %9782 = vmatpush1.msra.mxu0 %v9353
      %9783 = vmatprep.subr.mxu0 0.0
      %9784 = vmatpush1.msra.mxu0 %v9354
      %9785 = vmatprep.subr.mxu0 0.0
      %9786 = vmatpush1.msra.mxu0 %v9355
      %9787 = vmatprep.subr.mxu0 0.0
      %9788 = vmatpush1.msra.mxu0 0.0
      %9789 = vmatprep.subr.mxu0 0.0
      %9790 = vmatpush1.msra.mxu0 0.0
      %9791 = vmatprep.subr.mxu0 0.0
      %9792 = vmatpush1.msra.mxu0 0.0
      %9793 = vmatprep.subr.mxu0 0.0
      %9794 = vmatpush1.msra.mxu0 0.0
      %9795 = vmatprep.subr.mxu0 0.0
      %9796 = vmatpush1.msra.mxu0 0.0
      %9797 = vmatprep.subr.mxu0 0.0
      %9798 = vmatpush1.msra.mxu0 0.0
      %9799 = vmatprep.subr.mxu0 0.0
      %9800 = vmatpush1.msra.mxu0 0.0
      %9801 = vmatprep.subr.mxu0 0.0
      %9802 = vmatpush1.msra.mxu0 0.0
      %9803 = vmatprep.subr.mxu0 0.0
      %9804 = vmatpush1.msra.mxu0 0.0
      %9805 = vmatprep.subr.mxu0 0.0
      %9806 = vmatpush1.msra.mxu0 0.0
      %9807 = vmatprep.subr.mxu0 0.0
      %9808 = vmatpush1.msra.mxu0 0.0
      %9809 = vmatprep.subr.mxu0 0.0
      %9810 = vmatpush1.msra.mxu0 0.0
      %9811 = vmatprep.subr.mxu0 0.0
      %9812 = vmatpush1.msra.mxu0 0.0
      %9813 = vmatprep.subr.mxu0 0.0
      %9814 = vmatpush1.msra.mxu0 0.0
      %9815 = vmatprep.subr.mxu0 0.0
      %9816 = vmatpush1.msra.mxu0 0.0
      %9817 = vmatprep.subr.mxu0 0.0
      %9818 = vmatpush1.msra.mxu0 0.0
      %9819 = vmatprep.subr.mxu0 0.0
      %9820 = vmatpush1.msra.mxu0 0.0
      %9821 = vmatprep.subr.mxu0 0.0
      %9822 = vmatpush1.msra.mxu0 0.0
      %9823 = vmatprep.subr.mxu0 0.0
      %9824 = vmatpush1.msra.mxu0 0.0
      %9825 = vmatprep.subr.mxu0 0.0
      %9826 = vmatpush1.msra.mxu0 0.0
      %9827 = vmatprep.subr.mxu0 0.0
      %9828 = vmatpush1.msra.mxu0 0.0
      %9829 = vmatprep.subr.mxu0 0.0
      %9830 = vmatpush1.msra.mxu0 0.0
      %9831 = vmatprep.subr.mxu0 0.0
      %9832 = vmatpush1.msra.mxu0 0.0
      %9833 = vmatprep.subr.mxu0 0.0
      %9834 = vmatpush1.msra.mxu0 0.0
      %9835 = vmatprep.subr.mxu0 0.0
      %9836 = vmatpush1.msra.mxu0 0.0
      %9837 = vmatprep.subr.mxu0 0.0
      %9838 = vmatpush1.msra.mxu0 0.0
      %9839 = vmatprep.subr.mxu0 0.0
      %9840 = vmatpush1.msra.mxu0 0.0
      %9841 = vmatprep.subr.mxu0 0.0
      %9842 = vmatpush1.msra.mxu0 0.0
      %9843 = vmatprep.mubr.f32.mxu0 0.0
      %9844 = vmatmul.mubr.f32.gmra.mrb[0].mxu0 %v9777
      %v9845 = vpop.f32.mrb[0].mxu0
      %v9846 = vadd.f32 0.0, %v9845
      %v9847 = vpop.f32.mrb[0].mxu0
      %9848 = vdwg.mxu0
      %v9849 = vadd.f32 %v9771, %v9846
      %vm9850 = vcmp.ge.f32.partialorder %v9849, 0.0
      %v9851 = vmul.f32 %v9849, 0.01
      %v9852 = vsel %vm9850, %v9849, %v9851
      %v9854 = vsel %vm1546, %v9852, 0
      %9856 = vmatprep.subr.mxu0 0.0
      %9857 = vmatpush1.msra.mxu0 %v9356
      %9858 = vmatprep.subr.mxu0 0.0
      %9859 = vmatpush1.msra.mxu0 %v9357
      %9860 = vmatprep.subr.mxu0 0.0
      %9861 = vmatpush1.msra.mxu0 %v9358
      %9862 = vmatprep.subr.mxu0 0.0
      %9863 = vmatpush1.msra.mxu0 %v9359
      %9864 = vmatprep.subr.mxu0 0.0
      %9865 = vmatpush1.msra.mxu0 0.0
      %9866 = vmatprep.subr.mxu0 0.0
      %9867 = vmatpush1.msra.mxu0 0.0
      %9868 = vmatprep.subr.mxu0 0.0
      %9869 = vmatpush1.msra.mxu0 0.0
      %9870 = vmatprep.subr.mxu0 0.0
      %9871 = vmatpush1.msra.mxu0 0.0
      %9872 = vmatprep.subr.mxu0 0.0
      %9873 = vmatpush1.msra.mxu0 0.0
      %9874 = vmatprep.subr.mxu0 0.0
      %9875 = vmatpush1.msra.mxu0 0.0
      %9876 = vmatprep.subr.mxu0 0.0
      %9877 = vmatpush1.msra.mxu0 0.0
      %9878 = vmatprep.subr.mxu0 0.0
      %9879 = vmatpush1.msra.mxu0 0.0
      %9880 = vmatprep.subr.mxu0 0.0
      %9881 = vmatpush1.msra.mxu0 0.0
      %9882 = vmatprep.subr.mxu0 0.0
      %9883 = vmatpush1.msra.mxu0 0.0
      %9884 = vmatprep.subr.mxu0 0.0
      %9885 = vmatpush1.msra.mxu0 0.0
      %9886 = vmatprep.subr.mxu0 0.0
      %9887 = vmatpush1.msra.mxu0 0.0
      %9888 = vmatprep.subr.mxu0 0.0
      %9889 = vmatpush1.msra.mxu0 0.0
      %9890 = vmatprep.subr.mxu0 0.0
      %9891 = vmatpush1.msra.mxu0 0.0
      %9892 = vmatprep.subr.mxu0 0.0
      %9893 = vmatpush1.msra.mxu0 0.0
      %9894 = vmatprep.subr.mxu0 0.0
      %9895 = vmatpush1.msra.mxu0 0.0
      %9896 = vmatprep.subr.mxu0 0.0
      %9897 = vmatpush1.msra.mxu0 0.0
      %9898 = vmatprep.subr.mxu0 0.0
      %9899 = vmatpush1.msra.mxu0 0.0
      %9900 = vmatprep.subr.mxu0 0.0
      %9901 = vmatpush1.msra.mxu0 0.0
      %9902 = vmatprep.subr.mxu0 0.0
      %9903 = vmatpush1.msra.mxu0 0.0
      %9904 = vmatprep.subr.mxu0 0.0
      %9905 = vmatpush1.msra.mxu0 0.0
      %9906 = vmatprep.subr.mxu0 0.0
      %9907 = vmatpush1.msra.mxu0 0.0
      %9908 = vmatprep.subr.mxu0 0.0
      %9909 = vmatpush1.msra.mxu0 0.0
      %9910 = vmatprep.subr.mxu0 0.0
      %9911 = vmatpush1.msra.mxu0 0.0
      %9912 = vmatprep.subr.mxu0 0.0
      %9913 = vmatpush1.msra.mxu0 0.0
      %9914 = vmatprep.subr.mxu0 0.0
      %9915 = vmatpush1.msra.mxu0 0.0
      %9916 = vmatprep.subr.mxu0 0.0
      %9917 = vmatpush1.msra.mxu0 0.0
      %9918 = vmatprep.subr.mxu0 0.0
      %9919 = vmatpush1.msra.mxu0 0.0
      %9920 = vmatprep.mubr.f32.mxu0 0.0
      %9921 = vmatmul.mubr.f32.gmra.mrb[0].mxu0 %v9854
      %v9922 = vpop.f32.mrb[0].mxu0
      %v9923 = vadd.f32 0.0, %v9922
      %v9924 = vpop.f32.mrb[0].mxu0
      %9925 = vdwg.mxu0
      %v9926 = vadd.f32 %v9849, %v9923
      %v9928 = vsel %vm1546, %v9926, 0
      %9930 = vmatprep.subr.mxu0 0.0
      %9931 = vmatpush1.msra.mxu0 %v9360
      %9932 = vmatprep.subr.mxu0 0.0
      %9933 = vmatpush1.msra.mxu0 %v9361
      %9934 = vmatprep.subr.mxu0 0.0
      %9935 = vmatpush1.msra.mxu0 %v9362
      %9936 = vmatprep.subr.mxu0 0.0
      %9937 = vmatpush1.msra.mxu0 %v9363
      %9938 = vmatprep.subr.mxu0 0.0
      %9939 = vmatpush1.msra.mxu0 0.0
      %9940 = vmatprep.subr.mxu0 0.0
      %9941 = vmatpush1.msra.mxu0 0.0
      %9942 = vmatprep.subr.mxu0 0.0
      %9943 = vmatpush1.msra.mxu0 0.0
      %9944 = vmatprep.subr.mxu0 0.0
      %9945 = vmatpush1.msra.mxu0 0.0
      %9946 = vmatprep.subr.mxu0 0.0
      %9947 = vmatpush1.msra.mxu0 0.0
      %9948 = vmatprep.subr.mxu0 0.0
      %9949 = vmatpush1.msra.mxu0 0.0
      %9950 = vmatprep.subr.mxu0 0.0
      %9951 = vmatpush1.msra.mxu0 0.0
      %9952 = vmatprep.subr.mxu0 0.0
      %9953 = vmatpush1.msra.mxu0 0.0
      %9954 = vmatprep.subr.mxu0 0.0
      %9955 = vmatpush1.msra.mxu0 0.0
      %9956 = vmatprep.subr.mxu0 0.0
      %9957 = vmatpush1.msra.mxu0 0.0
      %9958 = vmatprep.subr.mxu0 0.0
      %9959 = vmatpush1.msra.mxu0 0.0
      %9960 = vmatprep.subr.mxu0 0.0
      %9961 = vmatpush1.msra.mxu0 0.0
      %9962 = vmatprep.subr.mxu0 0.0
      %9963 = vmatpush1.msra.mxu0 0.0
      %9964 = vmatprep.subr.mxu0 0.0
      %9965 = vmatpush1.msra.mxu0 0.0
      %9966 = vmatprep.subr.mxu0 0.0
      %9967 = vmatpush1.msra.mxu0 0.0
      %9968 = vmatprep.subr.mxu0 0.0
      %9969 = vmatpush1.msra.mxu0 0.0
      %9970 = vmatprep.subr.mxu0 0.0
      %9971 = vmatpush1.msra.mxu0 0.0
      %9972 = vmatprep.subr.mxu0 0.0
      %9973 = vmatpush1.msra.mxu0 0.0
      %9974 = vmatprep.subr.mxu0 0.0
      %9975 = vmatpush1.msra.mxu0 0.0
      %9976 = vmatprep.subr.mxu0 0.0
      %9977 = vmatpush1.msra.mxu0 0.0
      %9978 = vmatprep.subr.mxu0 0.0
      %9979 = vmatpush1.msra.mxu0 0.0
      %9980 = vmatprep.subr.mxu0 0.0
      %9981 = vmatpush1.msra.mxu0 0.0
      %9982 = vmatprep.subr.mxu0 0.0
      %9983 = vmatpush1.msra.mxu0 0.0
      %9984 = vmatprep.subr.mxu0 0.0
      %9985 = vmatpush1.msra.mxu0 0.0
      %9986 = vmatprep.subr.mxu0 0.0
      %9987 = vmatpush1.msra.mxu0 0.0
      %9988 = vmatprep.subr.mxu0 0.0
      %9989 = vmatpush1.msra.mxu0 0.0
      %9990 = vmatprep.subr.mxu0 0.0
      %9991 = vmatpush1.msra.mxu0 0.0
      %9992 = vmatprep.subr.mxu0 0.0
      %9993 = vmatpush1.msra.mxu0 0.0
      %9994 = vmatprep.mubr.f32.mxu0 0.0
      %9995 = vmatmul.mubr.f32.gmra.mrb[0].mxu0 %v9928
      %v9996 = vpop.f32.mrb[0].mxu0
      %v9997 = vadd.f32 %v9364, %v9996
      %v9998 = vpop.f32.mrb[0].mxu0
      %9999 = vdwg.mxu0
      %vm10000 = vcmp.ge.f32.partialorder %v9997, 0.0
      %v10001 = vmul.f32 %v9997, 0.01
      %v10002 = vsel %vm10000, %v9997, %v10001
      %v10003 = vadd.f32 %v9926, %v10002
      %v10005 = vsel %vm1546, %v10003, 0
      %10007 = vmatprep.subr.mxu0 0.0
      %10008 = vmatpush1.msra.mxu0 %v9365
      %10009 = vmatprep.subr.mxu0 0.0
      %10010 = vmatpush1.msra.mxu0 %v9366
      %10011 = vmatprep.subr.mxu0 0.0
      %10012 = vmatpush1.msra.mxu0 %v9367
      %10013 = vmatprep.subr.mxu0 0.0
      %10014 = vmatpush1.msra.mxu0 %v9368
      %10015 = vmatprep.subr.mxu0 0.0
      %10016 = vmatpush1.msra.mxu0 0.0
      %10017 = vmatprep.subr.mxu0 0.0
      %10018 = vmatpush1.msra.mxu0 0.0
      %10019 = vmatprep.subr.mxu0 0.0
      %10020 = vmatpush1.msra.mxu0 0.0
      %10021 = vmatprep.subr.mxu0 0.0
      %10022 = vmatpush1.msra.mxu0 0.0
      %10023 = vmatprep.subr.mxu0 0.0
      %10024 = vmatpush1.msra.mxu0 0.0
      %10025 = vmatprep.subr.mxu0 0.0
      %10026 = vmatpush1.msra.mxu0 0.0
      %10027 = vmatprep.subr.mxu0 0.0
      %10028 = vmatpush1.msra.mxu0 0.0
      %10029 = vmatprep.subr.mxu0 0.0
      %10030 = vmatpush1.msra.mxu0 0.0
      %10031 = vmatprep.subr.mxu0 0.0
      %10032 = vmatpush1.msra.mxu0 0.0
      %10033 = vmatprep.subr.mxu0 0.0
      %10034 = vmatpush1.msra.mxu0 0.0
      %10035 = vmatprep.subr.mxu0 0.0
      %10036 = vmatpush1.msra.mxu0 0.0
      %10037 = vmatprep.subr.mxu0 0.0
      %10038 = vmatpush1.msra.mxu0 0.0
      %10039 = vmatprep.subr.mxu0 0.0
      %10040 = vmatpush1.msra.mxu0 0.0
      %10041 = vmatprep.subr.mxu0 0.0
      %10042 = vmatpush1.msra.mxu0 0.0
      %10043 = vmatprep.subr.mxu0 0.0
      %10044 = vmatpush1.msra.mxu0 0.0
      %10045 = vmatprep.subr.mxu0 0.0
      %10046 = vmatpush1.msra.mxu0 0.0
      %10047 = vmatprep.subr.mxu0 0.0
      %10048 = vmatpush1.msra.mxu0 0.0
      %10049 = vmatprep.subr.mxu0 0.0
      %10050 = vmatpush1.msra.mxu0 0.0
      %10051 = vmatprep.subr.mxu0 0.0
      %10052 = vmatpush1.msra.mxu0 0.0
      %10053 = vmatprep.subr.mxu0 0.0
      %10054 = vmatpush1.msra.mxu0 0.0
      %10055 = vmatprep.subr.mxu0 0.0
      %10056 = vmatpush1.msra.mxu0 0.0
      %10057 = vmatprep.subr.mxu0 0.0
      %10058 = vmatpush1.msra.mxu0 0.0
      %10059 = vmatprep.subr.mxu0 0.0
      %10060 = vmatpush1.msra.mxu0 0.0
      %10061 = vmatprep.subr.mxu0 0.0
      %10062 = vmatpush1.msra.mxu0 0.0
      %10063 = vmatprep.subr.mxu0 0.0
      %10064 = vmatpush1.msra.mxu0 0.0
      %10065 = vmatprep.subr.mxu0 0.0
      %10066 = vmatpush1.msra.mxu0 0.0
      %10067 = vmatprep.subr.mxu0 0.0
      %10068 = vmatpush1.msra.mxu0 0.0
      %10069 = vmatprep.subr.mxu0 0.0
      %10070 = vmatpush1.msra.mxu0 0.0
      %10071 = vmatprep.mubr.f32.mxu0 0.0
      %10072 = vmatmul.mubr.f32.gmra.mrb[0].mxu0 %v10005
      %v10073 = vpop.f32.mrb[0].mxu0
      %v10074 = vadd.f32 %v9369, %v10073
      %v10075 = vpop.f32.mrb[0].mxu0
      %10076 = vdwg.mxu0
      %vm10077 = vcmask 0
      %10078 = vst.msk [vmem:[%s956] sm:$0x1] %vm10077, %v10074
      %p10079 = scmp.lt.s32.totalorder %s76, 1
      %s10080 = scalar_select %p10079, %s76, 1
      %s10081 = scalar_lea.vmem %s63, %s10080
      // Predicated region
      $region145: #{forward.1} parent=143 // pred_check
        %p10082 = pneg %p750
      $region146: #{forward.1} parent=143 // pred_check_branch
        %10084 = sbr.rel (%p10082) target = $region148
      $region147: #{forward.1} parent=143 // pred_region
        _
      $region148: #{forward.1} parent=143 // pred_fallthru
        _
    $region144: #{forward.1} parent=5 // pred_fallthru
      _
    %p10085 = scmp.le.s32.totalorder 2, %s71
    // Predicated region
    $region149: #{forward.1} parent=5 // pred_check
      %p10086 = pneg %p10085
    $region150: #{forward.1} parent=5 // pred_check_branch
      %10088 = sbr.rel (%p10086) target = $region152
    $region151: #{forward.1} parent=5 // pred_region
      %s10089 = ssub.s32 %s71, 2
      // Predicated region
      $region153: #{forward.1} parent=151 // pred_check
        %p10090 = pneg %p756
      $region154: #{forward.1} parent=151 // pred_check_branch
        %10092 = sbr.rel (%p10090) target = $region156
      $region155: #{forward.1} parent=151 // pred_region
        %p10093 = scmp.lt.s32.totalorder %s77, 1
        %s10094 = scalar_select %p10093, %s77, 1
        %s10095 = scalar_lea.vmem %s63, %s10094
      $region156: #{forward.1} parent=151 // pred_fallthru
        _
    $region152: #{forward.1} parent=5 // pred_fallthru
      _
  $region6: #{forward.1} parent=0 // loop_footer
    %s75 = sadd.s32 1, %s71
  $region7: #{forward.1} parent=0 // loop_footer_branch
    %70 = sbr.rel target = $region3
  $region8: #{forward.1} parent=0 // loop_exit
    _

</llo_original>
